<compile_context>
chip_gen: v7x
topology: tpu7x:2x2x1
jax: 0.10.0
libtpu: 0.0.40
codegen_flags: <defaults>
</compile_context>

<pallas_src>
import functools

import jax
import jax.numpy as jnp
from jax.experimental import pallas as pl
from jax.experimental.pallas import tpu as pltpu


# ------------------------ hardware-aware VMEM budget --------------------------

def _vmem_capacity_bytes():
    try:
        return int(pltpu.get_tpu_info().vmem_capacity_bytes)
    except Exception:
        return 64 * 1024 * 1024            # conservative (v7x per-core VMEM)


_VMEM_CAP = _vmem_capacity_bytes()
_VMEM_LIMIT = max(32 * 1024 * 1024,
                  min((_VMEM_CAP * 3) // 4, 100 * 1024 * 1024))
_TILE_BUDGET = _VMEM_LIMIT // 2            # headroom for double buffering


def _ceil_to(x, m):
    return (x + m - 1) // m * m


# ----------------------------- fused matmul kernel ----------------------------

def _mm_fused_kernel(*refs, n_lhs, has_res, act):
    lhs_refs = refs[:n_lhs]
    idx = n_lhs
    res_ref = None
    if has_res:
        res_ref = refs[idx]
        idx += 1
    w_refs = refs[idx:idx + n_lhs]
    idx += n_lhs
    b_ref = refs[idx]
    o_ref = refs[idx + 1]

    x0 = lhs_refs[0][...]
    if has_res:
        # fused residual add (f32 add, bf16 back onto the MXU)
        x0 = (x0.astype(jnp.float32)
              + res_ref[...].astype(jnp.float32)).astype(jnp.bfloat16)
    acc = jnp.dot(x0, w_refs[0][...], preferred_element_type=jnp.float32)
    for i in range(1, n_lhs):
        acc = acc + jnp.dot(lhs_refs[i][...], w_refs[i][...],
                            preferred_element_type=jnp.float32)
    y = acc + b_ref[...]
    if act == "relu":
        y = jnp.maximum(y, 0.0)
    elif act == "glu":
        half = y.shape[-1] // 2
        y = y[:, :half] * jax.nn.sigmoid(y[:, half:])
    o_ref[...] = y.astype(o_ref.dtype)


def fused_matmul(lhs_list, w_list, bias, *, act="none", residual=None,
                 out_dtype=jnp.bfloat16):
    """out = epilogue(sum_i lhs_i @ w_i + bias); lhs chunks (M, K_i), w (K_i, N).

    RHS is fully VMEM resident (no K/N padding, no K grid); only the M axis is
    tiled, sized against the generation's VMEM budget.  epilogue:
      act="none"/"relu": plain / ReLU;  act="glu": N=2*Cout -> a*sigmoid(g).
    residual (optional, same shape as lhs_list[0]) is added to chunk 0 in f32.
    """
    n_lhs = len(lhs_list)
    M = int(lhs_list[0].shape[0])
    k_list = [int(w.shape[0]) for w in w_list]
    N = int(w_list[0].shape[1])
    n_out = N // 2 if act == "glu" else N
    out_isz = jnp.dtype(out_dtype).itemsize

    fixed = sum(k * N for k in k_list) * 2 * 2 + N * 4 * 2
    per_row = sum(k_list) * 2 * 2 + n_out * out_isz * 2
    if residual is not None:
        per_row += k_list[0] * 2 * 2
    budget = max(_TILE_BUDGET - fixed, 256 * 1024)

    if M * per_row <= budget and M <= 8192:
        Mp, tm = M, M                       # full-extent block, no padding
    else:
        tm = 8
        for cand in (4096, 2048, 1024, 512, 256, 128, 64, 32, 16, 8):
            if cand <= M and cand * per_row <= budget:
                tm = cand
                break
        Mp = _ceil_to(M, tm)

    def prep_lhs(a):
        a = a.astype(jnp.bfloat16)
        if Mp != M:
            a = jnp.pad(a, ((0, Mp - M), (0, 0)))
        return a

    has_res = residual is not None
    args = [prep_lhs(a) for a in lhs_list]
    in_specs = [pl.BlockSpec((tm, k), lambda i: (i, 0)) for k in k_list]
    if has_res:
        args.append(prep_lhs(residual))
        in_specs.append(pl.BlockSpec((tm, k_list[0]), lambda i: (i, 0)))
    for w, k in zip(w_list, k_list):
        args.append(w.astype(jnp.bfloat16))
        in_specs.append(pl.BlockSpec((k, N), lambda i: (0, 0)))
    args.append(bias.astype(jnp.float32).reshape(1, N))
    in_specs.append(pl.BlockSpec((1, N), lambda i: (0, 0)))

    out = pl.pallas_call(
        functools.partial(_mm_fused_kernel, n_lhs=n_lhs, has_res=has_res,
                          act=act),
        grid_spec=pltpu.PrefetchScalarGridSpec(
            num_scalar_prefetch=0,
            grid=(Mp // tm,),
            in_specs=in_specs,
            out_specs=pl.BlockSpec((tm, n_out), lambda i: (i, 0)),
        ),
        out_shape=jax.ShapeDtypeStruct((Mp, n_out), out_dtype),
        compiler_params=pltpu.CompilerParams(
            dimension_semantics=("parallel",),
            vmem_limit_bytes=_VMEM_LIMIT),
    )(*args)
    return out if Mp == M else out[:M]


# --------------------------- bidirectional LSTM kernel -------------------------

def _bilstm_chunk_kernel(xgf_ref, xgb_ref, whh_ref, hf_ref, hb_ref,
                         h_sc, c_sc, *, tc):
    @pl.when(pl.program_id(0) == 0)
    def _():
        h_sc[...] = jnp.zeros_like(h_sc)
        c_sc[...] = jnp.zeros_like(c_sc)

    hsize = whh_ref.shape[1]
    whh_f = whh_ref[0]                      # (H, 4H) bf16, VMEM resident
    whh_b = whh_ref[1]

    def cell(z, c_prev):
        i = jax.nn.sigmoid(z[:, 0 * hsize:1 * hsize])
        f = jax.nn.sigmoid(z[:, 1 * hsize:2 * hsize])
        g = jnp.tanh(z[:, 2 * hsize:3 * hsize])
        o = jax.nn.sigmoid(z[:, 3 * hsize:4 * hsize])
        c = f * c_prev + i * g
        h = o * jnp.tanh(c)
        return h, c

    def step(j, carry):
        hf, cf, hb, cb = carry
        zf = xgf_ref[j] + jnp.dot(hf.astype(jnp.bfloat16), whh_f,
                                  preferred_element_type=jnp.float32)
        zb = xgb_ref[tc - 1 - j] + jnp.dot(hb.astype(jnp.bfloat16), whh_b,
                                           preferred_element_type=jnp.float32)
        hf, cf = cell(zf, cf)
        hb, cb = cell(zb, cb)
        hf_ref[j] = hf.astype(hf_ref.dtype)
        hb_ref[tc - 1 - j] = hb.astype(hb_ref.dtype)
        return hf, cf, hb, cb

    carry = (h_sc[0], c_sc[0], h_sc[1], c_sc[1])
    hf, cf, hb, cb = jax.lax.fori_loop(0, tc, step, carry, unroll=(tc <= 8))
    h_sc[0] = hf
    c_sc[0] = cf
    h_sc[1] = hb
    c_sc[1] = cb


def _chunk_size(T):
    if T <= 256:
        return T
    for cand in (256, 128, 64, 32, 16, 8, 4, 2):
        if T % cand == 0:
            return cand
    return 1


def bilstm_recurrence(xgf, xgb, whh):
    """Combined fwd+bwd recurrence.  xgf/xgb: (T, B, 4H) f32 gate inputs
    (x@W_ih^T + b), whh: (2, H, 4H) bf16.  Returns (hf, hb), each (T, B, H)."""
    T, B, H4 = xgf.shape
    H = H4 // 4
    tc = _chunk_size(T)
    nchunks = T // tc
    hf, hb = pl.pallas_call(
        functools.partial(_bilstm_chunk_kernel, tc=tc),
        grid_spec=pltpu.PrefetchScalarGridSpec(
            num_scalar_prefetch=0,
            grid=(nchunks,),
            in_specs=[
                pl.BlockSpec((tc, B, H4), lambda c: (c, 0, 0)),
                pl.BlockSpec((tc, B, H4), lambda c: (nchunks - 1 - c, 0, 0)),
                pl.BlockSpec((2, H, H4), lambda c: (0, 0, 0)),
            ],
            out_specs=[
                pl.BlockSpec((tc, B, H), lambda c: (c, 0, 0)),
                pl.BlockSpec((tc, B, H), lambda c: (nchunks - 1 - c, 0, 0)),
            ],
            scratch_shapes=[pltpu.VMEM((2, B, H), jnp.float32),
                            pltpu.VMEM((2, B, H), jnp.float32)],
        ),
        out_shape=(jax.ShapeDtypeStruct((T, B, H), jnp.bfloat16),
                   jax.ShapeDtypeStruct((T, B, H), jnp.bfloat16)),
        compiler_params=pltpu.CompilerParams(
            dimension_semantics=("arbitrary",),
            vmem_limit_bytes=_VMEM_LIMIT),
    )(xgf, xgb, whh)
    return hf, hb


def bilstm_layer(x_tbi, p_fwd, p_bwd):
    """One bidirectional LSTM layer, time-major.  x: (T, B, I) -> (T, B, 2H)."""
    T, B, I = x_tbi.shape
    w_ih_f, w_hh_f, b_ih_f, b_hh_f = p_fwd
    w_ih_b, w_hh_b, b_ih_b, b_hh_b = p_bwd
    H = w_hh_f.shape[1]
    x2d = x_tbi.reshape(T * B, I)
    xgf = fused_matmul([x2d], [w_ih_f.T], b_ih_f + b_hh_f,
                       out_dtype=jnp.float32).reshape(T, B, 4 * H)
    xgb = fused_matmul([x2d], [w_ih_b.T], b_ih_b + b_hh_b,
                       out_dtype=jnp.float32).reshape(T, B, 4 * H)
    whh = jnp.stack([w_hh_f.T, w_hh_b.T]).astype(jnp.bfloat16)   # (2, H, 4H)
    hf, hb = bilstm_recurrence(xgf, xgb, whh)
    return jnp.concatenate([hf, hb], axis=-1)                    # (T, B, 2H)


# ------------------------- layer wrappers (channels-last) ---------------------

def conv1d_strided_relu(x_btc, w, b, *, out_dtype=jnp.bfloat16):
    """PyTorch Conv1d(K=8, stride=4, padding=1) + fused bias/ReLU.
    x: (B, T, Cin), w: (Cout, Cin, 8) -> (B, Lout, Cout).
    Polyphase frames: two LHS chunks (taps 0..3 / 4..7), no im2col concat."""
    B, T, Cin = x_btc.shape
    Cout, _, K = w.shape
    stride, padding = 4, 1
    assert K == 8 and K == 2 * stride
    Lout = (T + 2 * padding - K) // stride + 1
    Lp = stride * (Lout + 1)
    xp = jnp.pad(x_btc, ((0, 0), (padding, max(0, Lp - (T + padding))),
                         (0, 0)))[:, :Lp, :]
    frames = xp.reshape(B, Lout + 1, stride * Cin)       # free reshape
    lo = frames[:, :Lout, :].reshape(B * Lout, stride * Cin)
    hi = frames[:, 1:, :].reshape(B * Lout, stride * Cin)
    wm = jnp.transpose(w, (2, 1, 0)).reshape(K * Cin, Cout)
    y = fused_matmul([lo, hi], [wm[:stride * Cin], wm[stride * Cin:]], b,
                     act="relu", out_dtype=out_dtype)
    return y.reshape(B, Lout, Cout)


def conv1x1_glu_pad1(x_btc, w, b, *, residual=None, out_dtype=jnp.bfloat16):
    """PyTorch Conv1d(K=1, stride=1, padding=1) + GLU(dim=channels).
    Optional residual (x + residual) fused into the kernel's LHS.
    The time axis is zero-padded so the kernel writes the full (B, T+2, Cout)
    output directly (border rows reduce to GLU(bias)), no output concat."""
    B, T, Cin = x_btc.shape
    C2 = w.shape[0]
    Cout = C2 // 2
    xp = jnp.pad(x_btc, ((0, 0), (1, 1), (0, 0)))
    wm = w.reshape(C2, Cin).T                             # (Cin, 2*Cout)
    res2d = None
    if residual is not None:
        res2d = jnp.pad(residual, ((0, 0), (1, 1), (0, 0))
                        ).reshape(B * (T + 2), Cin)
    y = fused_matmul([xp.reshape(B * (T + 2), Cin)], [wm], b, act="glu",
                     residual=res2d, out_dtype=out_dtype)
    return y.reshape(B, T + 2, Cout)


def conv_transpose1d_polyphase(x_btc, w, b, *, relu, out_dtype=jnp.bfloat16):
    """PyTorch ConvTranspose1d(K=8, stride=4, padding=1) [+ ReLU].
    Polyphase: phase p of output row m needs only x[m] (tap p) and x[m-1]
    (tap p+4), so the whole op is a 2-chunk matmul onto 4*Cout lanes.
    Returns the full (B, 4*(T+1), Cout) phase tensor plus (offset=1, Lo) --
    the padding shift is consumed by the following nearest-upsample gather."""
    B, T, Cin = x_btc.shape
    _, Cout, K = w.shape
    assert K == 8
    Lo = 4 * T + 2
    xz = jnp.pad(x_btc, ((0, 0), (1, 1), (0, 0)))         # (B, T+2, Cin)
    cur = xz[:, 1:T + 2, :].reshape(B * (T + 1), Cin)     # x[m]   (x[T] = 0)
    prev = xz[:, 0:T + 1, :].reshape(B * (T + 1), Cin)    # x[m-1] (x[-1] = 0)
    w_lo = jnp.transpose(w[:, :, 0:4], (0, 2, 1)).reshape(Cin, 4 * Cout)
    w_hi = jnp.transpose(w[:, :, 4:8], (0, 2, 1)).reshape(Cin, 4 * Cout)
    y = fused_matmul([cur, prev], [w_lo, w_hi], jnp.tile(b, 4),
                     act="relu" if relu else "none", out_dtype=out_dtype)
    return y.reshape(B, 4 * (T + 1), Cout), 1, Lo


def upsample_nearest_from(y_full, offset, length, size):
    """nn.Upsample(size, mode='nearest') over the valid window of y_full."""
    src = offset + (jnp.arange(size) * length) // size
    return y_full[:, src, :]


# ----------------------------- model forward ----------------------------------

def enc_block(x_btc, pb):
    h = conv1d_strided_relu(x_btc, pb["w1"], pb["b1"])
    return conv1x1_glu_pad1(h, pb["w2"], pb["b2"])


def wav_autoencoder_forward(x_nct, params):
    B, _, L = x_nct.shape
    x = jnp.transpose(x_nct, (0, 2, 1)).astype(jnp.bfloat16)   # channels-last

    e1 = enc_block(x, params["enc1"])
    e2 = enc_block(e1, params["enc2"])
    e3 = enc_block(e2, params["enc3"])
    e4 = enc_block(e3, params["enc4"])

    Bx, T4, C = e4.shape
    # PyTorch: x.reshape(B, T, C) on the NCT-contiguous tensor (memory
    # reinterpretation, not a permute) -- reproduced exactly.
    lstm_in = jnp.transpose(e4, (0, 2, 1)).reshape(Bx, T4, C)
    h = jnp.transpose(lstm_in, (1, 0, 2))                      # time-major
    for layer in range(2):
        h = bilstm_layer(h, params["lstm"][(layer, 0)],
                         params["lstm"][(layer, 1)])
        # eval-mode: no inter-layer dropout
    y = fused_matmul([h.reshape(T4 * Bx, 2 * C)], [params["lin_w"].T],
                     params["lin_b"], out_dtype=jnp.bfloat16)
    y = y.reshape(T4, Bx, C).transpose(1, 0, 2)                # (B, T, C)
    # PyTorch reshapes back to (B, C, T) (reinterpret), then adds e4 in NCT.
    y = jnp.transpose(y.reshape(Bx, C, T4), (0, 2, 1))         # channels-last

    h = conv1x1_glu_pad1(y, params["dec3"]["w1"], params["dec3"]["b1"],
                         residual=e4)
    h, off, ln = conv_transpose1d_polyphase(h, params["dec3"]["w2"],
                                            params["dec3"]["b2"], relu=True)
    h = upsample_nearest_from(h, off, ln, e3.shape[1])

    h = conv1x1_glu_pad1(h, params["dec4"]["w1"], params["dec4"]["b1"],
                         residual=e3)
    h, off, ln = conv_transpose1d_polyphase(h, params["dec4"]["w2"],
                                            params["dec4"]["b2"], relu=True)
    h = upsample_nearest_from(h, off, ln, e2.shape[1])

    h = conv1x1_glu_pad1(h, params["dec5"]["w1"], params["dec5"]["b1"],
                         residual=e2)
    h, off, ln = conv_transpose1d_polyphase(h, params["dec5"]["w2"],
                                            params["dec5"]["b2"], relu=True)
    h = upsample_nearest_from(h, off, ln, e1.shape[1])

    h = conv1x1_glu_pad1(h, params["dec6"]["w1"], params["dec6"]["b1"],
                         residual=e1)
    h, off, ln = conv_transpose1d_polyphase(h, params["dec6"]["w2"],
                                            params["dec6"]["b2"], relu=False,
                                            out_dtype=jnp.float32)
    h = upsample_nearest_from(h, off, ln, L)
    return jnp.transpose(h, (0, 2, 1))                         # back to NCT


# ----------------------------- parameter init ---------------------------------

def init_params(key, c0, in_ch):
    keys = iter(jax.random.split(key, 64))

    def nrm(shape, scale=0.05):
        return scale * jax.random.normal(next(keys), shape, jnp.float32)

    p = {}
    enc_io = [(in_ch, c0), (c0, 2 * c0), (2 * c0, 4 * c0), (4 * c0, 8 * c0)]
    for i, (ci, co) in enumerate(enc_io, start=1):
        p[f"enc{i}"] = dict(w1=nrm((co, ci, 8)), b1=nrm((co,)),
                            w2=nrm((2 * co, co, 1)), b2=nrm((2 * co,)))
    dec_io = [(8 * c0, 4 * c0), (4 * c0, 2 * c0), (2 * c0, c0), (c0, in_ch)]
    for i, (ci, co) in zip(range(3, 7), dec_io):
        p[f"dec{i}"] = dict(w1=nrm((2 * ci, ci, 1)), b1=nrm((2 * ci,)),
                            w2=nrm((ci, co, 8)), b2=nrm((co,)))
    H = 8 * c0
    lstm = {}
    for layer in range(2):
        I = H if layer == 0 else 2 * H
        for d in range(2):
            lstm[(layer, d)] = (nrm((4 * H, I)), nrm((4 * H, H)),
                                nrm((4 * H,)), nrm((4 * H,)))
    p["lstm"] = lstm
    p["lin_w"] = nrm((H, 2 * H))
    p["lin_b"] = nrm((H,))
    return p


# ----------------------------- main --------------------------------------------

if __name__ == "__main__":
    # Small config: in_channels=2, first_out_channels=8 (scaled from 64),
    # batch=2, time length 512 (enough depth for 4 stride-4 encoder stages).
    B, IN_CH, L, C0 = 2, 2, 512, 8
    key = jax.random.PRNGKey(0)
    pkey, xkey = jax.random.split(key)
    params = init_params(pkey, c0=C0, in_ch=IN_CH)
    x = jax.random.normal(xkey, (B, IN_CH, L), jnp.float32)

    fwd = jax.jit(wav_autoencoder_forward)
    y = fwd(x, params)
    jax.block_until_ready(y)
    assert y.shape == (B, IN_CH, L), y.shape
    assert bool(jnp.all(jnp.isfinite(y)))
    print("KERNEL_OK")
</pallas_src>

<mosaic_0001>
module attributes {stable_mosaic.version = 11 : i64} {
  func.func @_mm_fused_kernel(%arg0: i32, %arg1: memref<254x8xbf16, #tpu.memory_space<vmem>>, %arg2: memref<254x8xbf16, #tpu.memory_space<vmem>>, %arg3: memref<8x8xbf16, #tpu.memory_space<vmem>>, %arg4: memref<8x8xbf16, #tpu.memory_space<vmem>>, %arg5: memref<1x8xf32, #tpu.memory_space<vmem>>, %arg6: memref<254x8xbf16, #tpu.memory_space<vmem>>) attributes {dimension_semantics = [#tpu.dimension_semantics<parallel>], iteration_bounds = array<i64: 1>, scalar_prefetch = 0 : i64, scratch_operands = 0 : i64, tpu.core_type = #tpu.core_type<tc>, window_params = [{transform_indices = @transform_0, window_bounds = array<i64: 254, 8>}, {transform_indices = @transform_1, window_bounds = array<i64: 254, 8>}, {pipeline_mode = #tpu.pipeline_mode<synchronous>, transform_indices = @transform_2, window_bounds = array<i64: 8, 8>}, {pipeline_mode = #tpu.pipeline_mode<synchronous>, transform_indices = @transform_3, window_bounds = array<i64: 8, 8>}, {pipeline_mode = #tpu.pipeline_mode<synchronous>, transform_indices = @transform_4, window_bounds = array<i64: 1, 8>}, {transform_indices = @transform_5, window_bounds = array<i64: 254, 8>}]} {
    %c0 = arith.constant 0 : index
    %c0_0 = arith.constant 0 : index
    %0 = vector.load %arg1[%c0, %c0_0] : memref<254x8xbf16, #tpu.memory_space<vmem>>, vector<254x8xbf16>
    %c0_1 = arith.constant 0 : index
    %c0_2 = arith.constant 0 : index
    %1 = vector.load %arg3[%c0_1, %c0_2] : memref<8x8xbf16, #tpu.memory_space<vmem>>, vector<8x8xbf16>
    %cst = arith.constant dense<0.000000e+00> : vector<254x8xf32>
    %2 = tpu.matmul %0, %1, %cst {dimension_numbers = #tpu.dot_dimension_numbers<[1], [0], [0], [1], [0, 0, 1, 1], [], []>} : vector<254x8xbf16>, vector<8x8xbf16>, vector<254x8xf32> -> vector<254x8xf32>
    %c0_3 = arith.constant 0 : index
    %c0_4 = arith.constant 0 : index
    %3 = vector.load %arg2[%c0_3, %c0_4] : memref<254x8xbf16, #tpu.memory_space<vmem>>, vector<254x8xbf16>
    %c0_5 = arith.constant 0 : index
    %c0_6 = arith.constant 0 : index
    %4 = vector.load %arg4[%c0_5, %c0_6] : memref<8x8xbf16, #tpu.memory_space<vmem>>, vector<8x8xbf16>
    %cst_7 = arith.constant dense<0.000000e+00> : vector<254x8xf32>
    %5 = tpu.matmul %3, %4, %cst_7 {dimension_numbers = #tpu.dot_dimension_numbers<[1], [0], [0], [1], [0, 0, 1, 1], [], []>} : vector<254x8xbf16>, vector<8x8xbf16>, vector<254x8xf32> -> vector<254x8xf32>
    %6 = arith.addf %2, %5 : vector<254x8xf32>
    %c0_8 = arith.constant 0 : index
    %c0_9 = arith.constant 0 : index
    %7 = vector.load %arg5[%c0_8, %c0_9] : memref<1x8xf32, #tpu.memory_space<vmem>>, vector<1x8xf32>
    %8 = vector.broadcast %7 : vector<1x8xf32> to vector<254x8xf32>
    %9 = arith.addf %6, %8 : vector<254x8xf32>
    %cst_10 = arith.constant 0.000000e+00 : f32
    %10 = vector.broadcast %cst_10 : f32 to vector<254x8xf32>
    %11 = arith.maximumf %9, %10 : vector<254x8xf32>
    %12 = arith.truncf %11 : vector<254x8xf32> to vector<254x8xbf16>
    %c0_11 = arith.constant 0 : index
    %c0_12 = arith.constant 0 : index
    %13 = vector.load %arg6[%c0_11, %c0_12] : memref<254x8xbf16, #tpu.memory_space<vmem>>, vector<254x8xbf16>
    tpu.vector_store %arg6[%c0_11, %c0_12], %12 {strides = array<i32>} : memref<254x8xbf16, #tpu.memory_space<vmem>>, vector<254x8xbf16>,
    return
  }
  func.func @transform_0(%arg0: i32) -> (i32, i32) {
    %c0_i32 = arith.constant 0 : i32
    %c0_i32_0 = arith.constant 0 : i32
    return %arg0, %c0_i32 : i32, i32
  }
  func.func @transform_1(%arg0: i32) -> (i32, i32) {
    %c0_i32 = arith.constant 0 : i32
    %c0_i32_0 = arith.constant 0 : i32
    return %arg0, %c0_i32 : i32, i32
  }
  func.func @transform_2(%arg0: i32) -> (i32, i32) {
    %c0_i32 = arith.constant 0 : i32
    %c0_i32_0 = arith.constant 0 : i32
    %c0_i32_1 = arith.constant 0 : i32
    return %c0_i32, %c0_i32_0 : i32, i32
  }
  func.func @transform_3(%arg0: i32) -> (i32, i32) {
    %c0_i32 = arith.constant 0 : i32
    %c0_i32_0 = arith.constant 0 : i32
    %c0_i32_1 = arith.constant 0 : i32
    return %c0_i32, %c0_i32_0 : i32, i32
  }
  func.func @transform_4(%arg0: i32) -> (i32, i32) {
    %c0_i32 = arith.constant 0 : i32
    %c0_i32_0 = arith.constant 0 : i32
    %c0_i32_1 = arith.constant 0 : i32
    return %c0_i32, %c0_i32_0 : i32, i32
  }
  func.func @transform_5(%arg0: i32) -> (i32, i32) {
    %c0_i32 = arith.constant 0 : i32
    %c0_i32_0 = arith.constant 0 : i32
    return %arg0, %c0_i32 : i32, i32
  }
}

module attributes {stable_mosaic.version = 11 : i64} {
  func.func @_mm_fused_kernel(%arg0: i32, %arg1: memref<258x8xbf16, #tpu.memory_space<vmem>>, %arg2: memref<8x16xbf16, #tpu.memory_space<vmem>>, %arg3: memref<1x16xf32, #tpu.memory_space<vmem>>, %arg4: memref<258x8xbf16, #tpu.memory_space<vmem>>) attributes {dimension_semantics = [#tpu.dimension_semantics<parallel>], iteration_bounds = array<i64: 1>, scalar_prefetch = 0 : i64, scratch_operands = 0 : i64, tpu.core_type = #tpu.core_type<tc>, window_params = [{transform_indices = @transform_0, window_bounds = array<i64: 258, 8>}, {pipeline_mode = #tpu.pipeline_mode<synchronous>, transform_indices = @transform_1, window_bounds = array<i64: 8, 16>}, {pipeline_mode = #tpu.pipeline_mode<synchronous>, transform_indices = @transform_2, window_bounds = array<i64: 1, 16>}, {transform_indices = @transform_3, window_bounds = array<i64: 258, 8>}]} {
    %c0 = arith.constant 0 : index
    %c0_0 = arith.constant 0 : index
    %0 = vector.load %arg1[%c0, %c0_0] : memref<258x8xbf16, #tpu.memory_space<vmem>>, vector<258x8xbf16>
    %c0_1 = arith.constant 0 : index
    %c0_2 = arith.constant 0 : index
    %1 = vector.load %arg2[%c0_1, %c0_2] : memref<8x16xbf16, #tpu.memory_space<vmem>>, vector<8x16xbf16>
    %cst = arith.constant dense<0.000000e+00> : vector<258x16xf32>
    %2 = tpu.matmul %0, %1, %cst {dimension_numbers = #tpu.dot_dimension_numbers<[1], [0], [0], [1], [0, 0, 1, 1], [], []>} : vector<258x8xbf16>, vector<8x16xbf16>, vector<258x16xf32> -> vector<258x16xf32>
    %c0_3 = arith.constant 0 : index
    %c0_4 = arith.constant 0 : index
    %3 = vector.load %arg3[%c0_3, %c0_4] : memref<1x16xf32, #tpu.memory_space<vmem>>, vector<1x16xf32>
    %4 = vector.broadcast %3 : vector<1x16xf32> to vector<258x16xf32>
    %5 = arith.addf %2, %4 : vector<258x16xf32>
    %6 = vector.extract_strided_slice %5 {offsets = [0, 0], sizes = [258, 8], strides = [1, 1]} : vector<258x16xf32> to vector<258x8xf32>
    %7 = vector.extract_strided_slice %5 {offsets = [0, 8], sizes = [258, 8], strides = [1, 1]} : vector<258x16xf32> to vector<258x8xf32>
    %8 = arith.negf %7 : vector<258x8xf32>
    %9 = math.exp %8 : vector<258x8xf32>
    %cst_5 = arith.constant 1.000000e+00 : f32
    %10 = vector.broadcast %cst_5 : f32 to vector<258x8xf32>
    %11 = arith.addf %10, %9 : vector<258x8xf32>
    %12 = arith.divf %10, %11 : vector<258x8xf32>
    %13 = arith.mulf %6, %12 : vector<258x8xf32>
    %14 = arith.truncf %13 : vector<258x8xf32> to vector<258x8xbf16>
    %c0_6 = arith.constant 0 : index
    %c0_7 = arith.constant 0 : index
    %15 = vector.load %arg4[%c0_6, %c0_7] : memref<258x8xbf16, #tpu.memory_space<vmem>>, vector<258x8xbf16>
    tpu.vector_store %arg4[%c0_6, %c0_7], %14 {strides = array<i32>} : memref<258x8xbf16, #tpu.memory_space<vmem>>, vector<258x8xbf16>,
    return
  }
  func.func @transform_0(%arg0: i32) -> (i32, i32) {
    %c0_i32 = arith.constant 0 : i32
    %c0_i32_0 = arith.constant 0 : i32
    return %arg0, %c0_i32 : i32, i32
  }
  func.func @transform_1(%arg0: i32) -> (i32, i32) {
    %c0_i32 = arith.constant 0 : i32
    %c0_i32_0 = arith.constant 0 : i32
    %c0_i32_1 = arith.constant 0 : i32
    return %c0_i32, %c0_i32_0 : i32, i32
  }
  func.func @transform_2(%arg0: i32) -> (i32, i32) {
    %c0_i32 = arith.constant 0 : i32
    %c0_i32_0 = arith.constant 0 : i32
    %c0_i32_1 = arith.constant 0 : i32
    return %c0_i32, %c0_i32_0 : i32, i32
  }
  func.func @transform_3(%arg0: i32) -> (i32, i32) {
    %c0_i32 = arith.constant 0 : i32
    %c0_i32_0 = arith.constant 0 : i32
    return %arg0, %c0_i32 : i32, i32
  }
}

module attributes {stable_mosaic.version = 11 : i64} {
  func.func @_mm_fused_kernel(%arg0: i32, %arg1: memref<62x32xbf16, #tpu.memory_space<vmem>>, %arg2: memref<62x32xbf16, #tpu.memory_space<vmem>>, %arg3: memref<32x16xbf16, #tpu.memory_space<vmem>>, %arg4: memref<32x16xbf16, #tpu.memory_space<vmem>>, %arg5: memref<1x16xf32, #tpu.memory_space<vmem>>, %arg6: memref<62x16xbf16, #tpu.memory_space<vmem>>) attributes {dimension_semantics = [#tpu.dimension_semantics<parallel>], iteration_bounds = array<i64: 1>, scalar_prefetch = 0 : i64, scratch_operands = 0 : i64, tpu.core_type = #tpu.core_type<tc>, window_params = [{transform_indices = @transform_0, window_bounds = array<i64: 62, 32>}, {transform_indices = @transform_1, window_bounds = array<i64: 62, 32>}, {pipeline_mode = #tpu.pipeline_mode<synchronous>, transform_indices = @transform_2, window_bounds = array<i64: 32, 16>}, {pipeline_mode = #tpu.pipeline_mode<synchronous>, transform_indices = @transform_3, window_bounds = array<i64: 32, 16>}, {pipeline_mode = #tpu.pipeline_mode<synchronous>, transform_indices = @transform_4, window_bounds = array<i64: 1, 16>}, {transform_indices = @transform_5, window_bounds = array<i64: 62, 16>}]} {
    %c0 = arith.constant 0 : index
    %c0_0 = arith.constant 0 : index
    %0 = vector.load %arg1[%c0, %c0_0] : memref<62x32xbf16, #tpu.memory_space<vmem>>, vector<62x32xbf16>
    %c0_1 = arith.constant 0 : index
    %c0_2 = arith.constant 0 : index
    %1 = vector.load %arg3[%c0_1, %c0_2] : memref<32x16xbf16, #tpu.memory_space<vmem>>, vector<32x16xbf16>
    %cst = arith.constant dense<0.000000e+00> : vector<62x16xf32>
    %2 = tpu.matmul %0, %1, %cst {dimension_numbers = #tpu.dot_dimension_numbers<[1], [0], [0], [1], [0, 0, 1, 1], [], []>} : vector<62x32xbf16>, vector<32x16xbf16>, vector<62x16xf32> -> vector<62x16xf32>
    %c0_3 = arith.constant 0 : index
    %c0_4 = arith.constant 0 : index
    %3 = vector.load %arg2[%c0_3, %c0_4] : memref<62x32xbf16, #tpu.memory_space<vmem>>, vector<62x32xbf16>
    %c0_5 = arith.constant 0 : index
    %c0_6 = arith.constant 0 : index
    %4 = vector.load %arg4[%c0_5, %c0_6] : memref<32x16xbf16, #tpu.memory_space<vmem>>, vector<32x16xbf16>
    %cst_7 = arith.constant dense<0.000000e+00> : vector<62x16xf32>
    %5 = tpu.matmul %3, %4, %cst_7 {dimension_numbers = #tpu.dot_dimension_numbers<[1], [0], [0], [1], [0, 0, 1, 1], [], []>} : vector<62x32xbf16>, vector<32x16xbf16>, vector<62x16xf32> -> vector<62x16xf32>
    %6 = arith.addf %2, %5 : vector<62x16xf32>
    %c0_8 = arith.constant 0 : index
    %c0_9 = arith.constant 0 : index
    %7 = vector.load %arg5[%c0_8, %c0_9] : memref<1x16xf32, #tpu.memory_space<vmem>>, vector<1x16xf32>
    %8 = vector.broadcast %7 : vector<1x16xf32> to vector<62x16xf32>
    %9 = arith.addf %6, %8 : vector<62x16xf32>
    %cst_10 = arith.constant 0.000000e+00 : f32
    %10 = vector.broadcast %cst_10 : f32 to vector<62x16xf32>
    %11 = arith.maximumf %9, %10 : vector<62x16xf32>
    %12 = arith.truncf %11 : vector<62x16xf32> to vector<62x16xbf16>
    %c0_11 = arith.constant 0 : index
    %c0_12 = arith.constant 0 : index
    %13 = vector.load %arg6[%c0_11, %c0_12] : memref<62x16xbf16, #tpu.memory_space<vmem>>, vector<62x16xbf16>
    tpu.vector_store %arg6[%c0_11, %c0_12], %12 {strides = array<i32>} : memref<62x16xbf16, #tpu.memory_space<vmem>>, vector<62x16xbf16>,
    return
  }
  func.func @transform_0(%arg0: i32) -> (i32, i32) {
    %c0_i32 = arith.constant 0 : i32
    %c0_i32_0 = arith.constant 0 : i32
    return %arg0, %c0_i32 : i32, i32
  }
  func.func @transform_1(%arg0: i32) -> (i32, i32) {
    %c0_i32 = arith.constant 0 : i32
    %c0_i32_0 = arith.constant 0 : i32
    return %arg0, %c0_i32 : i32, i32
  }
  func.func @transform_2(%arg0: i32) -> (i32, i32) {
    %c0_i32 = arith.constant 0 : i32
    %c0_i32_0 = arith.constant 0 : i32
    %c0_i32_1 = arith.constant 0 : i32
    return %c0_i32, %c0_i32_0 : i32, i32
  }
  func.func @transform_3(%arg0: i32) -> (i32, i32) {
    %c0_i32 = arith.constant 0 : i32
    %c0_i32_0 = arith.constant 0 : i32
    %c0_i32_1 = arith.constant 0 : i32
    return %c0_i32, %c0_i32_0 : i32, i32
  }
  func.func @transform_4(%arg0: i32) -> (i32, i32) {
    %c0_i32 = arith.constant 0 : i32
    %c0_i32_0 = arith.constant 0 : i32
    %c0_i32_1 = arith.constant 0 : i32
    return %c0_i32, %c0_i32_0 : i32, i32
  }
  func.func @transform_5(%arg0: i32) -> (i32, i32) {
    %c0_i32 = arith.constant 0 : i32
    %c0_i32_0 = arith.constant 0 : i32
    return %arg0, %c0_i32 : i32, i32
  }
}

module attributes {stable_mosaic.version = 11 : i64} {
  func.func @_mm_fused_kernel(%arg0: i32, %arg1: memref<66x16xbf16, #tpu.memory_space<vmem>>, %arg2: memref<16x32xbf16, #tpu.memory_space<vmem>>, %arg3: memref<1x32xf32, #tpu.memory_space<vmem>>, %arg4: memref<66x16xbf16, #tpu.memory_space<vmem>>) attributes {dimension_semantics = [#tpu.dimension_semantics<parallel>], iteration_bounds = array<i64: 1>, scalar_prefetch = 0 : i64, scratch_operands = 0 : i64, tpu.core_type = #tpu.core_type<tc>, window_params = [{transform_indices = @transform_0, window_bounds = array<i64: 66, 16>}, {pipeline_mode = #tpu.pipeline_mode<synchronous>, transform_indices = @transform_1, window_bounds = array<i64: 16, 32>}, {pipeline_mode = #tpu.pipeline_mode<synchronous>, transform_indices = @transform_2, window_bounds = array<i64: 1, 32>}, {transform_indices = @transform_3, window_bounds = array<i64: 66, 16>}]} {
    %c0 = arith.constant 0 : index
    %c0_0 = arith.constant 0 : index
    %0 = vector.load %arg1[%c0, %c0_0] : memref<66x16xbf16, #tpu.memory_space<vmem>>, vector<66x16xbf16>
    %c0_1 = arith.constant 0 : index
    %c0_2 = arith.constant 0 : index
    %1 = vector.load %arg2[%c0_1, %c0_2] : memref<16x32xbf16, #tpu.memory_space<vmem>>, vector<16x32xbf16>
    %cst = arith.constant dense<0.000000e+00> : vector<66x32xf32>
    %2 = tpu.matmul %0, %1, %cst {dimension_numbers = #tpu.dot_dimension_numbers<[1], [0], [0], [1], [0, 0, 1, 1], [], []>} : vector<66x16xbf16>, vector<16x32xbf16>, vector<66x32xf32> -> vector<66x32xf32>
    %c0_3 = arith.constant 0 : index
    %c0_4 = arith.constant 0 : index
    %3 = vector.load %arg3[%c0_3, %c0_4] : memref<1x32xf32, #tpu.memory_space<vmem>>, vector<1x32xf32>
    %4 = vector.broadcast %3 : vector<1x32xf32> to vector<66x32xf32>
    %5 = arith.addf %2, %4 : vector<66x32xf32>
    %6 = vector.extract_strided_slice %5 {offsets = [0, 0], sizes = [66, 16], strides = [1, 1]} : vector<66x32xf32> to vector<66x16xf32>
    %7 = vector.extract_strided_slice %5 {offsets = [0, 16], sizes = [66, 16], strides = [1, 1]} : vector<66x32xf32> to vector<66x16xf32>
    %8 = arith.negf %7 : vector<66x16xf32>
    %9 = math.exp %8 : vector<66x16xf32>
    %cst_5 = arith.constant 1.000000e+00 : f32
    %10 = vector.broadcast %cst_5 : f32 to vector<66x16xf32>
    %11 = arith.addf %10, %9 : vector<66x16xf32>
    %12 = arith.divf %10, %11 : vector<66x16xf32>
    %13 = arith.mulf %6, %12 : vector<66x16xf32>
    %14 = arith.truncf %13 : vector<66x16xf32> to vector<66x16xbf16>
    %c0_6 = arith.constant 0 : index
    %c0_7 = arith.constant 0 : index
    %15 = vector.load %arg4[%c0_6, %c0_7] : memref<66x16xbf16, #tpu.memory_space<vmem>>, vector<66x16xbf16>
    tpu.vector_store %arg4[%c0_6, %c0_7], %14 {strides = array<i32>} : memref<66x16xbf16, #tpu.memory_space<vmem>>, vector<66x16xbf16>,
    return
  }
  func.func @transform_0(%arg0: i32) -> (i32, i32) {
    %c0_i32 = arith.constant 0 : i32
    %c0_i32_0 = arith.constant 0 : i32
    return %arg0, %c0_i32 : i32, i32
  }
  func.func @transform_1(%arg0: i32) -> (i32, i32) {
    %c0_i32 = arith.constant 0 : i32
    %c0_i32_0 = arith.constant 0 : i32
    %c0_i32_1 = arith.constant 0 : i32
    return %c0_i32, %c0_i32_0 : i32, i32
  }
  func.func @transform_2(%arg0: i32) -> (i32, i32) {
    %c0_i32 = arith.constant 0 : i32
    %c0_i32_0 = arith.constant 0 : i32
    %c0_i32_1 = arith.constant 0 : i32
    return %c0_i32, %c0_i32_0 : i32, i32
  }
  func.func @transform_3(%arg0: i32) -> (i32, i32) {
    %c0_i32 = arith.constant 0 : i32
    %c0_i32_0 = arith.constant 0 : i32
    return %arg0, %c0_i32 : i32, i32
  }
}

module attributes {stable_mosaic.version = 11 : i64} {
  func.func @_mm_fused_kernel(%arg0: i32, %arg1: memref<14x64xbf16, #tpu.memory_space<vmem>>, %arg2: memref<14x64xbf16, #tpu.memory_space<vmem>>, %arg3: memref<64x32xbf16, #tpu.memory_space<vmem>>, %arg4: memref<64x32xbf16, #tpu.memory_space<vmem>>, %arg5: memref<1x32xf32, #tpu.memory_space<vmem>>, %arg6: memref<14x32xbf16, #tpu.memory_space<vmem>>) attributes {dimension_semantics = [#tpu.dimension_semantics<parallel>], iteration_bounds = array<i64: 1>, scalar_prefetch = 0 : i64, scratch_operands = 0 : i64, tpu.core_type = #tpu.core_type<tc>, window_params = [{transform_indices = @transform_0, window_bounds = array<i64: 14, 64>}, {transform_indices = @transform_1, window_bounds = array<i64: 14, 64>}, {pipeline_mode = #tpu.pipeline_mode<synchronous>, transform_indices = @transform_2, window_bounds = array<i64: 64, 32>}, {pipeline_mode = #tpu.pipeline_mode<synchronous>, transform_indices = @transform_3, window_bounds = array<i64: 64, 32>}, {pipeline_mode = #tpu.pipeline_mode<synchronous>, transform_indices = @transform_4, window_bounds = array<i64: 1, 32>}, {transform_indices = @transform_5, window_bounds = array<i64: 14, 32>}]} {
    %c0 = arith.constant 0 : index
    %c0_0 = arith.constant 0 : index
    %0 = vector.load %arg1[%c0, %c0_0] : memref<14x64xbf16, #tpu.memory_space<vmem>>, vector<14x64xbf16>
    %c0_1 = arith.constant 0 : index
    %c0_2 = arith.constant 0 : index
    %1 = vector.load %arg3[%c0_1, %c0_2] : memref<64x32xbf16, #tpu.memory_space<vmem>>, vector<64x32xbf16>
    %cst = arith.constant dense<0.000000e+00> : vector<14x32xf32>
    %2 = tpu.matmul %0, %1, %cst {dimension_numbers = #tpu.dot_dimension_numbers<[1], [0], [0], [1], [0, 0, 1, 1], [], []>} : vector<14x64xbf16>, vector<64x32xbf16>, vector<14x32xf32> -> vector<14x32xf32>
    %c0_3 = arith.constant 0 : index
    %c0_4 = arith.constant 0 : index
    %3 = vector.load %arg2[%c0_3, %c0_4] : memref<14x64xbf16, #tpu.memory_space<vmem>>, vector<14x64xbf16>
    %c0_5 = arith.constant 0 : index
    %c0_6 = arith.constant 0 : index
    %4 = vector.load %arg4[%c0_5, %c0_6] : memref<64x32xbf16, #tpu.memory_space<vmem>>, vector<64x32xbf16>
    %cst_7 = arith.constant dense<0.000000e+00> : vector<14x32xf32>
    %5 = tpu.matmul %3, %4, %cst_7 {dimension_numbers = #tpu.dot_dimension_numbers<[1], [0], [0], [1], [0, 0, 1, 1], [], []>} : vector<14x64xbf16>, vector<64x32xbf16>, vector<14x32xf32> -> vector<14x32xf32>
    %6 = arith.addf %2, %5 : vector<14x32xf32>
    %c0_8 = arith.constant 0 : index
    %c0_9 = arith.constant 0 : index
    %7 = vector.load %arg5[%c0_8, %c0_9] : memref<1x32xf32, #tpu.memory_space<vmem>>, vector<1x32xf32>
    %8 = vector.broadcast %7 : vector<1x32xf32> to vector<14x32xf32>
    %9 = arith.addf %6, %8 : vector<14x32xf32>
    %cst_10 = arith.constant 0.000000e+00 : f32
    %10 = vector.broadcast %cst_10 : f32 to vector<14x32xf32>
    %11 = arith.maximumf %9, %10 : vector<14x32xf32>
    %12 = arith.truncf %11 : vector<14x32xf32> to vector<14x32xbf16>
    %c0_11 = arith.constant 0 : index
    %c0_12 = arith.constant 0 : index
    %13 = vector.load %arg6[%c0_11, %c0_12] : memref<14x32xbf16, #tpu.memory_space<vmem>>, vector<14x32xbf16>
    tpu.vector_store %arg6[%c0_11, %c0_12], %12 {strides = array<i32>} : memref<14x32xbf16, #tpu.memory_space<vmem>>, vector<14x32xbf16>,
    return
  }
  func.func @transform_0(%arg0: i32) -> (i32, i32) {
    %c0_i32 = arith.constant 0 : i32
    %c0_i32_0 = arith.constant 0 : i32
    return %arg0, %c0_i32 : i32, i32
  }
  func.func @transform_1(%arg0: i32) -> (i32, i32) {
    %c0_i32 = arith.constant 0 : i32
    %c0_i32_0 = arith.constant 0 : i32
    return %arg0, %c0_i32 : i32, i32
  }
  func.func @transform_2(%arg0: i32) -> (i32, i32) {
    %c0_i32 = arith.constant 0 : i32
    %c0_i32_0 = arith.constant 0 : i32
    %c0_i32_1 = arith.constant 0 : i32
    return %c0_i32, %c0_i32_0 : i32, i32
  }
  func.func @transform_3(%arg0: i32) -> (i32, i32) {
    %c0_i32 = arith.constant 0 : i32
    %c0_i32_0 = arith.constant 0 : i32
    %c0_i32_1 = arith.constant 0 : i32
    return %c0_i32, %c0_i32_0 : i32, i32
  }
  func.func @transform_4(%arg0: i32) -> (i32, i32) {
    %c0_i32 = arith.constant 0 : i32
    %c0_i32_0 = arith.constant 0 : i32
    %c0_i32_1 = arith.constant 0 : i32
    return %c0_i32, %c0_i32_0 : i32, i32
  }
  func.func @transform_5(%arg0: i32) -> (i32, i32) {
    %c0_i32 = arith.constant 0 : i32
    %c0_i32_0 = arith.constant 0 : i32
    return %arg0, %c0_i32 : i32, i32
  }
}

module attributes {stable_mosaic.version = 11 : i64} {
  func.func @_mm_fused_kernel(%arg0: i32, %arg1: memref<18x32xbf16, #tpu.memory_space<vmem>>, %arg2: memref<32x64xbf16, #tpu.memory_space<vmem>>, %arg3: memref<1x64xf32, #tpu.memory_space<vmem>>, %arg4: memref<18x32xbf16, #tpu.memory_space<vmem>>) attributes {dimension_semantics = [#tpu.dimension_semantics<parallel>], iteration_bounds = array<i64: 1>, scalar_prefetch = 0 : i64, scratch_operands = 0 : i64, tpu.core_type = #tpu.core_type<tc>, window_params = [{transform_indices = @transform_0, window_bounds = array<i64: 18, 32>}, {pipeline_mode = #tpu.pipeline_mode<synchronous>, transform_indices = @transform_1, window_bounds = array<i64: 32, 64>}, {pipeline_mode = #tpu.pipeline_mode<synchronous>, transform_indices = @transform_2, window_bounds = array<i64: 1, 64>}, {transform_indices = @transform_3, window_bounds = array<i64: 18, 32>}]} {
    %c0 = arith.constant 0 : index
    %c0_0 = arith.constant 0 : index
    %0 = vector.load %arg1[%c0, %c0_0] : memref<18x32xbf16, #tpu.memory_space<vmem>>, vector<18x32xbf16>
    %c0_1 = arith.constant 0 : index
    %c0_2 = arith.constant 0 : index
    %1 = vector.load %arg2[%c0_1, %c0_2] : memref<32x64xbf16, #tpu.memory_space<vmem>>, vector<32x64xbf16>
    %cst = arith.constant dense<0.000000e+00> : vector<18x64xf32>
    %2 = tpu.matmul %0, %1, %cst {dimension_numbers = #tpu.dot_dimension_numbers<[1], [0], [0], [1], [0, 0, 1, 1], [], []>} : vector<18x32xbf16>, vector<32x64xbf16>, vector<18x64xf32> -> vector<18x64xf32>
    %c0_3 = arith.constant 0 : index
    %c0_4 = arith.constant 0 : index
    %3 = vector.load %arg3[%c0_3, %c0_4] : memref<1x64xf32, #tpu.memory_space<vmem>>, vector<1x64xf32>
    %4 = vector.broadcast %3 : vector<1x64xf32> to vector<18x64xf32>
    %5 = arith.addf %2, %4 : vector<18x64xf32>
    %6 = vector.extract_strided_slice %5 {offsets = [0, 0], sizes = [18, 32], strides = [1, 1]} : vector<18x64xf32> to vector<18x32xf32>
    %7 = vector.extract_strided_slice %5 {offsets = [0, 32], sizes = [18, 32], strides = [1, 1]} : vector<18x64xf32> to vector<18x32xf32>
    %8 = arith.negf %7 : vector<18x32xf32>
    %9 = math.exp %8 : vector<18x32xf32>
    %cst_5 = arith.constant 1.000000e+00 : f32
    %10 = vector.broadcast %cst_5 : f32 to vector<18x32xf32>
    %11 = arith.addf %10, %9 : vector<18x32xf32>
    %12 = arith.divf %10, %11 : vector<18x32xf32>
    %13 = arith.mulf %6, %12 : vector<18x32xf32>
    %14 = arith.truncf %13 : vector<18x32xf32> to vector<18x32xbf16>
    %c0_6 = arith.constant 0 : index
    %c0_7 = arith.constant 0 : index
    %15 = vector.load %arg4[%c0_6, %c0_7] : memref<18x32xbf16, #tpu.memory_space<vmem>>, vector<18x32xbf16>
    tpu.vector_store %arg4[%c0_6, %c0_7], %14 {strides = array<i32>} : memref<18x32xbf16, #tpu.memory_space<vmem>>, vector<18x32xbf16>,
    return
  }
  func.func @transform_0(%arg0: i32) -> (i32, i32) {
    %c0_i32 = arith.constant 0 : i32
    %c0_i32_0 = arith.constant 0 : i32
    return %arg0, %c0_i32 : i32, i32
  }
  func.func @transform_1(%arg0: i32) -> (i32, i32) {
    %c0_i32 = arith.constant 0 : i32
    %c0_i32_0 = arith.constant 0 : i32
    %c0_i32_1 = arith.constant 0 : i32
    return %c0_i32, %c0_i32_0 : i32, i32
  }
  func.func @transform_2(%arg0: i32) -> (i32, i32) {
    %c0_i32 = arith.constant 0 : i32
    %c0_i32_0 = arith.constant 0 : i32
    %c0_i32_1 = arith.constant 0 : i32
    return %c0_i32, %c0_i32_0 : i32, i32
  }
  func.func @transform_3(%arg0: i32) -> (i32, i32) {
    %c0_i32 = arith.constant 0 : i32
    %c0_i32_0 = arith.constant 0 : i32
    return %arg0, %c0_i32 : i32, i32
  }
}

module attributes {stable_mosaic.version = 11 : i64} {
  func.func @_mm_fused_kernel(%arg0: i32, %arg1: memref<6x64xbf16, #tpu.memory_space<vmem>>, %arg2: memref<64x128xbf16, #tpu.memory_space<vmem>>, %arg3: memref<1x128xf32, #tpu.memory_space<vmem>>, %arg4: memref<6x64xbf16, #tpu.memory_space<vmem>>) attributes {dimension_semantics = [#tpu.dimension_semantics<parallel>], iteration_bounds = array<i64: 1>, scalar_prefetch = 0 : i64, scratch_operands = 0 : i64, tpu.core_type = #tpu.core_type<tc>, window_params = [{transform_indices = @transform_0, window_bounds = array<i64: 6, 64>}, {pipeline_mode = #tpu.pipeline_mode<synchronous>, transform_indices = @transform_1, window_bounds = array<i64: 64, 128>}, {pipeline_mode = #tpu.pipeline_mode<synchronous>, transform_indices = @transform_2, window_bounds = array<i64: 1, 128>}, {transform_indices = @transform_3, window_bounds = array<i64: 6, 64>}]} {
    %c0 = arith.constant 0 : index
    %c0_0 = arith.constant 0 : index
    %0 = vector.load %arg1[%c0, %c0_0] : memref<6x64xbf16, #tpu.memory_space<vmem>>, vector<6x64xbf16>
    %c0_1 = arith.constant 0 : index
    %c0_2 = arith.constant 0 : index
    %1 = vector.load %arg2[%c0_1, %c0_2] : memref<64x128xbf16, #tpu.memory_space<vmem>>, vector<64x128xbf16>
    %cst = arith.constant dense<0.000000e+00> : vector<6x128xf32>
    %2 = tpu.matmul %0, %1, %cst {dimension_numbers = #tpu.dot_dimension_numbers<[1], [0], [0], [1], [0, 0, 1, 1], [], []>} : vector<6x64xbf16>, vector<64x128xbf16>, vector<6x128xf32> -> vector<6x128xf32>
    %c0_3 = arith.constant 0 : index
    %c0_4 = arith.constant 0 : index
    %3 = vector.load %arg3[%c0_3, %c0_4] : memref<1x128xf32, #tpu.memory_space<vmem>>, vector<1x128xf32>
    %4 = vector.broadcast %3 : vector<1x128xf32> to vector<6x128xf32>
    %5 = arith.addf %2, %4 : vector<6x128xf32>
    %6 = vector.extract_strided_slice %5 {offsets = [0, 0], sizes = [6, 64], strides = [1, 1]} : vector<6x128xf32> to vector<6x64xf32>
    %7 = vector.extract_strided_slice %5 {offsets = [0, 64], sizes = [6, 64], strides = [1, 1]} : vector<6x128xf32> to vector<6x64xf32>
    %8 = arith.negf %7 : vector<6x64xf32>
    %9 = math.exp %8 : vector<6x64xf32>
    %cst_5 = arith.constant 1.000000e+00 : f32
    %10 = vector.broadcast %cst_5 : f32 to vector<6x64xf32>
    %11 = arith.addf %10, %9 : vector<6x64xf32>
    %12 = arith.divf %10, %11 : vector<6x64xf32>
    %13 = arith.mulf %6, %12 : vector<6x64xf32>
    %14 = arith.truncf %13 : vector<6x64xf32> to vector<6x64xbf16>
    %c0_6 = arith.constant 0 : index
    %c0_7 = arith.constant 0 : index
    %15 = vector.load %arg4[%c0_6, %c0_7] : memref<6x64xbf16, #tpu.memory_space<vmem>>, vector<6x64xbf16>
    tpu.vector_store %arg4[%c0_6, %c0_7], %14 {strides = array<i32>} : memref<6x64xbf16, #tpu.memory_space<vmem>>, vector<6x64xbf16>,
    return
  }
  func.func @transform_0(%arg0: i32) -> (i32, i32) {
    %c0_i32 = arith.constant 0 : i32
    %c0_i32_0 = arith.constant 0 : i32
    return %arg0, %c0_i32 : i32, i32
  }
  func.func @transform_1(%arg0: i32) -> (i32, i32) {
    %c0_i32 = arith.constant 0 : i32
    %c0_i32_0 = arith.constant 0 : i32
    %c0_i32_1 = arith.constant 0 : i32
    return %c0_i32, %c0_i32_0 : i32, i32
  }
  func.func @transform_2(%arg0: i32) -> (i32, i32) {
    %c0_i32 = arith.constant 0 : i32
    %c0_i32_0 = arith.constant 0 : i32
    %c0_i32_1 = arith.constant 0 : i32
    return %c0_i32, %c0_i32_0 : i32, i32
  }
  func.func @transform_3(%arg0: i32) -> (i32, i32) {
    %c0_i32 = arith.constant 0 : i32
    %c0_i32_0 = arith.constant 0 : i32
    return %arg0, %c0_i32 : i32, i32
  }
}

module attributes {stable_mosaic.version = 11 : i64} {
  func.func @_mm_fused_kernel(%arg0: i32, %arg1: memref<2x128xbf16, #tpu.memory_space<vmem>>, %arg2: memref<2x128xbf16, #tpu.memory_space<vmem>>, %arg3: memref<128x64xbf16, #tpu.memory_space<vmem>>, %arg4: memref<128x64xbf16, #tpu.memory_space<vmem>>, %arg5: memref<1x64xf32, #tpu.memory_space<vmem>>, %arg6: memref<2x64xbf16, #tpu.memory_space<vmem>>) attributes {dimension_semantics = [#tpu.dimension_semantics<parallel>], iteration_bounds = array<i64: 1>, scalar_prefetch = 0 : i64, scratch_operands = 0 : i64, tpu.core_type = #tpu.core_type<tc>, window_params = [{transform_indices = @transform_0, window_bounds = array<i64: 2, 128>}, {transform_indices = @transform_1, window_bounds = array<i64: 2, 128>}, {pipeline_mode = #tpu.pipeline_mode<synchronous>, transform_indices = @transform_2, window_bounds = array<i64: 128, 64>}, {pipeline_mode = #tpu.pipeline_mode<synchronous>, transform_indices = @transform_3, window_bounds = array<i64: 128, 64>}, {pipeline_mode = #tpu.pipeline_mode<synchronous>, transform_indices = @transform_4, window_bounds = array<i64: 1, 64>}, {transform_indices = @transform_5, window_bounds = array<i64: 2, 64>}]} {
    %c0 = arith.constant 0 : index
    %c0_0 = arith.constant 0 : index
    %0 = vector.load %arg1[%c0, %c0_0] : memref<2x128xbf16, #tpu.memory_space<vmem>>, vector<2x128xbf16>
    %c0_1 = arith.constant 0 : index
    %c0_2 = arith.constant 0 : index
    %1 = vector.load %arg3[%c0_1, %c0_2] : memref<128x64xbf16, #tpu.memory_space<vmem>>, vector<128x64xbf16>
    %cst = arith.constant dense<0.000000e+00> : vector<2x64xf32>
    %2 = tpu.matmul %0, %1, %cst {dimension_numbers = #tpu.dot_dimension_numbers<[1], [0], [0], [1], [0, 0, 1, 1], [], []>} : vector<2x128xbf16>, vector<128x64xbf16>, vector<2x64xf32> -> vector<2x64xf32>
    %c0_3 = arith.constant 0 : index
    %c0_4 = arith.constant 0 : index
    %3 = vector.load %arg2[%c0_3, %c0_4] : memref<2x128xbf16, #tpu.memory_space<vmem>>, vector<2x128xbf16>
    %c0_5 = arith.constant 0 : index
    %c0_6 = arith.constant 0 : index
    %4 = vector.load %arg4[%c0_5, %c0_6] : memref<128x64xbf16, #tpu.memory_space<vmem>>, vector<128x64xbf16>
    %cst_7 = arith.constant dense<0.000000e+00> : vector<2x64xf32>
    %5 = tpu.matmul %3, %4, %cst_7 {dimension_numbers = #tpu.dot_dimension_numbers<[1], [0], [0], [1], [0, 0, 1, 1], [], []>} : vector<2x128xbf16>, vector<128x64xbf16>, vector<2x64xf32> -> vector<2x64xf32>
    %6 = arith.addf %2, %5 : vector<2x64xf32>
    %c0_8 = arith.constant 0 : index
    %c0_9 = arith.constant 0 : index
    %7 = vector.load %arg5[%c0_8, %c0_9] : memref<1x64xf32, #tpu.memory_space<vmem>>, vector<1x64xf32>
    %8 = vector.broadcast %7 : vector<1x64xf32> to vector<2x64xf32>
    %9 = arith.addf %6, %8 : vector<2x64xf32>
    %cst_10 = arith.constant 0.000000e+00 : f32
    %10 = vector.broadcast %cst_10 : f32 to vector<2x64xf32>
    %11 = arith.maximumf %9, %10 : vector<2x64xf32>
    %12 = arith.truncf %11 : vector<2x64xf32> to vector<2x64xbf16>
    %c0_11 = arith.constant 0 : index
    %c0_12 = arith.constant 0 : index
    %13 = vector.load %arg6[%c0_11, %c0_12] : memref<2x64xbf16, #tpu.memory_space<vmem>>, vector<2x64xbf16>
    tpu.vector_store %arg6[%c0_11, %c0_12], %12 {strides = array<i32>} : memref<2x64xbf16, #tpu.memory_space<vmem>>, vector<2x64xbf16>,
    return
  }
  func.func @transform_0(%arg0: i32) -> (i32, i32) {
    %c0_i32 = arith.constant 0 : i32
    %c0_i32_0 = arith.constant 0 : i32
    return %arg0, %c0_i32 : i32, i32
  }
  func.func @transform_1(%arg0: i32) -> (i32, i32) {
    %c0_i32 = arith.constant 0 : i32
    %c0_i32_0 = arith.constant 0 : i32
    return %arg0, %c0_i32 : i32, i32
  }
  func.func @transform_2(%arg0: i32) -> (i32, i32) {
    %c0_i32 = arith.constant 0 : i32
    %c0_i32_0 = arith.constant 0 : i32
    %c0_i32_1 = arith.constant 0 : i32
    return %c0_i32, %c0_i32_0 : i32, i32
  }
  func.func @transform_3(%arg0: i32) -> (i32, i32) {
    %c0_i32 = arith.constant 0 : i32
    %c0_i32_0 = arith.constant 0 : i32
    %c0_i32_1 = arith.constant 0 : i32
    return %c0_i32, %c0_i32_0 : i32, i32
  }
  func.func @transform_4(%arg0: i32) -> (i32, i32) {
    %c0_i32 = arith.constant 0 : i32
    %c0_i32_0 = arith.constant 0 : i32
    %c0_i32_1 = arith.constant 0 : i32
    return %c0_i32, %c0_i32_0 : i32, i32
  }
  func.func @transform_5(%arg0: i32) -> (i32, i32) {
    %c0_i32 = arith.constant 0 : i32
    %c0_i32_0 = arith.constant 0 : i32
    return %arg0, %c0_i32 : i32, i32
  }
}

module attributes {stable_mosaic.version = 11 : i64} {
  func.func @_mm_fused_kernel(%arg0: i32, %arg1: memref<6x64xbf16, #tpu.memory_space<vmem>>, %arg2: memref<64x256xbf16, #tpu.memory_space<vmem>>, %arg3: memref<1x256xf32, #tpu.memory_space<vmem>>, %arg4: memref<6x256xf32, #tpu.memory_space<vmem>>) attributes {dimension_semantics = [#tpu.dimension_semantics<parallel>], iteration_bounds = array<i64: 1>, scalar_prefetch = 0 : i64, scratch_operands = 0 : i64, tpu.core_type = #tpu.core_type<tc>, window_params = [{transform_indices = @transform_0, window_bounds = array<i64: 6, 64>}, {pipeline_mode = #tpu.pipeline_mode<synchronous>, transform_indices = @transform_1, window_bounds = array<i64: 64, 256>}, {pipeline_mode = #tpu.pipeline_mode<synchronous>, transform_indices = @transform_2, window_bounds = array<i64: 1, 256>}, {transform_indices = @transform_3, window_bounds = array<i64: 6, 256>}]} {
    %c0 = arith.constant 0 : index
    %c0_0 = arith.constant 0 : index
    %0 = vector.load %arg1[%c0, %c0_0] : memref<6x64xbf16, #tpu.memory_space<vmem>>, vector<6x64xbf16>
    %c0_1 = arith.constant 0 : index
    %c0_2 = arith.constant 0 : index
    %1 = vector.load %arg2[%c0_1, %c0_2] : memref<64x256xbf16, #tpu.memory_space<vmem>>, vector<64x256xbf16>
    %cst = arith.constant dense<0.000000e+00> : vector<6x256xf32>
    %2 = tpu.matmul %0, %1, %cst {dimension_numbers = #tpu.dot_dimension_numbers<[1], [0], [0], [1], [0, 0, 1, 1], [], []>} : vector<6x64xbf16>, vector<64x256xbf16>, vector<6x256xf32> -> vector<6x256xf32>
    %c0_3 = arith.constant 0 : index
    %c0_4 = arith.constant 0 : index
    %3 = vector.load %arg3[%c0_3, %c0_4] : memref<1x256xf32, #tpu.memory_space<vmem>>, vector<1x256xf32>
    %4 = vector.broadcast %3 : vector<1x256xf32> to vector<6x256xf32>
    %5 = arith.addf %2, %4 : vector<6x256xf32>
    %c0_5 = arith.constant 0 : index
    %c0_6 = arith.constant 0 : index
    %6 = vector.load %arg4[%c0_5, %c0_6] : memref<6x256xf32, #tpu.memory_space<vmem>>, vector<6x256xf32>
    tpu.vector_store %arg4[%c0_5, %c0_6], %5 {strides = array<i32>} : memref<6x256xf32, #tpu.memory_space<vmem>>, vector<6x256xf32>,
    return
  }
  func.func @transform_0(%arg0: i32) -> (i32, i32) {
    %c0_i32 = arith.constant 0 : i32
    %c0_i32_0 = arith.constant 0 : i32
    return %arg0, %c0_i32 : i32, i32
  }
  func.func @transform_1(%arg0: i32) -> (i32, i32) {
    %c0_i32 = arith.constant 0 : i32
    %c0_i32_0 = arith.constant 0 : i32
    %c0_i32_1 = arith.constant 0 : i32
    return %c0_i32, %c0_i32_0 : i32, i32
  }
  func.func @transform_2(%arg0: i32) -> (i32, i32) {
    %c0_i32 = arith.constant 0 : i32
    %c0_i32_0 = arith.constant 0 : i32
    %c0_i32_1 = arith.constant 0 : i32
    return %c0_i32, %c0_i32_0 : i32, i32
  }
  func.func @transform_3(%arg0: i32) -> (i32, i32) {
    %c0_i32 = arith.constant 0 : i32
    %c0_i32_0 = arith.constant 0 : i32
    return %arg0, %c0_i32 : i32, i32
  }
}

module attributes {stable_mosaic.version = 11 : i64} {
  func.func @_mm_fused_kernel(%arg0: i32, %arg1: memref<6x128xbf16, #tpu.memory_space<vmem>>, %arg2: memref<128x256xbf16, #tpu.memory_space<vmem>>, %arg3: memref<1x256xf32, #tpu.memory_space<vmem>>, %arg4: memref<6x256xf32, #tpu.memory_space<vmem>>) attributes {dimension_semantics = [#tpu.dimension_semantics<parallel>], iteration_bounds = array<i64: 1>, scalar_prefetch = 0 : i64, scratch_operands = 0 : i64, tpu.core_type = #tpu.core_type<tc>, window_params = [{transform_indices = @transform_0, window_bounds = array<i64: 6, 128>}, {pipeline_mode = #tpu.pipeline_mode<synchronous>, transform_indices = @transform_1, window_bounds = array<i64: 128, 256>}, {pipeline_mode = #tpu.pipeline_mode<synchronous>, transform_indices = @transform_2, window_bounds = array<i64: 1, 256>}, {transform_indices = @transform_3, window_bounds = array<i64: 6, 256>}]} {
    %c0 = arith.constant 0 : index
    %c0_0 = arith.constant 0 : index
    %0 = vector.load %arg1[%c0, %c0_0] : memref<6x128xbf16, #tpu.memory_space<vmem>>, vector<6x128xbf16>
    %c0_1 = arith.constant 0 : index
    %c0_2 = arith.constant 0 : index
    %1 = vector.load %arg2[%c0_1, %c0_2] : memref<128x256xbf16, #tpu.memory_space<vmem>>, vector<128x256xbf16>
    %cst = arith.constant dense<0.000000e+00> : vector<6x256xf32>
    %2 = tpu.matmul %0, %1, %cst {dimension_numbers = #tpu.dot_dimension_numbers<[1], [0], [0], [1], [0, 0, 1, 1], [], []>} : vector<6x128xbf16>, vector<128x256xbf16>, vector<6x256xf32> -> vector<6x256xf32>
    %c0_3 = arith.constant 0 : index
    %c0_4 = arith.constant 0 : index
    %3 = vector.load %arg3[%c0_3, %c0_4] : memref<1x256xf32, #tpu.memory_space<vmem>>, vector<1x256xf32>
    %4 = vector.broadcast %3 : vector<1x256xf32> to vector<6x256xf32>
    %5 = arith.addf %2, %4 : vector<6x256xf32>
    %c0_5 = arith.constant 0 : index
    %c0_6 = arith.constant 0 : index
    %6 = vector.load %arg4[%c0_5, %c0_6] : memref<6x256xf32, #tpu.memory_space<vmem>>, vector<6x256xf32>
    tpu.vector_store %arg4[%c0_5, %c0_6], %5 {strides = array<i32>} : memref<6x256xf32, #tpu.memory_space<vmem>>, vector<6x256xf32>,
    return
  }
  func.func @transform_0(%arg0: i32) -> (i32, i32) {
    %c0_i32 = arith.constant 0 : i32
    %c0_i32_0 = arith.constant 0 : i32
    return %arg0, %c0_i32 : i32, i32
  }
  func.func @transform_1(%arg0: i32) -> (i32, i32) {
    %c0_i32 = arith.constant 0 : i32
    %c0_i32_0 = arith.constant 0 : i32
    %c0_i32_1 = arith.constant 0 : i32
    return %c0_i32, %c0_i32_0 : i32, i32
  }
  func.func @transform_2(%arg0: i32) -> (i32, i32) {
    %c0_i32 = arith.constant 0 : i32
    %c0_i32_0 = arith.constant 0 : i32
    %c0_i32_1 = arith.constant 0 : i32
    return %c0_i32, %c0_i32_0 : i32, i32
  }
  func.func @transform_3(%arg0: i32) -> (i32, i32) {
    %c0_i32 = arith.constant 0 : i32
    %c0_i32_0 = arith.constant 0 : i32
    return %arg0, %c0_i32 : i32, i32
  }
}

module attributes {stable_mosaic.version = 11 : i64} {
  func.func @_bilstm_chunk_kernel(%arg0: i32, %arg1: memref<3x2x256xf32, #tpu.memory_space<vmem>>, %arg2: memref<3x2x256xf32, #tpu.memory_space<vmem>>, %arg3: memref<2x64x256xbf16, #tpu.memory_space<vmem>>, %arg4: memref<3x2x64xbf16, #tpu.memory_space<vmem>>, %arg5: memref<3x2x64xbf16, #tpu.memory_space<vmem>>, %arg6: memref<2x2x64xf32, #tpu.memory_space<vmem>>, %arg7: memref<2x2x64xf32, #tpu.memory_space<vmem>>) attributes {dimension_semantics = [#tpu.dimension_semantics<arbitrary>], iteration_bounds = array<i64: 1>, scalar_prefetch = 0 : i64, scratch_operands = 2 : i64, tpu.core_type = #tpu.core_type<tc>, window_params = [{transform_indices = @transform_0, window_bounds = array<i64: 3, 2, 256>}, {transform_indices = @transform_1, window_bounds = array<i64: 3, 2, 256>}, {pipeline_mode = #tpu.pipeline_mode<synchronous>, transform_indices = @transform_2, window_bounds = array<i64: 2, 64, 256>}, {transform_indices = @transform_3, window_bounds = array<i64: 3, 2, 64>}, {transform_indices = @transform_4, window_bounds = array<i64: 3, 2, 64>}]} {
    %c0_i32 = arith.constant 0 : i32
    %0 = arith.cmpi eq, %arg0, %c0_i32 : i32
    %1 = arith.extui %0 : i1 to i32
    %c0_i32_0 = arith.constant 0 : i32
    %2 = arith.cmpi ne, %1, %c0_i32_0 : i32
    scf.if %2 {
      %cst_83 = arith.constant 0.000000e+00 : f32
      %249 = vector.broadcast %cst_83 : f32 to vector<2x2x64xf32>
      %c0_84 = arith.constant 0 : index
      %c0_85 = arith.constant 0 : index
      %c0_86 = arith.constant 0 : index
      %250 = vector.load %arg6[%c0_84, %c0_85, %c0_86] : memref<2x2x64xf32, #tpu.memory_space<vmem>>, vector<2x2x64xf32>
      tpu.vector_store %arg6[%c0_84, %c0_85, %c0_86], %249 {strides = array<i32>} : memref<2x2x64xf32, #tpu.memory_space<vmem>>, vector<2x2x64xf32>,
      %cst_87 = arith.constant 0.000000e+00 : f32
      %251 = vector.broadcast %cst_87 : f32 to vector<2x2x64xf32>
      %c0_88 = arith.constant 0 : index
      %c0_89 = arith.constant 0 : index
      %c0_90 = arith.constant 0 : index
      %252 = vector.load %arg7[%c0_88, %c0_89, %c0_90] : memref<2x2x64xf32, #tpu.memory_space<vmem>>, vector<2x2x64xf32>
      tpu.vector_store %arg7[%c0_88, %c0_89, %c0_90], %251 {strides = array<i32>} : memref<2x2x64xf32, #tpu.memory_space<vmem>>, vector<2x2x64xf32>,
    } else {
    }
    %c0 = arith.constant 0 : index
    %c0_1 = arith.constant 0 : index
    %c0_2 = arith.constant 0 : index
    %3 = vector.load %arg3[%c0, %c0_1, %c0_2] : memref<2x64x256xbf16, #tpu.memory_space<vmem>>, vector<1x64x256xbf16>
    %4 = vector.shape_cast %3 : vector<1x64x256xbf16> to vector<64x256xbf16>
    %c1 = arith.constant 1 : index
    %c0_3 = arith.constant 0 : index
    %c0_4 = arith.constant 0 : index
    %5 = vector.load %arg3[%c1, %c0_3, %c0_4] : memref<2x64x256xbf16, #tpu.memory_space<vmem>>, vector<1x64x256xbf16>
    %6 = vector.shape_cast %5 : vector<1x64x256xbf16> to vector<64x256xbf16>
    %c0_5 = arith.constant 0 : index
    %c0_6 = arith.constant 0 : index
    %c0_7 = arith.constant 0 : index
    %7 = vector.load %arg6[%c0_5, %c0_6, %c0_7] : memref<2x2x64xf32, #tpu.memory_space<vmem>>, vector<1x2x64xf32>
    %8 = vector.shape_cast %7 : vector<1x2x64xf32> to vector<2x64xf32>
    %c0_8 = arith.constant 0 : index
    %c0_9 = arith.constant 0 : index
    %c0_10 = arith.constant 0 : index
    %9 = vector.load %arg7[%c0_8, %c0_9, %c0_10] : memref<2x2x64xf32, #tpu.memory_space<vmem>>, vector<1x2x64xf32>
    %10 = vector.shape_cast %9 : vector<1x2x64xf32> to vector<2x64xf32>
    %c1_11 = arith.constant 1 : index
    %c0_12 = arith.constant 0 : index
    %c0_13 = arith.constant 0 : index
    %11 = vector.load %arg6[%c1_11, %c0_12, %c0_13] : memref<2x2x64xf32, #tpu.memory_space<vmem>>, vector<1x2x64xf32>
    %12 = vector.shape_cast %11 : vector<1x2x64xf32> to vector<2x64xf32>
    %c1_14 = arith.constant 1 : index
    %c0_15 = arith.constant 0 : index
    %c0_16 = arith.constant 0 : index
    %13 = vector.load %arg7[%c1_14, %c0_15, %c0_16] : memref<2x2x64xf32, #tpu.memory_space<vmem>>, vector<1x2x64xf32>
    %14 = vector.shape_cast %13 : vector<1x2x64xf32> to vector<2x64xf32>
    %c0_i32_17 = arith.constant 0 : i32
    %15 = arith.index_cast %c0_i32_17 : i32 to index
    %c0_18 = arith.constant 0 : index
    %c0_19 = arith.constant 0 : index
    %16 = vector.load %arg1[%15, %c0_18, %c0_19] : memref<3x2x256xf32, #tpu.memory_space<vmem>>, vector<1x2x256xf32>
    %17 = vector.shape_cast %16 : vector<1x2x256xf32> to vector<2x256xf32>
    %18 = arith.truncf %8 : vector<2x64xf32> to vector<2x64xbf16>
    %cst = arith.constant dense<0.000000e+00> : vector<2x256xf32>
    %19 = tpu.matmul %18, %4, %cst {dimension_numbers = #tpu.dot_dimension_numbers<[1], [0], [0], [1], [0, 0, 1, 1], [], []>} : vector<2x64xbf16>, vector<64x256xbf16>, vector<2x256xf32> -> vector<2x256xf32>
    %20 = arith.addf %17, %19 : vector<2x256xf32>
    %c2_i32 = arith.constant 2 : i32
    %21 = arith.subi %c2_i32, %c0_i32_17 : i32
    %22 = arith.index_cast %21 : i32 to index
    %c0_20 = arith.constant 0 : index
    %c0_21 = arith.constant 0 : index
    %23 = vector.load %arg2[%22, %c0_20, %c0_21] : memref<3x2x256xf32, #tpu.memory_space<vmem>>, vector<1x2x256xf32>
    %24 = vector.shape_cast %23 : vector<1x2x256xf32> to vector<2x256xf32>
    %25 = arith.truncf %12 : vector<2x64xf32> to vector<2x64xbf16>
    %cst_22 = arith.constant dense<0.000000e+00> : vector<2x256xf32>
    %26 = tpu.matmul %25, %6, %cst_22 {dimension_numbers = #tpu.dot_dimension_numbers<[1], [0], [0], [1], [0, 0, 1, 1], [], []>} : vector<2x64xbf16>, vector<64x256xbf16>, vector<2x256xf32> -> vector<2x256xf32>
    %27 = arith.addf %24, %26 : vector<2x256xf32>
    %28 = vector.extract_strided_slice %20 {offsets = [0, 0], sizes = [2, 64], strides = [1, 1]} : vector<2x256xf32> to vector<2x64xf32>
    %29 = arith.negf %28 : vector<2x64xf32>
    %30 = math.exp %29 : vector<2x64xf32>
    %cst_23 = arith.constant 1.000000e+00 : f32
    %31 = vector.broadcast %cst_23 : f32 to vector<2x64xf32>
    %32 = arith.addf %31, %30 : vector<2x64xf32>
    %33 = arith.divf %31, %32 : vector<2x64xf32>
    %34 = vector.extract_strided_slice %20 {offsets = [0, 64], sizes = [2, 64], strides = [1, 1]} : vector<2x256xf32> to vector<2x64xf32>
    %35 = arith.negf %34 : vector<2x64xf32>
    %36 = math.exp %35 : vector<2x64xf32>
    %cst_24 = arith.constant 1.000000e+00 : f32
    %37 = vector.broadcast %cst_24 : f32 to vector<2x64xf32>
    %38 = arith.addf %37, %36 : vector<2x64xf32>
    %39 = arith.divf %37, %38 : vector<2x64xf32>
    %40 = vector.extract_strided_slice %20 {offsets = [0, 128], sizes = [2, 64], strides = [1, 1]} : vector<2x256xf32> to vector<2x64xf32>
    %41 = math.tanh %40 : vector<2x64xf32>
    %42 = vector.extract_strided_slice %20 {offsets = [0, 192], sizes = [2, 64], strides = [1, 1]} : vector<2x256xf32> to vector<2x64xf32>
    %43 = arith.negf %42 : vector<2x64xf32>
    %44 = math.exp %43 : vector<2x64xf32>
    %cst_25 = arith.constant 1.000000e+00 : f32
    %45 = vector.broadcast %cst_25 : f32 to vector<2x64xf32>
    %46 = arith.addf %45, %44 : vector<2x64xf32>
    %47 = arith.divf %45, %46 : vector<2x64xf32>
    %48 = arith.mulf %39, %10 : vector<2x64xf32>
    %49 = arith.mulf %33, %41 : vector<2x64xf32>
    %50 = arith.addf %48, %49 : vector<2x64xf32>
    %51 = math.tanh %50 : vector<2x64xf32>
    %52 = arith.mulf %47, %51 : vector<2x64xf32>
    %53 = vector.extract_strided_slice %27 {offsets = [0, 0], sizes = [2, 64], strides = [1, 1]} : vector<2x256xf32> to vector<2x64xf32>
    %54 = arith.negf %53 : vector<2x64xf32>
    %55 = math.exp %54 : vector<2x64xf32>
    %cst_26 = arith.constant 1.000000e+00 : f32
    %56 = vector.broadcast %cst_26 : f32 to vector<2x64xf32>
    %57 = arith.addf %56, %55 : vector<2x64xf32>
    %58 = arith.divf %56, %57 : vector<2x64xf32>
    %59 = vector.extract_strided_slice %27 {offsets = [0, 64], sizes = [2, 64], strides = [1, 1]} : vector<2x256xf32> to vector<2x64xf32>
    %60 = arith.negf %59 : vector<2x64xf32>
    %61 = math.exp %60 : vector<2x64xf32>
    %cst_27 = arith.constant 1.000000e+00 : f32
    %62 = vector.broadcast %cst_27 : f32 to vector<2x64xf32>
    %63 = arith.addf %62, %61 : vector<2x64xf32>
    %64 = arith.divf %62, %63 : vector<2x64xf32>
    %65 = vector.extract_strided_slice %27 {offsets = [0, 128], sizes = [2, 64], strides = [1, 1]} : vector<2x256xf32> to vector<2x64xf32>
    %66 = math.tanh %65 : vector<2x64xf32>
    %67 = vector.extract_strided_slice %27 {offsets = [0, 192], sizes = [2, 64], strides = [1, 1]} : vector<2x256xf32> to vector<2x64xf32>
    %68 = arith.negf %67 : vector<2x64xf32>
    %69 = math.exp %68 : vector<2x64xf32>
    %cst_28 = arith.constant 1.000000e+00 : f32
    %70 = vector.broadcast %cst_28 : f32 to vector<2x64xf32>
    %71 = arith.addf %70, %69 : vector<2x64xf32>
    %72 = arith.divf %70, %71 : vector<2x64xf32>
    %73 = arith.mulf %64, %14 : vector<2x64xf32>
    %74 = arith.mulf %58, %66 : vector<2x64xf32>
    %75 = arith.addf %73, %74 : vector<2x64xf32>
    %76 = math.tanh %75 : vector<2x64xf32>
    %77 = arith.mulf %72, %76 : vector<2x64xf32>
    %78 = arith.truncf %52 : vector<2x64xf32> to vector<2x64xbf16>
    %79 = arith.index_cast %c0_i32_17 : i32 to index
    %c0_29 = arith.constant 0 : index
    %c0_30 = arith.constant 0 : index
    %80 = vector.load %arg4[%79, %c0_29, %c0_30] : memref<3x2x64xbf16, #tpu.memory_space<vmem>>, vector<1x2x64xbf16>
    %81 = vector.shape_cast %80 : vector<1x2x64xbf16> to vector<2x64xbf16>
    %82 = vector.shape_cast %78 : vector<2x64xbf16> to vector<1x2x64xbf16>
    tpu.vector_store %arg4[%79, %c0_29, %c0_30], %82 {strides = array<i32>} : memref<3x2x64xbf16, #tpu.memory_space<vmem>>, vector<1x2x64xbf16>,
    %83 = arith.truncf %77 : vector<2x64xf32> to vector<2x64xbf16>
    %c2_i32_31 = arith.constant 2 : i32
    %84 = arith.subi %c2_i32_31, %c0_i32_17 : i32
    %85 = arith.index_cast %84 : i32 to index
    %c0_32 = arith.constant 0 : index
    %c0_33 = arith.constant 0 : index
    %86 = vector.load %arg5[%85, %c0_32, %c0_33] : memref<3x2x64xbf16, #tpu.memory_space<vmem>>, vector<1x2x64xbf16>
    %87 = vector.shape_cast %86 : vector<1x2x64xbf16> to vector<2x64xbf16>
    %88 = vector.shape_cast %83 : vector<2x64xbf16> to vector<1x2x64xbf16>
    tpu.vector_store %arg5[%85, %c0_32, %c0_33], %88 {strides = array<i32>} : memref<3x2x64xbf16, #tpu.memory_space<vmem>>, vector<1x2x64xbf16>,
    %c1_i32 = arith.constant 1 : i32
    %89 = arith.index_cast %c1_i32 : i32 to index
    %c0_34 = arith.constant 0 : index
    %c0_35 = arith.constant 0 : index
    %90 = vector.load %arg1[%89, %c0_34, %c0_35] : memref<3x2x256xf32, #tpu.memory_space<vmem>>, vector<1x2x256xf32>
    %91 = vector.shape_cast %90 : vector<1x2x256xf32> to vector<2x256xf32>
    %92 = arith.truncf %52 : vector<2x64xf32> to vector<2x64xbf16>
    %cst_36 = arith.constant dense<0.000000e+00> : vector<2x256xf32>
    %93 = tpu.matmul %92, %4, %cst_36 {dimension_numbers = #tpu.dot_dimension_numbers<[1], [0], [0], [1], [0, 0, 1, 1], [], []>} : vector<2x64xbf16>, vector<64x256xbf16>, vector<2x256xf32> -> vector<2x256xf32>
    %94 = arith.addf %91, %93 : vector<2x256xf32>
    %c2_i32_37 = arith.constant 2 : i32
    %95 = arith.subi %c2_i32_37, %c1_i32 : i32
    %96 = arith.index_cast %95 : i32 to index
    %c0_38 = arith.constant 0 : index
    %c0_39 = arith.constant 0 : index
    %97 = vector.load %arg2[%96, %c0_38, %c0_39] : memref<3x2x256xf32, #tpu.memory_space<vmem>>, vector<1x2x256xf32>
    %98 = vector.shape_cast %97 : vector<1x2x256xf32> to vector<2x256xf32>
    %99 = arith.truncf %77 : vector<2x64xf32> to vector<2x64xbf16>
    %cst_40 = arith.constant dense<0.000000e+00> : vector<2x256xf32>
    %100 = tpu.matmul %99, %6, %cst_40 {dimension_numbers = #tpu.dot_dimension_numbers<[1], [0], [0], [1], [0, 0, 1, 1], [], []>} : vector<2x64xbf16>, vector<64x256xbf16>, vector<2x256xf32> -> vector<2x256xf32>
    %101 = arith.addf %98, %100 : vector<2x256xf32>
    %102 = vector.extract_strided_slice %94 {offsets = [0, 0], sizes = [2, 64], strides = [1, 1]} : vector<2x256xf32> to vector<2x64xf32>
    %103 = arith.negf %102 : vector<2x64xf32>
    %104 = math.exp %103 : vector<2x64xf32>
    %cst_41 = arith.constant 1.000000e+00 : f32
    %105 = vector.broadcast %cst_41 : f32 to vector<2x64xf32>
    %106 = arith.addf %105, %104 : vector<2x64xf32>
    %107 = arith.divf %105, %106 : vector<2x64xf32>
    %108 = vector.extract_strided_slice %94 {offsets = [0, 64], sizes = [2, 64], strides = [1, 1]} : vector<2x256xf32> to vector<2x64xf32>
    %109 = arith.negf %108 : vector<2x64xf32>
    %110 = math.exp %109 : vector<2x64xf32>
    %cst_42 = arith.constant 1.000000e+00 : f32
    %111 = vector.broadcast %cst_42 : f32 to vector<2x64xf32>
    %112 = arith.addf %111, %110 : vector<2x64xf32>
    %113 = arith.divf %111, %112 : vector<2x64xf32>
    %114 = vector.extract_strided_slice %94 {offsets = [0, 128], sizes = [2, 64], strides = [1, 1]} : vector<2x256xf32> to vector<2x64xf32>
    %115 = math.tanh %114 : vector<2x64xf32>
    %116 = vector.extract_strided_slice %94 {offsets = [0, 192], sizes = [2, 64], strides = [1, 1]} : vector<2x256xf32> to vector<2x64xf32>
    %117 = arith.negf %116 : vector<2x64xf32>
    %118 = math.exp %117 : vector<2x64xf32>
    %cst_43 = arith.constant 1.000000e+00 : f32
    %119 = vector.broadcast %cst_43 : f32 to vector<2x64xf32>
    %120 = arith.addf %119, %118 : vector<2x64xf32>
    %121 = arith.divf %119, %120 : vector<2x64xf32>
    %122 = arith.mulf %113, %50 : vector<2x64xf32>
    %123 = arith.mulf %107, %115 : vector<2x64xf32>
    %124 = arith.addf %122, %123 : vector<2x64xf32>
    %125 = math.tanh %124 : vector<2x64xf32>
    %126 = arith.mulf %121, %125 : vector<2x64xf32>
    %127 = vector.extract_strided_slice %101 {offsets = [0, 0], sizes = [2, 64], strides = [1, 1]} : vector<2x256xf32> to vector<2x64xf32>
    %128 = arith.negf %127 : vector<2x64xf32>
    %129 = math.exp %128 : vector<2x64xf32>
    %cst_44 = arith.constant 1.000000e+00 : f32
    %130 = vector.broadcast %cst_44 : f32 to vector<2x64xf32>
    %131 = arith.addf %130, %129 : vector<2x64xf32>
    %132 = arith.divf %130, %131 : vector<2x64xf32>
    %133 = vector.extract_strided_slice %101 {offsets = [0, 64], sizes = [2, 64], strides = [1, 1]} : vector<2x256xf32> to vector<2x64xf32>
    %134 = arith.negf %133 : vector<2x64xf32>
    %135 = math.exp %134 : vector<2x64xf32>
    %cst_45 = arith.constant 1.000000e+00 : f32
    %136 = vector.broadcast %cst_45 : f32 to vector<2x64xf32>
    %137 = arith.addf %136, %135 : vector<2x64xf32>
    %138 = arith.divf %136, %137 : vector<2x64xf32>
    %139 = vector.extract_strided_slice %101 {offsets = [0, 128], sizes = [2, 64], strides = [1, 1]} : vector<2x256xf32> to vector<2x64xf32>
    %140 = math.tanh %139 : vector<2x64xf32>
    %141 = vector.extract_strided_slice %101 {offsets = [0, 192], sizes = [2, 64], strides = [1, 1]} : vector<2x256xf32> to vector<2x64xf32>
    %142 = arith.negf %141 : vector<2x64xf32>
    %143 = math.exp %142 : vector<2x64xf32>
    %cst_46 = arith.constant 1.000000e+00 : f32
    %144 = vector.broadcast %cst_46 : f32 to vector<2x64xf32>
    %145 = arith.addf %144, %143 : vector<2x64xf32>
    %146 = arith.divf %144, %145 : vector<2x64xf32>
    %147 = arith.mulf %138, %75 : vector<2x64xf32>
    %148 = arith.mulf %132, %140 : vector<2x64xf32>
    %149 = arith.addf %147, %148 : vector<2x64xf32>
    %150 = math.tanh %149 : vector<2x64xf32>
    %151 = arith.mulf %146, %150 : vector<2x64xf32>
    %152 = arith.truncf %126 : vector<2x64xf32> to vector<2x64xbf16>
    %153 = arith.index_cast %c1_i32 : i32 to index
    %c0_47 = arith.constant 0 : index
    %c0_48 = arith.constant 0 : index
    %154 = vector.load %arg4[%153, %c0_47, %c0_48] : memref<3x2x64xbf16, #tpu.memory_space<vmem>>, vector<1x2x64xbf16>
    %155 = vector.shape_cast %154 : vector<1x2x64xbf16> to vector<2x64xbf16>
    %156 = vector.shape_cast %152 : vector<2x64xbf16> to vector<1x2x64xbf16>
    tpu.vector_store %arg4[%153, %c0_47, %c0_48], %156 {strides = array<i32>} : memref<3x2x64xbf16, #tpu.memory_space<vmem>>, vector<1x2x64xbf16>,
    %157 = arith.truncf %151 : vector<2x64xf32> to vector<2x64xbf16>
    %c2_i32_49 = arith.constant 2 : i32
    %158 = arith.subi %c2_i32_49, %c1_i32 : i32
    %159 = arith.index_cast %158 : i32 to index
    %c0_50 = arith.constant 0 : index
    %c0_51 = arith.constant 0 : index
    %160 = vector.load %arg5[%159, %c0_50, %c0_51] : memref<3x2x64xbf16, #tpu.memory_space<vmem>>, vector<1x2x64xbf16>
    %161 = vector.shape_cast %160 : vector<1x2x64xbf16> to vector<2x64xbf16>
    %162 = vector.shape_cast %157 : vector<2x64xbf16> to vector<1x2x64xbf16>
    tpu.vector_store %arg5[%159, %c0_50, %c0_51], %162 {strides = array<i32>} : memref<3x2x64xbf16, #tpu.memory_space<vmem>>, vector<1x2x64xbf16>,
    %c2_i32_52 = arith.constant 2 : i32
    %163 = arith.index_cast %c2_i32_52 : i32 to index
    %c0_53 = arith.constant 0 : index
    %c0_54 = arith.constant 0 : index
    %164 = vector.load %arg1[%163, %c0_53, %c0_54] : memref<3x2x256xf32, #tpu.memory_space<vmem>>, vector<1x2x256xf32>
    %165 = vector.shape_cast %164 : vector<1x2x256xf32> to vector<2x256xf32>
    %166 = arith.truncf %126 : vector<2x64xf32> to vector<2x64xbf16>
    %cst_55 = arith.constant dense<0.000000e+00> : vector<2x256xf32>
    %167 = tpu.matmul %166, %4, %cst_55 {dimension_numbers = #tpu.dot_dimension_numbers<[1], [0], [0], [1], [0, 0, 1, 1], [], []>} : vector<2x64xbf16>, vector<64x256xbf16>, vector<2x256xf32> -> vector<2x256xf32>
    %168 = arith.addf %165, %167 : vector<2x256xf32>
    %c2_i32_56 = arith.constant 2 : i32
    %169 = arith.subi %c2_i32_56, %c2_i32_52 : i32
    %170 = arith.index_cast %169 : i32 to index
    %c0_57 = arith.constant 0 : index
    %c0_58 = arith.constant 0 : index
    %171 = vector.load %arg2[%170, %c0_57, %c0_58] : memref<3x2x256xf32, #tpu.memory_space<vmem>>, vector<1x2x256xf32>
    %172 = vector.shape_cast %171 : vector<1x2x256xf32> to vector<2x256xf32>
    %173 = arith.truncf %151 : vector<2x64xf32> to vector<2x64xbf16>
    %cst_59 = arith.constant dense<0.000000e+00> : vector<2x256xf32>
    %174 = tpu.matmul %173, %6, %cst_59 {dimension_numbers = #tpu.dot_dimension_numbers<[1], [0], [0], [1], [0, 0, 1, 1], [], []>} : vector<2x64xbf16>, vector<64x256xbf16>, vector<2x256xf32> -> vector<2x256xf32>
    %175 = arith.addf %172, %174 : vector<2x256xf32>
    %176 = vector.extract_strided_slice %168 {offsets = [0, 0], sizes = [2, 64], strides = [1, 1]} : vector<2x256xf32> to vector<2x64xf32>
    %177 = arith.negf %176 : vector<2x64xf32>
    %178 = math.exp %177 : vector<2x64xf32>
    %cst_60 = arith.constant 1.000000e+00 : f32
    %179 = vector.broadcast %cst_60 : f32 to vector<2x64xf32>
    %180 = arith.addf %179, %178 : vector<2x64xf32>
    %181 = arith.divf %179, %180 : vector<2x64xf32>
    %182 = vector.extract_strided_slice %168 {offsets = [0, 64], sizes = [2, 64], strides = [1, 1]} : vector<2x256xf32> to vector<2x64xf32>
    %183 = arith.negf %182 : vector<2x64xf32>
    %184 = math.exp %183 : vector<2x64xf32>
    %cst_61 = arith.constant 1.000000e+00 : f32
    %185 = vector.broadcast %cst_61 : f32 to vector<2x64xf32>
    %186 = arith.addf %185, %184 : vector<2x64xf32>
    %187 = arith.divf %185, %186 : vector<2x64xf32>
    %188 = vector.extract_strided_slice %168 {offsets = [0, 128], sizes = [2, 64], strides = [1, 1]} : vector<2x256xf32> to vector<2x64xf32>
    %189 = math.tanh %188 : vector<2x64xf32>
    %190 = vector.extract_strided_slice %168 {offsets = [0, 192], sizes = [2, 64], strides = [1, 1]} : vector<2x256xf32> to vector<2x64xf32>
    %191 = arith.negf %190 : vector<2x64xf32>
    %192 = math.exp %191 : vector<2x64xf32>
    %cst_62 = arith.constant 1.000000e+00 : f32
    %193 = vector.broadcast %cst_62 : f32 to vector<2x64xf32>
    %194 = arith.addf %193, %192 : vector<2x64xf32>
    %195 = arith.divf %193, %194 : vector<2x64xf32>
    %196 = arith.mulf %187, %124 : vector<2x64xf32>
    %197 = arith.mulf %181, %189 : vector<2x64xf32>
    %198 = arith.addf %196, %197 : vector<2x64xf32>
    %199 = math.tanh %198 : vector<2x64xf32>
    %200 = arith.mulf %195, %199 : vector<2x64xf32>
    %201 = vector.extract_strided_slice %175 {offsets = [0, 0], sizes = [2, 64], strides = [1, 1]} : vector<2x256xf32> to vector<2x64xf32>
    %202 = arith.negf %201 : vector<2x64xf32>
    %203 = math.exp %202 : vector<2x64xf32>
    %cst_63 = arith.constant 1.000000e+00 : f32
    %204 = vector.broadcast %cst_63 : f32 to vector<2x64xf32>
    %205 = arith.addf %204, %203 : vector<2x64xf32>
    %206 = arith.divf %204, %205 : vector<2x64xf32>
    %207 = vector.extract_strided_slice %175 {offsets = [0, 64], sizes = [2, 64], strides = [1, 1]} : vector<2x256xf32> to vector<2x64xf32>
    %208 = arith.negf %207 : vector<2x64xf32>
    %209 = math.exp %208 : vector<2x64xf32>
    %cst_64 = arith.constant 1.000000e+00 : f32
    %210 = vector.broadcast %cst_64 : f32 to vector<2x64xf32>
    %211 = arith.addf %210, %209 : vector<2x64xf32>
    %212 = arith.divf %210, %211 : vector<2x64xf32>
    %213 = vector.extract_strided_slice %175 {offsets = [0, 128], sizes = [2, 64], strides = [1, 1]} : vector<2x256xf32> to vector<2x64xf32>
    %214 = math.tanh %213 : vector<2x64xf32>
    %215 = vector.extract_strided_slice %175 {offsets = [0, 192], sizes = [2, 64], strides = [1, 1]} : vector<2x256xf32> to vector<2x64xf32>
    %216 = arith.negf %215 : vector<2x64xf32>
    %217 = math.exp %216 : vector<2x64xf32>
    %cst_65 = arith.constant 1.000000e+00 : f32
    %218 = vector.broadcast %cst_65 : f32 to vector<2x64xf32>
    %219 = arith.addf %218, %217 : vector<2x64xf32>
    %220 = arith.divf %218, %219 : vector<2x64xf32>
    %221 = arith.mulf %212, %149 : vector<2x64xf32>
    %222 = arith.mulf %206, %214 : vector<2x64xf32>
    %223 = arith.addf %221, %222 : vector<2x64xf32>
    %224 = math.tanh %223 : vector<2x64xf32>
    %225 = arith.mulf %220, %224 : vector<2x64xf32>
    %226 = arith.truncf %200 : vector<2x64xf32> to vector<2x64xbf16>
    %227 = arith.index_cast %c2_i32_52 : i32 to index
    %c0_66 = arith.constant 0 : index
    %c0_67 = arith.constant 0 : index
    %228 = vector.load %arg4[%227, %c0_66, %c0_67] : memref<3x2x64xbf16, #tpu.memory_space<vmem>>, vector<1x2x64xbf16>
    %229 = vector.shape_cast %228 : vector<1x2x64xbf16> to vector<2x64xbf16>
    %230 = vector.shape_cast %226 : vector<2x64xbf16> to vector<1x2x64xbf16>
    tpu.vector_store %arg4[%227, %c0_66, %c0_67], %230 {strides = array<i32>} : memref<3x2x64xbf16, #tpu.memory_space<vmem>>, vector<1x2x64xbf16>,
    %231 = arith.truncf %225 : vector<2x64xf32> to vector<2x64xbf16>
    %c2_i32_68 = arith.constant 2 : i32
    %232 = arith.subi %c2_i32_68, %c2_i32_52 : i32
    %233 = arith.index_cast %232 : i32 to index
    %c0_69 = arith.constant 0 : index
    %c0_70 = arith.constant 0 : index
    %234 = vector.load %arg5[%233, %c0_69, %c0_70] : memref<3x2x64xbf16, #tpu.memory_space<vmem>>, vector<1x2x64xbf16>
    %235 = vector.shape_cast %234 : vector<1x2x64xbf16> to vector<2x64xbf16>
    %236 = vector.shape_cast %231 : vector<2x64xbf16> to vector<1x2x64xbf16>
    tpu.vector_store %arg5[%233, %c0_69, %c0_70], %236 {strides = array<i32>} : memref<3x2x64xbf16, #tpu.memory_space<vmem>>, vector<1x2x64xbf16>,
    %c3_i32 = arith.constant 3 : i32
    %c0_71 = arith.constant 0 : index
    %c0_72 = arith.constant 0 : index
    %c0_73 = arith.constant 0 : index
    %237 = vector.load %arg6[%c0_71, %c0_72, %c0_73] : memref<2x2x64xf32, #tpu.memory_space<vmem>>, vector<1x2x64xf32>
    %238 = vector.shape_cast %237 : vector<1x2x64xf32> to vector<2x64xf32>
    %239 = vector.shape_cast %200 : vector<2x64xf32> to vector<1x2x64xf32>
    tpu.vector_store %arg6[%c0_71, %c0_72, %c0_73], %239 {strides = array<i32>} : memref<2x2x64xf32, #tpu.memory_space<vmem>>, vector<1x2x64xf32>,
    %c0_74 = arith.constant 0 : index
    %c0_75 = arith.constant 0 : index
    %c0_76 = arith.constant 0 : index
    %240 = vector.load %arg7[%c0_74, %c0_75, %c0_76] : memref<2x2x64xf32, #tpu.memory_space<vmem>>, vector<1x2x64xf32>
    %241 = vector.shape_cast %240 : vector<1x2x64xf32> to vector<2x64xf32>
    %242 = vector.shape_cast %198 : vector<2x64xf32> to vector<1x2x64xf32>
    tpu.vector_store %arg7[%c0_74, %c0_75, %c0_76], %242 {strides = array<i32>} : memref<2x2x64xf32, #tpu.memory_space<vmem>>, vector<1x2x64xf32>,
    %c1_77 = arith.constant 1 : index
    %c0_78 = arith.constant 0 : index
    %c0_79 = arith.constant 0 : index
    %243 = vector.load %arg6[%c1_77, %c0_78, %c0_79] : memref<2x2x64xf32, #tpu.memory_space<vmem>>, vector<1x2x64xf32>
    %244 = vector.shape_cast %243 : vector<1x2x64xf32> to vector<2x64xf32>
    %245 = vector.shape_cast %225 : vector<2x64xf32> to vector<1x2x64xf32>
    tpu.vector_store %arg6[%c1_77, %c0_78, %c0_79], %245 {strides = array<i32>} : memref<2x2x64xf32, #tpu.memory_space<vmem>>, vector<1x2x64xf32>,
    %c1_80 = arith.constant 1 : index
    %c0_81 = arith.constant 0 : index
    %c0_82 = arith.constant 0 : index
    %246 = vector.load %arg7[%c1_80, %c0_81, %c0_82] : memref<2x2x64xf32, #tpu.memory_space<vmem>>, vector<1x2x64xf32>
    %247 = vector.shape_cast %246 : vector<1x2x64xf32> to vector<2x64xf32>
    %248 = vector.shape_cast %223 : vector<2x64xf32> to vector<1x2x64xf32>
    tpu.vector_store %arg7[%c1_80, %c0_81, %c0_82], %248 {strides = array<i32>} : memref<2x2x64xf32, #tpu.memory_space<vmem>>, vector<1x2x64xf32>,
    return
  }
  func.func @transform_0(%arg0: i32) -> (i32, i32, i32) {
    %c0_i32 = arith.constant 0 : i32
    %c0_i32_0 = arith.constant 0 : i32
    %c0_i32_1 = arith.constant 0 : i32
    return %arg0, %c0_i32, %c0_i32_0 : i32, i32, i32
  }
  func.func @transform_1(%arg0: i32) -> (i32, i32, i32) {
    %c0_i32 = arith.constant 0 : i32
    %0 = arith.subi %c0_i32, %arg0 : i32
    %c0_i32_0 = arith.constant 0 : i32
    %c0_i32_1 = arith.constant 0 : i32
    %c0_i32_2 = arith.constant 0 : i32
    return %0, %c0_i32_0, %c0_i32_1 : i32, i32, i32
  }
  func.func @transform_2(%arg0: i32) -> (i32, i32, i32) {
    %c0_i32 = arith.constant 0 : i32
    %c0_i32_0 = arith.constant 0 : i32
    %c0_i32_1 = arith.constant 0 : i32
    %c0_i32_2 = arith.constant 0 : i32
    return %c0_i32, %c0_i32_0, %c0_i32_1 : i32, i32, i32
  }
  func.func @transform_3(%arg0: i32) -> (i32, i32, i32) {
    %c0_i32 = arith.constant 0 : i32
    %c0_i32_0 = arith.constant 0 : i32
    %c0_i32_1 = arith.constant 0 : i32
    return %arg0, %c0_i32, %c0_i32_0 : i32, i32, i32
  }
  func.func @transform_4(%arg0: i32) -> (i32, i32, i32) {
    %c0_i32 = arith.constant 0 : i32
    %0 = arith.subi %c0_i32, %arg0 : i32
    %c0_i32_0 = arith.constant 0 : i32
    %c0_i32_1 = arith.constant 0 : i32
    %c0_i32_2 = arith.constant 0 : i32
    return %0, %c0_i32_0, %c0_i32_1 : i32, i32, i32
  }
}

module attributes {stable_mosaic.version = 11 : i64} {
  func.func @_mm_fused_kernel(%arg0: i32, %arg1: memref<6x128xbf16, #tpu.memory_space<vmem>>, %arg2: memref<128x64xbf16, #tpu.memory_space<vmem>>, %arg3: memref<1x64xf32, #tpu.memory_space<vmem>>, %arg4: memref<6x64xbf16, #tpu.memory_space<vmem>>) attributes {dimension_semantics = [#tpu.dimension_semantics<parallel>], iteration_bounds = array<i64: 1>, scalar_prefetch = 0 : i64, scratch_operands = 0 : i64, tpu.core_type = #tpu.core_type<tc>, window_params = [{transform_indices = @transform_0, window_bounds = array<i64: 6, 128>}, {pipeline_mode = #tpu.pipeline_mode<synchronous>, transform_indices = @transform_1, window_bounds = array<i64: 128, 64>}, {pipeline_mode = #tpu.pipeline_mode<synchronous>, transform_indices = @transform_2, window_bounds = array<i64: 1, 64>}, {transform_indices = @transform_3, window_bounds = array<i64: 6, 64>}]} {
    %c0 = arith.constant 0 : index
    %c0_0 = arith.constant 0 : index
    %0 = vector.load %arg1[%c0, %c0_0] : memref<6x128xbf16, #tpu.memory_space<vmem>>, vector<6x128xbf16>
    %c0_1 = arith.constant 0 : index
    %c0_2 = arith.constant 0 : index
    %1 = vector.load %arg2[%c0_1, %c0_2] : memref<128x64xbf16, #tpu.memory_space<vmem>>, vector<128x64xbf16>
    %cst = arith.constant dense<0.000000e+00> : vector<6x64xf32>
    %2 = tpu.matmul %0, %1, %cst {dimension_numbers = #tpu.dot_dimension_numbers<[1], [0], [0], [1], [0, 0, 1, 1], [], []>} : vector<6x128xbf16>, vector<128x64xbf16>, vector<6x64xf32> -> vector<6x64xf32>
    %c0_3 = arith.constant 0 : index
    %c0_4 = arith.constant 0 : index
    %3 = vector.load %arg3[%c0_3, %c0_4] : memref<1x64xf32, #tpu.memory_space<vmem>>, vector<1x64xf32>
    %4 = vector.broadcast %3 : vector<1x64xf32> to vector<6x64xf32>
    %5 = arith.addf %2, %4 : vector<6x64xf32>
    %6 = arith.truncf %5 : vector<6x64xf32> to vector<6x64xbf16>
    %c0_5 = arith.constant 0 : index
    %c0_6 = arith.constant 0 : index
    %7 = vector.load %arg4[%c0_5, %c0_6] : memref<6x64xbf16, #tpu.memory_space<vmem>>, vector<6x64xbf16>
    tpu.vector_store %arg4[%c0_5, %c0_6], %6 {strides = array<i32>} : memref<6x64xbf16, #tpu.memory_space<vmem>>, vector<6x64xbf16>,
    return
  }
  func.func @transform_0(%arg0: i32) -> (i32, i32) {
    %c0_i32 = arith.constant 0 : i32
    %c0_i32_0 = arith.constant 0 : i32
    return %arg0, %c0_i32 : i32, i32
  }
  func.func @transform_1(%arg0: i32) -> (i32, i32) {
    %c0_i32 = arith.constant 0 : i32
    %c0_i32_0 = arith.constant 0 : i32
    %c0_i32_1 = arith.constant 0 : i32
    return %c0_i32, %c0_i32_0 : i32, i32
  }
  func.func @transform_2(%arg0: i32) -> (i32, i32) {
    %c0_i32 = arith.constant 0 : i32
    %c0_i32_0 = arith.constant 0 : i32
    %c0_i32_1 = arith.constant 0 : i32
    return %c0_i32, %c0_i32_0 : i32, i32
  }
  func.func @transform_3(%arg0: i32) -> (i32, i32) {
    %c0_i32 = arith.constant 0 : i32
    %c0_i32_0 = arith.constant 0 : i32
    return %arg0, %c0_i32 : i32, i32
  }
}

module attributes {stable_mosaic.version = 11 : i64} {
  func.func @_mm_fused_kernel(%arg0: i32, %arg1: memref<10x64xbf16, #tpu.memory_space<vmem>>, %arg2: memref<10x64xbf16, #tpu.memory_space<vmem>>, %arg3: memref<64x128xbf16, #tpu.memory_space<vmem>>, %arg4: memref<1x128xf32, #tpu.memory_space<vmem>>, %arg5: memref<10x64xbf16, #tpu.memory_space<vmem>>) attributes {dimension_semantics = [#tpu.dimension_semantics<parallel>], iteration_bounds = array<i64: 1>, scalar_prefetch = 0 : i64, scratch_operands = 0 : i64, tpu.core_type = #tpu.core_type<tc>, window_params = [{transform_indices = @transform_0, window_bounds = array<i64: 10, 64>}, {transform_indices = @transform_1, window_bounds = array<i64: 10, 64>}, {pipeline_mode = #tpu.pipeline_mode<synchronous>, transform_indices = @transform_2, window_bounds = array<i64: 64, 128>}, {pipeline_mode = #tpu.pipeline_mode<synchronous>, transform_indices = @transform_3, window_bounds = array<i64: 1, 128>}, {transform_indices = @transform_4, window_bounds = array<i64: 10, 64>}]} {
    %c0 = arith.constant 0 : index
    %c0_0 = arith.constant 0 : index
    %0 = vector.load %arg1[%c0, %c0_0] : memref<10x64xbf16, #tpu.memory_space<vmem>>, vector<10x64xbf16>
    %1 = arith.extf %0 : vector<10x64xbf16> to vector<10x64xf32>
    %c0_1 = arith.constant 0 : index
    %c0_2 = arith.constant 0 : index
    %2 = vector.load %arg2[%c0_1, %c0_2] : memref<10x64xbf16, #tpu.memory_space<vmem>>, vector<10x64xbf16>
    %3 = arith.extf %2 : vector<10x64xbf16> to vector<10x64xf32>
    %4 = arith.addf %1, %3 : vector<10x64xf32>
    %5 = arith.truncf %4 : vector<10x64xf32> to vector<10x64xbf16>
    %c0_3 = arith.constant 0 : index
    %c0_4 = arith.constant 0 : index
    %6 = vector.load %arg3[%c0_3, %c0_4] : memref<64x128xbf16, #tpu.memory_space<vmem>>, vector<64x128xbf16>
    %cst = arith.constant dense<0.000000e+00> : vector<10x128xf32>
    %7 = tpu.matmul %5, %6, %cst {dimension_numbers = #tpu.dot_dimension_numbers<[1], [0], [0], [1], [0, 0, 1, 1], [], []>} : vector<10x64xbf16>, vector<64x128xbf16>, vector<10x128xf32> -> vector<10x128xf32>
    %c0_5 = arith.constant 0 : index
    %c0_6 = arith.constant 0 : index
    %8 = vector.load %arg4[%c0_5, %c0_6] : memref<1x128xf32, #tpu.memory_space<vmem>>, vector<1x128xf32>
    %9 = vector.broadcast %8 : vector<1x128xf32> to vector<10x128xf32>
    %10 = arith.addf %7, %9 : vector<10x128xf32>
    %11 = vector.extract_strided_slice %10 {offsets = [0, 0], sizes = [10, 64], strides = [1, 1]} : vector<10x128xf32> to vector<10x64xf32>
    %12 = vector.extract_strided_slice %10 {offsets = [0, 64], sizes = [10, 64], strides = [1, 1]} : vector<10x128xf32> to vector<10x64xf32>
    %13 = arith.negf %12 : vector<10x64xf32>
    %14 = math.exp %13 : vector<10x64xf32>
    %cst_7 = arith.constant 1.000000e+00 : f32
    %15 = vector.broadcast %cst_7 : f32 to vector<10x64xf32>
    %16 = arith.addf %15, %14 : vector<10x64xf32>
    %17 = arith.divf %15, %16 : vector<10x64xf32>
    %18 = arith.mulf %11, %17 : vector<10x64xf32>
    %19 = arith.truncf %18 : vector<10x64xf32> to vector<10x64xbf16>
    %c0_8 = arith.constant 0 : index
    %c0_9 = arith.constant 0 : index
    %20 = vector.load %arg5[%c0_8, %c0_9] : memref<10x64xbf16, #tpu.memory_space<vmem>>, vector<10x64xbf16>
    tpu.vector_store %arg5[%c0_8, %c0_9], %19 {strides = array<i32>} : memref<10x64xbf16, #tpu.memory_space<vmem>>, vector<10x64xbf16>,
    return
  }
  func.func @transform_0(%arg0: i32) -> (i32, i32) {
    %c0_i32 = arith.constant 0 : i32
    %c0_i32_0 = arith.constant 0 : i32
    return %arg0, %c0_i32 : i32, i32
  }
  func.func @transform_1(%arg0: i32) -> (i32, i32) {
    %c0_i32 = arith.constant 0 : i32
    %c0_i32_0 = arith.constant 0 : i32
    return %arg0, %c0_i32 : i32, i32
  }
  func.func @transform_2(%arg0: i32) -> (i32, i32) {
    %c0_i32 = arith.constant 0 : i32
    %c0_i32_0 = arith.constant 0 : i32
    %c0_i32_1 = arith.constant 0 : i32
    return %c0_i32, %c0_i32_0 : i32, i32
  }
  func.func @transform_3(%arg0: i32) -> (i32, i32) {
    %c0_i32 = arith.constant 0 : i32
    %c0_i32_0 = arith.constant 0 : i32
    %c0_i32_1 = arith.constant 0 : i32
    return %c0_i32, %c0_i32_0 : i32, i32
  }
  func.func @transform_4(%arg0: i32) -> (i32, i32) {
    %c0_i32 = arith.constant 0 : i32
    %c0_i32_0 = arith.constant 0 : i32
    return %arg0, %c0_i32 : i32, i32
  }
}

module attributes {stable_mosaic.version = 11 : i64} {
  func.func @_mm_fused_kernel(%arg0: i32, %arg1: memref<12x64xbf16, #tpu.memory_space<vmem>>, %arg2: memref<12x64xbf16, #tpu.memory_space<vmem>>, %arg3: memref<64x128xbf16, #tpu.memory_space<vmem>>, %arg4: memref<64x128xbf16, #tpu.memory_space<vmem>>, %arg5: memref<1x128xf32, #tpu.memory_space<vmem>>, %arg6: memref<12x128xbf16, #tpu.memory_space<vmem>>) attributes {dimension_semantics = [#tpu.dimension_semantics<parallel>], iteration_bounds = array<i64: 1>, scalar_prefetch = 0 : i64, scratch_operands = 0 : i64, tpu.core_type = #tpu.core_type<tc>, window_params = [{transform_indices = @transform_0, window_bounds = array<i64: 12, 64>}, {transform_indices = @transform_1, window_bounds = array<i64: 12, 64>}, {pipeline_mode = #tpu.pipeline_mode<synchronous>, transform_indices = @transform_2, window_bounds = array<i64: 64, 128>}, {pipeline_mode = #tpu.pipeline_mode<synchronous>, transform_indices = @transform_3, window_bounds = array<i64: 64, 128>}, {pipeline_mode = #tpu.pipeline_mode<synchronous>, transform_indices = @transform_4, window_bounds = array<i64: 1, 128>}, {transform_indices = @transform_5, window_bounds = array<i64: 12, 128>}]} {
    %c0 = arith.constant 0 : index
    %c0_0 = arith.constant 0 : index
    %0 = vector.load %arg1[%c0, %c0_0] : memref<12x64xbf16, #tpu.memory_space<vmem>>, vector<12x64xbf16>
    %c0_1 = arith.constant 0 : index
    %c0_2 = arith.constant 0 : index
    %1 = vector.load %arg3[%c0_1, %c0_2] : memref<64x128xbf16, #tpu.memory_space<vmem>>, vector<64x128xbf16>
    %cst = arith.constant dense<0.000000e+00> : vector<12x128xf32>
    %2 = tpu.matmul %0, %1, %cst {dimension_numbers = #tpu.dot_dimension_numbers<[1], [0], [0], [1], [0, 0, 1, 1], [], []>} : vector<12x64xbf16>, vector<64x128xbf16>, vector<12x128xf32> -> vector<12x128xf32>
    %c0_3 = arith.constant 0 : index
    %c0_4 = arith.constant 0 : index
    %3 = vector.load %arg2[%c0_3, %c0_4] : memref<12x64xbf16, #tpu.memory_space<vmem>>, vector<12x64xbf16>
    %c0_5 = arith.constant 0 : index
    %c0_6 = arith.constant 0 : index
    %4 = vector.load %arg4[%c0_5, %c0_6] : memref<64x128xbf16, #tpu.memory_space<vmem>>, vector<64x128xbf16>
    %cst_7 = arith.constant dense<0.000000e+00> : vector<12x128xf32>
    %5 = tpu.matmul %3, %4, %cst_7 {dimension_numbers = #tpu.dot_dimension_numbers<[1], [0], [0], [1], [0, 0, 1, 1], [], []>} : vector<12x64xbf16>, vector<64x128xbf16>, vector<12x128xf32> -> vector<12x128xf32>
    %6 = arith.addf %2, %5 : vector<12x128xf32>
    %c0_8 = arith.constant 0 : index
    %c0_9 = arith.constant 0 : index
    %7 = vector.load %arg5[%c0_8, %c0_9] : memref<1x128xf32, #tpu.memory_space<vmem>>, vector<1x128xf32>
    %8 = vector.broadcast %7 : vector<1x128xf32> to vector<12x128xf32>
    %9 = arith.addf %6, %8 : vector<12x128xf32>
    %cst_10 = arith.constant 0.000000e+00 : f32
    %10 = vector.broadcast %cst_10 : f32 to vector<12x128xf32>
    %11 = arith.maximumf %9, %10 : vector<12x128xf32>
    %12 = arith.truncf %11 : vector<12x128xf32> to vector<12x128xbf16>
    %c0_11 = arith.constant 0 : index
    %c0_12 = arith.constant 0 : index
    %13 = vector.load %arg6[%c0_11, %c0_12] : memref<12x128xbf16, #tpu.memory_space<vmem>>, vector<12x128xbf16>
    tpu.vector_store %arg6[%c0_11, %c0_12], %12 {strides = array<i32>} : memref<12x128xbf16, #tpu.memory_space<vmem>>, vector<12x128xbf16>,
    return
  }
  func.func @transform_0(%arg0: i32) -> (i32, i32) {
    %c0_i32 = arith.constant 0 : i32
    %c0_i32_0 = arith.constant 0 : i32
    return %arg0, %c0_i32 : i32, i32
  }
  func.func @transform_1(%arg0: i32) -> (i32, i32) {
    %c0_i32 = arith.constant 0 : i32
    %c0_i32_0 = arith.constant 0 : i32
    return %arg0, %c0_i32 : i32, i32
  }
  func.func @transform_2(%arg0: i32) -> (i32, i32) {
    %c0_i32 = arith.constant 0 : i32
    %c0_i32_0 = arith.constant 0 : i32
    %c0_i32_1 = arith.constant 0 : i32
    return %c0_i32, %c0_i32_0 : i32, i32
  }
  func.func @transform_3(%arg0: i32) -> (i32, i32) {
    %c0_i32 = arith.constant 0 : i32
    %c0_i32_0 = arith.constant 0 : i32
    %c0_i32_1 = arith.constant 0 : i32
    return %c0_i32, %c0_i32_0 : i32, i32
  }
  func.func @transform_4(%arg0: i32) -> (i32, i32) {
    %c0_i32 = arith.constant 0 : i32
    %c0_i32_0 = arith.constant 0 : i32
    %c0_i32_1 = arith.constant 0 : i32
    return %c0_i32, %c0_i32_0 : i32, i32
  }
  func.func @transform_5(%arg0: i32) -> (i32, i32) {
    %c0_i32 = arith.constant 0 : i32
    %c0_i32_0 = arith.constant 0 : i32
    return %arg0, %c0_i32 : i32, i32
  }
}

module attributes {stable_mosaic.version = 11 : i64} {
  func.func @_mm_fused_kernel(%arg0: i32, %arg1: memref<22x32xbf16, #tpu.memory_space<vmem>>, %arg2: memref<22x32xbf16, #tpu.memory_space<vmem>>, %arg3: memref<32x64xbf16, #tpu.memory_space<vmem>>, %arg4: memref<1x64xf32, #tpu.memory_space<vmem>>, %arg5: memref<22x32xbf16, #tpu.memory_space<vmem>>) attributes {dimension_semantics = [#tpu.dimension_semantics<parallel>], iteration_bounds = array<i64: 1>, scalar_prefetch = 0 : i64, scratch_operands = 0 : i64, tpu.core_type = #tpu.core_type<tc>, window_params = [{transform_indices = @transform_0, window_bounds = array<i64: 22, 32>}, {transform_indices = @transform_1, window_bounds = array<i64: 22, 32>}, {pipeline_mode = #tpu.pipeline_mode<synchronous>, transform_indices = @transform_2, window_bounds = array<i64: 32, 64>}, {pipeline_mode = #tpu.pipeline_mode<synchronous>, transform_indices = @transform_3, window_bounds = array<i64: 1, 64>}, {transform_indices = @transform_4, window_bounds = array<i64: 22, 32>}]} {
    %c0 = arith.constant 0 : index
    %c0_0 = arith.constant 0 : index
    %0 = vector.load %arg1[%c0, %c0_0] : memref<22x32xbf16, #tpu.memory_space<vmem>>, vector<22x32xbf16>
    %1 = arith.extf %0 : vector<22x32xbf16> to vector<22x32xf32>
    %c0_1 = arith.constant 0 : index
    %c0_2 = arith.constant 0 : index
    %2 = vector.load %arg2[%c0_1, %c0_2] : memref<22x32xbf16, #tpu.memory_space<vmem>>, vector<22x32xbf16>
    %3 = arith.extf %2 : vector<22x32xbf16> to vector<22x32xf32>
    %4 = arith.addf %1, %3 : vector<22x32xf32>
    %5 = arith.truncf %4 : vector<22x32xf32> to vector<22x32xbf16>
    %c0_3 = arith.constant 0 : index
    %c0_4 = arith.constant 0 : index
    %6 = vector.load %arg3[%c0_3, %c0_4] : memref<32x64xbf16, #tpu.memory_space<vmem>>, vector<32x64xbf16>
    %cst = arith.constant dense<0.000000e+00> : vector<22x64xf32>
    %7 = tpu.matmul %5, %6, %cst {dimension_numbers = #tpu.dot_dimension_numbers<[1], [0], [0], [1], [0, 0, 1, 1], [], []>} : vector<22x32xbf16>, vector<32x64xbf16>, vector<22x64xf32> -> vector<22x64xf32>
    %c0_5 = arith.constant 0 : index
    %c0_6 = arith.constant 0 : index
    %8 = vector.load %arg4[%c0_5, %c0_6] : memref<1x64xf32, #tpu.memory_space<vmem>>, vector<1x64xf32>
    %9 = vector.broadcast %8 : vector<1x64xf32> to vector<22x64xf32>
    %10 = arith.addf %7, %9 : vector<22x64xf32>
    %11 = vector.extract_strided_slice %10 {offsets = [0, 0], sizes = [22, 32], strides = [1, 1]} : vector<22x64xf32> to vector<22x32xf32>
    %12 = vector.extract_strided_slice %10 {offsets = [0, 32], sizes = [22, 32], strides = [1, 1]} : vector<22x64xf32> to vector<22x32xf32>
    %13 = arith.negf %12 : vector<22x32xf32>
    %14 = math.exp %13 : vector<22x32xf32>
    %cst_7 = arith.constant 1.000000e+00 : f32
    %15 = vector.broadcast %cst_7 : f32 to vector<22x32xf32>
    %16 = arith.addf %15, %14 : vector<22x32xf32>
    %17 = arith.divf %15, %16 : vector<22x32xf32>
    %18 = arith.mulf %11, %17 : vector<22x32xf32>
    %19 = arith.truncf %18 : vector<22x32xf32> to vector<22x32xbf16>
    %c0_8 = arith.constant 0 : index
    %c0_9 = arith.constant 0 : index
    %20 = vector.load %arg5[%c0_8, %c0_9] : memref<22x32xbf16, #tpu.memory_space<vmem>>, vector<22x32xbf16>
    tpu.vector_store %arg5[%c0_8, %c0_9], %19 {strides = array<i32>} : memref<22x32xbf16, #tpu.memory_space<vmem>>, vector<22x32xbf16>,
    return
  }
  func.func @transform_0(%arg0: i32) -> (i32, i32) {
    %c0_i32 = arith.constant 0 : i32
    %c0_i32_0 = arith.constant 0 : i32
    return %arg0, %c0_i32 : i32, i32
  }
  func.func @transform_1(%arg0: i32) -> (i32, i32) {
    %c0_i32 = arith.constant 0 : i32
    %c0_i32_0 = arith.constant 0 : i32
    return %arg0, %c0_i32 : i32, i32
  }
  func.func @transform_2(%arg0: i32) -> (i32, i32) {
    %c0_i32 = arith.constant 0 : i32
    %c0_i32_0 = arith.constant 0 : i32
    %c0_i32_1 = arith.constant 0 : i32
    return %c0_i32, %c0_i32_0 : i32, i32
  }
  func.func @transform_3(%arg0: i32) -> (i32, i32) {
    %c0_i32 = arith.constant 0 : i32
    %c0_i32_0 = arith.constant 0 : i32
    %c0_i32_1 = arith.constant 0 : i32
    return %c0_i32, %c0_i32_0 : i32, i32
  }
  func.func @transform_4(%arg0: i32) -> (i32, i32) {
    %c0_i32 = arith.constant 0 : i32
    %c0_i32_0 = arith.constant 0 : i32
    return %arg0, %c0_i32 : i32, i32
  }
}

module attributes {stable_mosaic.version = 11 : i64} {
  func.func @_mm_fused_kernel(%arg0: i32, %arg1: memref<24x32xbf16, #tpu.memory_space<vmem>>, %arg2: memref<24x32xbf16, #tpu.memory_space<vmem>>, %arg3: memref<32x64xbf16, #tpu.memory_space<vmem>>, %arg4: memref<32x64xbf16, #tpu.memory_space<vmem>>, %arg5: memref<1x64xf32, #tpu.memory_space<vmem>>, %arg6: memref<24x64xbf16, #tpu.memory_space<vmem>>) attributes {dimension_semantics = [#tpu.dimension_semantics<parallel>], iteration_bounds = array<i64: 1>, scalar_prefetch = 0 : i64, scratch_operands = 0 : i64, tpu.core_type = #tpu.core_type<tc>, window_params = [{transform_indices = @transform_0, window_bounds = array<i64: 24, 32>}, {transform_indices = @transform_1, window_bounds = array<i64: 24, 32>}, {pipeline_mode = #tpu.pipeline_mode<synchronous>, transform_indices = @transform_2, window_bounds = array<i64: 32, 64>}, {pipeline_mode = #tpu.pipeline_mode<synchronous>, transform_indices = @transform_3, window_bounds = array<i64: 32, 64>}, {pipeline_mode = #tpu.pipeline_mode<synchronous>, transform_indices = @transform_4, window_bounds = array<i64: 1, 64>}, {transform_indices = @transform_5, window_bounds = array<i64: 24, 64>}]} {
    %c0 = arith.constant 0 : index
    %c0_0 = arith.constant 0 : index
    %0 = vector.load %arg1[%c0, %c0_0] : memref<24x32xbf16, #tpu.memory_space<vmem>>, vector<24x32xbf16>
    %c0_1 = arith.constant 0 : index
    %c0_2 = arith.constant 0 : index
    %1 = vector.load %arg3[%c0_1, %c0_2] : memref<32x64xbf16, #tpu.memory_space<vmem>>, vector<32x64xbf16>
    %cst = arith.constant dense<0.000000e+00> : vector<24x64xf32>
    %2 = tpu.matmul %0, %1, %cst {dimension_numbers = #tpu.dot_dimension_numbers<[1], [0], [0], [1], [0, 0, 1, 1], [], []>} : vector<24x32xbf16>, vector<32x64xbf16>, vector<24x64xf32> -> vector<24x64xf32>
    %c0_3 = arith.constant 0 : index
    %c0_4 = arith.constant 0 : index
    %3 = vector.load %arg2[%c0_3, %c0_4] : memref<24x32xbf16, #tpu.memory_space<vmem>>, vector<24x32xbf16>
    %c0_5 = arith.constant 0 : index
    %c0_6 = arith.constant 0 : index
    %4 = vector.load %arg4[%c0_5, %c0_6] : memref<32x64xbf16, #tpu.memory_space<vmem>>, vector<32x64xbf16>
    %cst_7 = arith.constant dense<0.000000e+00> : vector<24x64xf32>
    %5 = tpu.matmul %3, %4, %cst_7 {dimension_numbers = #tpu.dot_dimension_numbers<[1], [0], [0], [1], [0, 0, 1, 1], [], []>} : vector<24x32xbf16>, vector<32x64xbf16>, vector<24x64xf32> -> vector<24x64xf32>
    %6 = arith.addf %2, %5 : vector<24x64xf32>
    %c0_8 = arith.constant 0 : index
    %c0_9 = arith.constant 0 : index
    %7 = vector.load %arg5[%c0_8, %c0_9] : memref<1x64xf32, #tpu.memory_space<vmem>>, vector<1x64xf32>
    %8 = vector.broadcast %7 : vector<1x64xf32> to vector<24x64xf32>
    %9 = arith.addf %6, %8 : vector<24x64xf32>
    %cst_10 = arith.constant 0.000000e+00 : f32
    %10 = vector.broadcast %cst_10 : f32 to vector<24x64xf32>
    %11 = arith.maximumf %9, %10 : vector<24x64xf32>
    %12 = arith.truncf %11 : vector<24x64xf32> to vector<24x64xbf16>
    %c0_11 = arith.constant 0 : index
    %c0_12 = arith.constant 0 : index
    %13 = vector.load %arg6[%c0_11, %c0_12] : memref<24x64xbf16, #tpu.memory_space<vmem>>, vector<24x64xbf16>
    tpu.vector_store %arg6[%c0_11, %c0_12], %12 {strides = array<i32>} : memref<24x64xbf16, #tpu.memory_space<vmem>>, vector<24x64xbf16>,
    return
  }
  func.func @transform_0(%arg0: i32) -> (i32, i32) {
    %c0_i32 = arith.constant 0 : i32
    %c0_i32_0 = arith.constant 0 : i32
    return %arg0, %c0_i32 : i32, i32
  }
  func.func @transform_1(%arg0: i32) -> (i32, i32) {
    %c0_i32 = arith.constant 0 : i32
    %c0_i32_0 = arith.constant 0 : i32
    return %arg0, %c0_i32 : i32, i32
  }
  func.func @transform_2(%arg0: i32) -> (i32, i32) {
    %c0_i32 = arith.constant 0 : i32
    %c0_i32_0 = arith.constant 0 : i32
    %c0_i32_1 = arith.constant 0 : i32
    return %c0_i32, %c0_i32_0 : i32, i32
  }
  func.func @transform_3(%arg0: i32) -> (i32, i32) {
    %c0_i32 = arith.constant 0 : i32
    %c0_i32_0 = arith.constant 0 : i32
    %c0_i32_1 = arith.constant 0 : i32
    return %c0_i32, %c0_i32_0 : i32, i32
  }
  func.func @transform_4(%arg0: i32) -> (i32, i32) {
    %c0_i32 = arith.constant 0 : i32
    %c0_i32_0 = arith.constant 0 : i32
    %c0_i32_1 = arith.constant 0 : i32
    return %c0_i32, %c0_i32_0 : i32, i32
  }
  func.func @transform_5(%arg0: i32) -> (i32, i32) {
    %c0_i32 = arith.constant 0 : i32
    %c0_i32_0 = arith.constant 0 : i32
    return %arg0, %c0_i32 : i32, i32
  }
}

module attributes {stable_mosaic.version = 11 : i64} {
  func.func @_mm_fused_kernel(%arg0: i32, %arg1: memref<70x16xbf16, #tpu.memory_space<vmem>>, %arg2: memref<70x16xbf16, #tpu.memory_space<vmem>>, %arg3: memref<16x32xbf16, #tpu.memory_space<vmem>>, %arg4: memref<1x32xf32, #tpu.memory_space<vmem>>, %arg5: memref<70x16xbf16, #tpu.memory_space<vmem>>) attributes {dimension_semantics = [#tpu.dimension_semantics<parallel>], iteration_bounds = array<i64: 1>, scalar_prefetch = 0 : i64, scratch_operands = 0 : i64, tpu.core_type = #tpu.core_type<tc>, window_params = [{transform_indices = @transform_0, window_bounds = array<i64: 70, 16>}, {transform_indices = @transform_1, window_bounds = array<i64: 70, 16>}, {pipeline_mode = #tpu.pipeline_mode<synchronous>, transform_indices = @transform_2, window_bounds = array<i64: 16, 32>}, {pipeline_mode = #tpu.pipeline_mode<synchronous>, transform_indices = @transform_3, window_bounds = array<i64: 1, 32>}, {transform_indices = @transform_4, window_bounds = array<i64: 70, 16>}]} {
    %c0 = arith.constant 0 : index
    %c0_0 = arith.constant 0 : index
    %0 = vector.load %arg1[%c0, %c0_0] : memref<70x16xbf16, #tpu.memory_space<vmem>>, vector<70x16xbf16>
    %1 = arith.extf %0 : vector<70x16xbf16> to vector<70x16xf32>
    %c0_1 = arith.constant 0 : index
    %c0_2 = arith.constant 0 : index
    %2 = vector.load %arg2[%c0_1, %c0_2] : memref<70x16xbf16, #tpu.memory_space<vmem>>, vector<70x16xbf16>
    %3 = arith.extf %2 : vector<70x16xbf16> to vector<70x16xf32>
    %4 = arith.addf %1, %3 : vector<70x16xf32>
    %5 = arith.truncf %4 : vector<70x16xf32> to vector<70x16xbf16>
    %c0_3 = arith.constant 0 : index
    %c0_4 = arith.constant 0 : index
    %6 = vector.load %arg3[%c0_3, %c0_4] : memref<16x32xbf16, #tpu.memory_space<vmem>>, vector<16x32xbf16>
    %cst = arith.constant dense<0.000000e+00> : vector<70x32xf32>
    %7 = tpu.matmul %5, %6, %cst {dimension_numbers = #tpu.dot_dimension_numbers<[1], [0], [0], [1], [0, 0, 1, 1], [], []>} : vector<70x16xbf16>, vector<16x32xbf16>, vector<70x32xf32> -> vector<70x32xf32>
    %c0_5 = arith.constant 0 : index
    %c0_6 = arith.constant 0 : index
    %8 = vector.load %arg4[%c0_5, %c0_6] : memref<1x32xf32, #tpu.memory_space<vmem>>, vector<1x32xf32>
    %9 = vector.broadcast %8 : vector<1x32xf32> to vector<70x32xf32>
    %10 = arith.addf %7, %9 : vector<70x32xf32>
    %11 = vector.extract_strided_slice %10 {offsets = [0, 0], sizes = [70, 16], strides = [1, 1]} : vector<70x32xf32> to vector<70x16xf32>
    %12 = vector.extract_strided_slice %10 {offsets = [0, 16], sizes = [70, 16], strides = [1, 1]} : vector<70x32xf32> to vector<70x16xf32>
    %13 = arith.negf %12 : vector<70x16xf32>
    %14 = math.exp %13 : vector<70x16xf32>
    %cst_7 = arith.constant 1.000000e+00 : f32
    %15 = vector.broadcast %cst_7 : f32 to vector<70x16xf32>
    %16 = arith.addf %15, %14 : vector<70x16xf32>
    %17 = arith.divf %15, %16 : vector<70x16xf32>
    %18 = arith.mulf %11, %17 : vector<70x16xf32>
    %19 = arith.truncf %18 : vector<70x16xf32> to vector<70x16xbf16>
    %c0_8 = arith.constant 0 : index
    %c0_9 = arith.constant 0 : index
    %20 = vector.load %arg5[%c0_8, %c0_9] : memref<70x16xbf16, #tpu.memory_space<vmem>>, vector<70x16xbf16>
    tpu.vector_store %arg5[%c0_8, %c0_9], %19 {strides = array<i32>} : memref<70x16xbf16, #tpu.memory_space<vmem>>, vector<70x16xbf16>,
    return
  }
  func.func @transform_0(%arg0: i32) -> (i32, i32) {
    %c0_i32 = arith.constant 0 : i32
    %c0_i32_0 = arith.constant 0 : i32
    return %arg0, %c0_i32 : i32, i32
  }
  func.func @transform_1(%arg0: i32) -> (i32, i32) {
    %c0_i32 = arith.constant 0 : i32
    %c0_i32_0 = arith.constant 0 : i32
    return %arg0, %c0_i32 : i32, i32
  }
  func.func @transform_2(%arg0: i32) -> (i32, i32) {
    %c0_i32 = arith.constant 0 : i32
    %c0_i32_0 = arith.constant 0 : i32
    %c0_i32_1 = arith.constant 0 : i32
    return %c0_i32, %c0_i32_0 : i32, i32
  }
  func.func @transform_3(%arg0: i32) -> (i32, i32) {
    %c0_i32 = arith.constant 0 : i32
    %c0_i32_0 = arith.constant 0 : i32
    %c0_i32_1 = arith.constant 0 : i32
    return %c0_i32, %c0_i32_0 : i32, i32
  }
  func.func @transform_4(%arg0: i32) -> (i32, i32) {
    %c0_i32 = arith.constant 0 : i32
    %c0_i32_0 = arith.constant 0 : i32
    return %arg0, %c0_i32 : i32, i32
  }
}

module attributes {stable_mosaic.version = 11 : i64} {
  func.func @_mm_fused_kernel(%arg0: i32, %arg1: memref<72x16xbf16, #tpu.memory_space<vmem>>, %arg2: memref<72x16xbf16, #tpu.memory_space<vmem>>, %arg3: memref<16x32xbf16, #tpu.memory_space<vmem>>, %arg4: memref<16x32xbf16, #tpu.memory_space<vmem>>, %arg5: memref<1x32xf32, #tpu.memory_space<vmem>>, %arg6: memref<72x32xbf16, #tpu.memory_space<vmem>>) attributes {dimension_semantics = [#tpu.dimension_semantics<parallel>], iteration_bounds = array<i64: 1>, scalar_prefetch = 0 : i64, scratch_operands = 0 : i64, tpu.core_type = #tpu.core_type<tc>, window_params = [{transform_indices = @transform_0, window_bounds = array<i64: 72, 16>}, {transform_indices = @transform_1, window_bounds = array<i64: 72, 16>}, {pipeline_mode = #tpu.pipeline_mode<synchronous>, transform_indices = @transform_2, window_bounds = array<i64: 16, 32>}, {pipeline_mode = #tpu.pipeline_mode<synchronous>, transform_indices = @transform_3, window_bounds = array<i64: 16, 32>}, {pipeline_mode = #tpu.pipeline_mode<synchronous>, transform_indices = @transform_4, window_bounds = array<i64: 1, 32>}, {transform_indices = @transform_5, window_bounds = array<i64: 72, 32>}]} {
    %c0 = arith.constant 0 : index
    %c0_0 = arith.constant 0 : index
    %0 = vector.load %arg1[%c0, %c0_0] : memref<72x16xbf16, #tpu.memory_space<vmem>>, vector<72x16xbf16>
    %c0_1 = arith.constant 0 : index
    %c0_2 = arith.constant 0 : index
    %1 = vector.load %arg3[%c0_1, %c0_2] : memref<16x32xbf16, #tpu.memory_space<vmem>>, vector<16x32xbf16>
    %cst = arith.constant dense<0.000000e+00> : vector<72x32xf32>
    %2 = tpu.matmul %0, %1, %cst {dimension_numbers = #tpu.dot_dimension_numbers<[1], [0], [0], [1], [0, 0, 1, 1], [], []>} : vector<72x16xbf16>, vector<16x32xbf16>, vector<72x32xf32> -> vector<72x32xf32>
    %c0_3 = arith.constant 0 : index
    %c0_4 = arith.constant 0 : index
    %3 = vector.load %arg2[%c0_3, %c0_4] : memref<72x16xbf16, #tpu.memory_space<vmem>>, vector<72x16xbf16>
    %c0_5 = arith.constant 0 : index
    %c0_6 = arith.constant 0 : index
    %4 = vector.load %arg4[%c0_5, %c0_6] : memref<16x32xbf16, #tpu.memory_space<vmem>>, vector<16x32xbf16>
    %cst_7 = arith.constant dense<0.000000e+00> : vector<72x32xf32>
    %5 = tpu.matmul %3, %4, %cst_7 {dimension_numbers = #tpu.dot_dimension_numbers<[1], [0], [0], [1], [0, 0, 1, 1], [], []>} : vector<72x16xbf16>, vector<16x32xbf16>, vector<72x32xf32> -> vector<72x32xf32>
    %6 = arith.addf %2, %5 : vector<72x32xf32>
    %c0_8 = arith.constant 0 : index
    %c0_9 = arith.constant 0 : index
    %7 = vector.load %arg5[%c0_8, %c0_9] : memref<1x32xf32, #tpu.memory_space<vmem>>, vector<1x32xf32>
    %8 = vector.broadcast %7 : vector<1x32xf32> to vector<72x32xf32>
    %9 = arith.addf %6, %8 : vector<72x32xf32>
    %cst_10 = arith.constant 0.000000e+00 : f32
    %10 = vector.broadcast %cst_10 : f32 to vector<72x32xf32>
    %11 = arith.maximumf %9, %10 : vector<72x32xf32>
    %12 = arith.truncf %11 : vector<72x32xf32> to vector<72x32xbf16>
    %c0_11 = arith.constant 0 : index
    %c0_12 = arith.constant 0 : index
    %13 = vector.load %arg6[%c0_11, %c0_12] : memref<72x32xbf16, #tpu.memory_space<vmem>>, vector<72x32xbf16>
    tpu.vector_store %arg6[%c0_11, %c0_12], %12 {strides = array<i32>} : memref<72x32xbf16, #tpu.memory_space<vmem>>, vector<72x32xbf16>,
    return
  }
  func.func @transform_0(%arg0: i32) -> (i32, i32) {
    %c0_i32 = arith.constant 0 : i32
    %c0_i32_0 = arith.constant 0 : i32
    return %arg0, %c0_i32 : i32, i32
  }
  func.func @transform_1(%arg0: i32) -> (i32, i32) {
    %c0_i32 = arith.constant 0 : i32
    %c0_i32_0 = arith.constant 0 : i32
    return %arg0, %c0_i32 : i32, i32
  }
  func.func @transform_2(%arg0: i32) -> (i32, i32) {
    %c0_i32 = arith.constant 0 : i32
    %c0_i32_0 = arith.constant 0 : i32
    %c0_i32_1 = arith.constant 0 : i32
    return %c0_i32, %c0_i32_0 : i32, i32
  }
  func.func @transform_3(%arg0: i32) -> (i32, i32) {
    %c0_i32 = arith.constant 0 : i32
    %c0_i32_0 = arith.constant 0 : i32
    %c0_i32_1 = arith.constant 0 : i32
    return %c0_i32, %c0_i32_0 : i32, i32
  }
  func.func @transform_4(%arg0: i32) -> (i32, i32) {
    %c0_i32 = arith.constant 0 : i32
    %c0_i32_0 = arith.constant 0 : i32
    %c0_i32_1 = arith.constant 0 : i32
    return %c0_i32, %c0_i32_0 : i32, i32
  }
  func.func @transform_5(%arg0: i32) -> (i32, i32) {
    %c0_i32 = arith.constant 0 : i32
    %c0_i32_0 = arith.constant 0 : i32
    return %arg0, %c0_i32 : i32, i32
  }
}

module attributes {stable_mosaic.version = 11 : i64} {
  func.func @_mm_fused_kernel(%arg0: i32, %arg1: memref<262x8xbf16, #tpu.memory_space<vmem>>, %arg2: memref<262x8xbf16, #tpu.memory_space<vmem>>, %arg3: memref<8x16xbf16, #tpu.memory_space<vmem>>, %arg4: memref<1x16xf32, #tpu.memory_space<vmem>>, %arg5: memref<262x8xbf16, #tpu.memory_space<vmem>>) attributes {dimension_semantics = [#tpu.dimension_semantics<parallel>], iteration_bounds = array<i64: 1>, scalar_prefetch = 0 : i64, scratch_operands = 0 : i64, tpu.core_type = #tpu.core_type<tc>, window_params = [{transform_indices = @transform_0, window_bounds = array<i64: 262, 8>}, {transform_indices = @transform_1, window_bounds = array<i64: 262, 8>}, {pipeline_mode = #tpu.pipeline_mode<synchronous>, transform_indices = @transform_2, window_bounds = array<i64: 8, 16>}, {pipeline_mode = #tpu.pipeline_mode<synchronous>, transform_indices = @transform_3, window_bounds = array<i64: 1, 16>}, {transform_indices = @transform_4, window_bounds = array<i64: 262, 8>}]} {
    %c0 = arith.constant 0 : index
    %c0_0 = arith.constant 0 : index
    %0 = vector.load %arg1[%c0, %c0_0] : memref<262x8xbf16, #tpu.memory_space<vmem>>, vector<262x8xbf16>
    %1 = arith.extf %0 : vector<262x8xbf16> to vector<262x8xf32>
    %c0_1 = arith.constant 0 : index
    %c0_2 = arith.constant 0 : index
    %2 = vector.load %arg2[%c0_1, %c0_2] : memref<262x8xbf16, #tpu.memory_space<vmem>>, vector<262x8xbf16>
    %3 = arith.extf %2 : vector<262x8xbf16> to vector<262x8xf32>
    %4 = arith.addf %1, %3 : vector<262x8xf32>
    %5 = arith.truncf %4 : vector<262x8xf32> to vector<262x8xbf16>
    %c0_3 = arith.constant 0 : index
    %c0_4 = arith.constant 0 : index
    %6 = vector.load %arg3[%c0_3, %c0_4] : memref<8x16xbf16, #tpu.memory_space<vmem>>, vector<8x16xbf16>
    %cst = arith.constant dense<0.000000e+00> : vector<262x16xf32>
    %7 = tpu.matmul %5, %6, %cst {dimension_numbers = #tpu.dot_dimension_numbers<[1], [0], [0], [1], [0, 0, 1, 1], [], []>} : vector<262x8xbf16>, vector<8x16xbf16>, vector<262x16xf32> -> vector<262x16xf32>
    %c0_5 = arith.constant 0 : index
    %c0_6 = arith.constant 0 : index
    %8 = vector.load %arg4[%c0_5, %c0_6] : memref<1x16xf32, #tpu.memory_space<vmem>>, vector<1x16xf32>
    %9 = vector.broadcast %8 : vector<1x16xf32> to vector<262x16xf32>
    %10 = arith.addf %7, %9 : vector<262x16xf32>
    %11 = vector.extract_strided_slice %10 {offsets = [0, 0], sizes = [262, 8], strides = [1, 1]} : vector<262x16xf32> to vector<262x8xf32>
    %12 = vector.extract_strided_slice %10 {offsets = [0, 8], sizes = [262, 8], strides = [1, 1]} : vector<262x16xf32> to vector<262x8xf32>
    %13 = arith.negf %12 : vector<262x8xf32>
    %14 = math.exp %13 : vector<262x8xf32>
    %cst_7 = arith.constant 1.000000e+00 : f32
    %15 = vector.broadcast %cst_7 : f32 to vector<262x8xf32>
    %16 = arith.addf %15, %14 : vector<262x8xf32>
    %17 = arith.divf %15, %16 : vector<262x8xf32>
    %18 = arith.mulf %11, %17 : vector<262x8xf32>
    %19 = arith.truncf %18 : vector<262x8xf32> to vector<262x8xbf16>
    %c0_8 = arith.constant 0 : index
    %c0_9 = arith.constant 0 : index
    %20 = vector.load %arg5[%c0_8, %c0_9] : memref<262x8xbf16, #tpu.memory_space<vmem>>, vector<262x8xbf16>
    tpu.vector_store %arg5[%c0_8, %c0_9], %19 {strides = array<i32>} : memref<262x8xbf16, #tpu.memory_space<vmem>>, vector<262x8xbf16>,
    return
  }
  func.func @transform_0(%arg0: i32) -> (i32, i32) {
    %c0_i32 = arith.constant 0 : i32
    %c0_i32_0 = arith.constant 0 : i32
    return %arg0, %c0_i32 : i32, i32
  }
  func.func @transform_1(%arg0: i32) -> (i32, i32) {
    %c0_i32 = arith.constant 0 : i32
    %c0_i32_0 = arith.constant 0 : i32
    return %arg0, %c0_i32 : i32, i32
  }
  func.func @transform_2(%arg0: i32) -> (i32, i32) {
    %c0_i32 = arith.constant 0 : i32
    %c0_i32_0 = arith.constant 0 : i32
    %c0_i32_1 = arith.constant 0 : i32
    return %c0_i32, %c0_i32_0 : i32, i32
  }
  func.func @transform_3(%arg0: i32) -> (i32, i32) {
    %c0_i32 = arith.constant 0 : i32
    %c0_i32_0 = arith.constant 0 : i32
    %c0_i32_1 = arith.constant 0 : i32
    return %c0_i32, %c0_i32_0 : i32, i32
  }
  func.func @transform_4(%arg0: i32) -> (i32, i32) {
    %c0_i32 = arith.constant 0 : i32
    %c0_i32_0 = arith.constant 0 : i32
    return %arg0, %c0_i32 : i32, i32
  }
}

module attributes {stable_mosaic.version = 11 : i64} {
  func.func @_mm_fused_kernel(%arg0: i32, %arg1: memref<264x8xbf16, #tpu.memory_space<vmem>>, %arg2: memref<264x8xbf16, #tpu.memory_space<vmem>>, %arg3: memref<8x8xbf16, #tpu.memory_space<vmem>>, %arg4: memref<8x8xbf16, #tpu.memory_space<vmem>>, %arg5: memref<1x8xf32, #tpu.memory_space<vmem>>, %arg6: memref<264x8xf32, #tpu.memory_space<vmem>>) attributes {dimension_semantics = [#tpu.dimension_semantics<parallel>], iteration_bounds = array<i64: 1>, scalar_prefetch = 0 : i64, scratch_operands = 0 : i64, tpu.core_type = #tpu.core_type<tc>, window_params = [{transform_indices = @transform_0, window_bounds = array<i64: 264, 8>}, {transform_indices = @transform_1, window_bounds = array<i64: 264, 8>}, {pipeline_mode = #tpu.pipeline_mode<synchronous>, transform_indices = @transform_2, window_bounds = array<i64: 8, 8>}, {pipeline_mode = #tpu.pipeline_mode<synchronous>, transform_indices = @transform_3, window_bounds = array<i64: 8, 8>}, {pipeline_mode = #tpu.pipeline_mode<synchronous>, transform_indices = @transform_4, window_bounds = array<i64: 1, 8>}, {transform_indices = @transform_5, window_bounds = array<i64: 264, 8>}]} {
    %c0 = arith.constant 0 : index
    %c0_0 = arith.constant 0 : index
    %0 = vector.load %arg1[%c0, %c0_0] : memref<264x8xbf16, #tpu.memory_space<vmem>>, vector<264x8xbf16>
    %c0_1 = arith.constant 0 : index
    %c0_2 = arith.constant 0 : index
    %1 = vector.load %arg3[%c0_1, %c0_2] : memref<8x8xbf16, #tpu.memory_space<vmem>>, vector<8x8xbf16>
    %cst = arith.constant dense<0.000000e+00> : vector<264x8xf32>
    %2 = tpu.matmul %0, %1, %cst {dimension_numbers = #tpu.dot_dimension_numbers<[1], [0], [0], [1], [0, 0, 1, 1], [], []>} : vector<264x8xbf16>, vector<8x8xbf16>, vector<264x8xf32> -> vector<264x8xf32>
    %c0_3 = arith.constant 0 : index
    %c0_4 = arith.constant 0 : index
    %3 = vector.load %arg2[%c0_3, %c0_4] : memref<264x8xbf16, #tpu.memory_space<vmem>>, vector<264x8xbf16>
    %c0_5 = arith.constant 0 : index
    %c0_6 = arith.constant 0 : index
    %4 = vector.load %arg4[%c0_5, %c0_6] : memref<8x8xbf16, #tpu.memory_space<vmem>>, vector<8x8xbf16>
    %cst_7 = arith.constant dense<0.000000e+00> : vector<264x8xf32>
    %5 = tpu.matmul %3, %4, %cst_7 {dimension_numbers = #tpu.dot_dimension_numbers<[1], [0], [0], [1], [0, 0, 1, 1], [], []>} : vector<264x8xbf16>, vector<8x8xbf16>, vector<264x8xf32> -> vector<264x8xf32>
    %6 = arith.addf %2, %5 : vector<264x8xf32>
    %c0_8 = arith.constant 0 : index
    %c0_9 = arith.constant 0 : index
    %7 = vector.load %arg5[%c0_8, %c0_9] : memref<1x8xf32, #tpu.memory_space<vmem>>, vector<1x8xf32>
    %8 = vector.broadcast %7 : vector<1x8xf32> to vector<264x8xf32>
    %9 = arith.addf %6, %8 : vector<264x8xf32>
    %c0_10 = arith.constant 0 : index
    %c0_11 = arith.constant 0 : index
    %10 = vector.load %arg6[%c0_10, %c0_11] : memref<264x8xf32, #tpu.memory_space<vmem>>, vector<264x8xf32>
    tpu.vector_store %arg6[%c0_10, %c0_11], %9 {strides = array<i32>} : memref<264x8xf32, #tpu.memory_space<vmem>>, vector<264x8xf32>,
    return
  }
  func.func @transform_0(%arg0: i32) -> (i32, i32) {
    %c0_i32 = arith.constant 0 : i32
    %c0_i32_0 = arith.constant 0 : i32
    return %arg0, %c0_i32 : i32, i32
  }
  func.func @transform_1(%arg0: i32) -> (i32, i32) {
    %c0_i32 = arith.constant 0 : i32
    %c0_i32_0 = arith.constant 0 : i32
    return %arg0, %c0_i32 : i32, i32
  }
  func.func @transform_2(%arg0: i32) -> (i32, i32) {
    %c0_i32 = arith.constant 0 : i32
    %c0_i32_0 = arith.constant 0 : i32
    %c0_i32_1 = arith.constant 0 : i32
    return %c0_i32, %c0_i32_0 : i32, i32
  }
  func.func @transform_3(%arg0: i32) -> (i32, i32) {
    %c0_i32 = arith.constant 0 : i32
    %c0_i32_0 = arith.constant 0 : i32
    %c0_i32_1 = arith.constant 0 : i32
    return %c0_i32, %c0_i32_0 : i32, i32
  }
  func.func @transform_4(%arg0: i32) -> (i32, i32) {
    %c0_i32 = arith.constant 0 : i32
    %c0_i32_0 = arith.constant 0 : i32
    %c0_i32_1 = arith.constant 0 : i32
    return %c0_i32, %c0_i32_0 : i32, i32
  }
  func.func @transform_5(%arg0: i32) -> (i32, i32) {
    %c0_i32 = arith.constant 0 : i32
    %c0_i32_0 = arith.constant 0 : i32
    return %arg0, %c0_i32 : i32, i32
  }
}

</mosaic_0001>

<llo_original>
// kernel: wav_autoencoder_forward.23
$region0: #{wav_autoencoder_forward.23}
  #allocation0 [shape = 'u32[]', space=smem, size = 0x4, offset = 0x4, fixed_abs, tag = 'smem constant byte address 0x4 - core index']
  #allocation1 [shape = 'u32[144,128]{1,0:T(1,128)}', space=vmem, size = 0x12000, scoped, tag = 'internal scratch']
  %s0 = inlined_call_operand.vmem [shape: bf16[254,8], index: 0, kind: input, shape index: {}]
  %s1 = inlined_call_operand.vmem [shape: bf16[254,8], index: 1, kind: input, shape index: {}]
  %s2 = inlined_call_operand.vmem [shape: bf16[8,8], index: 2, kind: input, shape index: {}]
  %s3 = inlined_call_operand.vmem [shape: bf16[8,8], index: 3, kind: input, shape index: {}]
  %s4 = inlined_call_operand.vmem [shape: f32[1,8], index: 4, kind: input, shape index: {}]
  %s5 = inlined_call_operand.vmem [shape: bf16[254,8], index: 5, kind: output, shape index: {}]
  %s6 = sld [smem:[#allocation0]]
  $region30: #{wav_autoencoder_forward.23} parent=0
    _
  %s8 = ssub.s32 1, %s6
  %s9 = scalar_select 0, %s8, %s6
  // Predicated region
  $region2: #{wav_autoencoder_forward.23} parent=0 // pred_check
    _
  $region3: #{wav_autoencoder_forward.23} parent=0 // pred_check_branch
    %11 = sbr.rel (0) target = $region5
  $region4: #{wav_autoencoder_forward.23} parent=0 // pred_region
    _
  $region5: #{wav_autoencoder_forward.23} parent=0 // pred_fallthru
    _
  // Predicated region
  $region6: #{wav_autoencoder_forward.23} parent=0 // pred_check
    _
  $region7: #{wav_autoencoder_forward.23} parent=0 // pred_check_branch
    %13 = sbr.rel (0) target = $region9
  $region8: #{wav_autoencoder_forward.23} parent=0 // pred_region
    _
  $region9: #{wav_autoencoder_forward.23} parent=0 // pred_fallthru
    _
  // Predicated region
  $region10: #{wav_autoencoder_forward.23} parent=0 // pred_check
    _
  $region11: #{wav_autoencoder_forward.23} parent=0 // pred_check_branch
    %15 = sbr.rel (0) target = $region13
  $region12: #{wav_autoencoder_forward.23} parent=0 // pred_region
    _
  $region13: #{wav_autoencoder_forward.23} parent=0 // pred_fallthru
    _
  // Predicated region
  $region14: #{wav_autoencoder_forward.23} parent=0 // pred_check
    _
  $region15: #{wav_autoencoder_forward.23} parent=0 // pred_check_branch
    %17 = sbr.rel (0) target = $region17
  $region16: #{wav_autoencoder_forward.23} parent=0 // pred_region
    _
  $region17: #{wav_autoencoder_forward.23} parent=0 // pred_fallthru
    _
  // Predicated region
  $region18: #{wav_autoencoder_forward.23} parent=0 // pred_check
    _
  $region19: #{wav_autoencoder_forward.23} parent=0 // pred_check_branch
    %19 = sbr.rel (0) target = $region21
  $region20: #{wav_autoencoder_forward.23} parent=0 // pred_region
    _
  $region21: #{wav_autoencoder_forward.23} parent=0 // pred_fallthru
    _
  %v21 = vld [vmem:[%s0] sm:$0xf]
  %v22 = vld [vmem:[%s0 + $0x4] sm:$0xf]
  %v23 = vld [vmem:[%s0 + $0x8] sm:$0xf]
  %v24 = vld [vmem:[%s0 + $0xc] sm:$0xf]
  %v25 = vld [vmem:[%s0 + $0x10] sm:$0xf]
  %v26 = vld [vmem:[%s0 + $0x14] sm:$0xf]
  %v27 = vld [vmem:[%s0 + $0x18] sm:$0xf]
  %v28 = vld [vmem:[%s0 + $0x1c] sm:$0xf]
  %v29 = vld [vmem:[%s0 + $0x20] sm:$0xf]
  %v30 = vld [vmem:[%s0 + $0x24] sm:$0xf]
  %v31 = vld [vmem:[%s0 + $0x28] sm:$0xf]
  %v32 = vld [vmem:[%s0 + $0x2c] sm:$0xf]
  %v33 = vld [vmem:[%s0 + $0x30] sm:$0xf]
  %v34 = vld [vmem:[%s0 + $0x34] sm:$0xf]
  %v35 = vld [vmem:[%s0 + $0x38] sm:$0xf]
  %v36 = vld [vmem:[%s0 + $0x3c] sm:$0xf]
  %v37 = vld [vmem:[%s0 + $0x40] sm:$0xf]
  %v38 = vld [vmem:[%s0 + $0x44] sm:$0xf]
  %v39 = vld [vmem:[%s0 + $0x48] sm:$0xf]
  %v40 = vld [vmem:[%s0 + $0x4c] sm:$0xf]
  %v41 = vld [vmem:[%s0 + $0x50] sm:$0xf]
  %v42 = vld [vmem:[%s0 + $0x54] sm:$0xf]
  %v43 = vld [vmem:[%s0 + $0x58] sm:$0xf]
  %v44 = vld [vmem:[%s0 + $0x5c] sm:$0xf]
  %v45 = vld [vmem:[%s0 + $0x60] sm:$0xf]
  %v46 = vld [vmem:[%s0 + $0x64] sm:$0xf]
  %v47 = vld [vmem:[%s0 + $0x68] sm:$0xf]
  %v48 = vld [vmem:[%s0 + $0x6c] sm:$0xf]
  %v49 = vld [vmem:[%s0 + $0x70] sm:$0xf]
  %v50 = vld [vmem:[%s0 + $0x74] sm:$0xf]
  %v51 = vld [vmem:[%s0 + $0x78] sm:$0xf]
  %v52 = vld [vmem:[%s0 + $0x7c] sm:$0x7]
  %v53 = vld [vmem:[%s2] sm:$0xf]
  %v54 = vld [vmem:[%s1] sm:$0xf]
  %v55 = vld [vmem:[%s1 + $0x4] sm:$0xf]
  %v56 = vld [vmem:[%s1 + $0x8] sm:$0xf]
  %v57 = vld [vmem:[%s1 + $0xc] sm:$0xf]
  %v58 = vld [vmem:[%s1 + $0x10] sm:$0xf]
  %v59 = vld [vmem:[%s1 + $0x14] sm:$0xf]
  %v60 = vld [vmem:[%s1 + $0x18] sm:$0xf]
  %v61 = vld [vmem:[%s1 + $0x1c] sm:$0xf]
  %v62 = vld [vmem:[%s1 + $0x20] sm:$0xf]
  %v63 = vld [vmem:[%s1 + $0x24] sm:$0xf]
  %v64 = vld [vmem:[%s1 + $0x28] sm:$0xf]
  %v65 = vld [vmem:[%s1 + $0x2c] sm:$0xf]
  %v66 = vld [vmem:[%s1 + $0x30] sm:$0xf]
  %v67 = vld [vmem:[%s1 + $0x34] sm:$0xf]
  %v68 = vld [vmem:[%s1 + $0x38] sm:$0xf]
  %v69 = vld [vmem:[%s1 + $0x3c] sm:$0xf]
  %v70 = vld [vmem:[%s1 + $0x40] sm:$0xf]
  %v71 = vld [vmem:[%s1 + $0x44] sm:$0xf]
  %v72 = vld [vmem:[%s1 + $0x48] sm:$0xf]
  %v73 = vld [vmem:[%s1 + $0x4c] sm:$0xf]
  %v74 = vld [vmem:[%s1 + $0x50] sm:$0xf]
  %v75 = vld [vmem:[%s1 + $0x54] sm:$0xf]
  %v76 = vld [vmem:[%s1 + $0x58] sm:$0xf]
  %v77 = vld [vmem:[%s1 + $0x5c] sm:$0xf]
  %v78 = vld [vmem:[%s1 + $0x60] sm:$0xf]
  %v79 = vld [vmem:[%s1 + $0x64] sm:$0xf]
  %v80 = vld [vmem:[%s1 + $0x68] sm:$0xf]
  %v81 = vld [vmem:[%s1 + $0x6c] sm:$0xf]
  %v82 = vld [vmem:[%s1 + $0x70] sm:$0xf]
  %v83 = vld [vmem:[%s1 + $0x74] sm:$0xf]
  %v84 = vld [vmem:[%s1 + $0x78] sm:$0xf]
  %v85 = vld [vmem:[%s1 + $0x7c] sm:$0x7]
  %v86 = vld [vmem:[%s3] sm:$0xf]
  %v119 = vunpack.c.l.b16 %v54
  %v120 = vunpack.c.l.b16 %v55
  %v121 = vunpack.c.l.b16 %v56
  %v122 = vunpack.c.l.b16 %v57
  %v123 = vunpack.c.l.b16 %v58
  %v124 = vunpack.c.l.b16 %v59
  %v125 = vunpack.c.l.b16 %v60
  %v126 = vunpack.c.l.b16 %v61
  %v127 = vunpack.c.l.b16 %v62
  %v128 = vunpack.c.l.b16 %v63
  %v129 = vunpack.c.l.b16 %v64
  %v130 = vunpack.c.l.b16 %v65
  %v131 = vunpack.c.l.b16 %v66
  %v132 = vunpack.c.l.b16 %v67
  %v133 = vunpack.c.l.b16 %v68
  %v134 = vunpack.c.l.b16 %v69
  %v135 = vunpack.c.l.b16 %v70
  %v136 = vunpack.c.l.b16 %v71
  %v137 = vunpack.c.l.b16 %v72
  %v138 = vunpack.c.l.b16 %v73
  %v139 = vunpack.c.l.b16 %v74
  %v140 = vunpack.c.l.b16 %v75
  %v141 = vunpack.c.l.b16 %v76
  %v142 = vunpack.c.l.b16 %v77
  %v143 = vunpack.c.l.b16 %v78
  %v144 = vunpack.c.l.b16 %v79
  %v145 = vunpack.c.l.b16 %v80
  %v146 = vunpack.c.l.b16 %v81
  %v147 = vunpack.c.l.b16 %v82
  %v148 = vunpack.c.l.b16 %v83
  %v149 = vunpack.c.l.b16 %v84
  %v150 = vunpack.c.l.b16 %v85
  %v151 = vpack.c.b16 %v120, %v119
  %v152 = vpack.c.b16 %v122, %v121
  %v153 = vpack.c.b16 %v124, %v123
  %v154 = vpack.c.b16 %v126, %v125
  %v155 = vpack.c.b16 %v128, %v127
  %v156 = vpack.c.b16 %v130, %v129
  %v157 = vpack.c.b16 %v132, %v131
  %v158 = vpack.c.b16 %v134, %v133
  %v159 = vpack.c.b16 %v136, %v135
  %v160 = vpack.c.b16 %v138, %v137
  %v161 = vpack.c.b16 %v140, %v139
  %v162 = vpack.c.b16 %v142, %v141
  %v163 = vpack.c.b16 %v144, %v143
  %v164 = vpack.c.b16 %v146, %v145
  %v165 = vpack.c.b16 %v148, %v147
  %v166 = vpack.c.b16 %v150, %v149
  %vm167 = vcmask 64512
  %v169 = vsel %vm167, %v151, 0
  %v172 = vsel %vm167, %v152, 0
  %v175 = vsel %vm167, %v153, 0
  %v178 = vsel %vm167, %v154, 0
  %v181 = vsel %vm167, %v155, 0
  %v184 = vsel %vm167, %v156, 0
  %v187 = vsel %vm167, %v157, 0
  %v190 = vsel %vm167, %v158, 0
  %v193 = vsel %vm167, %v159, 0
  %v196 = vsel %vm167, %v160, 0
  %v199 = vsel %vm167, %v161, 0
  %v202 = vsel %vm167, %v162, 0
  %v205 = vsel %vm167, %v163, 0
  %v208 = vsel %vm167, %v164, 0
  %v211 = vsel %vm167, %v165, 0
  %v214 = vsel %vm167, %v166, 0
  %vm216 = vcmask 1043456
  %v218 = vsel %vm216, %v86, 0
  %220 = vmatprep.subr.bf16.mxu0 0
  %221 = vmatpush1.bf16.msra.mxu0 %v218
  %222 = vmatprep.subr.bf16.mxu0 0
  %223 = vmatpush1.bf16.msra.mxu0 0
  %224 = vmatprep.subr.bf16.mxu0 0
  %225 = vmatpush1.bf16.msra.mxu0 0
  %226 = vmatprep.subr.bf16.mxu0 0
  %227 = vmatpush1.bf16.msra.mxu0 0
  %228 = vmatprep.subr.bf16.mxu0 0
  %229 = vmatpush1.bf16.msra.mxu0 0
  %230 = vmatprep.subr.bf16.mxu0 0
  %231 = vmatpush1.bf16.msra.mxu0 0
  %232 = vmatprep.subr.bf16.mxu0 0
  %233 = vmatpush1.bf16.msra.mxu0 0
  %234 = vmatprep.subr.bf16.mxu0 0
  %235 = vmatpush1.bf16.msra.mxu0 0
  %236 = vmatprep.subr.bf16.mxu0 0
  %237 = vmatpush1.bf16.msra.mxu0 0
  %238 = vmatprep.subr.bf16.mxu0 0
  %239 = vmatpush1.bf16.msra.mxu0 0
  %240 = vmatprep.subr.bf16.mxu0 0
  %241 = vmatpush1.bf16.msra.mxu0 0
  %242 = vmatprep.subr.bf16.mxu0 0
  %243 = vmatpush1.bf16.msra.mxu0 0
  %244 = vmatprep.subr.bf16.mxu0 0
  %245 = vmatpush1.bf16.msra.mxu0 0
  %246 = vmatprep.subr.bf16.mxu0 0
  %247 = vmatpush1.bf16.msra.mxu0 0
  %248 = vmatprep.subr.bf16.mxu0 0
  %249 = vmatpush1.bf16.msra.mxu0 0
  %250 = vmatprep.subr.bf16.mxu0 0
  %251 = vmatpush1.bf16.msra.mxu0 0
  %252 = vmatprep.mubr.bf16.mxu0 0
  %253 = vmatmul.mubr.bf16.gmra.mrb[0].mxu0 %v169
  %v254 = vpop.f32.mrb[0].mxu0
  %v255 = vadd.f32 0.0, %v254
  %v256 = vpop.f32.mrb[0].mxu0
  %v257 = vpop.f32.mrb[0].mxu0
  %v258 = vadd.f32 0.0, %v257
  %v259 = vpop.f32.mrb[0].mxu0
  %260 = vmatprep.mubr.bf16.mxu0 0
  %261 = vmatmul.mubr.bf16.gmra.mrb[0].mxu0 %v172
  %v262 = vpop.f32.mrb[0].mxu0
  %v263 = vadd.f32 0.0, %v262
  %v264 = vpop.f32.mrb[0].mxu0
  %v265 = vpop.f32.mrb[0].mxu0
  %v266 = vadd.f32 0.0, %v265
  %v267 = vpop.f32.mrb[0].mxu0
  %268 = vmatprep.mubr.bf16.mxu0 0
  %269 = vmatmul.mubr.bf16.gmra.mrb[0].mxu0 %v175
  %v270 = vpop.f32.mrb[0].mxu0
  %v271 = vadd.f32 0.0, %v270
  %v272 = vpop.f32.mrb[0].mxu0
  %v273 = vpop.f32.mrb[0].mxu0
  %v274 = vadd.f32 0.0, %v273
  %v275 = vpop.f32.mrb[0].mxu0
  %276 = vmatprep.mubr.bf16.mxu0 0
  %277 = vmatmul.mubr.bf16.gmra.mrb[0].mxu0 %v178
  %v278 = vpop.f32.mrb[0].mxu0
  %v279 = vadd.f32 0.0, %v278
  %v280 = vpop.f32.mrb[0].mxu0
  %v281 = vpop.f32.mrb[0].mxu0
  %v282 = vadd.f32 0.0, %v281
  %v283 = vpop.f32.mrb[0].mxu0
  %284 = vmatprep.mubr.bf16.mxu0 0
  %285 = vmatmul.mubr.bf16.gmra.mrb[0].mxu0 %v181
  %v286 = vpop.f32.mrb[0].mxu0
  %v287 = vadd.f32 0.0, %v286
  %v288 = vpop.f32.mrb[0].mxu0
  %v289 = vpop.f32.mrb[0].mxu0
  %v290 = vadd.f32 0.0, %v289
  %v291 = vpop.f32.mrb[0].mxu0
  %292 = vmatprep.mubr.bf16.mxu0 0
  %293 = vmatmul.mubr.bf16.gmra.mrb[0].mxu0 %v184
  %v294 = vpop.f32.mrb[0].mxu0
  %v295 = vadd.f32 0.0, %v294
  %v296 = vpop.f32.mrb[0].mxu0
  %v297 = vpop.f32.mrb[0].mxu0
  %v298 = vadd.f32 0.0, %v297
  %v299 = vpop.f32.mrb[0].mxu0
  %300 = vmatprep.mubr.bf16.mxu0 0
  %301 = vmatmul.mubr.bf16.gmra.mrb[0].mxu0 %v187
  %v302 = vpop.f32.mrb[0].mxu0
  %v303 = vadd.f32 0.0, %v302
  %v304 = vpop.f32.mrb[0].mxu0
  %v305 = vpop.f32.mrb[0].mxu0
  %v306 = vadd.f32 0.0, %v305
  %v307 = vpop.f32.mrb[0].mxu0
  %308 = vmatprep.mubr.bf16.mxu0 0
  %309 = vmatmul.mubr.bf16.gmra.mrb[0].mxu0 %v190
  %v310 = vpop.f32.mrb[0].mxu0
  %v311 = vadd.f32 0.0, %v310
  %v312 = vpop.f32.mrb[0].mxu0
  %v313 = vpop.f32.mrb[0].mxu0
  %v314 = vadd.f32 0.0, %v313
  %v315 = vpop.f32.mrb[0].mxu0
  %316 = vmatprep.mubr.bf16.mxu0 0
  %317 = vmatmul.mubr.bf16.gmra.mrb[0].mxu0 %v193
  %v318 = vpop.f32.mrb[0].mxu0
  %v319 = vadd.f32 0.0, %v318
  %v320 = vpop.f32.mrb[0].mxu0
  %v321 = vpop.f32.mrb[0].mxu0
  %v322 = vadd.f32 0.0, %v321
  %v323 = vpop.f32.mrb[0].mxu0
  %324 = vmatprep.mubr.bf16.mxu0 0
  %325 = vmatmul.mubr.bf16.gmra.mrb[0].mxu0 %v196
  %v326 = vpop.f32.mrb[0].mxu0
  %v327 = vadd.f32 0.0, %v326
  %v328 = vpop.f32.mrb[0].mxu0
  %v329 = vpop.f32.mrb[0].mxu0
  %v330 = vadd.f32 0.0, %v329
  %v331 = vpop.f32.mrb[0].mxu0
  %332 = vmatprep.mubr.bf16.mxu0 0
  %333 = vmatmul.mubr.bf16.gmra.mrb[0].mxu0 %v199
  %v334 = vpop.f32.mrb[0].mxu0
  %v335 = vadd.f32 0.0, %v334
  %v336 = vpop.f32.mrb[0].mxu0
  %v337 = vpop.f32.mrb[0].mxu0
  %v338 = vadd.f32 0.0, %v337
  %v339 = vpop.f32.mrb[0].mxu0
  %340 = vmatprep.mubr.bf16.mxu0 0
  %341 = vmatmul.mubr.bf16.gmra.mrb[0].mxu0 %v202
  %v342 = vpop.f32.mrb[0].mxu0
  %v343 = vadd.f32 0.0, %v342
  %v344 = vpop.f32.mrb[0].mxu0
  %v345 = vpop.f32.mrb[0].mxu0
  %v346 = vadd.f32 0.0, %v345
  %v347 = vpop.f32.mrb[0].mxu0
  %348 = vmatprep.mubr.bf16.mxu0 0
  %349 = vmatmul.mubr.bf16.gmra.mrb[0].mxu0 %v205
  %v350 = vpop.f32.mrb[0].mxu0
  %v351 = vadd.f32 0.0, %v350
  %v352 = vpop.f32.mrb[0].mxu0
  %v353 = vpop.f32.mrb[0].mxu0
  %v354 = vadd.f32 0.0, %v353
  %v355 = vpop.f32.mrb[0].mxu0
  %356 = vmatprep.mubr.bf16.mxu0 0
  %357 = vmatmul.mubr.bf16.gmra.mrb[0].mxu0 %v208
  %v358 = vpop.f32.mrb[0].mxu0
  %v359 = vadd.f32 0.0, %v358
  %v360 = vpop.f32.mrb[0].mxu0
  %v361 = vpop.f32.mrb[0].mxu0
  %v362 = vadd.f32 0.0, %v361
  %v363 = vpop.f32.mrb[0].mxu0
  %364 = vmatprep.mubr.bf16.mxu0 0
  %365 = vmatmul.mubr.bf16.gmra.mrb[0].mxu0 %v211
  %v366 = vpop.f32.mrb[0].mxu0
  %v367 = vadd.f32 0.0, %v366
  %v368 = vpop.f32.mrb[0].mxu0
  %v369 = vpop.f32.mrb[0].mxu0
  %v370 = vadd.f32 0.0, %v369
  %v371 = vpop.f32.mrb[0].mxu0
  %372 = vmatprep.mubr.bf16.mxu0 0
  %373 = vmatmul.mubr.bf16.gmra.mrb[0].mxu0 %v214
  %v374 = vpop.f32.mrb[0].mxu0
  %v375 = vadd.f32 0.0, %v374
  %v376 = vpop.f32.mrb[0].mxu0
  %v377 = vpop.f32.mrb[0].mxu0
  %v378 = vadd.f32 0.0, %v377
  %v379 = vpop.f32.mrb[0].mxu0
  %380 = vdwg.mxu0
  %v413 = vunpack.c.l.b16 %v21
  %v414 = vunpack.c.l.b16 %v22
  %v415 = vunpack.c.l.b16 %v23
  %v416 = vunpack.c.l.b16 %v24
  %v417 = vunpack.c.l.b16 %v25
  %v418 = vunpack.c.l.b16 %v26
  %v419 = vunpack.c.l.b16 %v27
  %v420 = vunpack.c.l.b16 %v28
  %v421 = vunpack.c.l.b16 %v29
  %v422 = vunpack.c.l.b16 %v30
  %v423 = vunpack.c.l.b16 %v31
  %v424 = vunpack.c.l.b16 %v32
  %v425 = vunpack.c.l.b16 %v33
  %v426 = vunpack.c.l.b16 %v34
  %v427 = vunpack.c.l.b16 %v35
  %v428 = vunpack.c.l.b16 %v36
  %v429 = vunpack.c.l.b16 %v37
  %v430 = vunpack.c.l.b16 %v38
  %v431 = vunpack.c.l.b16 %v39
  %v432 = vunpack.c.l.b16 %v40
  %v433 = vunpack.c.l.b16 %v41
  %v434 = vunpack.c.l.b16 %v42
  %v435 = vunpack.c.l.b16 %v43
  %v436 = vunpack.c.l.b16 %v44
  %v437 = vunpack.c.l.b16 %v45
  %v438 = vunpack.c.l.b16 %v46
  %v439 = vunpack.c.l.b16 %v47
  %v440 = vunpack.c.l.b16 %v48
  %v441 = vunpack.c.l.b16 %v49
  %v442 = vunpack.c.l.b16 %v50
  %v443 = vunpack.c.l.b16 %v51
  %v444 = vunpack.c.l.b16 %v52
  %v445 = vpack.c.b16 %v414, %v413
  %v446 = vpack.c.b16 %v416, %v415
  %v447 = vpack.c.b16 %v418, %v417
  %v448 = vpack.c.b16 %v420, %v419
  %v449 = vpack.c.b16 %v422, %v421
  %v450 = vpack.c.b16 %v424, %v423
  %v451 = vpack.c.b16 %v426, %v425
  %v452 = vpack.c.b16 %v428, %v427
  %v453 = vpack.c.b16 %v430, %v429
  %v454 = vpack.c.b16 %v432, %v431
  %v455 = vpack.c.b16 %v434, %v433
  %v456 = vpack.c.b16 %v436, %v435
  %v457 = vpack.c.b16 %v438, %v437
  %v458 = vpack.c.b16 %v440, %v439
  %v459 = vpack.c.b16 %v442, %v441
  %v460 = vpack.c.b16 %v444, %v443
  %v462 = vsel %vm167, %v445, 0
  %v465 = vsel %vm167, %v446, 0
  %v468 = vsel %vm167, %v447, 0
  %v471 = vsel %vm167, %v448, 0
  %v474 = vsel %vm167, %v449, 0
  %v477 = vsel %vm167, %v450, 0
  %v480 = vsel %vm167, %v451, 0
  %v483 = vsel %vm167, %v452, 0
  %v486 = vsel %vm167, %v453, 0
  %v489 = vsel %vm167, %v454, 0
  %v492 = vsel %vm167, %v455, 0
  %v495 = vsel %vm167, %v456, 0
  %v498 = vsel %vm167, %v457, 0
  %v501 = vsel %vm167, %v458, 0
  %v504 = vsel %vm167, %v459, 0
  %v507 = vsel %vm167, %v460, 0
  %v510 = vsel %vm216, %v53, 0
  %512 = vmatprep.subr.bf16.mxu0 0
  %513 = vmatpush1.bf16.msra.mxu0 %v510
  %514 = vmatprep.subr.bf16.mxu0 0
  %515 = vmatpush1.bf16.msra.mxu0 0
  %516 = vmatprep.subr.bf16.mxu0 0
  %517 = vmatpush1.bf16.msra.mxu0 0
  %518 = vmatprep.subr.bf16.mxu0 0
  %519 = vmatpush1.bf16.msra.mxu0 0
  %520 = vmatprep.subr.bf16.mxu0 0
  %521 = vmatpush1.bf16.msra.mxu0 0
  %522 = vmatprep.subr.bf16.mxu0 0
  %523 = vmatpush1.bf16.msra.mxu0 0
  %524 = vmatprep.subr.bf16.mxu0 0
  %525 = vmatpush1.bf16.msra.mxu0 0
  %526 = vmatprep.subr.bf16.mxu0 0
  %527 = vmatpush1.bf16.msra.mxu0 0
  %528 = vmatprep.subr.bf16.mxu0 0
  %529 = vmatpush1.bf16.msra.mxu0 0
  %530 = vmatprep.subr.bf16.mxu0 0
  %531 = vmatpush1.bf16.msra.mxu0 0
  %532 = vmatprep.subr.bf16.mxu0 0
  %533 = vmatpush1.bf16.msra.mxu0 0
  %534 = vmatprep.subr.bf16.mxu0 0
  %535 = vmatpush1.bf16.msra.mxu0 0
  %536 = vmatprep.subr.bf16.mxu0 0
  %537 = vmatpush1.bf16.msra.mxu0 0
  %538 = vmatprep.subr.bf16.mxu0 0
  %539 = vmatpush1.bf16.msra.mxu0 0
  %540 = vmatprep.subr.bf16.mxu0 0
  %541 = vmatpush1.bf16.msra.mxu0 0
  %542 = vmatprep.subr.bf16.mxu0 0
  %543 = vmatpush1.bf16.msra.mxu0 0
  %544 = vmatprep.mubr.bf16.mxu0 0
  %545 = vmatmul.mubr.bf16.gmra.mrb[0].mxu0 %v462
  %v546 = vpop.f32.mrb[0].mxu0
  %v547 = vadd.f32 %v255, %v546
  %v548 = vpop.f32.mrb[0].mxu0
  %v549 = vpop.f32.mrb[0].mxu0
  %v550 = vadd.f32 %v258, %v549
  %v551 = vpop.f32.mrb[0].mxu0
  %552 = vmatprep.mubr.bf16.mxu0 0
  %553 = vmatmul.mubr.bf16.gmra.mrb[0].mxu0 %v465
  %v554 = vpop.f32.mrb[0].mxu0
  %v555 = vadd.f32 %v263, %v554
  %v556 = vpop.f32.mrb[0].mxu0
  %v557 = vpop.f32.mrb[0].mxu0
  %v558 = vadd.f32 %v266, %v557
  %v559 = vpop.f32.mrb[0].mxu0
  %560 = vmatprep.mubr.bf16.mxu0 0
  %561 = vmatmul.mubr.bf16.gmra.mrb[0].mxu0 %v468
  %v562 = vpop.f32.mrb[0].mxu0
  %v563 = vadd.f32 %v271, %v562
  %v564 = vpop.f32.mrb[0].mxu0
  %v565 = vpop.f32.mrb[0].mxu0
  %v566 = vadd.f32 %v274, %v565
  %v567 = vpop.f32.mrb[0].mxu0
  %568 = vmatprep.mubr.bf16.mxu0 0
  %569 = vmatmul.mubr.bf16.gmra.mrb[0].mxu0 %v471
  %v570 = vpop.f32.mrb[0].mxu0
  %v571 = vadd.f32 %v279, %v570
  %v572 = vpop.f32.mrb[0].mxu0
  %v573 = vpop.f32.mrb[0].mxu0
  %v574 = vadd.f32 %v282, %v573
  %v575 = vpop.f32.mrb[0].mxu0
  %576 = vmatprep.mubr.bf16.mxu0 0
  %577 = vmatmul.mubr.bf16.gmra.mrb[0].mxu0 %v474
  %v578 = vpop.f32.mrb[0].mxu0
  %v579 = vadd.f32 %v287, %v578
  %v580 = vpop.f32.mrb[0].mxu0
  %v581 = vpop.f32.mrb[0].mxu0
  %v582 = vadd.f32 %v290, %v581
  %v583 = vpop.f32.mrb[0].mxu0
  %584 = vmatprep.mubr.bf16.mxu0 0
  %585 = vmatmul.mubr.bf16.gmra.mrb[0].mxu0 %v477
  %v586 = vpop.f32.mrb[0].mxu0
  %v587 = vadd.f32 %v295, %v586
  %v588 = vpop.f32.mrb[0].mxu0
  %v589 = vpop.f32.mrb[0].mxu0
  %v590 = vadd.f32 %v298, %v589
  %v591 = vpop.f32.mrb[0].mxu0
  %592 = vmatprep.mubr.bf16.mxu0 0
  %593 = vmatmul.mubr.bf16.gmra.mrb[0].mxu0 %v480
  %v594 = vpop.f32.mrb[0].mxu0
  %v595 = vadd.f32 %v303, %v594
  %v596 = vpop.f32.mrb[0].mxu0
  %v597 = vpop.f32.mrb[0].mxu0
  %v598 = vadd.f32 %v306, %v597
  %v599 = vpop.f32.mrb[0].mxu0
  %600 = vmatprep.mubr.bf16.mxu0 0
  %601 = vmatmul.mubr.bf16.gmra.mrb[0].mxu0 %v483
  %v602 = vpop.f32.mrb[0].mxu0
  %v603 = vadd.f32 %v311, %v602
  %v604 = vpop.f32.mrb[0].mxu0
  %v605 = vpop.f32.mrb[0].mxu0
  %v606 = vadd.f32 %v314, %v605
  %v607 = vpop.f32.mrb[0].mxu0
  %608 = vmatprep.mubr.bf16.mxu0 0
  %609 = vmatmul.mubr.bf16.gmra.mrb[0].mxu0 %v486
  %v610 = vpop.f32.mrb[0].mxu0
  %v611 = vadd.f32 %v319, %v610
  %v612 = vpop.f32.mrb[0].mxu0
  %v613 = vpop.f32.mrb[0].mxu0
  %v614 = vadd.f32 %v322, %v613
  %v615 = vpop.f32.mrb[0].mxu0
  %616 = vmatprep.mubr.bf16.mxu0 0
  %617 = vmatmul.mubr.bf16.gmra.mrb[0].mxu0 %v489
  %v618 = vpop.f32.mrb[0].mxu0
  %v619 = vadd.f32 %v327, %v618
  %v620 = vpop.f32.mrb[0].mxu0
  %v621 = vpop.f32.mrb[0].mxu0
  %v622 = vadd.f32 %v330, %v621
  %v623 = vpop.f32.mrb[0].mxu0
  %624 = vmatprep.mubr.bf16.mxu0 0
  %625 = vmatmul.mubr.bf16.gmra.mrb[0].mxu0 %v492
  %v626 = vpop.f32.mrb[0].mxu0
  %v627 = vadd.f32 %v335, %v626
  %v628 = vpop.f32.mrb[0].mxu0
  %v629 = vpop.f32.mrb[0].mxu0
  %v630 = vadd.f32 %v338, %v629
  %v631 = vpop.f32.mrb[0].mxu0
  %632 = vmatprep.mubr.bf16.mxu0 0
  %633 = vmatmul.mubr.bf16.gmra.mrb[0].mxu0 %v495
  %v634 = vpop.f32.mrb[0].mxu0
  %v635 = vadd.f32 %v343, %v634
  %v636 = vpop.f32.mrb[0].mxu0
  %v637 = vpop.f32.mrb[0].mxu0
  %v638 = vadd.f32 %v346, %v637
  %v639 = vpop.f32.mrb[0].mxu0
  %640 = vmatprep.mubr.bf16.mxu0 0
  %641 = vmatmul.mubr.bf16.gmra.mrb[0].mxu0 %v498
  %v642 = vpop.f32.mrb[0].mxu0
  %v643 = vadd.f32 %v351, %v642
  %v644 = vpop.f32.mrb[0].mxu0
  %v645 = vpop.f32.mrb[0].mxu0
  %v646 = vadd.f32 %v354, %v645
  %v647 = vpop.f32.mrb[0].mxu0
  %648 = vmatprep.mubr.bf16.mxu0 0
  %649 = vmatmul.mubr.bf16.gmra.mrb[0].mxu0 %v501
  %v650 = vpop.f32.mrb[0].mxu0
  %v651 = vadd.f32 %v359, %v650
  %v652 = vpop.f32.mrb[0].mxu0
  %v653 = vpop.f32.mrb[0].mxu0
  %v654 = vadd.f32 %v362, %v653
  %v655 = vpop.f32.mrb[0].mxu0
  %656 = vmatprep.mubr.bf16.mxu0 0
  %657 = vmatmul.mubr.bf16.gmra.mrb[0].mxu0 %v504
  %v658 = vpop.f32.mrb[0].mxu0
  %v659 = vadd.f32 %v367, %v658
  %v660 = vpop.f32.mrb[0].mxu0
  %v661 = vpop.f32.mrb[0].mxu0
  %v662 = vadd.f32 %v370, %v661
  %v663 = vpop.f32.mrb[0].mxu0
  %664 = vmatprep.mubr.bf16.mxu0 0
  %665 = vmatmul.mubr.bf16.gmra.mrb[0].mxu0 %v507
  %v666 = vpop.f32.mrb[0].mxu0
  %v667 = vadd.f32 %v375, %v666
  %v668 = vpop.f32.mrb[0].mxu0
  %v669 = vpop.f32.mrb[0].mxu0
  %v670 = vadd.f32 %v378, %v669
  %v671 = vpop.f32.mrb[0].mxu0
  %672 = vdwg.mxu0
  %v673 = vld [vmem:[%s4] sm:$0x1]
  %v675 = vlaneseq
  %v676 = vshrl.u32 %v675, 7
  %v677 = vsub.s32 0, %v676
  %v678 = vrot.slane %v673, %v677
  %v680 = vadd.f32 %v547, %v678
  %v681 = vadd.f32 %v550, %v678
  %v682 = vadd.f32 %v555, %v678
  %v683 = vadd.f32 %v558, %v678
  %v684 = vadd.f32 %v563, %v678
  %v685 = vadd.f32 %v566, %v678
  %v686 = vadd.f32 %v571, %v678
  %v687 = vadd.f32 %v574, %v678
  %v688 = vadd.f32 %v579, %v678
  %v689 = vadd.f32 %v582, %v678
  %v690 = vadd.f32 %v587, %v678
  %v691 = vadd.f32 %v590, %v678
  %v692 = vadd.f32 %v595, %v678
  %v693 = vadd.f32 %v598, %v678
  %v694 = vadd.f32 %v603, %v678
  %v695 = vadd.f32 %v606, %v678
  %v696 = vadd.f32 %v611, %v678
  %v697 = vadd.f32 %v614, %v678
  %v698 = vadd.f32 %v619, %v678
  %v699 = vadd.f32 %v622, %v678
  %v700 = vadd.f32 %v627, %v678
  %v701 = vadd.f32 %v630, %v678
  %v702 = vadd.f32 %v635, %v678
  %v703 = vadd.f32 %v638, %v678
  %v704 = vadd.f32 %v643, %v678
  %v705 = vadd.f32 %v646, %v678
  %v706 = vadd.f32 %v651, %v678
  %v707 = vadd.f32 %v654, %v678
  %v708 = vadd.f32 %v659, %v678
  %v709 = vadd.f32 %v662, %v678
  %v710 = vadd.f32 %v667, %v678
  %v711 = vadd.f32 %v670, %v678
  %v712 = vmax.f32 %v680, 0.0
  %v713 = vmax.f32 %v681, 0.0
  %v714 = vmax.f32 %v682, 0.0
  %v715 = vmax.f32 %v683, 0.0
  %v716 = vmax.f32 %v684, 0.0
  %v717 = vmax.f32 %v685, 0.0
  %v718 = vmax.f32 %v686, 0.0
  %v719 = vmax.f32 %v687, 0.0
  %v720 = vmax.f32 %v688, 0.0
  %v721 = vmax.f32 %v689, 0.0
  %v722 = vmax.f32 %v690, 0.0
  %v723 = vmax.f32 %v691, 0.0
  %v724 = vmax.f32 %v692, 0.0
  %v725 = vmax.f32 %v693, 0.0
  %v726 = vmax.f32 %v694, 0.0
  %v727 = vmax.f32 %v695, 0.0
  %v728 = vmax.f32 %v696, 0.0
  %v729 = vmax.f32 %v697, 0.0
  %v730 = vmax.f32 %v698, 0.0
  %v731 = vmax.f32 %v699, 0.0
  %v732 = vmax.f32 %v700, 0.0
  %v733 = vmax.f32 %v701, 0.0
  %v734 = vmax.f32 %v702, 0.0
  %v735 = vmax.f32 %v703, 0.0
  %v736 = vmax.f32 %v704, 0.0
  %v737 = vmax.f32 %v705, 0.0
  %v738 = vmax.f32 %v706, 0.0
  %v739 = vmax.f32 %v707, 0.0
  %v740 = vmax.f32 %v708, 0.0
  %v741 = vmax.f32 %v709, 0.0
  %v742 = vmax.f32 %v710, 0.0
  %v743 = vmax.f32 %v711, 0.0
  %v744 = vpack.c.bf16 %v713, %v712
  %v745 = vpack.c.bf16 %v715, %v714
  %v746 = vpack.c.bf16 %v717, %v716
  %v747 = vpack.c.bf16 %v719, %v718
  %v748 = vpack.c.bf16 %v721, %v720
  %v749 = vpack.c.bf16 %v723, %v722
  %v750 = vpack.c.bf16 %v725, %v724
  %v751 = vpack.c.bf16 %v727, %v726
  %v752 = vpack.c.bf16 %v729, %v728
  %v753 = vpack.c.bf16 %v731, %v730
  %v754 = vpack.c.bf16 %v733, %v732
  %v755 = vpack.c.bf16 %v735, %v734
  %v756 = vpack.c.bf16 %v737, %v736
  %v757 = vpack.c.bf16 %v739, %v738
  %v758 = vpack.c.bf16 %v741, %v740
  %v759 = vpack.c.bf16 %v743, %v742
  %v776 = vunpack.c.l.b16 %v744
  %v777 = vunpack.c.h.b16 %v744
  %v778 = vunpack.c.l.b16 %v745
  %v779 = vunpack.c.h.b16 %v745
  %v780 = vunpack.c.l.b16 %v746
  %v781 = vunpack.c.h.b16 %v746
  %v782 = vunpack.c.l.b16 %v747
  %v783 = vunpack.c.h.b16 %v747
  %v784 = vunpack.c.l.b16 %v748
  %v785 = vunpack.c.h.b16 %v748
  %v786 = vunpack.c.l.b16 %v749
  %v787 = vunpack.c.h.b16 %v749
  %v788 = vunpack.c.l.b16 %v750
  %v789 = vunpack.c.h.b16 %v750
  %v790 = vunpack.c.l.b16 %v751
  %v791 = vunpack.c.h.b16 %v751
  %v792 = vunpack.c.l.b16 %v752
  %v793 = vunpack.c.h.b16 %v752
  %v794 = vunpack.c.l.b16 %v753
  %v795 = vunpack.c.h.b16 %v753
  %v796 = vunpack.c.l.b16 %v754
  %v797 = vunpack.c.h.b16 %v754
  %v798 = vunpack.c.l.b16 %v755
  %v799 = vunpack.c.h.b16 %v755
  %v800 = vunpack.c.l.b16 %v756
  %v801 = vunpack.c.h.b16 %v756
  %v802 = vunpack.c.l.b16 %v757
  %v803 = vunpack.c.h.b16 %v757
  %v804 = vunpack.c.l.b16 %v758
  %v805 = vunpack.c.h.b16 %v758
  %v806 = vunpack.c.l.b16 %v759
  %v807 = vunpack.c.h.b16 %v759
  %v808 = vpack.c.b16 %v776, %v776
  %v809 = vpack.c.b16 %v777, %v777
  %v810 = vpack.c.b16 %v778, %v778
  %v811 = vpack.c.b16 %v779, %v779
  %v812 = vpack.c.b16 %v780, %v780
  %v813 = vpack.c.b16 %v781, %v781
  %v814 = vpack.c.b16 %v782, %v782
  %v815 = vpack.c.b16 %v783, %v783
  %v816 = vpack.c.b16 %v784, %v784
  %v817 = vpack.c.b16 %v785, %v785
  %v818 = vpack.c.b16 %v786, %v786
  %v819 = vpack.c.b16 %v787, %v787
  %v820 = vpack.c.b16 %v788, %v788
  %v821 = vpack.c.b16 %v789, %v789
  %v822 = vpack.c.b16 %v790, %v790
  %v823 = vpack.c.b16 %v791, %v791
  %v824 = vpack.c.b16 %v792, %v792
  %v825 = vpack.c.b16 %v793, %v793
  %v826 = vpack.c.b16 %v794, %v794
  %v827 = vpack.c.b16 %v795, %v795
  %v828 = vpack.c.b16 %v796, %v796
  %v829 = vpack.c.b16 %v797, %v797
  %v830 = vpack.c.b16 %v798, %v798
  %v831 = vpack.c.b16 %v799, %v799
  %v832 = vpack.c.b16 %v800, %v800
  %v833 = vpack.c.b16 %v801, %v801
  %v834 = vpack.c.b16 %v802, %v802
  %v835 = vpack.c.b16 %v803, %v803
  %v836 = vpack.c.b16 %v804, %v804
  %v837 = vpack.c.b16 %v805, %v805
  %v838 = vpack.c.b16 %v806, %v806
  %v839 = vpack.c.b16 %v807, %v807
  %vm872 = vcmask 60416
  %873 = vst.msk [vmem:[%s5] sm:$0xf] %vm872, %v808
  %874 = vst.msk [vmem:[%s5 + $0x4] sm:$0xf] %vm872, %v809
  %875 = vst.msk [vmem:[%s5 + $0x8] sm:$0xf] %vm872, %v810
  %876 = vst.msk [vmem:[%s5 + $0xc] sm:$0xf] %vm872, %v811
  %877 = vst.msk [vmem:[%s5 + $0x10] sm:$0xf] %vm872, %v812
  %878 = vst.msk [vmem:[%s5 + $0x14] sm:$0xf] %vm872, %v813
  %879 = vst.msk [vmem:[%s5 + $0x18] sm:$0xf] %vm872, %v814
  %880 = vst.msk [vmem:[%s5 + $0x1c] sm:$0xf] %vm872, %v815
  %881 = vst.msk [vmem:[%s5 + $0x20] sm:$0xf] %vm872, %v816
  %882 = vst.msk [vmem:[%s5 + $0x24] sm:$0xf] %vm872, %v817
  %883 = vst.msk [vmem:[%s5 + $0x28] sm:$0xf] %vm872, %v818
  %884 = vst.msk [vmem:[%s5 + $0x2c] sm:$0xf] %vm872, %v819
  %885 = vst.msk [vmem:[%s5 + $0x30] sm:$0xf] %vm872, %v820
  %886 = vst.msk [vmem:[%s5 + $0x34] sm:$0xf] %vm872, %v821
  %887 = vst.msk [vmem:[%s5 + $0x38] sm:$0xf] %vm872, %v822
  %888 = vst.msk [vmem:[%s5 + $0x3c] sm:$0xf] %vm872, %v823
  %889 = vst.msk [vmem:[%s5 + $0x40] sm:$0xf] %vm872, %v824
  %890 = vst.msk [vmem:[%s5 + $0x44] sm:$0xf] %vm872, %v825
  %891 = vst.msk [vmem:[%s5 + $0x48] sm:$0xf] %vm872, %v826
  %892 = vst.msk [vmem:[%s5 + $0x4c] sm:$0xf] %vm872, %v827
  %893 = vst.msk [vmem:[%s5 + $0x50] sm:$0xf] %vm872, %v828
  %894 = vst.msk [vmem:[%s5 + $0x54] sm:$0xf] %vm872, %v829
  %895 = vst.msk [vmem:[%s5 + $0x58] sm:$0xf] %vm872, %v830
  %896 = vst.msk [vmem:[%s5 + $0x5c] sm:$0xf] %vm872, %v831
  %897 = vst.msk [vmem:[%s5 + $0x60] sm:$0xf] %vm872, %v832
  %898 = vst.msk [vmem:[%s5 + $0x64] sm:$0xf] %vm872, %v833
  %899 = vst.msk [vmem:[%s5 + $0x68] sm:$0xf] %vm872, %v834
  %900 = vst.msk [vmem:[%s5 + $0x6c] sm:$0xf] %vm872, %v835
  %901 = vst.msk [vmem:[%s5 + $0x70] sm:$0xf] %vm872, %v836
  %902 = vst.msk [vmem:[%s5 + $0x74] sm:$0xf] %vm872, %v837
  %903 = vst.msk [vmem:[%s5 + $0x78] sm:$0xf] %vm872, %v838
  %vm904 = vcmask 59392
  %905 = vst.msk [vmem:[%s5 + $0x7c] sm:$0x7] %vm904, %v839
  // Predicated region
  $region22: #{wav_autoencoder_forward.23} parent=0 // pred_check
    _
  $region23: #{wav_autoencoder_forward.23} parent=0 // pred_check_branch
    %907 = sbr.rel (0) target = $region25
  $region24: #{wav_autoencoder_forward.23} parent=0 // pred_region
    _
  $region25: #{wav_autoencoder_forward.23} parent=0 // pred_fallthru
    _
  // Predicated region
  $region26: #{wav_autoencoder_forward.23} parent=0 // pred_check
    _
  $region27: #{wav_autoencoder_forward.23} parent=0 // pred_check_branch
    %909 = sbr.rel (0) target = $region29
  $region28: #{wav_autoencoder_forward.23} parent=0 // pred_region
    _
  $region29: #{wav_autoencoder_forward.23} parent=0 // pred_fallthru
    _

// kernel: wav_autoencoder_forward.24
$region0: #{wav_autoencoder_forward.24}
  #allocation0 [shape = 'u32[]', space=smem, size = 0x4, offset = 0x4, fixed_abs, tag = 'smem constant byte address 0x4 - core index']
  #allocation1 [shape = 'u32[144,128]{1,0:T(1,128)}', space=vmem, size = 0x12000, scoped, tag = 'internal scratch']
  %s0 = inlined_call_operand.vmem [shape: bf16[258,8], index: 0, kind: input, shape index: {}]
  %s1 = inlined_call_operand.vmem [shape: bf16[8,16], index: 1, kind: input, shape index: {}]
  %s2 = inlined_call_operand.vmem [shape: f32[1,16], index: 2, kind: input, shape index: {}]
  %s3 = inlined_call_operand.vmem [shape: bf16[258,8], index: 3, kind: output, shape index: {}]
  %s4 = sld [smem:[#allocation0]]
  $region22: #{wav_autoencoder_forward.24} parent=0
    _
  %s6 = ssub.s32 1, %s4
  %s7 = scalar_select 0, %s6, %s4
  // Predicated region
  $region2: #{wav_autoencoder_forward.24} parent=0 // pred_check
    _
  $region3: #{wav_autoencoder_forward.24} parent=0 // pred_check_branch
    %9 = sbr.rel (0) target = $region5
  $region4: #{wav_autoencoder_forward.24} parent=0 // pred_region
    _
  $region5: #{wav_autoencoder_forward.24} parent=0 // pred_fallthru
    _
  // Predicated region
  $region6: #{wav_autoencoder_forward.24} parent=0 // pred_check
    _
  $region7: #{wav_autoencoder_forward.24} parent=0 // pred_check_branch
    %11 = sbr.rel (0) target = $region9
  $region8: #{wav_autoencoder_forward.24} parent=0 // pred_region
    _
  $region9: #{wav_autoencoder_forward.24} parent=0 // pred_fallthru
    _
  // Predicated region
  $region10: #{wav_autoencoder_forward.24} parent=0 // pred_check
    _
  $region11: #{wav_autoencoder_forward.24} parent=0 // pred_check_branch
    %13 = sbr.rel (0) target = $region13
  $region12: #{wav_autoencoder_forward.24} parent=0 // pred_region
    _
  $region13: #{wav_autoencoder_forward.24} parent=0 // pred_fallthru
    _
  %v15 = vld [vmem:[%s0] sm:$0xf]
  %v16 = vld [vmem:[%s0 + $0x4] sm:$0xf]
  %v17 = vld [vmem:[%s0 + $0x8] sm:$0xf]
  %v18 = vld [vmem:[%s0 + $0xc] sm:$0xf]
  %v19 = vld [vmem:[%s0 + $0x10] sm:$0xf]
  %v20 = vld [vmem:[%s0 + $0x14] sm:$0xf]
  %v21 = vld [vmem:[%s0 + $0x18] sm:$0xf]
  %v22 = vld [vmem:[%s0 + $0x1c] sm:$0xf]
  %v23 = vld [vmem:[%s0 + $0x20] sm:$0xf]
  %v24 = vld [vmem:[%s0 + $0x24] sm:$0xf]
  %v25 = vld [vmem:[%s0 + $0x28] sm:$0xf]
  %v26 = vld [vmem:[%s0 + $0x2c] sm:$0xf]
  %v27 = vld [vmem:[%s0 + $0x30] sm:$0xf]
  %v28 = vld [vmem:[%s0 + $0x34] sm:$0xf]
  %v29 = vld [vmem:[%s0 + $0x38] sm:$0xf]
  %v30 = vld [vmem:[%s0 + $0x3c] sm:$0xf]
  %v31 = vld [vmem:[%s0 + $0x40] sm:$0xf]
  %v32 = vld [vmem:[%s0 + $0x44] sm:$0xf]
  %v33 = vld [vmem:[%s0 + $0x48] sm:$0xf]
  %v34 = vld [vmem:[%s0 + $0x4c] sm:$0xf]
  %v35 = vld [vmem:[%s0 + $0x50] sm:$0xf]
  %v36 = vld [vmem:[%s0 + $0x54] sm:$0xf]
  %v37 = vld [vmem:[%s0 + $0x58] sm:$0xf]
  %v38 = vld [vmem:[%s0 + $0x5c] sm:$0xf]
  %v39 = vld [vmem:[%s0 + $0x60] sm:$0xf]
  %v40 = vld [vmem:[%s0 + $0x64] sm:$0xf]
  %v41 = vld [vmem:[%s0 + $0x68] sm:$0xf]
  %v42 = vld [vmem:[%s0 + $0x6c] sm:$0xf]
  %v43 = vld [vmem:[%s0 + $0x70] sm:$0xf]
  %v44 = vld [vmem:[%s0 + $0x74] sm:$0xf]
  %v45 = vld [vmem:[%s0 + $0x78] sm:$0xf]
  %v46 = vld [vmem:[%s0 + $0x7c] sm:$0xf]
  %v47 = vld [vmem:[%s0 + $0x80] sm:$0x1]
  %v48 = vld [vmem:[%s1] sm:$0xf]
  %v49 = vld [vmem:[%s2] sm:$0x1]
  %v51 = vlaneseq
  %v52 = vshrl.u32 %v51, 7
  %v53 = vsub.s32 0, %v52
  %v54 = vrot.slane %v49, %v53
  %v89 = vunpack.c.l.b16 %v15
  %v90 = vunpack.c.l.b16 %v16
  %v91 = vunpack.c.l.b16 %v17
  %v92 = vunpack.c.l.b16 %v18
  %v93 = vunpack.c.l.b16 %v19
  %v94 = vunpack.c.l.b16 %v20
  %v95 = vunpack.c.l.b16 %v21
  %v96 = vunpack.c.l.b16 %v22
  %v97 = vunpack.c.l.b16 %v23
  %v98 = vunpack.c.l.b16 %v24
  %v99 = vunpack.c.l.b16 %v25
  %v100 = vunpack.c.l.b16 %v26
  %v101 = vunpack.c.l.b16 %v27
  %v102 = vunpack.c.l.b16 %v28
  %v103 = vunpack.c.l.b16 %v29
  %v104 = vunpack.c.l.b16 %v30
  %v105 = vunpack.c.l.b16 %v31
  %v106 = vunpack.c.l.b16 %v32
  %v107 = vunpack.c.l.b16 %v33
  %v108 = vunpack.c.l.b16 %v34
  %v109 = vunpack.c.l.b16 %v35
  %v110 = vunpack.c.l.b16 %v36
  %v111 = vunpack.c.l.b16 %v37
  %v112 = vunpack.c.l.b16 %v38
  %v113 = vunpack.c.l.b16 %v39
  %v114 = vunpack.c.l.b16 %v40
  %v115 = vunpack.c.l.b16 %v41
  %v116 = vunpack.c.l.b16 %v42
  %v117 = vunpack.c.l.b16 %v43
  %v118 = vunpack.c.l.b16 %v44
  %v119 = vunpack.c.l.b16 %v45
  %v120 = vunpack.c.l.b16 %v46
  %v121 = vunpack.c.l.b16 %v47
  %v122 = vpack.c.b16 %v90, %v89
  %v123 = vpack.c.b16 %v92, %v91
  %v124 = vpack.c.b16 %v94, %v93
  %v125 = vpack.c.b16 %v96, %v95
  %v126 = vpack.c.b16 %v98, %v97
  %v127 = vpack.c.b16 %v100, %v99
  %v128 = vpack.c.b16 %v102, %v101
  %v129 = vpack.c.b16 %v104, %v103
  %v130 = vpack.c.b16 %v106, %v105
  %v131 = vpack.c.b16 %v108, %v107
  %v132 = vpack.c.b16 %v110, %v109
  %v133 = vpack.c.b16 %v112, %v111
  %v134 = vpack.c.b16 %v114, %v113
  %v135 = vpack.c.b16 %v116, %v115
  %v136 = vpack.c.b16 %v118, %v117
  %v137 = vpack.c.b16 %v120, %v119
  %v138 = vpack.c.b16 %v121, %v121
  %vm139 = vcmask 64512
  %v141 = vsel %vm139, %v122, 0
  %v144 = vsel %vm139, %v123, 0
  %v147 = vsel %vm139, %v124, 0
  %v150 = vsel %vm139, %v125, 0
  %v153 = vsel %vm139, %v126, 0
  %v156 = vsel %vm139, %v127, 0
  %v159 = vsel %vm139, %v128, 0
  %v162 = vsel %vm139, %v129, 0
  %v165 = vsel %vm139, %v130, 0
  %v168 = vsel %vm139, %v131, 0
  %v171 = vsel %vm139, %v132, 0
  %v174 = vsel %vm139, %v133, 0
  %v177 = vsel %vm139, %v134, 0
  %v180 = vsel %vm139, %v135, 0
  %v183 = vsel %vm139, %v136, 0
  %v186 = vsel %vm139, %v137, 0
  %v189 = vsel %vm139, %v138, 0
  %vm191 = vcmask 1043456
  %v193 = vsel %vm191, %v48, 0
  %195 = vmatprep.subr.bf16.mxu0 0
  %196 = vmatpush1.bf16.msra.mxu0 %v193
  %197 = vmatprep.subr.bf16.mxu0 0
  %198 = vmatpush1.bf16.msra.mxu0 0
  %199 = vmatprep.subr.bf16.mxu0 0
  %200 = vmatpush1.bf16.msra.mxu0 0
  %201 = vmatprep.subr.bf16.mxu0 0
  %202 = vmatpush1.bf16.msra.mxu0 0
  %203 = vmatprep.subr.bf16.mxu0 0
  %204 = vmatpush1.bf16.msra.mxu0 0
  %205 = vmatprep.subr.bf16.mxu0 0
  %206 = vmatpush1.bf16.msra.mxu0 0
  %207 = vmatprep.subr.bf16.mxu0 0
  %208 = vmatpush1.bf16.msra.mxu0 0
  %209 = vmatprep.subr.bf16.mxu0 0
  %210 = vmatpush1.bf16.msra.mxu0 0
  %211 = vmatprep.subr.bf16.mxu0 0
  %212 = vmatpush1.bf16.msra.mxu0 0
  %213 = vmatprep.subr.bf16.mxu0 0
  %214 = vmatpush1.bf16.msra.mxu0 0
  %215 = vmatprep.subr.bf16.mxu0 0
  %216 = vmatpush1.bf16.msra.mxu0 0
  %217 = vmatprep.subr.bf16.mxu0 0
  %218 = vmatpush1.bf16.msra.mxu0 0
  %219 = vmatprep.subr.bf16.mxu0 0
  %220 = vmatpush1.bf16.msra.mxu0 0
  %221 = vmatprep.subr.bf16.mxu0 0
  %222 = vmatpush1.bf16.msra.mxu0 0
  %223 = vmatprep.subr.bf16.mxu0 0
  %224 = vmatpush1.bf16.msra.mxu0 0
  %225 = vmatprep.subr.bf16.mxu0 0
  %226 = vmatpush1.bf16.msra.mxu0 0
  %227 = vmatprep.mubr.bf16.mxu0 0
  %228 = vmatmul.mubr.bf16.gmra.mrb[0].mxu0 %v141
  %v229 = vpop.f32.mrb[0].mxu0
  %v230 = vadd.f32 %v54, %v229
  %v231 = vpop.f32.mrb[0].mxu0
  %v232 = vpop.f32.mrb[0].mxu0
  %v233 = vadd.f32 %v54, %v232
  %v234 = vpop.f32.mrb[0].mxu0
  %235 = vmatprep.mubr.bf16.mxu0 0
  %236 = vmatmul.mubr.bf16.gmra.mrb[0].mxu0 %v144
  %v237 = vpop.f32.mrb[0].mxu0
  %v238 = vadd.f32 %v54, %v237
  %v239 = vpop.f32.mrb[0].mxu0
  %v240 = vpop.f32.mrb[0].mxu0
  %v241 = vadd.f32 %v54, %v240
  %v242 = vpop.f32.mrb[0].mxu0
  %243 = vmatprep.mubr.bf16.mxu0 0
  %244 = vmatmul.mubr.bf16.gmra.mrb[0].mxu0 %v147
  %v245 = vpop.f32.mrb[0].mxu0
  %v246 = vadd.f32 %v54, %v245
  %v247 = vpop.f32.mrb[0].mxu0
  %v248 = vpop.f32.mrb[0].mxu0
  %v249 = vadd.f32 %v54, %v248
  %v250 = vpop.f32.mrb[0].mxu0
  %251 = vmatprep.mubr.bf16.mxu0 0
  %252 = vmatmul.mubr.bf16.gmra.mrb[0].mxu0 %v150
  %v253 = vpop.f32.mrb[0].mxu0
  %v254 = vadd.f32 %v54, %v253
  %v255 = vpop.f32.mrb[0].mxu0
  %v256 = vpop.f32.mrb[0].mxu0
  %v257 = vadd.f32 %v54, %v256
  %v258 = vpop.f32.mrb[0].mxu0
  %259 = vmatprep.mubr.bf16.mxu0 0
  %260 = vmatmul.mubr.bf16.gmra.mrb[0].mxu0 %v153
  %v261 = vpop.f32.mrb[0].mxu0
  %v262 = vadd.f32 %v54, %v261
  %v263 = vpop.f32.mrb[0].mxu0
  %v264 = vpop.f32.mrb[0].mxu0
  %v265 = vadd.f32 %v54, %v264
  %v266 = vpop.f32.mrb[0].mxu0
  %267 = vmatprep.mubr.bf16.mxu0 0
  %268 = vmatmul.mubr.bf16.gmra.mrb[0].mxu0 %v156
  %v269 = vpop.f32.mrb[0].mxu0
  %v270 = vadd.f32 %v54, %v269
  %v271 = vpop.f32.mrb[0].mxu0
  %v272 = vpop.f32.mrb[0].mxu0
  %v273 = vadd.f32 %v54, %v272
  %v274 = vpop.f32.mrb[0].mxu0
  %275 = vmatprep.mubr.bf16.mxu0 0
  %276 = vmatmul.mubr.bf16.gmra.mrb[0].mxu0 %v159
  %v277 = vpop.f32.mrb[0].mxu0
  %v278 = vadd.f32 %v54, %v277
  %v279 = vpop.f32.mrb[0].mxu0
  %v280 = vpop.f32.mrb[0].mxu0
  %v281 = vadd.f32 %v54, %v280
  %v282 = vpop.f32.mrb[0].mxu0
  %283 = vmatprep.mubr.bf16.mxu0 0
  %284 = vmatmul.mubr.bf16.gmra.mrb[0].mxu0 %v162
  %v285 = vpop.f32.mrb[0].mxu0
  %v286 = vadd.f32 %v54, %v285
  %v287 = vpop.f32.mrb[0].mxu0
  %v288 = vpop.f32.mrb[0].mxu0
  %v289 = vadd.f32 %v54, %v288
  %v290 = vpop.f32.mrb[0].mxu0
  %291 = vmatprep.mubr.bf16.mxu0 0
  %292 = vmatmul.mubr.bf16.gmra.mrb[0].mxu0 %v165
  %v293 = vpop.f32.mrb[0].mxu0
  %v294 = vadd.f32 %v54, %v293
  %v295 = vpop.f32.mrb[0].mxu0
  %v296 = vpop.f32.mrb[0].mxu0
  %v297 = vadd.f32 %v54, %v296
  %v298 = vpop.f32.mrb[0].mxu0
  %299 = vmatprep.mubr.bf16.mxu0 0
  %300 = vmatmul.mubr.bf16.gmra.mrb[0].mxu0 %v168
  %v301 = vpop.f32.mrb[0].mxu0
  %v302 = vadd.f32 %v54, %v301
  %v303 = vpop.f32.mrb[0].mxu0
  %v304 = vpop.f32.mrb[0].mxu0
  %v305 = vadd.f32 %v54, %v304
  %v306 = vpop.f32.mrb[0].mxu0
  %307 = vmatprep.mubr.bf16.mxu0 0
  %308 = vmatmul.mubr.bf16.gmra.mrb[0].mxu0 %v171
  %v309 = vpop.f32.mrb[0].mxu0
  %v310 = vadd.f32 %v54, %v309
  %v311 = vpop.f32.mrb[0].mxu0
  %v312 = vpop.f32.mrb[0].mxu0
  %v313 = vadd.f32 %v54, %v312
  %v314 = vpop.f32.mrb[0].mxu0
  %315 = vmatprep.mubr.bf16.mxu0 0
  %316 = vmatmul.mubr.bf16.gmra.mrb[0].mxu0 %v174
  %v317 = vpop.f32.mrb[0].mxu0
  %v318 = vadd.f32 %v54, %v317
  %v319 = vpop.f32.mrb[0].mxu0
  %v320 = vpop.f32.mrb[0].mxu0
  %v321 = vadd.f32 %v54, %v320
  %v322 = vpop.f32.mrb[0].mxu0
  %323 = vmatprep.mubr.bf16.mxu0 0
  %324 = vmatmul.mubr.bf16.gmra.mrb[0].mxu0 %v177
  %v325 = vpop.f32.mrb[0].mxu0
  %v326 = vadd.f32 %v54, %v325
  %v327 = vpop.f32.mrb[0].mxu0
  %v328 = vpop.f32.mrb[0].mxu0
  %v329 = vadd.f32 %v54, %v328
  %v330 = vpop.f32.mrb[0].mxu0
  %331 = vmatprep.mubr.bf16.mxu0 0
  %332 = vmatmul.mubr.bf16.gmra.mrb[0].mxu0 %v180
  %v333 = vpop.f32.mrb[0].mxu0
  %v334 = vadd.f32 %v54, %v333
  %v335 = vpop.f32.mrb[0].mxu0
  %v336 = vpop.f32.mrb[0].mxu0
  %v337 = vadd.f32 %v54, %v336
  %v338 = vpop.f32.mrb[0].mxu0
  %339 = vmatprep.mubr.bf16.mxu0 0
  %340 = vmatmul.mubr.bf16.gmra.mrb[0].mxu0 %v183
  %v341 = vpop.f32.mrb[0].mxu0
  %v342 = vadd.f32 %v54, %v341
  %v343 = vpop.f32.mrb[0].mxu0
  %v344 = vpop.f32.mrb[0].mxu0
  %v345 = vadd.f32 %v54, %v344
  %v346 = vpop.f32.mrb[0].mxu0
  %347 = vmatprep.mubr.bf16.mxu0 0
  %348 = vmatmul.mubr.bf16.gmra.mrb[0].mxu0 %v186
  %v349 = vpop.f32.mrb[0].mxu0
  %v350 = vadd.f32 %v54, %v349
  %v351 = vpop.f32.mrb[0].mxu0
  %v352 = vpop.f32.mrb[0].mxu0
  %v353 = vadd.f32 %v54, %v352
  %v354 = vpop.f32.mrb[0].mxu0
  %355 = vmatprep.mubr.bf16.mxu0 0
  %356 = vmatmul.mubr.bf16.gmra.mrb[0].mxu0 %v189
  %v357 = vpop.f32.mrb[0].mxu0
  %v358 = vadd.f32 %v54, %v357
  %v359 = vpop.f32.mrb[0].mxu0
  %v360 = vpop.f32.mrb[0].mxu0
  %v361 = vpop.f32.mrb[0].mxu0
  %362 = vdwg.mxu0
  %v363 = vxor.u32 %v230, 2147483648
  %v364 = vxor.u32 %v233, 2147483648
  %v365 = vxor.u32 %v238, 2147483648
  %v366 = vxor.u32 %v241, 2147483648
  %v367 = vxor.u32 %v246, 2147483648
  %v368 = vxor.u32 %v249, 2147483648
  %v369 = vxor.u32 %v254, 2147483648
  %v370 = vxor.u32 %v257, 2147483648
  %v371 = vxor.u32 %v262, 2147483648
  %v372 = vxor.u32 %v265, 2147483648
  %v373 = vxor.u32 %v270, 2147483648
  %v374 = vxor.u32 %v273, 2147483648
  %v375 = vxor.u32 %v278, 2147483648
  %v376 = vxor.u32 %v281, 2147483648
  %v377 = vxor.u32 %v286, 2147483648
  %v378 = vxor.u32 %v289, 2147483648
  %v379 = vxor.u32 %v294, 2147483648
  %v380 = vxor.u32 %v297, 2147483648
  %v381 = vxor.u32 %v302, 2147483648
  %v382 = vxor.u32 %v305, 2147483648
  %v383 = vxor.u32 %v310, 2147483648
  %v384 = vxor.u32 %v313, 2147483648
  %v385 = vxor.u32 %v318, 2147483648
  %v386 = vxor.u32 %v321, 2147483648
  %v387 = vxor.u32 %v326, 2147483648
  %v388 = vxor.u32 %v329, 2147483648
  %v389 = vxor.u32 %v334, 2147483648
  %v390 = vxor.u32 %v337, 2147483648
  %v391 = vxor.u32 %v342, 2147483648
  %v392 = vxor.u32 %v345, 2147483648
  %v393 = vxor.u32 %v350, 2147483648
  %v394 = vxor.u32 %v353, 2147483648
  %v395 = vxor.u32 %v358, 2147483648
  %v396 = vmul.f32 %v363, 1.442695
  %v397 = vpow.pop %v396
  %v398 = vmul.f32 %v364, 1.442695
  %v399 = vpow.pop %v398
  %v400 = vmul.f32 %v365, 1.442695
  %v401 = vpow.pop %v400
  %v402 = vmul.f32 %v366, 1.442695
  %v403 = vpow.pop %v402
  %v404 = vmul.f32 %v367, 1.442695
  %v405 = vpow.pop %v404
  %v406 = vmul.f32 %v368, 1.442695
  %v407 = vpow.pop %v406
  %v408 = vmul.f32 %v369, 1.442695
  %v409 = vpow.pop %v408
  %v410 = vmul.f32 %v370, 1.442695
  %v411 = vpow.pop %v410
  %v412 = vmul.f32 %v371, 1.442695
  %v413 = vpow.pop %v412
  %v414 = vmul.f32 %v372, 1.442695
  %v415 = vpow.pop %v414
  %v416 = vmul.f32 %v373, 1.442695
  %v417 = vpow.pop %v416
  %v418 = vmul.f32 %v374, 1.442695
  %v419 = vpow.pop %v418
  %v420 = vmul.f32 %v375, 1.442695
  %v421 = vpow.pop %v420
  %v422 = vmul.f32 %v376, 1.442695
  %v423 = vpow.pop %v422
  %v424 = vmul.f32 %v377, 1.442695
  %v425 = vpow.pop %v424
  %v426 = vmul.f32 %v378, 1.442695
  %v427 = vpow.pop %v426
  %v428 = vmul.f32 %v379, 1.442695
  %v429 = vpow.pop %v428
  %v430 = vmul.f32 %v380, 1.442695
  %v431 = vpow.pop %v430
  %v432 = vmul.f32 %v381, 1.442695
  %v433 = vpow.pop %v432
  %v434 = vmul.f32 %v382, 1.442695
  %v435 = vpow.pop %v434
  %v436 = vmul.f32 %v383, 1.442695
  %v437 = vpow.pop %v436
  %v438 = vmul.f32 %v384, 1.442695
  %v439 = vpow.pop %v438
  %v440 = vmul.f32 %v385, 1.442695
  %v441 = vpow.pop %v440
  %v442 = vmul.f32 %v386, 1.442695
  %v443 = vpow.pop %v442
  %v444 = vmul.f32 %v387, 1.442695
  %v445 = vpow.pop %v444
  %v446 = vmul.f32 %v388, 1.442695
  %v447 = vpow.pop %v446
  %v448 = vmul.f32 %v389, 1.442695
  %v449 = vpow.pop %v448
  %v450 = vmul.f32 %v390, 1.442695
  %v451 = vpow.pop %v450
  %v452 = vmul.f32 %v391, 1.442695
  %v453 = vpow.pop %v452
  %v454 = vmul.f32 %v392, 1.442695
  %v455 = vpow.pop %v454
  %v456 = vmul.f32 %v393, 1.442695
  %v457 = vpow.pop %v456
  %v458 = vmul.f32 %v394, 1.442695
  %v459 = vpow.pop %v458
  %v460 = vmul.f32 %v395, 1.442695
  %v461 = vpow.pop %v460
  %v462 = vadd.f32 %v397, 1.0
  %v463 = vadd.f32 %v399, 1.0
  %v464 = vadd.f32 %v401, 1.0
  %v465 = vadd.f32 %v403, 1.0
  %v466 = vadd.f32 %v405, 1.0
  %v467 = vadd.f32 %v407, 1.0
  %v468 = vadd.f32 %v409, 1.0
  %v469 = vadd.f32 %v411, 1.0
  %v470 = vadd.f32 %v413, 1.0
  %v471 = vadd.f32 %v415, 1.0
  %v472 = vadd.f32 %v417, 1.0
  %v473 = vadd.f32 %v419, 1.0
  %v474 = vadd.f32 %v421, 1.0
  %v475 = vadd.f32 %v423, 1.0
  %v476 = vadd.f32 %v425, 1.0
  %v477 = vadd.f32 %v427, 1.0
  %v478 = vadd.f32 %v429, 1.0
  %v479 = vadd.f32 %v431, 1.0
  %v480 = vadd.f32 %v433, 1.0
  %v481 = vadd.f32 %v435, 1.0
  %v482 = vadd.f32 %v437, 1.0
  %v483 = vadd.f32 %v439, 1.0
  %v484 = vadd.f32 %v441, 1.0
  %v485 = vadd.f32 %v443, 1.0
  %v486 = vadd.f32 %v445, 1.0
  %v487 = vadd.f32 %v447, 1.0
  %v488 = vadd.f32 %v449, 1.0
  %v489 = vadd.f32 %v451, 1.0
  %v490 = vadd.f32 %v453, 1.0
  %v491 = vadd.f32 %v455, 1.0
  %v492 = vadd.f32 %v457, 1.0
  %v493 = vadd.f32 %v459, 1.0
  %v494 = vadd.f32 %v461, 1.0
  %v495 = vrcp.pop %v462
  %v496 = vmul.f32 1.0, %v495
  %v497 = vrcp.pop %v463
  %v498 = vmul.f32 1.0, %v497
  %v499 = vrcp.pop %v464
  %v500 = vmul.f32 1.0, %v499
  %v501 = vrcp.pop %v465
  %v502 = vmul.f32 1.0, %v501
  %v503 = vrcp.pop %v466
  %v504 = vmul.f32 1.0, %v503
  %v505 = vrcp.pop %v467
  %v506 = vmul.f32 1.0, %v505
  %v507 = vrcp.pop %v468
  %v508 = vmul.f32 1.0, %v507
  %v509 = vrcp.pop %v469
  %v510 = vmul.f32 1.0, %v509
  %v511 = vrcp.pop %v470
  %v512 = vmul.f32 1.0, %v511
  %v513 = vrcp.pop %v471
  %v514 = vmul.f32 1.0, %v513
  %v515 = vrcp.pop %v472
  %v516 = vmul.f32 1.0, %v515
  %v517 = vrcp.pop %v473
  %v518 = vmul.f32 1.0, %v517
  %v519 = vrcp.pop %v474
  %v520 = vmul.f32 1.0, %v519
  %v521 = vrcp.pop %v475
  %v522 = vmul.f32 1.0, %v521
  %v523 = vrcp.pop %v476
  %v524 = vmul.f32 1.0, %v523
  %v525 = vrcp.pop %v477
  %v526 = vmul.f32 1.0, %v525
  %v527 = vrcp.pop %v478
  %v528 = vmul.f32 1.0, %v527
  %v529 = vrcp.pop %v479
  %v530 = vmul.f32 1.0, %v529
  %v531 = vrcp.pop %v480
  %v532 = vmul.f32 1.0, %v531
  %v533 = vrcp.pop %v481
  %v534 = vmul.f32 1.0, %v533
  %v535 = vrcp.pop %v482
  %v536 = vmul.f32 1.0, %v535
  %v537 = vrcp.pop %v483
  %v538 = vmul.f32 1.0, %v537
  %v539 = vrcp.pop %v484
  %v540 = vmul.f32 1.0, %v539
  %v541 = vrcp.pop %v485
  %v542 = vmul.f32 1.0, %v541
  %v543 = vrcp.pop %v486
  %v544 = vmul.f32 1.0, %v543
  %v545 = vrcp.pop %v487
  %v546 = vmul.f32 1.0, %v545
  %v547 = vrcp.pop %v488
  %v548 = vmul.f32 1.0, %v547
  %v549 = vrcp.pop %v489
  %v550 = vmul.f32 1.0, %v549
  %v551 = vrcp.pop %v490
  %v552 = vmul.f32 1.0, %v551
  %v553 = vrcp.pop %v491
  %v554 = vmul.f32 1.0, %v553
  %v555 = vrcp.pop %v492
  %v556 = vmul.f32 1.0, %v555
  %v557 = vrcp.pop %v493
  %v558 = vmul.f32 1.0, %v557
  %v559 = vrcp.pop %v494
  %v560 = vmul.f32 1.0, %v559
  %594 = vrot.lane.b32.xlu0 %v496, 120
  %v595 = vpop.permute.xlu0 %594
  %596 = vrot.lane.b32.xlu0 %v498, 120
  %v597 = vpop.permute.xlu0 %596
  %598 = vrot.lane.b32.xlu0 %v500, 120
  %v599 = vpop.permute.xlu0 %598
  %600 = vrot.lane.b32.xlu0 %v502, 120
  %v601 = vpop.permute.xlu0 %600
  %602 = vrot.lane.b32.xlu0 %v504, 120
  %v603 = vpop.permute.xlu0 %602
  %604 = vrot.lane.b32.xlu0 %v506, 120
  %v605 = vpop.permute.xlu0 %604
  %606 = vrot.lane.b32.xlu0 %v508, 120
  %v607 = vpop.permute.xlu0 %606
  %608 = vrot.lane.b32.xlu0 %v510, 120
  %v609 = vpop.permute.xlu0 %608
  %610 = vrot.lane.b32.xlu0 %v512, 120
  %v611 = vpop.permute.xlu0 %610
  %612 = vrot.lane.b32.xlu0 %v514, 120
  %v613 = vpop.permute.xlu0 %612
  %614 = vrot.lane.b32.xlu0 %v516, 120
  %v615 = vpop.permute.xlu0 %614
  %616 = vrot.lane.b32.xlu0 %v518, 120
  %v617 = vpop.permute.xlu0 %616
  %618 = vrot.lane.b32.xlu0 %v520, 120
  %v619 = vpop.permute.xlu0 %618
  %620 = vrot.lane.b32.xlu0 %v522, 120
  %v621 = vpop.permute.xlu0 %620
  %622 = vrot.lane.b32.xlu0 %v524, 120
  %v623 = vpop.permute.xlu0 %622
  %624 = vrot.lane.b32.xlu0 %v526, 120
  %v625 = vpop.permute.xlu0 %624
  %626 = vrot.lane.b32.xlu0 %v528, 120
  %v627 = vpop.permute.xlu0 %626
  %628 = vrot.lane.b32.xlu0 %v530, 120
  %v629 = vpop.permute.xlu0 %628
  %630 = vrot.lane.b32.xlu0 %v532, 120
  %v631 = vpop.permute.xlu0 %630
  %632 = vrot.lane.b32.xlu0 %v534, 120
  %v633 = vpop.permute.xlu0 %632
  %634 = vrot.lane.b32.xlu0 %v536, 120
  %v635 = vpop.permute.xlu0 %634
  %636 = vrot.lane.b32.xlu0 %v538, 120
  %v637 = vpop.permute.xlu0 %636
  %638 = vrot.lane.b32.xlu0 %v540, 120
  %v639 = vpop.permute.xlu0 %638
  %640 = vrot.lane.b32.xlu0 %v542, 120
  %v641 = vpop.permute.xlu0 %640
  %642 = vrot.lane.b32.xlu0 %v544, 120
  %v643 = vpop.permute.xlu0 %642
  %644 = vrot.lane.b32.xlu0 %v546, 120
  %v645 = vpop.permute.xlu0 %644
  %646 = vrot.lane.b32.xlu0 %v548, 120
  %v647 = vpop.permute.xlu0 %646
  %648 = vrot.lane.b32.xlu0 %v550, 120
  %v649 = vpop.permute.xlu0 %648
  %650 = vrot.lane.b32.xlu0 %v552, 120
  %v651 = vpop.permute.xlu0 %650
  %652 = vrot.lane.b32.xlu0 %v554, 120
  %v653 = vpop.permute.xlu0 %652
  %654 = vrot.lane.b32.xlu0 %v556, 120
  %v655 = vpop.permute.xlu0 %654
  %656 = vrot.lane.b32.xlu0 %v558, 120
  %v657 = vpop.permute.xlu0 %656
  %658 = vrot.lane.b32.xlu0 %v560, 120
  %v659 = vpop.permute.xlu0 %658
  %v693 = vmul.f32 %v230, %v595
  %v694 = vmul.f32 %v233, %v597
  %v695 = vmul.f32 %v238, %v599
  %v696 = vmul.f32 %v241, %v601
  %v697 = vmul.f32 %v246, %v603
  %v698 = vmul.f32 %v249, %v605
  %v699 = vmul.f32 %v254, %v607
  %v700 = vmul.f32 %v257, %v609
  %v701 = vmul.f32 %v262, %v611
  %v702 = vmul.f32 %v265, %v613
  %v703 = vmul.f32 %v270, %v615
  %v704 = vmul.f32 %v273, %v617
  %v705 = vmul.f32 %v278, %v619
  %v706 = vmul.f32 %v281, %v621
  %v707 = vmul.f32 %v286, %v623
  %v708 = vmul.f32 %v289, %v625
  %v709 = vmul.f32 %v294, %v627
  %v710 = vmul.f32 %v297, %v629
  %v711 = vmul.f32 %v302, %v631
  %v712 = vmul.f32 %v305, %v633
  %v713 = vmul.f32 %v310, %v635
  %v714 = vmul.f32 %v313, %v637
  %v715 = vmul.f32 %v318, %v639
  %v716 = vmul.f32 %v321, %v641
  %v717 = vmul.f32 %v326, %v643
  %v718 = vmul.f32 %v329, %v645
  %v719 = vmul.f32 %v334, %v647
  %v720 = vmul.f32 %v337, %v649
  %v721 = vmul.f32 %v342, %v651
  %v722 = vmul.f32 %v345, %v653
  %v723 = vmul.f32 %v350, %v655
  %v724 = vmul.f32 %v353, %v657
  %v725 = vmul.f32 %v358, %v659
  %v726 = vpack.c.bf16 %v694, %v693
  %v727 = vpack.c.bf16 %v696, %v695
  %v728 = vpack.c.bf16 %v698, %v697
  %v729 = vpack.c.bf16 %v700, %v699
  %v730 = vpack.c.bf16 %v702, %v701
  %v731 = vpack.c.bf16 %v704, %v703
  %v732 = vpack.c.bf16 %v706, %v705
  %v733 = vpack.c.bf16 %v708, %v707
  %v734 = vpack.c.bf16 %v710, %v709
  %v735 = vpack.c.bf16 %v712, %v711
  %v736 = vpack.c.bf16 %v714, %v713
  %v737 = vpack.c.bf16 %v716, %v715
  %v738 = vpack.c.bf16 %v718, %v717
  %v739 = vpack.c.bf16 %v720, %v719
  %v740 = vpack.c.bf16 %v722, %v721
  %v741 = vpack.c.bf16 %v724, %v723
  %v742 = vpack.c.bf16 %v725, %v725
  %v760 = vunpack.c.l.b16 %v726
  %v761 = vunpack.c.h.b16 %v726
  %v762 = vunpack.c.l.b16 %v727
  %v763 = vunpack.c.h.b16 %v727
  %v764 = vunpack.c.l.b16 %v728
  %v765 = vunpack.c.h.b16 %v728
  %v766 = vunpack.c.l.b16 %v729
  %v767 = vunpack.c.h.b16 %v729
  %v768 = vunpack.c.l.b16 %v730
  %v769 = vunpack.c.h.b16 %v730
  %v770 = vunpack.c.l.b16 %v731
  %v771 = vunpack.c.h.b16 %v731
  %v772 = vunpack.c.l.b16 %v732
  %v773 = vunpack.c.h.b16 %v732
  %v774 = vunpack.c.l.b16 %v733
  %v775 = vunpack.c.h.b16 %v733
  %v776 = vunpack.c.l.b16 %v734
  %v777 = vunpack.c.h.b16 %v734
  %v778 = vunpack.c.l.b16 %v735
  %v779 = vunpack.c.h.b16 %v735
  %v780 = vunpack.c.l.b16 %v736
  %v781 = vunpack.c.h.b16 %v736
  %v782 = vunpack.c.l.b16 %v737
  %v783 = vunpack.c.h.b16 %v737
  %v784 = vunpack.c.l.b16 %v738
  %v785 = vunpack.c.h.b16 %v738
  %v786 = vunpack.c.l.b16 %v739
  %v787 = vunpack.c.h.b16 %v739
  %v788 = vunpack.c.l.b16 %v740
  %v789 = vunpack.c.h.b16 %v740
  %v790 = vunpack.c.l.b16 %v741
  %v791 = vunpack.c.h.b16 %v741
  %v792 = vunpack.c.l.b16 %v742
  %v793 = vpack.c.b16 %v760, %v760
  %v794 = vpack.c.b16 %v761, %v761
  %v795 = vpack.c.b16 %v762, %v762
  %v796 = vpack.c.b16 %v763, %v763
  %v797 = vpack.c.b16 %v764, %v764
  %v798 = vpack.c.b16 %v765, %v765
  %v799 = vpack.c.b16 %v766, %v766
  %v800 = vpack.c.b16 %v767, %v767
  %v801 = vpack.c.b16 %v768, %v768
  %v802 = vpack.c.b16 %v769, %v769
  %v803 = vpack.c.b16 %v770, %v770
  %v804 = vpack.c.b16 %v771, %v771
  %v805 = vpack.c.b16 %v772, %v772
  %v806 = vpack.c.b16 %v773, %v773
  %v807 = vpack.c.b16 %v774, %v774
  %v808 = vpack.c.b16 %v775, %v775
  %v809 = vpack.c.b16 %v776, %v776
  %v810 = vpack.c.b16 %v777, %v777
  %v811 = vpack.c.b16 %v778, %v778
  %v812 = vpack.c.b16 %v779, %v779
  %v813 = vpack.c.b16 %v780, %v780
  %v814 = vpack.c.b16 %v781, %v781
  %v815 = vpack.c.b16 %v782, %v782
  %v816 = vpack.c.b16 %v783, %v783
  %v817 = vpack.c.b16 %v784, %v784
  %v818 = vpack.c.b16 %v785, %v785
  %v819 = vpack.c.b16 %v786, %v786
  %v820 = vpack.c.b16 %v787, %v787
  %v821 = vpack.c.b16 %v788, %v788
  %v822 = vpack.c.b16 %v789, %v789
  %v823 = vpack.c.b16 %v790, %v790
  %v824 = vpack.c.b16 %v791, %v791
  %v825 = vpack.c.b16 %v792, %v792
  %vm859 = vcmask 60416
  %860 = vst.msk [vmem:[%s3] sm:$0xf] %vm859, %v793
  %861 = vst.msk [vmem:[%s3 + $0x4] sm:$0xf] %vm859, %v794
  %862 = vst.msk [vmem:[%s3 + $0x8] sm:$0xf] %vm859, %v795
  %863 = vst.msk [vmem:[%s3 + $0xc] sm:$0xf] %vm859, %v796
  %864 = vst.msk [vmem:[%s3 + $0x10] sm:$0xf] %vm859, %v797
  %865 = vst.msk [vmem:[%s3 + $0x14] sm:$0xf] %vm859, %v798
  %866 = vst.msk [vmem:[%s3 + $0x18] sm:$0xf] %vm859, %v799
  %867 = vst.msk [vmem:[%s3 + $0x1c] sm:$0xf] %vm859, %v800
  %868 = vst.msk [vmem:[%s3 + $0x20] sm:$0xf] %vm859, %v801
  %869 = vst.msk [vmem:[%s3 + $0x24] sm:$0xf] %vm859, %v802
  %870 = vst.msk [vmem:[%s3 + $0x28] sm:$0xf] %vm859, %v803
  %871 = vst.msk [vmem:[%s3 + $0x2c] sm:$0xf] %vm859, %v804
  %872 = vst.msk [vmem:[%s3 + $0x30] sm:$0xf] %vm859, %v805
  %873 = vst.msk [vmem:[%s3 + $0x34] sm:$0xf] %vm859, %v806
  %874 = vst.msk [vmem:[%s3 + $0x38] sm:$0xf] %vm859, %v807
  %875 = vst.msk [vmem:[%s3 + $0x3c] sm:$0xf] %vm859, %v808
  %876 = vst.msk [vmem:[%s3 + $0x40] sm:$0xf] %vm859, %v809
  %877 = vst.msk [vmem:[%s3 + $0x44] sm:$0xf] %vm859, %v810
  %878 = vst.msk [vmem:[%s3 + $0x48] sm:$0xf] %vm859, %v811
  %879 = vst.msk [vmem:[%s3 + $0x4c] sm:$0xf] %vm859, %v812
  %880 = vst.msk [vmem:[%s3 + $0x50] sm:$0xf] %vm859, %v813
  %881 = vst.msk [vmem:[%s3 + $0x54] sm:$0xf] %vm859, %v814
  %882 = vst.msk [vmem:[%s3 + $0x58] sm:$0xf] %vm859, %v815
  %883 = vst.msk [vmem:[%s3 + $0x5c] sm:$0xf] %vm859, %v816
  %884 = vst.msk [vmem:[%s3 + $0x60] sm:$0xf] %vm859, %v817
  %885 = vst.msk [vmem:[%s3 + $0x64] sm:$0xf] %vm859, %v818
  %886 = vst.msk [vmem:[%s3 + $0x68] sm:$0xf] %vm859, %v819
  %887 = vst.msk [vmem:[%s3 + $0x6c] sm:$0xf] %vm859, %v820
  %888 = vst.msk [vmem:[%s3 + $0x70] sm:$0xf] %vm859, %v821
  %889 = vst.msk [vmem:[%s3 + $0x74] sm:$0xf] %vm859, %v822
  %890 = vst.msk [vmem:[%s3 + $0x78] sm:$0xf] %vm859, %v823
  %891 = vst.msk [vmem:[%s3 + $0x7c] sm:$0xf] %vm859, %v824
  %vm892 = vcmask 57344
  %893 = vst.msk [vmem:[%s3 + $0x80] sm:$0x1] %vm892, %v825
  // Predicated region
  $region14: #{wav_autoencoder_forward.24} parent=0 // pred_check
    _
  $region15: #{wav_autoencoder_forward.24} parent=0 // pred_check_branch
    %895 = sbr.rel (0) target = $region17
  $region16: #{wav_autoencoder_forward.24} parent=0 // pred_region
    _
  $region17: #{wav_autoencoder_forward.24} parent=0 // pred_fallthru
    _
  // Predicated region
  $region18: #{wav_autoencoder_forward.24} parent=0 // pred_check
    _
  $region19: #{wav_autoencoder_forward.24} parent=0 // pred_check_branch
    %897 = sbr.rel (0) target = $region21
  $region20: #{wav_autoencoder_forward.24} parent=0 // pred_region
    _
  $region21: #{wav_autoencoder_forward.24} parent=0 // pred_fallthru
    _

// kernel: wav_autoencoder_forward.25
$region0: #{wav_autoencoder_forward.25}
  #allocation0 [shape = 'u32[]', space=smem, size = 0x4, offset = 0x4, fixed_abs, tag = 'smem constant byte address 0x4 - core index']
  #allocation1 [shape = 'u32[144,128]{1,0:T(1,128)}', space=vmem, size = 0x12000, scoped, tag = 'internal scratch']
  %s0 = inlined_call_operand.vmem [shape: bf16[62,32], index: 0, kind: input, shape index: {}]
  %s1 = inlined_call_operand.vmem [shape: bf16[62,32], index: 1, kind: input, shape index: {}]
  %s2 = inlined_call_operand.vmem [shape: bf16[32,16], index: 2, kind: input, shape index: {}]
  %s3 = inlined_call_operand.vmem [shape: bf16[32,16], index: 3, kind: input, shape index: {}]
  %s4 = inlined_call_operand.vmem [shape: f32[1,16], index: 4, kind: input, shape index: {}]
  %s5 = inlined_call_operand.vmem [shape: bf16[62,16], index: 5, kind: output, shape index: {}]
  %s6 = sld [smem:[#allocation0]]
  $region30: #{wav_autoencoder_forward.25} parent=0
    _
  %s8 = ssub.s32 1, %s6
  %s9 = scalar_select 0, %s8, %s6
  // Predicated region
  $region2: #{wav_autoencoder_forward.25} parent=0 // pred_check
    _
  $region3: #{wav_autoencoder_forward.25} parent=0 // pred_check_branch
    %11 = sbr.rel (0) target = $region5
  $region4: #{wav_autoencoder_forward.25} parent=0 // pred_region
    _
  $region5: #{wav_autoencoder_forward.25} parent=0 // pred_fallthru
    _
  // Predicated region
  $region6: #{wav_autoencoder_forward.25} parent=0 // pred_check
    _
  $region7: #{wav_autoencoder_forward.25} parent=0 // pred_check_branch
    %13 = sbr.rel (0) target = $region9
  $region8: #{wav_autoencoder_forward.25} parent=0 // pred_region
    _
  $region9: #{wav_autoencoder_forward.25} parent=0 // pred_fallthru
    _
  // Predicated region
  $region10: #{wav_autoencoder_forward.25} parent=0 // pred_check
    _
  $region11: #{wav_autoencoder_forward.25} parent=0 // pred_check_branch
    %15 = sbr.rel (0) target = $region13
  $region12: #{wav_autoencoder_forward.25} parent=0 // pred_region
    _
  $region13: #{wav_autoencoder_forward.25} parent=0 // pred_fallthru
    _
  // Predicated region
  $region14: #{wav_autoencoder_forward.25} parent=0 // pred_check
    _
  $region15: #{wav_autoencoder_forward.25} parent=0 // pred_check_branch
    %17 = sbr.rel (0) target = $region17
  $region16: #{wav_autoencoder_forward.25} parent=0 // pred_region
    _
  $region17: #{wav_autoencoder_forward.25} parent=0 // pred_fallthru
    _
  // Predicated region
  $region18: #{wav_autoencoder_forward.25} parent=0 // pred_check
    _
  $region19: #{wav_autoencoder_forward.25} parent=0 // pred_check_branch
    %19 = sbr.rel (0) target = $region21
  $region20: #{wav_autoencoder_forward.25} parent=0 // pred_region
    _
  $region21: #{wav_autoencoder_forward.25} parent=0 // pred_fallthru
    _
  %v21 = vld [vmem:[%s0] sm:$0xf]
  %v22 = vld [vmem:[%s0 + $0x4] sm:$0xf]
  %v23 = vld [vmem:[%s0 + $0x8] sm:$0xf]
  %v24 = vld [vmem:[%s0 + $0xc] sm:$0xf]
  %v25 = vld [vmem:[%s0 + $0x10] sm:$0xf]
  %v26 = vld [vmem:[%s0 + $0x14] sm:$0xf]
  %v27 = vld [vmem:[%s0 + $0x18] sm:$0xf]
  %v28 = vld [vmem:[%s0 + $0x1c] sm:$0x7]
  %v29 = vld [vmem:[%s2] sm:$0xf]
  %v30 = vld [vmem:[%s2 + $0x4] sm:$0xf]
  %v31 = vld [vmem:[%s2 + $0x8] sm:$0xf]
  %v32 = vld [vmem:[%s2 + $0xc] sm:$0xf]
  %v33 = vld [vmem:[%s1] sm:$0xf]
  %v34 = vld [vmem:[%s1 + $0x4] sm:$0xf]
  %v35 = vld [vmem:[%s1 + $0x8] sm:$0xf]
  %v36 = vld [vmem:[%s1 + $0xc] sm:$0xf]
  %v37 = vld [vmem:[%s1 + $0x10] sm:$0xf]
  %v38 = vld [vmem:[%s1 + $0x14] sm:$0xf]
  %v39 = vld [vmem:[%s1 + $0x18] sm:$0xf]
  %v40 = vld [vmem:[%s1 + $0x1c] sm:$0x7]
  %v41 = vld [vmem:[%s3] sm:$0xf]
  %v42 = vld [vmem:[%s3 + $0x4] sm:$0xf]
  %v43 = vld [vmem:[%s3 + $0x8] sm:$0xf]
  %v44 = vld [vmem:[%s3 + $0xc] sm:$0xf]
  %v53 = vunpack.c.l.b16 %v33
  %v54 = vunpack.c.l.b16 %v34
  %v55 = vunpack.c.l.b16 %v35
  %v56 = vunpack.c.l.b16 %v36
  %v57 = vunpack.c.l.b16 %v37
  %v58 = vunpack.c.l.b16 %v38
  %v59 = vunpack.c.l.b16 %v39
  %v60 = vunpack.c.l.b16 %v40
  %v61 = vpack.c.b16 %v54, %v53
  %v62 = vpack.c.b16 %v56, %v55
  %v63 = vpack.c.b16 %v58, %v57
  %v64 = vpack.c.b16 %v60, %v59
  %v69 = vunpack.c.l.b16 %v41
  %v70 = vunpack.c.l.b16 %v42
  %v71 = vunpack.c.l.b16 %v43
  %v72 = vunpack.c.l.b16 %v44
  %v73 = vpack.c.b16 %v70, %v69
  %v74 = vpack.c.b16 %v72, %v71
  %vm77 = vcmask 261120
  %v79 = vsel %vm77, %v61, 0
  %v82 = vsel %vm77, %v62, 0
  %v85 = vsel %vm77, %v63, 0
  %v88 = vsel %vm77, %v64, 0
  %90 = vmatprep.subr.bf16.mxu0 0
  %91 = vmatpush1.bf16.msra.mxu0 %v73
  %92 = vmatprep.subr.bf16.mxu0 0
  %93 = vmatpush1.bf16.msra.mxu0 %v74
  %94 = vmatprep.subr.bf16.mxu0 0
  %95 = vmatpush1.bf16.msra.mxu0 0
  %96 = vmatprep.subr.bf16.mxu0 0
  %97 = vmatpush1.bf16.msra.mxu0 0
  %98 = vmatprep.subr.bf16.mxu0 0
  %99 = vmatpush1.bf16.msra.mxu0 0
  %100 = vmatprep.subr.bf16.mxu0 0
  %101 = vmatpush1.bf16.msra.mxu0 0
  %102 = vmatprep.subr.bf16.mxu0 0
  %103 = vmatpush1.bf16.msra.mxu0 0
  %104 = vmatprep.subr.bf16.mxu0 0
  %105 = vmatpush1.bf16.msra.mxu0 0
  %106 = vmatprep.subr.bf16.mxu0 0
  %107 = vmatpush1.bf16.msra.mxu0 0
  %108 = vmatprep.subr.bf16.mxu0 0
  %109 = vmatpush1.bf16.msra.mxu0 0
  %110 = vmatprep.subr.bf16.mxu0 0
  %111 = vmatpush1.bf16.msra.mxu0 0
  %112 = vmatprep.subr.bf16.mxu0 0
  %113 = vmatpush1.bf16.msra.mxu0 0
  %114 = vmatprep.subr.bf16.mxu0 0
  %115 = vmatpush1.bf16.msra.mxu0 0
  %116 = vmatprep.subr.bf16.mxu0 0
  %117 = vmatpush1.bf16.msra.mxu0 0
  %118 = vmatprep.subr.bf16.mxu0 0
  %119 = vmatpush1.bf16.msra.mxu0 0
  %120 = vmatprep.subr.bf16.mxu0 0
  %121 = vmatpush1.bf16.msra.mxu0 0
  %122 = vmatprep.mubr.bf16.mxu0 0
  %123 = vmatmul.mubr.bf16.gmra.mrb[0].mxu0 %v79
  %v124 = vpop.f32.mrb[0].mxu0
  %v125 = vadd.f32 0.0, %v124
  %v126 = vpop.f32.mrb[0].mxu0
  %v127 = vpop.f32.mrb[0].mxu0
  %v128 = vadd.f32 0.0, %v127
  %v129 = vpop.f32.mrb[0].mxu0
  %130 = vmatprep.mubr.bf16.mxu0 0
  %131 = vmatmul.mubr.bf16.gmra.mrb[0].mxu0 %v82
  %v132 = vpop.f32.mrb[0].mxu0
  %v133 = vadd.f32 0.0, %v132
  %v134 = vpop.f32.mrb[0].mxu0
  %v135 = vpop.f32.mrb[0].mxu0
  %v136 = vadd.f32 0.0, %v135
  %v137 = vpop.f32.mrb[0].mxu0
  %138 = vmatprep.mubr.bf16.mxu0 0
  %139 = vmatmul.mubr.bf16.gmra.mrb[0].mxu0 %v85
  %v140 = vpop.f32.mrb[0].mxu0
  %v141 = vadd.f32 0.0, %v140
  %v142 = vpop.f32.mrb[0].mxu0
  %v143 = vpop.f32.mrb[0].mxu0
  %v144 = vadd.f32 0.0, %v143
  %v145 = vpop.f32.mrb[0].mxu0
  %146 = vmatprep.mubr.bf16.mxu0 0
  %147 = vmatmul.mubr.bf16.gmra.mrb[0].mxu0 %v88
  %v148 = vpop.f32.mrb[0].mxu0
  %v149 = vadd.f32 0.0, %v148
  %v150 = vpop.f32.mrb[0].mxu0
  %v151 = vpop.f32.mrb[0].mxu0
  %v152 = vadd.f32 0.0, %v151
  %v153 = vpop.f32.mrb[0].mxu0
  %154 = vdwg.mxu0
  %v163 = vunpack.c.l.b16 %v21
  %v164 = vunpack.c.l.b16 %v22
  %v165 = vunpack.c.l.b16 %v23
  %v166 = vunpack.c.l.b16 %v24
  %v167 = vunpack.c.l.b16 %v25
  %v168 = vunpack.c.l.b16 %v26
  %v169 = vunpack.c.l.b16 %v27
  %v170 = vunpack.c.l.b16 %v28
  %v171 = vpack.c.b16 %v164, %v163
  %v172 = vpack.c.b16 %v166, %v165
  %v173 = vpack.c.b16 %v168, %v167
  %v174 = vpack.c.b16 %v170, %v169
  %v179 = vunpack.c.l.b16 %v29
  %v180 = vunpack.c.l.b16 %v30
  %v181 = vunpack.c.l.b16 %v31
  %v182 = vunpack.c.l.b16 %v32
  %v183 = vpack.c.b16 %v180, %v179
  %v184 = vpack.c.b16 %v182, %v181
  %v188 = vsel %vm77, %v171, 0
  %v191 = vsel %vm77, %v172, 0
  %v194 = vsel %vm77, %v173, 0
  %v197 = vsel %vm77, %v174, 0
  %199 = vmatprep.subr.bf16.mxu0 0
  %200 = vmatpush1.bf16.msra.mxu0 %v183
  %201 = vmatprep.subr.bf16.mxu0 0
  %202 = vmatpush1.bf16.msra.mxu0 %v184
  %203 = vmatprep.subr.bf16.mxu0 0
  %204 = vmatpush1.bf16.msra.mxu0 0
  %205 = vmatprep.subr.bf16.mxu0 0
  %206 = vmatpush1.bf16.msra.mxu0 0
  %207 = vmatprep.subr.bf16.mxu0 0
  %208 = vmatpush1.bf16.msra.mxu0 0
  %209 = vmatprep.subr.bf16.mxu0 0
  %210 = vmatpush1.bf16.msra.mxu0 0
  %211 = vmatprep.subr.bf16.mxu0 0
  %212 = vmatpush1.bf16.msra.mxu0 0
  %213 = vmatprep.subr.bf16.mxu0 0
  %214 = vmatpush1.bf16.msra.mxu0 0
  %215 = vmatprep.subr.bf16.mxu0 0
  %216 = vmatpush1.bf16.msra.mxu0 0
  %217 = vmatprep.subr.bf16.mxu0 0
  %218 = vmatpush1.bf16.msra.mxu0 0
  %219 = vmatprep.subr.bf16.mxu0 0
  %220 = vmatpush1.bf16.msra.mxu0 0
  %221 = vmatprep.subr.bf16.mxu0 0
  %222 = vmatpush1.bf16.msra.mxu0 0
  %223 = vmatprep.subr.bf16.mxu0 0
  %224 = vmatpush1.bf16.msra.mxu0 0
  %225 = vmatprep.subr.bf16.mxu0 0
  %226 = vmatpush1.bf16.msra.mxu0 0
  %227 = vmatprep.subr.bf16.mxu0 0
  %228 = vmatpush1.bf16.msra.mxu0 0
  %229 = vmatprep.subr.bf16.mxu0 0
  %230 = vmatpush1.bf16.msra.mxu0 0
  %231 = vmatprep.mubr.bf16.mxu0 0
  %232 = vmatmul.mubr.bf16.gmra.mrb[0].mxu0 %v188
  %v233 = vpop.f32.mrb[0].mxu0
  %v234 = vadd.f32 %v125, %v233
  %v235 = vpop.f32.mrb[0].mxu0
  %v236 = vpop.f32.mrb[0].mxu0
  %v237 = vadd.f32 %v128, %v236
  %v238 = vpop.f32.mrb[0].mxu0
  %239 = vmatprep.mubr.bf16.mxu0 0
  %240 = vmatmul.mubr.bf16.gmra.mrb[0].mxu0 %v191
  %v241 = vpop.f32.mrb[0].mxu0
  %v242 = vadd.f32 %v133, %v241
  %v243 = vpop.f32.mrb[0].mxu0
  %v244 = vpop.f32.mrb[0].mxu0
  %v245 = vadd.f32 %v136, %v244
  %v246 = vpop.f32.mrb[0].mxu0
  %247 = vmatprep.mubr.bf16.mxu0 0
  %248 = vmatmul.mubr.bf16.gmra.mrb[0].mxu0 %v194
  %v249 = vpop.f32.mrb[0].mxu0
  %v250 = vadd.f32 %v141, %v249
  %v251 = vpop.f32.mrb[0].mxu0
  %v252 = vpop.f32.mrb[0].mxu0
  %v253 = vadd.f32 %v144, %v252
  %v254 = vpop.f32.mrb[0].mxu0
  %255 = vmatprep.mubr.bf16.mxu0 0
  %256 = vmatmul.mubr.bf16.gmra.mrb[0].mxu0 %v197
  %v257 = vpop.f32.mrb[0].mxu0
  %v258 = vadd.f32 %v149, %v257
  %v259 = vpop.f32.mrb[0].mxu0
  %v260 = vpop.f32.mrb[0].mxu0
  %v261 = vadd.f32 %v152, %v260
  %v262 = vpop.f32.mrb[0].mxu0
  %263 = vdwg.mxu0
  %v264 = vld [vmem:[%s4] sm:$0x1]
  %v266 = vlaneseq
  %v267 = vshrl.u32 %v266, 7
  %v268 = vsub.s32 0, %v267
  %v269 = vrot.slane %v264, %v268
  %v271 = vadd.f32 %v234, %v269
  %v272 = vadd.f32 %v237, %v269
  %v273 = vadd.f32 %v242, %v269
  %v274 = vadd.f32 %v245, %v269
  %v275 = vadd.f32 %v250, %v269
  %v276 = vadd.f32 %v253, %v269
  %v277 = vadd.f32 %v258, %v269
  %v278 = vadd.f32 %v261, %v269
  %v279 = vmax.f32 %v271, 0.0
  %v280 = vmax.f32 %v272, 0.0
  %v281 = vmax.f32 %v273, 0.0
  %v282 = vmax.f32 %v274, 0.0
  %v283 = vmax.f32 %v275, 0.0
  %v284 = vmax.f32 %v276, 0.0
  %v285 = vmax.f32 %v277, 0.0
  %v286 = vmax.f32 %v278, 0.0
  %v287 = vpack.c.bf16 %v280, %v279
  %v288 = vpack.c.bf16 %v282, %v281
  %v289 = vpack.c.bf16 %v284, %v283
  %v290 = vpack.c.bf16 %v286, %v285
  %v295 = vunpack.c.l.b16 %v287
  %v296 = vunpack.c.h.b16 %v287
  %v297 = vunpack.c.l.b16 %v288
  %v298 = vunpack.c.h.b16 %v288
  %v299 = vunpack.c.l.b16 %v289
  %v300 = vunpack.c.h.b16 %v289
  %v301 = vunpack.c.l.b16 %v290
  %v302 = vunpack.c.h.b16 %v290
  %v303 = vpack.c.b16 %v295, %v295
  %v304 = vpack.c.b16 %v296, %v296
  %v305 = vpack.c.b16 %v297, %v297
  %v306 = vpack.c.b16 %v298, %v298
  %v307 = vpack.c.b16 %v299, %v299
  %v308 = vpack.c.b16 %v300, %v300
  %v309 = vpack.c.b16 %v301, %v301
  %v310 = vpack.c.b16 %v302, %v302
  %vm319 = vcmask 125952
  %320 = vst.msk [vmem:[%s5] sm:$0xf] %vm319, %v303
  %321 = vst.msk [vmem:[%s5 + $0x4] sm:$0xf] %vm319, %v304
  %322 = vst.msk [vmem:[%s5 + $0x8] sm:$0xf] %vm319, %v305
  %323 = vst.msk [vmem:[%s5 + $0xc] sm:$0xf] %vm319, %v306
  %324 = vst.msk [vmem:[%s5 + $0x10] sm:$0xf] %vm319, %v307
  %325 = vst.msk [vmem:[%s5 + $0x14] sm:$0xf] %vm319, %v308
  %326 = vst.msk [vmem:[%s5 + $0x18] sm:$0xf] %vm319, %v309
  %vm327 = vcmask 124928
  %328 = vst.msk [vmem:[%s5 + $0x1c] sm:$0x7] %vm327, %v310
  // Predicated region
  $region22: #{wav_autoencoder_forward.25} parent=0 // pred_check
    _
  $region23: #{wav_autoencoder_forward.25} parent=0 // pred_check_branch
    %330 = sbr.rel (0) target = $region25
  $region24: #{wav_autoencoder_forward.25} parent=0 // pred_region
    _
  $region25: #{wav_autoencoder_forward.25} parent=0 // pred_fallthru
    _
  // Predicated region
  $region26: #{wav_autoencoder_forward.25} parent=0 // pred_check
    _
  $region27: #{wav_autoencoder_forward.25} parent=0 // pred_check_branch
    %332 = sbr.rel (0) target = $region29
  $region28: #{wav_autoencoder_forward.25} parent=0 // pred_region
    _
  $region29: #{wav_autoencoder_forward.25} parent=0 // pred_fallthru
    _

// kernel: wav_autoencoder_forward.26
$region0: #{wav_autoencoder_forward.26}
  #allocation0 [shape = 'u32[]', space=smem, size = 0x4, offset = 0x4, fixed_abs, tag = 'smem constant byte address 0x4 - core index']
  #allocation1 [shape = 'u32[144,128]{1,0:T(1,128)}', space=vmem, size = 0x12000, scoped, tag = 'internal scratch']
  %s0 = inlined_call_operand.vmem [shape: bf16[66,16], index: 0, kind: input, shape index: {}]
  %s1 = inlined_call_operand.vmem [shape: bf16[16,32], index: 1, kind: input, shape index: {}]
  %s2 = inlined_call_operand.vmem [shape: f32[1,32], index: 2, kind: input, shape index: {}]
  %s3 = inlined_call_operand.vmem [shape: bf16[66,16], index: 3, kind: output, shape index: {}]
  %s4 = sld [smem:[#allocation0]]
  $region22: #{wav_autoencoder_forward.26} parent=0
    _
  %s6 = ssub.s32 1, %s4
  %s7 = scalar_select 0, %s6, %s4
  // Predicated region
  $region2: #{wav_autoencoder_forward.26} parent=0 // pred_check
    _
  $region3: #{wav_autoencoder_forward.26} parent=0 // pred_check_branch
    %9 = sbr.rel (0) target = $region5
  $region4: #{wav_autoencoder_forward.26} parent=0 // pred_region
    _
  $region5: #{wav_autoencoder_forward.26} parent=0 // pred_fallthru
    _
  // Predicated region
  $region6: #{wav_autoencoder_forward.26} parent=0 // pred_check
    _
  $region7: #{wav_autoencoder_forward.26} parent=0 // pred_check_branch
    %11 = sbr.rel (0) target = $region9
  $region8: #{wav_autoencoder_forward.26} parent=0 // pred_region
    _
  $region9: #{wav_autoencoder_forward.26} parent=0 // pred_fallthru
    _
  // Predicated region
  $region10: #{wav_autoencoder_forward.26} parent=0 // pred_check
    _
  $region11: #{wav_autoencoder_forward.26} parent=0 // pred_check_branch
    %13 = sbr.rel (0) target = $region13
  $region12: #{wav_autoencoder_forward.26} parent=0 // pred_region
    _
  $region13: #{wav_autoencoder_forward.26} parent=0 // pred_fallthru
    _
  %v15 = vld [vmem:[%s0] sm:$0xf]
  %v16 = vld [vmem:[%s0 + $0x4] sm:$0xf]
  %v17 = vld [vmem:[%s0 + $0x8] sm:$0xf]
  %v18 = vld [vmem:[%s0 + $0xc] sm:$0xf]
  %v19 = vld [vmem:[%s0 + $0x10] sm:$0xf]
  %v20 = vld [vmem:[%s0 + $0x14] sm:$0xf]
  %v21 = vld [vmem:[%s0 + $0x18] sm:$0xf]
  %v22 = vld [vmem:[%s0 + $0x1c] sm:$0xf]
  %v23 = vld [vmem:[%s0 + $0x20] sm:$0x1]
  %v24 = vld [vmem:[%s1] sm:$0xf]
  %v25 = vld [vmem:[%s1 + $0x4] sm:$0xf]
  %v26 = vld [vmem:[%s2] sm:$0x1]
  %v28 = vlaneseq
  %v29 = vshrl.u32 %v28, 7
  %v30 = vsub.s32 0, %v29
  %v31 = vrot.slane %v26, %v30
  %v42 = vunpack.c.l.b16 %v15
  %v43 = vunpack.c.l.b16 %v16
  %v44 = vunpack.c.l.b16 %v17
  %v45 = vunpack.c.l.b16 %v18
  %v46 = vunpack.c.l.b16 %v19
  %v47 = vunpack.c.l.b16 %v20
  %v48 = vunpack.c.l.b16 %v21
  %v49 = vunpack.c.l.b16 %v22
  %v50 = vunpack.c.l.b16 %v23
  %v51 = vpack.c.b16 %v43, %v42
  %v52 = vpack.c.b16 %v45, %v44
  %v53 = vpack.c.b16 %v47, %v46
  %v54 = vpack.c.b16 %v49, %v48
  %v55 = vpack.c.b16 %v50, %v50
  %v58 = vunpack.c.l.b16 %v24
  %v59 = vunpack.c.l.b16 %v25
  %v60 = vpack.c.b16 %v59, %v58
  %vm62 = vcmask 130048
  %v64 = vsel %vm62, %v51, 0
  %v67 = vsel %vm62, %v52, 0
  %v70 = vsel %vm62, %v53, 0
  %v73 = vsel %vm62, %v54, 0
  %v76 = vsel %vm62, %v55, 0
  %78 = vmatprep.subr.bf16.mxu0 0
  %79 = vmatpush1.bf16.msra.mxu0 %v60
  %80 = vmatprep.subr.bf16.mxu0 0
  %81 = vmatpush1.bf16.msra.mxu0 0
  %82 = vmatprep.subr.bf16.mxu0 0
  %83 = vmatpush1.bf16.msra.mxu0 0
  %84 = vmatprep.subr.bf16.mxu0 0
  %85 = vmatpush1.bf16.msra.mxu0 0
  %86 = vmatprep.subr.bf16.mxu0 0
  %87 = vmatpush1.bf16.msra.mxu0 0
  %88 = vmatprep.subr.bf16.mxu0 0
  %89 = vmatpush1.bf16.msra.mxu0 0
  %90 = vmatprep.subr.bf16.mxu0 0
  %91 = vmatpush1.bf16.msra.mxu0 0
  %92 = vmatprep.subr.bf16.mxu0 0
  %93 = vmatpush1.bf16.msra.mxu0 0
  %94 = vmatprep.subr.bf16.mxu0 0
  %95 = vmatpush1.bf16.msra.mxu0 0
  %96 = vmatprep.subr.bf16.mxu0 0
  %97 = vmatpush1.bf16.msra.mxu0 0
  %98 = vmatprep.subr.bf16.mxu0 0
  %99 = vmatpush1.bf16.msra.mxu0 0
  %100 = vmatprep.subr.bf16.mxu0 0
  %101 = vmatpush1.bf16.msra.mxu0 0
  %102 = vmatprep.subr.bf16.mxu0 0
  %103 = vmatpush1.bf16.msra.mxu0 0
  %104 = vmatprep.subr.bf16.mxu0 0
  %105 = vmatpush1.bf16.msra.mxu0 0
  %106 = vmatprep.subr.bf16.mxu0 0
  %107 = vmatpush1.bf16.msra.mxu0 0
  %108 = vmatprep.subr.bf16.mxu0 0
  %109 = vmatpush1.bf16.msra.mxu0 0
  %110 = vmatprep.mubr.bf16.mxu0 0
  %111 = vmatmul.mubr.bf16.gmra.mrb[0].mxu0 %v64
  %v112 = vpop.f32.mrb[0].mxu0
  %v113 = vadd.f32 %v31, %v112
  %v114 = vpop.f32.mrb[0].mxu0
  %v115 = vpop.f32.mrb[0].mxu0
  %v116 = vadd.f32 %v31, %v115
  %v117 = vpop.f32.mrb[0].mxu0
  %118 = vmatprep.mubr.bf16.mxu0 0
  %119 = vmatmul.mubr.bf16.gmra.mrb[0].mxu0 %v67
  %v120 = vpop.f32.mrb[0].mxu0
  %v121 = vadd.f32 %v31, %v120
  %v122 = vpop.f32.mrb[0].mxu0
  %v123 = vpop.f32.mrb[0].mxu0
  %v124 = vadd.f32 %v31, %v123
  %v125 = vpop.f32.mrb[0].mxu0
  %126 = vmatprep.mubr.bf16.mxu0 0
  %127 = vmatmul.mubr.bf16.gmra.mrb[0].mxu0 %v70
  %v128 = vpop.f32.mrb[0].mxu0
  %v129 = vadd.f32 %v31, %v128
  %v130 = vpop.f32.mrb[0].mxu0
  %v131 = vpop.f32.mrb[0].mxu0
  %v132 = vadd.f32 %v31, %v131
  %v133 = vpop.f32.mrb[0].mxu0
  %134 = vmatprep.mubr.bf16.mxu0 0
  %135 = vmatmul.mubr.bf16.gmra.mrb[0].mxu0 %v73
  %v136 = vpop.f32.mrb[0].mxu0
  %v137 = vadd.f32 %v31, %v136
  %v138 = vpop.f32.mrb[0].mxu0
  %v139 = vpop.f32.mrb[0].mxu0
  %v140 = vadd.f32 %v31, %v139
  %v141 = vpop.f32.mrb[0].mxu0
  %142 = vmatprep.mubr.bf16.mxu0 0
  %143 = vmatmul.mubr.bf16.gmra.mrb[0].mxu0 %v76
  %v144 = vpop.f32.mrb[0].mxu0
  %v145 = vadd.f32 %v31, %v144
  %v146 = vpop.f32.mrb[0].mxu0
  %v147 = vpop.f32.mrb[0].mxu0
  %v148 = vpop.f32.mrb[0].mxu0
  %149 = vdwg.mxu0
  %v150 = vxor.u32 %v113, 2147483648
  %v151 = vxor.u32 %v116, 2147483648
  %v152 = vxor.u32 %v121, 2147483648
  %v153 = vxor.u32 %v124, 2147483648
  %v154 = vxor.u32 %v129, 2147483648
  %v155 = vxor.u32 %v132, 2147483648
  %v156 = vxor.u32 %v137, 2147483648
  %v157 = vxor.u32 %v140, 2147483648
  %v158 = vxor.u32 %v145, 2147483648
  %v159 = vmul.f32 %v150, 1.442695
  %v160 = vpow.pop %v159
  %v161 = vmul.f32 %v151, 1.442695
  %v162 = vpow.pop %v161
  %v163 = vmul.f32 %v152, 1.442695
  %v164 = vpow.pop %v163
  %v165 = vmul.f32 %v153, 1.442695
  %v166 = vpow.pop %v165
  %v167 = vmul.f32 %v154, 1.442695
  %v168 = vpow.pop %v167
  %v169 = vmul.f32 %v155, 1.442695
  %v170 = vpow.pop %v169
  %v171 = vmul.f32 %v156, 1.442695
  %v172 = vpow.pop %v171
  %v173 = vmul.f32 %v157, 1.442695
  %v174 = vpow.pop %v173
  %v175 = vmul.f32 %v158, 1.442695
  %v176 = vpow.pop %v175
  %v177 = vadd.f32 %v160, 1.0
  %v178 = vadd.f32 %v162, 1.0
  %v179 = vadd.f32 %v164, 1.0
  %v180 = vadd.f32 %v166, 1.0
  %v181 = vadd.f32 %v168, 1.0
  %v182 = vadd.f32 %v170, 1.0
  %v183 = vadd.f32 %v172, 1.0
  %v184 = vadd.f32 %v174, 1.0
  %v185 = vadd.f32 %v176, 1.0
  %v186 = vrcp.pop %v177
  %v187 = vmul.f32 1.0, %v186
  %v188 = vrcp.pop %v178
  %v189 = vmul.f32 1.0, %v188
  %v190 = vrcp.pop %v179
  %v191 = vmul.f32 1.0, %v190
  %v192 = vrcp.pop %v180
  %v193 = vmul.f32 1.0, %v192
  %v194 = vrcp.pop %v181
  %v195 = vmul.f32 1.0, %v194
  %v196 = vrcp.pop %v182
  %v197 = vmul.f32 1.0, %v196
  %v198 = vrcp.pop %v183
  %v199 = vmul.f32 1.0, %v198
  %v200 = vrcp.pop %v184
  %v201 = vmul.f32 1.0, %v200
  %v202 = vrcp.pop %v185
  %v203 = vmul.f32 1.0, %v202
  %213 = vrot.lane.b32.xlu0 %v187, 112
  %v214 = vpop.permute.xlu0 %213
  %215 = vrot.lane.b32.xlu0 %v189, 112
  %v216 = vpop.permute.xlu0 %215
  %217 = vrot.lane.b32.xlu0 %v191, 112
  %v218 = vpop.permute.xlu0 %217
  %219 = vrot.lane.b32.xlu0 %v193, 112
  %v220 = vpop.permute.xlu0 %219
  %221 = vrot.lane.b32.xlu0 %v195, 112
  %v222 = vpop.permute.xlu0 %221
  %223 = vrot.lane.b32.xlu0 %v197, 112
  %v224 = vpop.permute.xlu0 %223
  %225 = vrot.lane.b32.xlu0 %v199, 112
  %v226 = vpop.permute.xlu0 %225
  %227 = vrot.lane.b32.xlu0 %v201, 112
  %v228 = vpop.permute.xlu0 %227
  %229 = vrot.lane.b32.xlu0 %v203, 112
  %v230 = vpop.permute.xlu0 %229
  %v240 = vmul.f32 %v113, %v214
  %v241 = vmul.f32 %v116, %v216
  %v242 = vmul.f32 %v121, %v218
  %v243 = vmul.f32 %v124, %v220
  %v244 = vmul.f32 %v129, %v222
  %v245 = vmul.f32 %v132, %v224
  %v246 = vmul.f32 %v137, %v226
  %v247 = vmul.f32 %v140, %v228
  %v248 = vmul.f32 %v145, %v230
  %v249 = vpack.c.bf16 %v241, %v240
  %v250 = vpack.c.bf16 %v243, %v242
  %v251 = vpack.c.bf16 %v245, %v244
  %v252 = vpack.c.bf16 %v247, %v246
  %v253 = vpack.c.bf16 %v248, %v248
  %v259 = vunpack.c.l.b16 %v249
  %v260 = vunpack.c.h.b16 %v249
  %v261 = vunpack.c.l.b16 %v250
  %v262 = vunpack.c.h.b16 %v250
  %v263 = vunpack.c.l.b16 %v251
  %v264 = vunpack.c.h.b16 %v251
  %v265 = vunpack.c.l.b16 %v252
  %v266 = vunpack.c.h.b16 %v252
  %v267 = vunpack.c.l.b16 %v253
  %v268 = vpack.c.b16 %v259, %v259
  %v269 = vpack.c.b16 %v260, %v260
  %v270 = vpack.c.b16 %v261, %v261
  %v271 = vpack.c.b16 %v262, %v262
  %v272 = vpack.c.b16 %v263, %v263
  %v273 = vpack.c.b16 %v264, %v264
  %v274 = vpack.c.b16 %v265, %v265
  %v275 = vpack.c.b16 %v266, %v266
  %v276 = vpack.c.b16 %v267, %v267
  %vm286 = vcmask 125952
  %287 = vst.msk [vmem:[%s3] sm:$0xf] %vm286, %v268
  %288 = vst.msk [vmem:[%s3 + $0x4] sm:$0xf] %vm286, %v269
  %289 = vst.msk [vmem:[%s3 + $0x8] sm:$0xf] %vm286, %v270
  %290 = vst.msk [vmem:[%s3 + $0xc] sm:$0xf] %vm286, %v271
  %291 = vst.msk [vmem:[%s3 + $0x10] sm:$0xf] %vm286, %v272
  %292 = vst.msk [vmem:[%s3 + $0x14] sm:$0xf] %vm286, %v273
  %293 = vst.msk [vmem:[%s3 + $0x18] sm:$0xf] %vm286, %v274
  %294 = vst.msk [vmem:[%s3 + $0x1c] sm:$0xf] %vm286, %v275
  %vm295 = vcmask 122880
  %296 = vst.msk [vmem:[%s3 + $0x20] sm:$0x1] %vm295, %v276
  // Predicated region
  $region14: #{wav_autoencoder_forward.26} parent=0 // pred_check
    _
  $region15: #{wav_autoencoder_forward.26} parent=0 // pred_check_branch
    %298 = sbr.rel (0) target = $region17
  $region16: #{wav_autoencoder_forward.26} parent=0 // pred_region
    _
  $region17: #{wav_autoencoder_forward.26} parent=0 // pred_fallthru
    _
  // Predicated region
  $region18: #{wav_autoencoder_forward.26} parent=0 // pred_check
    _
  $region19: #{wav_autoencoder_forward.26} parent=0 // pred_check_branch
    %300 = sbr.rel (0) target = $region21
  $region20: #{wav_autoencoder_forward.26} parent=0 // pred_region
    _
  $region21: #{wav_autoencoder_forward.26} parent=0 // pred_fallthru
    _

// kernel: wav_autoencoder_forward.28
$region0: #{wav_autoencoder_forward.28}
  #allocation0 [shape = 'u32[]', space=smem, size = 0x4, offset = 0x4, fixed_abs, tag = 'smem constant byte address 0x4 - core index']
  #allocation1 [shape = 'u32[144,128]{1,0:T(1,128)}', space=vmem, size = 0x12000, scoped, tag = 'internal scratch']
  %s0 = inlined_call_operand.vmem [shape: bf16[18,32], index: 0, kind: input, shape index: {}]
  %s1 = inlined_call_operand.vmem [shape: bf16[32,64], index: 1, kind: input, shape index: {}]
  %s2 = inlined_call_operand.vmem [shape: f32[1,64], index: 2, kind: input, shape index: {}]
  %s3 = inlined_call_operand.vmem [shape: bf16[18,32], index: 3, kind: output, shape index: {}]
  %s4 = sld [smem:[#allocation0]]
  $region22: #{wav_autoencoder_forward.28} parent=0
    _
  %s6 = ssub.s32 1, %s4
  %s7 = scalar_select 0, %s6, %s4
  // Predicated region
  $region2: #{wav_autoencoder_forward.28} parent=0 // pred_check
    _
  $region3: #{wav_autoencoder_forward.28} parent=0 // pred_check_branch
    %9 = sbr.rel (0) target = $region5
  $region4: #{wav_autoencoder_forward.28} parent=0 // pred_region
    _
  $region5: #{wav_autoencoder_forward.28} parent=0 // pred_fallthru
    _
  // Predicated region
  $region6: #{wav_autoencoder_forward.28} parent=0 // pred_check
    _
  $region7: #{wav_autoencoder_forward.28} parent=0 // pred_check_branch
    %11 = sbr.rel (0) target = $region9
  $region8: #{wav_autoencoder_forward.28} parent=0 // pred_region
    _
  $region9: #{wav_autoencoder_forward.28} parent=0 // pred_fallthru
    _
  // Predicated region
  $region10: #{wav_autoencoder_forward.28} parent=0 // pred_check
    _
  $region11: #{wav_autoencoder_forward.28} parent=0 // pred_check_branch
    %13 = sbr.rel (0) target = $region13
  $region12: #{wav_autoencoder_forward.28} parent=0 // pred_region
    _
  $region13: #{wav_autoencoder_forward.28} parent=0 // pred_fallthru
    _
  %v15 = vld [vmem:[%s0] sm:$0xf]
  %v16 = vld [vmem:[%s0 + $0x4] sm:$0xf]
  %v17 = vld [vmem:[%s0 + $0x8] sm:$0x1]
  %v18 = vld [vmem:[%s1] sm:$0xf]
  %v19 = vld [vmem:[%s1 + $0x4] sm:$0xf]
  %v20 = vld [vmem:[%s1 + $0x8] sm:$0xf]
  %v21 = vld [vmem:[%s1 + $0xc] sm:$0xf]
  %v22 = vld [vmem:[%s2] sm:$0x1]
  %v24 = vlaneseq
  %v25 = vshrl.u32 %v24, 7
  %v26 = vsub.s32 0, %v25
  %v27 = vrot.slane %v22, %v26
  %v32 = vunpack.c.l.b16 %v15
  %v33 = vunpack.c.l.b16 %v16
  %v34 = vunpack.c.l.b16 %v17
  %v35 = vpack.c.b16 %v33, %v32
  %v36 = vpack.c.b16 %v34, %v34
  %v41 = vunpack.c.l.b16 %v18
  %v42 = vunpack.c.l.b16 %v19
  %v43 = vunpack.c.l.b16 %v20
  %v44 = vunpack.c.l.b16 %v21
  %v45 = vpack.c.b16 %v42, %v41
  %v46 = vpack.c.b16 %v44, %v43
  %vm49 = vcmask 261120
  %v51 = vsel %vm49, %v35, 0
  %v54 = vsel %vm49, %v36, 0
  %56 = vmatprep.subr.bf16.mxu0 0
  %57 = vmatpush1.bf16.msra.mxu0 %v45
  %58 = vmatprep.subr.bf16.mxu0 0
  %59 = vmatpush1.bf16.msra.mxu0 %v46
  %60 = vmatprep.subr.bf16.mxu0 0
  %61 = vmatpush1.bf16.msra.mxu0 0
  %62 = vmatprep.subr.bf16.mxu0 0
  %63 = vmatpush1.bf16.msra.mxu0 0
  %64 = vmatprep.subr.bf16.mxu0 0
  %65 = vmatpush1.bf16.msra.mxu0 0
  %66 = vmatprep.subr.bf16.mxu0 0
  %67 = vmatpush1.bf16.msra.mxu0 0
  %68 = vmatprep.subr.bf16.mxu0 0
  %69 = vmatpush1.bf16.msra.mxu0 0
  %70 = vmatprep.subr.bf16.mxu0 0
  %71 = vmatpush1.bf16.msra.mxu0 0
  %72 = vmatprep.subr.bf16.mxu0 0
  %73 = vmatpush1.bf16.msra.mxu0 0
  %74 = vmatprep.subr.bf16.mxu0 0
  %75 = vmatpush1.bf16.msra.mxu0 0
  %76 = vmatprep.subr.bf16.mxu0 0
  %77 = vmatpush1.bf16.msra.mxu0 0
  %78 = vmatprep.subr.bf16.mxu0 0
  %79 = vmatpush1.bf16.msra.mxu0 0
  %80 = vmatprep.subr.bf16.mxu0 0
  %81 = vmatpush1.bf16.msra.mxu0 0
  %82 = vmatprep.subr.bf16.mxu0 0
  %83 = vmatpush1.bf16.msra.mxu0 0
  %84 = vmatprep.subr.bf16.mxu0 0
  %85 = vmatpush1.bf16.msra.mxu0 0
  %86 = vmatprep.subr.bf16.mxu0 0
  %87 = vmatpush1.bf16.msra.mxu0 0
  %88 = vmatprep.mubr.bf16.mxu0 0
  %89 = vmatmul.mubr.bf16.gmra.mrb[0].mxu0 %v51
  %v90 = vpop.f32.mrb[0].mxu0
  %v91 = vadd.f32 %v27, %v90
  %v92 = vpop.f32.mrb[0].mxu0
  %v93 = vpop.f32.mrb[0].mxu0
  %v94 = vadd.f32 %v27, %v93
  %v95 = vpop.f32.mrb[0].mxu0
  %96 = vmatprep.mubr.bf16.mxu0 0
  %97 = vmatmul.mubr.bf16.gmra.mrb[0].mxu0 %v54
  %v98 = vpop.f32.mrb[0].mxu0
  %v99 = vadd.f32 %v27, %v98
  %v100 = vpop.f32.mrb[0].mxu0
  %v101 = vpop.f32.mrb[0].mxu0
  %v102 = vpop.f32.mrb[0].mxu0
  %103 = vdwg.mxu0
  %v104 = vxor.u32 %v91, 2147483648
  %v105 = vxor.u32 %v94, 2147483648
  %v106 = vxor.u32 %v99, 2147483648
  %v107 = vmul.f32 %v104, 1.442695
  %v108 = vpow.pop %v107
  %v109 = vmul.f32 %v105, 1.442695
  %v110 = vpow.pop %v109
  %v111 = vmul.f32 %v106, 1.442695
  %v112 = vpow.pop %v111
  %v113 = vadd.f32 %v108, 1.0
  %v114 = vadd.f32 %v110, 1.0
  %v115 = vadd.f32 %v112, 1.0
  %v116 = vrcp.pop %v113
  %v117 = vmul.f32 1.0, %v116
  %v118 = vrcp.pop %v114
  %v119 = vmul.f32 1.0, %v118
  %v120 = vrcp.pop %v115
  %v121 = vmul.f32 1.0, %v120
  %125 = vrot.lane.b32.xlu0 %v117, 96
  %v126 = vpop.permute.xlu0 %125
  %127 = vrot.lane.b32.xlu0 %v119, 96
  %v128 = vpop.permute.xlu0 %127
  %129 = vrot.lane.b32.xlu0 %v121, 96
  %v130 = vpop.permute.xlu0 %129
  %v134 = vmul.f32 %v91, %v126
  %v135 = vmul.f32 %v94, %v128
  %v136 = vmul.f32 %v99, %v130
  %v137 = vpack.c.bf16 %v135, %v134
  %v138 = vpack.c.bf16 %v136, %v136
  %v141 = vunpack.c.l.b16 %v137
  %v142 = vunpack.c.h.b16 %v137
  %v143 = vunpack.c.l.b16 %v138
  %v144 = vpack.c.b16 %v141, %v141
  %v145 = vpack.c.b16 %v142, %v142
  %v146 = vpack.c.b16 %v143, %v143
  %vm150 = vcmask 257024
  %151 = vst.msk [vmem:[%s3] sm:$0xf] %vm150, %v144
  %152 = vst.msk [vmem:[%s3 + $0x4] sm:$0xf] %vm150, %v145
  %vm153 = vcmask 253952
  %154 = vst.msk [vmem:[%s3 + $0x8] sm:$0x1] %vm153, %v146
  // Predicated region
  $region14: #{wav_autoencoder_forward.28} parent=0 // pred_check
    _
  $region15: #{wav_autoencoder_forward.28} parent=0 // pred_check_branch
    %156 = sbr.rel (0) target = $region17
  $region16: #{wav_autoencoder_forward.28} parent=0 // pred_region
    _
  $region17: #{wav_autoencoder_forward.28} parent=0 // pred_fallthru
    _
  // Predicated region
  $region18: #{wav_autoencoder_forward.28} parent=0 // pred_check
    _
  $region19: #{wav_autoencoder_forward.28} parent=0 // pred_check_branch
    %158 = sbr.rel (0) target = $region21
  $region20: #{wav_autoencoder_forward.28} parent=0 // pred_region
    _
  $region21: #{wav_autoencoder_forward.28} parent=0 // pred_fallthru
    _

// kernel: wav_autoencoder_forward.27
$region0: #{wav_autoencoder_forward.27}
  #allocation0 [shape = 'u32[]', space=smem, size = 0x4, offset = 0x4, fixed_abs, tag = 'smem constant byte address 0x4 - core index']
  #allocation1 [shape = 'u32[144,128]{1,0:T(1,128)}', space=vmem, size = 0x12000, scoped, tag = 'internal scratch']
  %s0 = inlined_call_operand.vmem [shape: bf16[14,64], index: 0, kind: input, shape index: {}]
  %s1 = inlined_call_operand.vmem [shape: bf16[14,64], index: 1, kind: input, shape index: {}]
  %s2 = inlined_call_operand.vmem [shape: bf16[64,32], index: 2, kind: input, shape index: {}]
  %s3 = inlined_call_operand.vmem [shape: bf16[64,32], index: 3, kind: input, shape index: {}]
  %s4 = inlined_call_operand.vmem [shape: f32[1,32], index: 4, kind: input, shape index: {}]
  %s5 = inlined_call_operand.vmem [shape: bf16[14,32], index: 5, kind: output, shape index: {}]
  %s6 = sld [smem:[#allocation0]]
  $region30: #{wav_autoencoder_forward.27} parent=0
    _
  %s8 = ssub.s32 1, %s6
  %s9 = scalar_select 0, %s8, %s6
  // Predicated region
  $region2: #{wav_autoencoder_forward.27} parent=0 // pred_check
    _
  $region3: #{wav_autoencoder_forward.27} parent=0 // pred_check_branch
    %11 = sbr.rel (0) target = $region5
  $region4: #{wav_autoencoder_forward.27} parent=0 // pred_region
    _
  $region5: #{wav_autoencoder_forward.27} parent=0 // pred_fallthru
    _
  // Predicated region
  $region6: #{wav_autoencoder_forward.27} parent=0 // pred_check
    _
  $region7: #{wav_autoencoder_forward.27} parent=0 // pred_check_branch
    %13 = sbr.rel (0) target = $region9
  $region8: #{wav_autoencoder_forward.27} parent=0 // pred_region
    _
  $region9: #{wav_autoencoder_forward.27} parent=0 // pred_fallthru
    _
  // Predicated region
  $region10: #{wav_autoencoder_forward.27} parent=0 // pred_check
    _
  $region11: #{wav_autoencoder_forward.27} parent=0 // pred_check_branch
    %15 = sbr.rel (0) target = $region13
  $region12: #{wav_autoencoder_forward.27} parent=0 // pred_region
    _
  $region13: #{wav_autoencoder_forward.27} parent=0 // pred_fallthru
    _
  // Predicated region
  $region14: #{wav_autoencoder_forward.27} parent=0 // pred_check
    _
  $region15: #{wav_autoencoder_forward.27} parent=0 // pred_check_branch
    %17 = sbr.rel (0) target = $region17
  $region16: #{wav_autoencoder_forward.27} parent=0 // pred_region
    _
  $region17: #{wav_autoencoder_forward.27} parent=0 // pred_fallthru
    _
  // Predicated region
  $region18: #{wav_autoencoder_forward.27} parent=0 // pred_check
    _
  $region19: #{wav_autoencoder_forward.27} parent=0 // pred_check_branch
    %19 = sbr.rel (0) target = $region21
  $region20: #{wav_autoencoder_forward.27} parent=0 // pred_region
    _
  $region21: #{wav_autoencoder_forward.27} parent=0 // pred_fallthru
    _
  %v21 = vld [vmem:[%s0] sm:$0xf]
  %v22 = vld [vmem:[%s0 + $0x4] sm:$0x7]
  %v23 = vld [vmem:[%s2] sm:$0xf]
  %v24 = vld [vmem:[%s2 + $0x4] sm:$0xf]
  %v25 = vld [vmem:[%s2 + $0x8] sm:$0xf]
  %v26 = vld [vmem:[%s2 + $0xc] sm:$0xf]
  %v27 = vld [vmem:[%s2 + $0x10] sm:$0xf]
  %v28 = vld [vmem:[%s2 + $0x14] sm:$0xf]
  %v29 = vld [vmem:[%s2 + $0x18] sm:$0xf]
  %v30 = vld [vmem:[%s2 + $0x1c] sm:$0xf]
  %v31 = vld [vmem:[%s1] sm:$0xf]
  %v32 = vld [vmem:[%s1 + $0x4] sm:$0x7]
  %v33 = vld [vmem:[%s3] sm:$0xf]
  %v34 = vld [vmem:[%s3 + $0x4] sm:$0xf]
  %v35 = vld [vmem:[%s3 + $0x8] sm:$0xf]
  %v36 = vld [vmem:[%s3 + $0xc] sm:$0xf]
  %v37 = vld [vmem:[%s3 + $0x10] sm:$0xf]
  %v38 = vld [vmem:[%s3 + $0x14] sm:$0xf]
  %v39 = vld [vmem:[%s3 + $0x18] sm:$0xf]
  %v40 = vld [vmem:[%s3 + $0x1c] sm:$0xf]
  %v43 = vunpack.c.l.b16 %v31
  %v44 = vunpack.c.l.b16 %v32
  %v45 = vpack.c.b16 %v44, %v43
  %v54 = vunpack.c.l.b16 %v33
  %v55 = vunpack.c.l.b16 %v34
  %v56 = vunpack.c.l.b16 %v35
  %v57 = vunpack.c.l.b16 %v36
  %v58 = vunpack.c.l.b16 %v37
  %v59 = vunpack.c.l.b16 %v38
  %v60 = vunpack.c.l.b16 %v39
  %v61 = vunpack.c.l.b16 %v40
  %v62 = vpack.c.b16 %v55, %v54
  %v63 = vpack.c.b16 %v57, %v56
  %v64 = vpack.c.b16 %v59, %v58
  %v65 = vpack.c.b16 %v61, %v60
  %vm70 = vcmask 523264
  %v72 = vsel %vm70, %v45, 0
  %74 = vmatprep.subr.bf16.mxu0 0
  %75 = vmatpush1.bf16.msra.mxu0 %v62
  %76 = vmatprep.subr.bf16.mxu0 0
  %77 = vmatpush1.bf16.msra.mxu0 %v63
  %78 = vmatprep.subr.bf16.mxu0 0
  %79 = vmatpush1.bf16.msra.mxu0 %v64
  %80 = vmatprep.subr.bf16.mxu0 0
  %81 = vmatpush1.bf16.msra.mxu0 %v65
  %82 = vmatprep.subr.bf16.mxu0 0
  %83 = vmatpush1.bf16.msra.mxu0 0
  %84 = vmatprep.subr.bf16.mxu0 0
  %85 = vmatpush1.bf16.msra.mxu0 0
  %86 = vmatprep.subr.bf16.mxu0 0
  %87 = vmatpush1.bf16.msra.mxu0 0
  %88 = vmatprep.subr.bf16.mxu0 0
  %89 = vmatpush1.bf16.msra.mxu0 0
  %90 = vmatprep.subr.bf16.mxu0 0
  %91 = vmatpush1.bf16.msra.mxu0 0
  %92 = vmatprep.subr.bf16.mxu0 0
  %93 = vmatpush1.bf16.msra.mxu0 0
  %94 = vmatprep.subr.bf16.mxu0 0
  %95 = vmatpush1.bf16.msra.mxu0 0
  %96 = vmatprep.subr.bf16.mxu0 0
  %97 = vmatpush1.bf16.msra.mxu0 0
  %98 = vmatprep.subr.bf16.mxu0 0
  %99 = vmatpush1.bf16.msra.mxu0 0
  %100 = vmatprep.subr.bf16.mxu0 0
  %101 = vmatpush1.bf16.msra.mxu0 0
  %102 = vmatprep.subr.bf16.mxu0 0
  %103 = vmatpush1.bf16.msra.mxu0 0
  %104 = vmatprep.subr.bf16.mxu0 0
  %105 = vmatpush1.bf16.msra.mxu0 0
  %106 = vmatprep.mubr.bf16.mxu0 0
  %107 = vmatmul.mubr.bf16.gmra.mrb[0].mxu0 %v72
  %v108 = vpop.f32.mrb[0].mxu0
  %v109 = vadd.f32 0.0, %v108
  %v110 = vpop.f32.mrb[0].mxu0
  %v111 = vpop.f32.mrb[0].mxu0
  %v112 = vadd.f32 0.0, %v111
  %v113 = vpop.f32.mrb[0].mxu0
  %114 = vdwg.mxu0
  %v117 = vunpack.c.l.b16 %v21
  %v118 = vunpack.c.l.b16 %v22
  %v119 = vpack.c.b16 %v118, %v117
  %v128 = vunpack.c.l.b16 %v23
  %v129 = vunpack.c.l.b16 %v24
  %v130 = vunpack.c.l.b16 %v25
  %v131 = vunpack.c.l.b16 %v26
  %v132 = vunpack.c.l.b16 %v27
  %v133 = vunpack.c.l.b16 %v28
  %v134 = vunpack.c.l.b16 %v29
  %v135 = vunpack.c.l.b16 %v30
  %v136 = vpack.c.b16 %v129, %v128
  %v137 = vpack.c.b16 %v131, %v130
  %v138 = vpack.c.b16 %v133, %v132
  %v139 = vpack.c.b16 %v135, %v134
  %v145 = vsel %vm70, %v119, 0
  %147 = vmatprep.subr.bf16.mxu0 0
  %148 = vmatpush1.bf16.msra.mxu0 %v136
  %149 = vmatprep.subr.bf16.mxu0 0
  %150 = vmatpush1.bf16.msra.mxu0 %v137
  %151 = vmatprep.subr.bf16.mxu0 0
  %152 = vmatpush1.bf16.msra.mxu0 %v138
  %153 = vmatprep.subr.bf16.mxu0 0
  %154 = vmatpush1.bf16.msra.mxu0 %v139
  %155 = vmatprep.subr.bf16.mxu0 0
  %156 = vmatpush1.bf16.msra.mxu0 0
  %157 = vmatprep.subr.bf16.mxu0 0
  %158 = vmatpush1.bf16.msra.mxu0 0
  %159 = vmatprep.subr.bf16.mxu0 0
  %160 = vmatpush1.bf16.msra.mxu0 0
  %161 = vmatprep.subr.bf16.mxu0 0
  %162 = vmatpush1.bf16.msra.mxu0 0
  %163 = vmatprep.subr.bf16.mxu0 0
  %164 = vmatpush1.bf16.msra.mxu0 0
  %165 = vmatprep.subr.bf16.mxu0 0
  %166 = vmatpush1.bf16.msra.mxu0 0
  %167 = vmatprep.subr.bf16.mxu0 0
  %168 = vmatpush1.bf16.msra.mxu0 0
  %169 = vmatprep.subr.bf16.mxu0 0
  %170 = vmatpush1.bf16.msra.mxu0 0
  %171 = vmatprep.subr.bf16.mxu0 0
  %172 = vmatpush1.bf16.msra.mxu0 0
  %173 = vmatprep.subr.bf16.mxu0 0
  %174 = vmatpush1.bf16.msra.mxu0 0
  %175 = vmatprep.subr.bf16.mxu0 0
  %176 = vmatpush1.bf16.msra.mxu0 0
  %177 = vmatprep.subr.bf16.mxu0 0
  %178 = vmatpush1.bf16.msra.mxu0 0
  %179 = vmatprep.mubr.bf16.mxu0 0
  %180 = vmatmul.mubr.bf16.gmra.mrb[0].mxu0 %v145
  %v181 = vpop.f32.mrb[0].mxu0
  %v182 = vadd.f32 %v109, %v181
  %v183 = vpop.f32.mrb[0].mxu0
  %v184 = vpop.f32.mrb[0].mxu0
  %v185 = vadd.f32 %v112, %v184
  %v186 = vpop.f32.mrb[0].mxu0
  %187 = vdwg.mxu0
  %v188 = vld [vmem:[%s4] sm:$0x1]
  %v190 = vlaneseq
  %v191 = vshrl.u32 %v190, 7
  %v192 = vsub.s32 0, %v191
  %v193 = vrot.slane %v188, %v192
  %v195 = vadd.f32 %v182, %v193
  %v196 = vadd.f32 %v185, %v193
  %v197 = vmax.f32 %v195, 0.0
  %v198 = vmax.f32 %v196, 0.0
  %v199 = vpack.c.bf16 %v198, %v197
  %v201 = vunpack.c.l.b16 %v199
  %v202 = vunpack.c.h.b16 %v199
  %v203 = vpack.c.b16 %v201, %v201
  %v204 = vpack.c.b16 %v202, %v202
  %vm207 = vcmask 257024
  %208 = vst.msk [vmem:[%s5] sm:$0xf] %vm207, %v203
  %vm209 = vcmask 256000
  %210 = vst.msk [vmem:[%s5 + $0x4] sm:$0x7] %vm209, %v204
  // Predicated region
  $region22: #{wav_autoencoder_forward.27} parent=0 // pred_check
    _
  $region23: #{wav_autoencoder_forward.27} parent=0 // pred_check_branch
    %212 = sbr.rel (0) target = $region25
  $region24: #{wav_autoencoder_forward.27} parent=0 // pred_region
    _
  $region25: #{wav_autoencoder_forward.27} parent=0 // pred_fallthru
    _
  // Predicated region
  $region26: #{wav_autoencoder_forward.27} parent=0 // pred_check
    _
  $region27: #{wav_autoencoder_forward.27} parent=0 // pred_check_branch
    %214 = sbr.rel (0) target = $region29
  $region28: #{wav_autoencoder_forward.27} parent=0 // pred_region
    _
  $region29: #{wav_autoencoder_forward.27} parent=0 // pred_fallthru
    _

// kernel: wav_autoencoder_forward.30
$region0: #{wav_autoencoder_forward.30}
  #allocation0 [shape = 'u32[]', space=smem, size = 0x4, offset = 0x4, fixed_abs, tag = 'smem constant byte address 0x4 - core index']
  #allocation1 [shape = 'u32[144,128]{1,0:T(1,128)}', space=vmem, size = 0x12000, scoped, tag = 'internal scratch']
  %s0 = inlined_call_operand.vmem [shape: bf16[6,64], index: 0, kind: input, shape index: {}]
  %s1 = inlined_call_operand.vmem [shape: bf16[64,128], index: 1, kind: input, shape index: {}]
  %s2 = inlined_call_operand.vmem [shape: f32[1,128], index: 2, kind: input, shape index: {}]
  %s3 = inlined_call_operand.vmem [shape: bf16[6,64], index: 3, kind: output, shape index: {}]
  %s4 = sld [smem:[#allocation0]]
  $region22: #{wav_autoencoder_forward.30} parent=0
    _
  %s6 = ssub.s32 1, %s4
  %s7 = scalar_select 0, %s6, %s4
  // Predicated region
  $region2: #{wav_autoencoder_forward.30} parent=0 // pred_check
    _
  $region3: #{wav_autoencoder_forward.30} parent=0 // pred_check_branch
    %9 = sbr.rel (0) target = $region5
  $region4: #{wav_autoencoder_forward.30} parent=0 // pred_region
    _
  $region5: #{wav_autoencoder_forward.30} parent=0 // pred_fallthru
    _
  // Predicated region
  $region6: #{wav_autoencoder_forward.30} parent=0 // pred_check
    _
  $region7: #{wav_autoencoder_forward.30} parent=0 // pred_check_branch
    %11 = sbr.rel (0) target = $region9
  $region8: #{wav_autoencoder_forward.30} parent=0 // pred_region
    _
  $region9: #{wav_autoencoder_forward.30} parent=0 // pred_fallthru
    _
  // Predicated region
  $region10: #{wav_autoencoder_forward.30} parent=0 // pred_check
    _
  $region11: #{wav_autoencoder_forward.30} parent=0 // pred_check_branch
    %13 = sbr.rel (0) target = $region13
  $region12: #{wav_autoencoder_forward.30} parent=0 // pred_region
    _
  $region13: #{wav_autoencoder_forward.30} parent=0 // pred_fallthru
    _
  %v15 = vld [vmem:[%s0] sm:$0x7]
  %v16 = vld [vmem:[%s1] sm:$0xf]
  %v17 = vld [vmem:[%s1 + $0x4] sm:$0xf]
  %v18 = vld [vmem:[%s1 + $0x8] sm:$0xf]
  %v19 = vld [vmem:[%s1 + $0xc] sm:$0xf]
  %v20 = vld [vmem:[%s1 + $0x10] sm:$0xf]
  %v21 = vld [vmem:[%s1 + $0x14] sm:$0xf]
  %v22 = vld [vmem:[%s1 + $0x18] sm:$0xf]
  %v23 = vld [vmem:[%s1 + $0x1c] sm:$0xf]
  %v24 = vld [vmem:[%s2] sm:$0x1]
  %v26 = vlaneseq
  %v27 = vshrl.u32 %v26, 7
  %v28 = vsub.s32 0, %v27
  %v29 = vrot.slane %v24, %v28
  %v39 = vunpack.c.l.b16 %v16
  %v40 = vunpack.c.l.b16 %v17
  %v41 = vunpack.c.l.b16 %v18
  %v42 = vunpack.c.l.b16 %v19
  %v43 = vunpack.c.l.b16 %v20
  %v44 = vunpack.c.l.b16 %v21
  %v45 = vunpack.c.l.b16 %v22
  %v46 = vunpack.c.l.b16 %v23
  %v47 = vpack.c.b16 %v40, %v39
  %v48 = vpack.c.b16 %v42, %v41
  %v49 = vpack.c.b16 %v44, %v43
  %v50 = vpack.c.b16 %v46, %v45
  %vm55 = vcmask 523264
  %v57 = vsel %vm55, %v15, 0
  %59 = vmatprep.subr.bf16.mxu0 0
  %60 = vmatpush1.bf16.msra.mxu0 %v47
  %61 = vmatprep.subr.bf16.mxu0 0
  %62 = vmatpush1.bf16.msra.mxu0 %v48
  %63 = vmatprep.subr.bf16.mxu0 0
  %64 = vmatpush1.bf16.msra.mxu0 %v49
  %65 = vmatprep.subr.bf16.mxu0 0
  %66 = vmatpush1.bf16.msra.mxu0 %v50
  %67 = vmatprep.subr.bf16.mxu0 0
  %68 = vmatpush1.bf16.msra.mxu0 0
  %69 = vmatprep.subr.bf16.mxu0 0
  %70 = vmatpush1.bf16.msra.mxu0 0
  %71 = vmatprep.subr.bf16.mxu0 0
  %72 = vmatpush1.bf16.msra.mxu0 0
  %73 = vmatprep.subr.bf16.mxu0 0
  %74 = vmatpush1.bf16.msra.mxu0 0
  %75 = vmatprep.subr.bf16.mxu0 0
  %76 = vmatpush1.bf16.msra.mxu0 0
  %77 = vmatprep.subr.bf16.mxu0 0
  %78 = vmatpush1.bf16.msra.mxu0 0
  %79 = vmatprep.subr.bf16.mxu0 0
  %80 = vmatpush1.bf16.msra.mxu0 0
  %81 = vmatprep.subr.bf16.mxu0 0
  %82 = vmatpush1.bf16.msra.mxu0 0
  %83 = vmatprep.subr.bf16.mxu0 0
  %84 = vmatpush1.bf16.msra.mxu0 0
  %85 = vmatprep.subr.bf16.mxu0 0
  %86 = vmatpush1.bf16.msra.mxu0 0
  %87 = vmatprep.subr.bf16.mxu0 0
  %88 = vmatpush1.bf16.msra.mxu0 0
  %89 = vmatprep.subr.bf16.mxu0 0
  %90 = vmatpush1.bf16.msra.mxu0 0
  %91 = vmatprep.mubr.bf16.mxu0 0
  %92 = vmatmul.mubr.bf16.gmra.mrb[0].mxu0 %v57
  %v93 = vpop.f32.mrb[0].mxu0
  %v94 = vadd.f32 %v29, %v93
  %v95 = vpop.f32.mrb[0].mxu0
  %v96 = vpop.f32.mrb[0].mxu0
  %v97 = vpop.f32.mrb[0].mxu0
  %98 = vdwg.mxu0
  %v99 = vxor.u32 %v94, 2147483648
  %v100 = vmul.f32 %v99, 1.442695
  %v101 = vpow.pop %v100
  %v102 = vadd.f32 %v101, 1.0
  %v103 = vrcp.pop %v102
  %v104 = vmul.f32 1.0, %v103
  %106 = vrot.lane.b32.xlu0 %v104, 64
  %v107 = vpop.permute.xlu0 %106
  %v109 = vmul.f32 %v94, %v107
  %v110 = vpack.c.bf16 %v109, %v109
  %vm111 = vcmask 518144
  %112 = vst.msk [vmem:[%s3] sm:$0x7] %vm111, %v110
  // Predicated region
  $region14: #{wav_autoencoder_forward.30} parent=0 // pred_check
    _
  $region15: #{wav_autoencoder_forward.30} parent=0 // pred_check_branch
    %114 = sbr.rel (0) target = $region17
  $region16: #{wav_autoencoder_forward.30} parent=0 // pred_region
    _
  $region17: #{wav_autoencoder_forward.30} parent=0 // pred_fallthru
    _
  // Predicated region
  $region18: #{wav_autoencoder_forward.30} parent=0 // pred_check
    _
  $region19: #{wav_autoencoder_forward.30} parent=0 // pred_check_branch
    %116 = sbr.rel (0) target = $region21
  $region20: #{wav_autoencoder_forward.30} parent=0 // pred_region
    _
  $region21: #{wav_autoencoder_forward.30} parent=0 // pred_fallthru
    _

// kernel: wav_autoencoder_forward.29
$region0: #{wav_autoencoder_forward.29}
  #allocation0 [shape = 'u32[]', space=smem, size = 0x4, offset = 0x4, fixed_abs, tag = 'smem constant byte address 0x4 - core index']
  #allocation1 [shape = 'u32[144,128]{1,0:T(1,128)}', space=vmem, size = 0x12000, scoped, tag = 'internal scratch']
  %s0 = inlined_call_operand.vmem [shape: bf16[2,128], index: 0, kind: input, shape index: {}]
  %s1 = inlined_call_operand.vmem [shape: bf16[2,128], index: 1, kind: input, shape index: {}]
  %s2 = inlined_call_operand.vmem [shape: bf16[128,64], index: 2, kind: input, shape index: {}]
  %s3 = inlined_call_operand.vmem [shape: bf16[128,64], index: 3, kind: input, shape index: {}]
  %s4 = inlined_call_operand.vmem [shape: f32[1,64], index: 4, kind: input, shape index: {}]
  %s5 = inlined_call_operand.vmem [shape: bf16[2,64], index: 5, kind: output, shape index: {}]
  %s6 = sld [smem:[#allocation0]]
  $region30: #{wav_autoencoder_forward.29} parent=0
    _
  %s8 = ssub.s32 1, %s6
  %s9 = scalar_select 0, %s8, %s6
  // Predicated region
  $region2: #{wav_autoencoder_forward.29} parent=0 // pred_check
    _
  $region3: #{wav_autoencoder_forward.29} parent=0 // pred_check_branch
    %11 = sbr.rel (0) target = $region5
  $region4: #{wav_autoencoder_forward.29} parent=0 // pred_region
    _
  $region5: #{wav_autoencoder_forward.29} parent=0 // pred_fallthru
    _
  // Predicated region
  $region6: #{wav_autoencoder_forward.29} parent=0 // pred_check
    _
  $region7: #{wav_autoencoder_forward.29} parent=0 // pred_check_branch
    %13 = sbr.rel (0) target = $region9
  $region8: #{wav_autoencoder_forward.29} parent=0 // pred_region
    _
  $region9: #{wav_autoencoder_forward.29} parent=0 // pred_fallthru
    _
  // Predicated region
  $region10: #{wav_autoencoder_forward.29} parent=0 // pred_check
    _
  $region11: #{wav_autoencoder_forward.29} parent=0 // pred_check_branch
    %15 = sbr.rel (0) target = $region13
  $region12: #{wav_autoencoder_forward.29} parent=0 // pred_region
    _
  $region13: #{wav_autoencoder_forward.29} parent=0 // pred_fallthru
    _
  // Predicated region
  $region14: #{wav_autoencoder_forward.29} parent=0 // pred_check
    _
  $region15: #{wav_autoencoder_forward.29} parent=0 // pred_check_branch
    %17 = sbr.rel (0) target = $region17
  $region16: #{wav_autoencoder_forward.29} parent=0 // pred_region
    _
  $region17: #{wav_autoencoder_forward.29} parent=0 // pred_fallthru
    _
  // Predicated region
  $region18: #{wav_autoencoder_forward.29} parent=0 // pred_check
    _
  $region19: #{wav_autoencoder_forward.29} parent=0 // pred_check_branch
    %19 = sbr.rel (0) target = $region21
  $region20: #{wav_autoencoder_forward.29} parent=0 // pred_region
    _
  $region21: #{wav_autoencoder_forward.29} parent=0 // pred_fallthru
    _
  %v21 = vld [vmem:[%s0] sm:$0x1]
  %v22 = vld [vmem:[%s2] sm:$0xf]
  %v23 = vld [vmem:[%s2 + $0x4] sm:$0xf]
  %v24 = vld [vmem:[%s2 + $0x8] sm:$0xf]
  %v25 = vld [vmem:[%s2 + $0xc] sm:$0xf]
  %v26 = vld [vmem:[%s2 + $0x10] sm:$0xf]
  %v27 = vld [vmem:[%s2 + $0x14] sm:$0xf]
  %v28 = vld [vmem:[%s2 + $0x18] sm:$0xf]
  %v29 = vld [vmem:[%s2 + $0x1c] sm:$0xf]
  %v30 = vld [vmem:[%s2 + $0x20] sm:$0xf]
  %v31 = vld [vmem:[%s2 + $0x24] sm:$0xf]
  %v32 = vld [vmem:[%s2 + $0x28] sm:$0xf]
  %v33 = vld [vmem:[%s2 + $0x2c] sm:$0xf]
  %v34 = vld [vmem:[%s2 + $0x30] sm:$0xf]
  %v35 = vld [vmem:[%s2 + $0x34] sm:$0xf]
  %v36 = vld [vmem:[%s2 + $0x38] sm:$0xf]
  %v37 = vld [vmem:[%s2 + $0x3c] sm:$0xf]
  %v38 = vld [vmem:[%s1] sm:$0x1]
  %v39 = vld [vmem:[%s3] sm:$0xf]
  %v40 = vld [vmem:[%s3 + $0x4] sm:$0xf]
  %v41 = vld [vmem:[%s3 + $0x8] sm:$0xf]
  %v42 = vld [vmem:[%s3 + $0xc] sm:$0xf]
  %v43 = vld [vmem:[%s3 + $0x10] sm:$0xf]
  %v44 = vld [vmem:[%s3 + $0x14] sm:$0xf]
  %v45 = vld [vmem:[%s3 + $0x18] sm:$0xf]
  %v46 = vld [vmem:[%s3 + $0x1c] sm:$0xf]
  %v47 = vld [vmem:[%s3 + $0x20] sm:$0xf]
  %v48 = vld [vmem:[%s3 + $0x24] sm:$0xf]
  %v49 = vld [vmem:[%s3 + $0x28] sm:$0xf]
  %v50 = vld [vmem:[%s3 + $0x2c] sm:$0xf]
  %v51 = vld [vmem:[%s3 + $0x30] sm:$0xf]
  %v52 = vld [vmem:[%s3 + $0x34] sm:$0xf]
  %v53 = vld [vmem:[%s3 + $0x38] sm:$0xf]
  %v54 = vld [vmem:[%s3 + $0x3c] sm:$0xf]
  %v71 = vunpack.c.l.b16 %v39
  %v72 = vunpack.c.l.b16 %v40
  %v73 = vunpack.c.l.b16 %v41
  %v74 = vunpack.c.l.b16 %v42
  %v75 = vunpack.c.l.b16 %v43
  %v76 = vunpack.c.l.b16 %v44
  %v77 = vunpack.c.l.b16 %v45
  %v78 = vunpack.c.l.b16 %v46
  %v79 = vunpack.c.l.b16 %v47
  %v80 = vunpack.c.l.b16 %v48
  %v81 = vunpack.c.l.b16 %v49
  %v82 = vunpack.c.l.b16 %v50
  %v83 = vunpack.c.l.b16 %v51
  %v84 = vunpack.c.l.b16 %v52
  %v85 = vunpack.c.l.b16 %v53
  %v86 = vunpack.c.l.b16 %v54
  %v87 = vpack.c.b16 %v72, %v71
  %v88 = vpack.c.b16 %v74, %v73
  %v89 = vpack.c.b16 %v76, %v75
  %v90 = vpack.c.b16 %v78, %v77
  %v91 = vpack.c.b16 %v80, %v79
  %v92 = vpack.c.b16 %v82, %v81
  %v93 = vpack.c.b16 %v84, %v83
  %v94 = vpack.c.b16 %v86, %v85
  %103 = vmatprep.subr.bf16.mxu0 0
  %104 = vmatpush1.bf16.msra.mxu0 %v87
  %105 = vmatprep.subr.bf16.mxu0 0
  %106 = vmatpush1.bf16.msra.mxu0 %v88
  %107 = vmatprep.subr.bf16.mxu0 0
  %108 = vmatpush1.bf16.msra.mxu0 %v89
  %109 = vmatprep.subr.bf16.mxu0 0
  %110 = vmatpush1.bf16.msra.mxu0 %v90
  %111 = vmatprep.subr.bf16.mxu0 0
  %112 = vmatpush1.bf16.msra.mxu0 %v91
  %113 = vmatprep.subr.bf16.mxu0 0
  %114 = vmatpush1.bf16.msra.mxu0 %v92
  %115 = vmatprep.subr.bf16.mxu0 0
  %116 = vmatpush1.bf16.msra.mxu0 %v93
  %117 = vmatprep.subr.bf16.mxu0 0
  %118 = vmatpush1.bf16.msra.mxu0 %v94
  %119 = vmatprep.subr.bf16.mxu0 0
  %120 = vmatpush1.bf16.msra.mxu0 0
  %121 = vmatprep.subr.bf16.mxu0 0
  %122 = vmatpush1.bf16.msra.mxu0 0
  %123 = vmatprep.subr.bf16.mxu0 0
  %124 = vmatpush1.bf16.msra.mxu0 0
  %125 = vmatprep.subr.bf16.mxu0 0
  %126 = vmatpush1.bf16.msra.mxu0 0
  %127 = vmatprep.subr.bf16.mxu0 0
  %128 = vmatpush1.bf16.msra.mxu0 0
  %129 = vmatprep.subr.bf16.mxu0 0
  %130 = vmatpush1.bf16.msra.mxu0 0
  %131 = vmatprep.subr.bf16.mxu0 0
  %132 = vmatpush1.bf16.msra.mxu0 0
  %133 = vmatprep.subr.bf16.mxu0 0
  %134 = vmatpush1.bf16.msra.mxu0 0
  %135 = vmatprep.mubr.bf16.mxu0 0
  %136 = vmatmul.mubr.bf16.gmra.mrb[0].mxu0 %v38
  %v137 = vpop.f32.mrb[0].mxu0
  %v138 = vadd.f32 0.0, %v137
  %v139 = vpop.f32.mrb[0].mxu0
  %v140 = vpop.f32.mrb[0].mxu0
  %v141 = vpop.f32.mrb[0].mxu0
  %142 = vdwg.mxu0
  %v159 = vunpack.c.l.b16 %v22
  %v160 = vunpack.c.l.b16 %v23
  %v161 = vunpack.c.l.b16 %v24
  %v162 = vunpack.c.l.b16 %v25
  %v163 = vunpack.c.l.b16 %v26
  %v164 = vunpack.c.l.b16 %v27
  %v165 = vunpack.c.l.b16 %v28
  %v166 = vunpack.c.l.b16 %v29
  %v167 = vunpack.c.l.b16 %v30
  %v168 = vunpack.c.l.b16 %v31
  %v169 = vunpack.c.l.b16 %v32
  %v170 = vunpack.c.l.b16 %v33
  %v171 = vunpack.c.l.b16 %v34
  %v172 = vunpack.c.l.b16 %v35
  %v173 = vunpack.c.l.b16 %v36
  %v174 = vunpack.c.l.b16 %v37
  %v175 = vpack.c.b16 %v160, %v159
  %v176 = vpack.c.b16 %v162, %v161
  %v177 = vpack.c.b16 %v164, %v163
  %v178 = vpack.c.b16 %v166, %v165
  %v179 = vpack.c.b16 %v168, %v167
  %v180 = vpack.c.b16 %v170, %v169
  %v181 = vpack.c.b16 %v172, %v171
  %v182 = vpack.c.b16 %v174, %v173
  %191 = vmatprep.subr.bf16.mxu0 0
  %192 = vmatpush1.bf16.msra.mxu0 %v175
  %193 = vmatprep.subr.bf16.mxu0 0
  %194 = vmatpush1.bf16.msra.mxu0 %v176
  %195 = vmatprep.subr.bf16.mxu0 0
  %196 = vmatpush1.bf16.msra.mxu0 %v177
  %197 = vmatprep.subr.bf16.mxu0 0
  %198 = vmatpush1.bf16.msra.mxu0 %v178
  %199 = vmatprep.subr.bf16.mxu0 0
  %200 = vmatpush1.bf16.msra.mxu0 %v179
  %201 = vmatprep.subr.bf16.mxu0 0
  %202 = vmatpush1.bf16.msra.mxu0 %v180
  %203 = vmatprep.subr.bf16.mxu0 0
  %204 = vmatpush1.bf16.msra.mxu0 %v181
  %205 = vmatprep.subr.bf16.mxu0 0
  %206 = vmatpush1.bf16.msra.mxu0 %v182
  %207 = vmatprep.subr.bf16.mxu0 0
  %208 = vmatpush1.bf16.msra.mxu0 0
  %209 = vmatprep.subr.bf16.mxu0 0
  %210 = vmatpush1.bf16.msra.mxu0 0
  %211 = vmatprep.subr.bf16.mxu0 0
  %212 = vmatpush1.bf16.msra.mxu0 0
  %213 = vmatprep.subr.bf16.mxu0 0
  %214 = vmatpush1.bf16.msra.mxu0 0
  %215 = vmatprep.subr.bf16.mxu0 0
  %216 = vmatpush1.bf16.msra.mxu0 0
  %217 = vmatprep.subr.bf16.mxu0 0
  %218 = vmatpush1.bf16.msra.mxu0 0
  %219 = vmatprep.subr.bf16.mxu0 0
  %220 = vmatpush1.bf16.msra.mxu0 0
  %221 = vmatprep.subr.bf16.mxu0 0
  %222 = vmatpush1.bf16.msra.mxu0 0
  %223 = vmatprep.mubr.bf16.mxu0 0
  %224 = vmatmul.mubr.bf16.gmra.mrb[0].mxu0 %v21
  %v225 = vpop.f32.mrb[0].mxu0
  %v226 = vadd.f32 %v138, %v225
  %v227 = vpop.f32.mrb[0].mxu0
  %v228 = vpop.f32.mrb[0].mxu0
  %v229 = vpop.f32.mrb[0].mxu0
  %230 = vdwg.mxu0
  %v231 = vld [vmem:[%s4] sm:$0x1]
  %v233 = vlaneseq
  %v234 = vshrl.u32 %v233, 7
  %v235 = vsub.s32 0, %v234
  %v236 = vrot.slane %v231, %v235
  %v238 = vadd.f32 %v226, %v236
  %v239 = vmax.f32 %v238, 0.0
  %v240 = vpack.c.bf16 %v239, %v239
  %vm241 = vcmask 516096
  %242 = vst.msk [vmem:[%s5] sm:$0x1] %vm241, %v240
  // Predicated region
  $region22: #{wav_autoencoder_forward.29} parent=0 // pred_check
    _
  $region23: #{wav_autoencoder_forward.29} parent=0 // pred_check_branch
    %244 = sbr.rel (0) target = $region25
  $region24: #{wav_autoencoder_forward.29} parent=0 // pred_region
    _
  $region25: #{wav_autoencoder_forward.29} parent=0 // pred_fallthru
    _
  // Predicated region
  $region26: #{wav_autoencoder_forward.29} parent=0 // pred_check
    _
  $region27: #{wav_autoencoder_forward.29} parent=0 // pred_check_branch
    %246 = sbr.rel (0) target = $region29
  $region28: #{wav_autoencoder_forward.29} parent=0 // pred_region
    _
  $region29: #{wav_autoencoder_forward.29} parent=0 // pred_fallthru
    _

// kernel: wav_autoencoder_forward.31
$region0: #{wav_autoencoder_forward.31}
  #allocation0 [shape = 'u32[]', space=smem, size = 0x4, offset = 0x4, fixed_abs, tag = 'smem constant byte address 0x4 - core index']
  #allocation1 [shape = 'u32[144,128]{1,0:T(1,128)}', space=vmem, size = 0x12000, scoped, tag = 'internal scratch']
  %s0 = inlined_call_operand.vmem [shape: bf16[6,64], index: 0, kind: input, shape index: {}]
  %s1 = inlined_call_operand.vmem [shape: bf16[64,256], index: 1, kind: input, shape index: {}]
  %s2 = inlined_call_operand.vmem [shape: f32[1,256], index: 2, kind: input, shape index: {}]
  %s3 = inlined_call_operand.vmem [shape: f32[6,256], index: 3, kind: output, shape index: {}]
  %s4 = sld [smem:[#allocation0]]
  $region22: #{wav_autoencoder_forward.31} parent=0
    _
  %s6 = ssub.s32 1, %s4
  %s7 = scalar_select 0, %s6, %s4
  // Predicated region
  $region2: #{wav_autoencoder_forward.31} parent=0 // pred_check
    _
  $region3: #{wav_autoencoder_forward.31} parent=0 // pred_check_branch
    %9 = sbr.rel (0) target = $region5
  $region4: #{wav_autoencoder_forward.31} parent=0 // pred_region
    _
  $region5: #{wav_autoencoder_forward.31} parent=0 // pred_fallthru
    _
  // Predicated region
  $region6: #{wav_autoencoder_forward.31} parent=0 // pred_check
    _
  $region7: #{wav_autoencoder_forward.31} parent=0 // pred_check_branch
    %11 = sbr.rel (0) target = $region9
  $region8: #{wav_autoencoder_forward.31} parent=0 // pred_region
    _
  $region9: #{wav_autoencoder_forward.31} parent=0 // pred_fallthru
    _
  // Predicated region
  $region10: #{wav_autoencoder_forward.31} parent=0 // pred_check
    _
  $region11: #{wav_autoencoder_forward.31} parent=0 // pred_check_branch
    %13 = sbr.rel (0) target = $region13
  $region12: #{wav_autoencoder_forward.31} parent=0 // pred_region
    _
  $region13: #{wav_autoencoder_forward.31} parent=0 // pred_fallthru
    _
  %v15 = vld [vmem:[%s0] sm:$0x7]
  %v16 = vld [vmem:[%s1] sm:$0xff]
  %v17 = vld [vmem:[%s1 + $0x8] sm:$0xff]
  %v18 = vld [vmem:[%s1 + $0x10] sm:$0xff]
  %v19 = vld [vmem:[%s1 + $0x18] sm:$0xff]
  %v20 = vld [vmem:[%s1 + $0x20] sm:$0xff]
  %v21 = vld [vmem:[%s1 + $0x28] sm:$0xff]
  %v22 = vld [vmem:[%s1 + $0x30] sm:$0xff]
  %v23 = vld [vmem:[%s1 + $0x38] sm:$0xff]
  %v24 = vld [vmem:[%s2] sm:$0x3]
  %v26 = vlaneseq
  %v27 = vshrl.u32 %v26, 7
  %v28 = vsub.s32 0, %v27
  %v29 = vrot.slane %v24, %v28
  %v30 = vlaneseq
  %v31 = vshrl.u32 %v30, 7
  %v32 = vsub.s32 1, %v31
  %v33 = vrot.slane %v24, %v32
  %v44 = vunpack.c.l.b16 %v16
  %v45 = vunpack.c.h.b16 %v16
  %v46 = vunpack.c.l.b16 %v17
  %v47 = vunpack.c.h.b16 %v17
  %v48 = vunpack.c.l.b16 %v18
  %v49 = vunpack.c.h.b16 %v18
  %v50 = vunpack.c.l.b16 %v19
  %v51 = vunpack.c.h.b16 %v19
  %v52 = vunpack.c.l.b16 %v20
  %v53 = vunpack.c.h.b16 %v20
  %v54 = vunpack.c.l.b16 %v21
  %v55 = vunpack.c.h.b16 %v21
  %v56 = vunpack.c.l.b16 %v22
  %v57 = vunpack.c.h.b16 %v22
  %v58 = vunpack.c.l.b16 %v23
  %v59 = vunpack.c.h.b16 %v23
  %v60 = vpack.c.b16 %v46, %v44
  %v61 = vpack.c.b16 %v47, %v45
  %v62 = vpack.c.b16 %v50, %v48
  %v63 = vpack.c.b16 %v51, %v49
  %v64 = vpack.c.b16 %v54, %v52
  %v65 = vpack.c.b16 %v55, %v53
  %v66 = vpack.c.b16 %v58, %v56
  %v67 = vpack.c.b16 %v59, %v57
  %vm76 = vcmask 523264
  %v78 = vsel %vm76, %v15, 0
  %80 = vmatprep.subr.bf16.mxu0 %v61
  %81 = vmatpush1.bf16.msra.mxu0 %v60
  %82 = vmatprep.subr.bf16.mxu0 %v63
  %83 = vmatpush1.bf16.msra.mxu0 %v62
  %84 = vmatprep.subr.bf16.mxu0 %v65
  %85 = vmatpush1.bf16.msra.mxu0 %v64
  %86 = vmatprep.subr.bf16.mxu0 %v67
  %87 = vmatpush1.bf16.msra.mxu0 %v66
  %88 = vmatprep.subr.bf16.mxu0 0
  %89 = vmatpush1.bf16.msra.mxu0 0
  %90 = vmatprep.subr.bf16.mxu0 0
  %91 = vmatpush1.bf16.msra.mxu0 0
  %92 = vmatprep.subr.bf16.mxu0 0
  %93 = vmatpush1.bf16.msra.mxu0 0
  %94 = vmatprep.subr.bf16.mxu0 0
  %95 = vmatpush1.bf16.msra.mxu0 0
  %96 = vmatprep.subr.bf16.mxu0 0
  %97 = vmatpush1.bf16.msra.mxu0 0
  %98 = vmatprep.subr.bf16.mxu0 0
  %99 = vmatpush1.bf16.msra.mxu0 0
  %100 = vmatprep.subr.bf16.mxu0 0
  %101 = vmatpush1.bf16.msra.mxu0 0
  %102 = vmatprep.subr.bf16.mxu0 0
  %103 = vmatpush1.bf16.msra.mxu0 0
  %104 = vmatprep.subr.bf16.mxu0 0
  %105 = vmatpush1.bf16.msra.mxu0 0
  %106 = vmatprep.subr.bf16.mxu0 0
  %107 = vmatpush1.bf16.msra.mxu0 0
  %108 = vmatprep.subr.bf16.mxu0 0
  %109 = vmatpush1.bf16.msra.mxu0 0
  %110 = vmatprep.subr.bf16.mxu0 0
  %111 = vmatpush1.bf16.msra.mxu0 0
  %112 = vmatprep.mubr.bf16.mxu0 0
  %113 = vmatmul.mubr.bf16.gmra.mrb[0].mxu0 %v78
  %v114 = vpop.f32.mrb[0].mxu0
  %v115 = vadd.f32 %v29, %v114
  %v116 = vpop.f32.mrb[0].mxu0
  %v117 = vadd.f32 %v33, %v116
  %v118 = vpop.f32.mrb[0].mxu0
  %v119 = vpop.f32.mrb[0].mxu0
  %120 = vdwg.mxu0
  %121 = vst [vmem:[%s3] sm:$0x3f] %v115
  %122 = vst [vmem:[%s3 + $0x8] sm:$0x3f] %v117
  // Predicated region
  $region14: #{wav_autoencoder_forward.31} parent=0 // pred_check
    _
  $region15: #{wav_autoencoder_forward.31} parent=0 // pred_check_branch
    %124 = sbr.rel (0) target = $region17
  $region16: #{wav_autoencoder_forward.31} parent=0 // pred_region
    _
  $region17: #{wav_autoencoder_forward.31} parent=0 // pred_fallthru
    _
  // Predicated region
  $region18: #{wav_autoencoder_forward.31} parent=0 // pred_check
    _
  $region19: #{wav_autoencoder_forward.31} parent=0 // pred_check_branch
    %126 = sbr.rel (0) target = $region21
  $region20: #{wav_autoencoder_forward.31} parent=0 // pred_region
    _
  $region21: #{wav_autoencoder_forward.31} parent=0 // pred_fallthru
    _

// kernel: wav_autoencoder_forward.34
$region0: #{wav_autoencoder_forward.34}
  #allocation0 [shape = 'u32[]', space=smem, size = 0x4, offset = 0x4, fixed_abs, tag = 'smem constant byte address 0x4 - core index']
  #allocation1 [shape = 'u32[144,128]{1,0:T(1,128)}', space=vmem, size = 0x12000, scoped, tag = 'internal scratch']
  %s0 = inlined_call_operand.vmem [shape: bf16[6,128], index: 0, kind: input, shape index: {}]
  %s1 = inlined_call_operand.vmem [shape: bf16[128,256], index: 1, kind: input, shape index: {}]
  %s2 = inlined_call_operand.vmem [shape: f32[1,256], index: 2, kind: input, shape index: {}]
  %s3 = inlined_call_operand.vmem [shape: f32[6,256], index: 3, kind: output, shape index: {}]
  %s4 = sld [smem:[#allocation0]]
  $region22: #{wav_autoencoder_forward.34} parent=0
    _
  %s6 = ssub.s32 1, %s4
  %s7 = scalar_select 0, %s6, %s4
  // Predicated region
  $region2: #{wav_autoencoder_forward.34} parent=0 // pred_check
    _
  $region3: #{wav_autoencoder_forward.34} parent=0 // pred_check_branch
    %9 = sbr.rel (0) target = $region5
  $region4: #{wav_autoencoder_forward.34} parent=0 // pred_region
    _
  $region5: #{wav_autoencoder_forward.34} parent=0 // pred_fallthru
    _
  // Predicated region
  $region6: #{wav_autoencoder_forward.34} parent=0 // pred_check
    _
  $region7: #{wav_autoencoder_forward.34} parent=0 // pred_check_branch
    %11 = sbr.rel (0) target = $region9
  $region8: #{wav_autoencoder_forward.34} parent=0 // pred_region
    _
  $region9: #{wav_autoencoder_forward.34} parent=0 // pred_fallthru
    _
  // Predicated region
  $region10: #{wav_autoencoder_forward.34} parent=0 // pred_check
    _
  $region11: #{wav_autoencoder_forward.34} parent=0 // pred_check_branch
    %13 = sbr.rel (0) target = $region13
  $region12: #{wav_autoencoder_forward.34} parent=0 // pred_region
    _
  $region13: #{wav_autoencoder_forward.34} parent=0 // pred_fallthru
    _
  %v15 = vld [vmem:[%s0] sm:$0x7]
  %v16 = vld [vmem:[%s1] sm:$0xff]
  %v17 = vld [vmem:[%s1 + $0x8] sm:$0xff]
  %v18 = vld [vmem:[%s1 + $0x10] sm:$0xff]
  %v19 = vld [vmem:[%s1 + $0x18] sm:$0xff]
  %v20 = vld [vmem:[%s1 + $0x20] sm:$0xff]
  %v21 = vld [vmem:[%s1 + $0x28] sm:$0xff]
  %v22 = vld [vmem:[%s1 + $0x30] sm:$0xff]
  %v23 = vld [vmem:[%s1 + $0x38] sm:$0xff]
  %v24 = vld [vmem:[%s1 + $0x40] sm:$0xff]
  %v25 = vld [vmem:[%s1 + $0x48] sm:$0xff]
  %v26 = vld [vmem:[%s1 + $0x50] sm:$0xff]
  %v27 = vld [vmem:[%s1 + $0x58] sm:$0xff]
  %v28 = vld [vmem:[%s1 + $0x60] sm:$0xff]
  %v29 = vld [vmem:[%s1 + $0x68] sm:$0xff]
  %v30 = vld [vmem:[%s1 + $0x70] sm:$0xff]
  %v31 = vld [vmem:[%s1 + $0x78] sm:$0xff]
  %v32 = vld [vmem:[%s2] sm:$0x3]
  %v34 = vlaneseq
  %v35 = vshrl.u32 %v34, 7
  %v36 = vsub.s32 0, %v35
  %v37 = vrot.slane %v32, %v36
  %v38 = vlaneseq
  %v39 = vshrl.u32 %v38, 7
  %v40 = vsub.s32 1, %v39
  %v41 = vrot.slane %v32, %v40
  %v60 = vunpack.c.l.b16 %v16
  %v61 = vunpack.c.h.b16 %v16
  %v62 = vunpack.c.l.b16 %v17
  %v63 = vunpack.c.h.b16 %v17
  %v64 = vunpack.c.l.b16 %v18
  %v65 = vunpack.c.h.b16 %v18
  %v66 = vunpack.c.l.b16 %v19
  %v67 = vunpack.c.h.b16 %v19
  %v68 = vunpack.c.l.b16 %v20
  %v69 = vunpack.c.h.b16 %v20
  %v70 = vunpack.c.l.b16 %v21
  %v71 = vunpack.c.h.b16 %v21
  %v72 = vunpack.c.l.b16 %v22
  %v73 = vunpack.c.h.b16 %v22
  %v74 = vunpack.c.l.b16 %v23
  %v75 = vunpack.c.h.b16 %v23
  %v76 = vunpack.c.l.b16 %v24
  %v77 = vunpack.c.h.b16 %v24
  %v78 = vunpack.c.l.b16 %v25
  %v79 = vunpack.c.h.b16 %v25
  %v80 = vunpack.c.l.b16 %v26
  %v81 = vunpack.c.h.b16 %v26
  %v82 = vunpack.c.l.b16 %v27
  %v83 = vunpack.c.h.b16 %v27
  %v84 = vunpack.c.l.b16 %v28
  %v85 = vunpack.c.h.b16 %v28
  %v86 = vunpack.c.l.b16 %v29
  %v87 = vunpack.c.h.b16 %v29
  %v88 = vunpack.c.l.b16 %v30
  %v89 = vunpack.c.h.b16 %v30
  %v90 = vunpack.c.l.b16 %v31
  %v91 = vunpack.c.h.b16 %v31
  %v92 = vpack.c.b16 %v62, %v60
  %v93 = vpack.c.b16 %v63, %v61
  %v94 = vpack.c.b16 %v66, %v64
  %v95 = vpack.c.b16 %v67, %v65
  %v96 = vpack.c.b16 %v70, %v68
  %v97 = vpack.c.b16 %v71, %v69
  %v98 = vpack.c.b16 %v74, %v72
  %v99 = vpack.c.b16 %v75, %v73
  %v100 = vpack.c.b16 %v78, %v76
  %v101 = vpack.c.b16 %v79, %v77
  %v102 = vpack.c.b16 %v82, %v80
  %v103 = vpack.c.b16 %v83, %v81
  %v104 = vpack.c.b16 %v86, %v84
  %v105 = vpack.c.b16 %v87, %v85
  %v106 = vpack.c.b16 %v90, %v88
  %v107 = vpack.c.b16 %v91, %v89
  %124 = vmatprep.subr.bf16.mxu0 %v93
  %125 = vmatpush1.bf16.msra.mxu0 %v92
  %126 = vmatprep.subr.bf16.mxu0 %v95
  %127 = vmatpush1.bf16.msra.mxu0 %v94
  %128 = vmatprep.subr.bf16.mxu0 %v97
  %129 = vmatpush1.bf16.msra.mxu0 %v96
  %130 = vmatprep.subr.bf16.mxu0 %v99
  %131 = vmatpush1.bf16.msra.mxu0 %v98
  %132 = vmatprep.subr.bf16.mxu0 %v101
  %133 = vmatpush1.bf16.msra.mxu0 %v100
  %134 = vmatprep.subr.bf16.mxu0 %v103
  %135 = vmatpush1.bf16.msra.mxu0 %v102
  %136 = vmatprep.subr.bf16.mxu0 %v105
  %137 = vmatpush1.bf16.msra.mxu0 %v104
  %138 = vmatprep.subr.bf16.mxu0 %v107
  %139 = vmatpush1.bf16.msra.mxu0 %v106
  %140 = vmatprep.subr.bf16.mxu0 0
  %141 = vmatpush1.bf16.msra.mxu0 0
  %142 = vmatprep.subr.bf16.mxu0 0
  %143 = vmatpush1.bf16.msra.mxu0 0
  %144 = vmatprep.subr.bf16.mxu0 0
  %145 = vmatpush1.bf16.msra.mxu0 0
  %146 = vmatprep.subr.bf16.mxu0 0
  %147 = vmatpush1.bf16.msra.mxu0 0
  %148 = vmatprep.subr.bf16.mxu0 0
  %149 = vmatpush1.bf16.msra.mxu0 0
  %150 = vmatprep.subr.bf16.mxu0 0
  %151 = vmatpush1.bf16.msra.mxu0 0
  %152 = vmatprep.subr.bf16.mxu0 0
  %153 = vmatpush1.bf16.msra.mxu0 0
  %154 = vmatprep.subr.bf16.mxu0 0
  %155 = vmatpush1.bf16.msra.mxu0 0
  %156 = vmatprep.mubr.bf16.mxu0 0
  %157 = vmatmul.mubr.bf16.gmra.mrb[0].mxu0 %v15
  %v158 = vpop.f32.mrb[0].mxu0
  %v159 = vadd.f32 %v37, %v158
  %v160 = vpop.f32.mrb[0].mxu0
  %v161 = vadd.f32 %v41, %v160
  %v162 = vpop.f32.mrb[0].mxu0
  %v163 = vpop.f32.mrb[0].mxu0
  %164 = vdwg.mxu0
  %165 = vst [vmem:[%s3] sm:$0x3f] %v159
  %166 = vst [vmem:[%s3 + $0x8] sm:$0x3f] %v161
  // Predicated region
  $region14: #{wav_autoencoder_forward.34} parent=0 // pred_check
    _
  $region15: #{wav_autoencoder_forward.34} parent=0 // pred_check_branch
    %168 = sbr.rel (0) target = $region17
  $region16: #{wav_autoencoder_forward.34} parent=0 // pred_region
    _
  $region17: #{wav_autoencoder_forward.34} parent=0 // pred_fallthru
    _
  // Predicated region
  $region18: #{wav_autoencoder_forward.34} parent=0 // pred_check
    _
  $region19: #{wav_autoencoder_forward.34} parent=0 // pred_check_branch
    %170 = sbr.rel (0) target = $region21
  $region20: #{wav_autoencoder_forward.34} parent=0 // pred_region
    _
  $region21: #{wav_autoencoder_forward.34} parent=0 // pred_fallthru
    _

// kernel: wav_autoencoder_forward.33
$region0: #{wav_autoencoder_forward.33}
  #allocation0 [shape = 'u32[]', space=smem, size = 0x4, offset = 0x4, fixed_abs, tag = 'smem constant byte address 0x4 - core index']
  #allocation1 [shape = 'u32[144,128]{1,0:T(1,128)}', space=vmem, size = 0x12000, scoped, tag = 'internal scratch']
  #allocation2 [shape = 'f32[2,2,64]{2,1,0:T(2,128)}', space=vmem, size = 0x800, scoped, tag = 'scratch operand']
  #allocation3 [shape = 'f32[2,2,64]{2,1,0:T(2,128)}', space=vmem, size = 0x800, scoped, tag = 'scratch operand']
  %s0 = inlined_call_operand.vmem [shape: f32[3,2,256], index: 0, kind: input, shape index: {}]
  %s1 = inlined_call_operand.vmem [shape: f32[3,2,256], index: 1, kind: input, shape index: {}]
  %s2 = inlined_call_operand.vmem [shape: bf16[2,64,256], index: 2, kind: input, shape index: {}]
  %s3 = inlined_call_operand.vmem [shape: bf16[3,2,64], index: 3, kind: output, shape index: {0}]
  %s4 = inlined_call_operand.vmem [shape: bf16[3,2,64], index: 4, kind: output, shape index: {1}]
  %5 = xla_tuple %s3, %s4
  %s6 = sld [smem:[#allocation0]]
  $region34: #{wav_autoencoder_forward.33} parent=0
    _
  %s8 = ssub.s32 1, %s6
  %s9 = scalar_select 0, %s8, %s6
  // Predicated region
  $region2: #{wav_autoencoder_forward.33} parent=0 // pred_check
    _
  $region3: #{wav_autoencoder_forward.33} parent=0 // pred_check_branch
    %11 = sbr.rel (0) target = $region5
  $region4: #{wav_autoencoder_forward.33} parent=0 // pred_region
    _
  $region5: #{wav_autoencoder_forward.33} parent=0 // pred_fallthru
    _
  // Predicated region
  $region6: #{wav_autoencoder_forward.33} parent=0 // pred_check
    _
  $region7: #{wav_autoencoder_forward.33} parent=0 // pred_check_branch
    %13 = sbr.rel (0) target = $region9
  $region8: #{wav_autoencoder_forward.33} parent=0 // pred_region
    %s14 = ssub.s32 0, 0
    %s15 = smul.u32 3, %s14
    %p16 = scmp.lt.s32.totalorder %s15, 2
    %s17 = scalar_select %p16, %s15, 2
    %s18 = smul.addr %s17, 2
    %s19 = smul.addr %s18, 2
    %s20 = scalar_lea.vmem %s1, %s19
    %s21 = ssub.s32 0, 0
    %s22 = smul.u32 3, %s21
  $region9: #{wav_autoencoder_forward.33} parent=0 // pred_fallthru
    _
  // Predicated region
  $region10: #{wav_autoencoder_forward.33} parent=0 // pred_check
    _
  $region11: #{wav_autoencoder_forward.33} parent=0 // pred_check_branch
    %24 = sbr.rel (0) target = $region13
  $region12: #{wav_autoencoder_forward.33} parent=0 // pred_region
    _
  $region13: #{wav_autoencoder_forward.33} parent=0 // pred_fallthru
    _
  %s25 = ssub.s32 0, 0
  %s26 = smul.u32 3, %s25
  %p27 = scmp.lt.s32.totalorder %s26, 2
  %s28 = scalar_select %p27, %s26, 2
  %s29 = smul.addr %s28, 2
  %s30 = smul.addr %s29, 2
  %s31 = scalar_lea.vmem %s1, %s30
  %s32 = ssub.s32 0, 0
  %s33 = smul.u32 3, %s32
  %p34 = scmp.lt.s32.totalorder %s33, 2
  %s35 = scalar_select %p34, %s33, 2
  %s36 = scalar_lea.vmem %s4, %s35
  %s37 = ssub.s32 0, 0
  %s38 = smul.u32 3, %s37
  %p39 = scmp.lt.s32.totalorder %s38, 2
  %s40 = scalar_select %p39, %s38, 2
  %s41 = smul.addr %s40, 2
  %s42 = smul.addr %s41, 2
  %s43 = scalar_lea.vmem %s1, %s42
  %s44 = ssub.s32 0, 0
  %s45 = smul.u32 3, %s44
  %s46 = ssub.s32 0, 0
  %s47 = smul.u32 3, %s46
  %p48 = scmp.lt.s32.totalorder %s47, 2
  %s49 = scalar_select %p48, %s47, 2
  %s50 = scalar_lea.vmem %s4, %s49
  %s51 = ssub.s32 0, 0
  %s52 = smul.u32 3, %s51
  %p54 = scmp.eq.s32.totalorder 0, 0
  // Predicated region
  $region14: #{wav_autoencoder_forward.33} parent=0 // pred_check
    %p55 = pneg %p54
  $region15: #{wav_autoencoder_forward.33} parent=0 // pred_check_branch
    %57 = sbr.rel (%p55) target = $region17
  $region16: #{wav_autoencoder_forward.33} parent=0 // pred_region
    %vm58 = vcmask 517120
    %59 = vst.msk [vmem:[#allocation2] sm:$0x3] %vm58, 0.0
    %60 = vst.msk [vmem:[#allocation2 + $0x2] sm:$0x3] %vm58, 0.0
    %61 = vst.msk [vmem:[#allocation3] sm:$0x3] %vm58, 0.0
    %62 = vst.msk [vmem:[#allocation3 + $0x2] sm:$0x3] %vm58, 0.0
  $region17: #{wav_autoencoder_forward.33} parent=0 // pred_fallthru
    _
  %v63 = vld [vmem:[%s2] sm:$0xff]
  %v64 = vld [vmem:[%s2 + $0x8] sm:$0xff]
  %v65 = vld [vmem:[%s2 + $0x10] sm:$0xff]
  %v66 = vld [vmem:[%s2 + $0x18] sm:$0xff]
  %v67 = vld [vmem:[%s2 + $0x20] sm:$0xff]
  %v68 = vld [vmem:[%s2 + $0x28] sm:$0xff]
  %v69 = vld [vmem:[%s2 + $0x30] sm:$0xff]
  %v70 = vld [vmem:[%s2 + $0x38] sm:$0xff]
  %s71 = scalar_lea.vmem %s2, 64
  %v72 = vld [vmem:[%s71] sm:$0xff]
  %v73 = vld [vmem:[%s71 + $0x8] sm:$0xff]
  %v74 = vld [vmem:[%s71 + $0x10] sm:$0xff]
  %v75 = vld [vmem:[%s71 + $0x18] sm:$0xff]
  %v76 = vld [vmem:[%s71 + $0x20] sm:$0xff]
  %v77 = vld [vmem:[%s71 + $0x28] sm:$0xff]
  %v78 = vld [vmem:[%s71 + $0x30] sm:$0xff]
  %v79 = vld [vmem:[%s71 + $0x38] sm:$0xff]
  %v80 = vld [vmem:[#allocation2] sm:$0x3]
  %v81 = vld [vmem:[#allocation3] sm:$0x3]
  %s82 = scalar_lea.vmem [#allocation2], 2
  %v83 = vld [vmem:[%s82] sm:$0x3]
  %s84 = scalar_lea.vmem [#allocation3], 2
  %v85 = vld [vmem:[%s84] sm:$0x3]
  %v86 = vld [vmem:[%s0] sm:$0xf]
  %v87 = vpack.c.bf16 %v80, %v80
  %v96 = vunpack.c.l.b16 %v63
  %v97 = vunpack.c.h.b16 %v63
  %v98 = vunpack.c.l.b16 %v64
  %v99 = vunpack.c.h.b16 %v64
  %v100 = vunpack.c.l.b16 %v65
  %v101 = vunpack.c.h.b16 %v65
  %v102 = vunpack.c.l.b16 %v66
  %v103 = vunpack.c.h.b16 %v66
  %v104 = vunpack.c.l.b16 %v67
  %v105 = vunpack.c.h.b16 %v67
  %v106 = vunpack.c.l.b16 %v68
  %v107 = vunpack.c.h.b16 %v68
  %v108 = vunpack.c.l.b16 %v69
  %v109 = vunpack.c.h.b16 %v69
  %v110 = vunpack.c.l.b16 %v70
  %v111 = vunpack.c.h.b16 %v70
  %v112 = vpack.c.b16 %v98, %v96
  %v113 = vpack.c.b16 %v99, %v97
  %v114 = vpack.c.b16 %v102, %v100
  %v115 = vpack.c.b16 %v103, %v101
  %v116 = vpack.c.b16 %v106, %v104
  %v117 = vpack.c.b16 %v107, %v105
  %v118 = vpack.c.b16 %v110, %v108
  %v119 = vpack.c.b16 %v111, %v109
  %vm128 = vcmask 523264
  %v130 = vsel %vm128, %v87, 0
  %132 = vmatprep.subr.bf16.mxu0 %v113
  %133 = vmatpush1.bf16.msra.mxu0 %v112
  %134 = vmatprep.subr.bf16.mxu0 %v115
  %135 = vmatpush1.bf16.msra.mxu0 %v114
  %136 = vmatprep.subr.bf16.mxu0 %v117
  %137 = vmatpush1.bf16.msra.mxu0 %v116
  %138 = vmatprep.subr.bf16.mxu0 %v119
  %139 = vmatpush1.bf16.msra.mxu0 %v118
  %140 = vmatprep.subr.bf16.mxu0 0
  %141 = vmatpush1.bf16.msra.mxu0 0
  %142 = vmatprep.subr.bf16.mxu0 0
  %143 = vmatpush1.bf16.msra.mxu0 0
  %144 = vmatprep.subr.bf16.mxu0 0
  %145 = vmatpush1.bf16.msra.mxu0 0
  %146 = vmatprep.subr.bf16.mxu0 0
  %147 = vmatpush1.bf16.msra.mxu0 0
  %148 = vmatprep.subr.bf16.mxu0 0
  %149 = vmatpush1.bf16.msra.mxu0 0
  %150 = vmatprep.subr.bf16.mxu0 0
  %151 = vmatpush1.bf16.msra.mxu0 0
  %152 = vmatprep.subr.bf16.mxu0 0
  %153 = vmatpush1.bf16.msra.mxu0 0
  %154 = vmatprep.subr.bf16.mxu0 0
  %155 = vmatpush1.bf16.msra.mxu0 0
  %156 = vmatprep.subr.bf16.mxu0 0
  %157 = vmatpush1.bf16.msra.mxu0 0
  %158 = vmatprep.subr.bf16.mxu0 0
  %159 = vmatpush1.bf16.msra.mxu0 0
  %160 = vmatprep.subr.bf16.mxu0 0
  %161 = vmatpush1.bf16.msra.mxu0 0
  %162 = vmatprep.subr.bf16.mxu0 0
  %163 = vmatpush1.bf16.msra.mxu0 0
  %164 = vmatprep.mubr.bf16.mxu0 0
  %165 = vmatmul.mubr.bf16.gmra.mrb[0].mxu0 %v130
  %v166 = vpop.f32.mrb[0].mxu0
  %v167 = vadd.f32 0.0, %v166
  %v168 = vpop.f32.mrb[0].mxu0
  %v169 = vadd.f32 0.0, %v168
  %v170 = vpop.f32.mrb[0].mxu0
  %v171 = vpop.f32.mrb[0].mxu0
  %172 = vdwg.mxu0
  %v175 = vcombine.low %v167, %v169
  %v177 = vunpack.c.l.s4 1983009808
  %v178 = vunpack.c.0.s8 %v177
  %v179 = vlaneseq
  %v180 = vshrl.u32 %v179, 7
  %v181 = vsub.s32 %v178, %v180
  %v182 = vrot.slane %v175, %v181
  %v184 = vadd.f32 %v86, %v182
  %s185 = scalar_lea.vmem %s43, 8
  %v186 = vld [vmem:[%s185] sm:$0xf]
  %v187 = vpack.c.bf16 %v83, %v83
  %v196 = vunpack.c.l.b16 %v72
  %v197 = vunpack.c.h.b16 %v72
  %v198 = vunpack.c.l.b16 %v73
  %v199 = vunpack.c.h.b16 %v73
  %v200 = vunpack.c.l.b16 %v74
  %v201 = vunpack.c.h.b16 %v74
  %v202 = vunpack.c.l.b16 %v75
  %v203 = vunpack.c.h.b16 %v75
  %v204 = vunpack.c.l.b16 %v76
  %v205 = vunpack.c.h.b16 %v76
  %v206 = vunpack.c.l.b16 %v77
  %v207 = vunpack.c.h.b16 %v77
  %v208 = vunpack.c.l.b16 %v78
  %v209 = vunpack.c.h.b16 %v78
  %v210 = vunpack.c.l.b16 %v79
  %v211 = vunpack.c.h.b16 %v79
  %v212 = vpack.c.b16 %v198, %v196
  %v213 = vpack.c.b16 %v199, %v197
  %v214 = vpack.c.b16 %v202, %v200
  %v215 = vpack.c.b16 %v203, %v201
  %v216 = vpack.c.b16 %v206, %v204
  %v217 = vpack.c.b16 %v207, %v205
  %v218 = vpack.c.b16 %v210, %v208
  %v219 = vpack.c.b16 %v211, %v209
  %v229 = vsel %vm128, %v187, 0
  %231 = vmatprep.subr.bf16.mxu0 %v213
  %232 = vmatpush1.bf16.msra.mxu0 %v212
  %233 = vmatprep.subr.bf16.mxu0 %v215
  %234 = vmatpush1.bf16.msra.mxu0 %v214
  %235 = vmatprep.subr.bf16.mxu0 %v217
  %236 = vmatpush1.bf16.msra.mxu0 %v216
  %237 = vmatprep.subr.bf16.mxu0 %v219
  %238 = vmatpush1.bf16.msra.mxu0 %v218
  %239 = vmatprep.subr.bf16.mxu0 0
  %240 = vmatpush1.bf16.msra.mxu0 0
  %241 = vmatprep.subr.bf16.mxu0 0
  %242 = vmatpush1.bf16.msra.mxu0 0
  %243 = vmatprep.subr.bf16.mxu0 0
  %244 = vmatpush1.bf16.msra.mxu0 0
  %245 = vmatprep.subr.bf16.mxu0 0
  %246 = vmatpush1.bf16.msra.mxu0 0
  %247 = vmatprep.subr.bf16.mxu0 0
  %248 = vmatpush1.bf16.msra.mxu0 0
  %249 = vmatprep.subr.bf16.mxu0 0
  %250 = vmatpush1.bf16.msra.mxu0 0
  %251 = vmatprep.subr.bf16.mxu0 0
  %252 = vmatpush1.bf16.msra.mxu0 0
  %253 = vmatprep.subr.bf16.mxu0 0
  %254 = vmatpush1.bf16.msra.mxu0 0
  %255 = vmatprep.subr.bf16.mxu0 0
  %256 = vmatpush1.bf16.msra.mxu0 0
  %257 = vmatprep.subr.bf16.mxu0 0
  %258 = vmatpush1.bf16.msra.mxu0 0
  %259 = vmatprep.subr.bf16.mxu0 0
  %260 = vmatpush1.bf16.msra.mxu0 0
  %261 = vmatprep.subr.bf16.mxu0 0
  %262 = vmatpush1.bf16.msra.mxu0 0
  %263 = vmatprep.mubr.bf16.mxu0 0
  %264 = vmatmul.mubr.bf16.gmra.mrb[0].mxu0 %v229
  %v265 = vpop.f32.mrb[0].mxu0
  %v266 = vadd.f32 0.0, %v265
  %v267 = vpop.f32.mrb[0].mxu0
  %v268 = vadd.f32 0.0, %v267
  %v269 = vpop.f32.mrb[0].mxu0
  %v270 = vpop.f32.mrb[0].mxu0
  %271 = vdwg.mxu0
  %v274 = vcombine.low %v266, %v268
  %v276 = vunpack.c.l.s4 1983009808
  %v277 = vunpack.c.0.s8 %v276
  %v278 = vlaneseq
  %v279 = vshrl.u32 %v278, 7
  %v280 = vsub.s32 %v277, %v279
  %v281 = vrot.slane %v274, %v280
  %v283 = vadd.f32 %v186, %v281
  %v284 = vxor.u32 %v184, 2147483648
  %v285 = vmul.f32 %v284, 1.442695
  %v286 = vpow.pop %v285
  %v287 = vadd.f32 %v286, 1.0
  %v288 = vrcp.pop %v287
  %v289 = vmul.f32 1.0, %v288
  %v291 = vrot.slane %v184, 2
  %v293 = vtanh.pop %v291
  %294 = vrot.lane.b32.xlu0 %v184, 64
  %v295 = vpop.permute.xlu0 %294
  %v296 = vrot.slane %v295, 2
  %v298 = vxor.u32 %v296, 2147483648
  %v299 = vmul.f32 %v298, 1.442695
  %v300 = vpow.pop %v299
  %v301 = vadd.f32 %v300, 1.0
  %v302 = vrcp.pop %v301
  %v303 = vmul.f32 1.0, %v302
  %v306 = vunpack.c.l.s4 1983009808
  %v307 = vunpack.c.0.s8 %v306
  %v308 = vlaneseq
  %v309 = vshrl.u32 %v308, 7
  %v310 = vsub.s32 %v307, %v309
  %v311 = vrot.slane %v81, %v310
  %312 = vrot.lane.b32.xlu0 %v311, 64
  %v313 = vpop.permute.xlu0 %312
  %v315 = vmul.f32 %v289, %v313
  %v316 = vmul.f32 %v289, %v293
  %318 = vrot.lane.b32.xlu0 %v316, 64
  %v319 = vpop.permute.xlu0 %318
  %v321 = vadd.f32 %v315, %v319
  %v322 = vtanh.pop %v321
  %324 = vrot.lane.b32.xlu0 %v322, 64
  %v325 = vpop.permute.xlu0 %324
  %v327 = vmul.f32 %v303, %v325
  %v328 = vxor.u32 %v283, 2147483648
  %v329 = vmul.f32 %v328, 1.442695
  %v330 = vpow.pop %v329
  %v331 = vadd.f32 %v330, 1.0
  %v332 = vrcp.pop %v331
  %v333 = vmul.f32 1.0, %v332
  %v335 = vrot.slane %v283, 2
  %v337 = vtanh.pop %v335
  %338 = vrot.lane.b32.xlu0 %v283, 64
  %v339 = vpop.permute.xlu0 %338
  %v340 = vrot.slane %v339, 2
  %v342 = vxor.u32 %v340, 2147483648
  %v343 = vmul.f32 %v342, 1.442695
  %v344 = vpow.pop %v343
  %v345 = vadd.f32 %v344, 1.0
  %v346 = vrcp.pop %v345
  %v347 = vmul.f32 1.0, %v346
  %v350 = vunpack.c.l.s4 1983009808
  %v351 = vunpack.c.0.s8 %v350
  %v352 = vlaneseq
  %v353 = vshrl.u32 %v352, 7
  %v354 = vsub.s32 %v351, %v353
  %v355 = vrot.slane %v85, %v354
  %356 = vrot.lane.b32.xlu0 %v355, 64
  %v357 = vpop.permute.xlu0 %356
  %v359 = vmul.f32 %v333, %v357
  %v360 = vmul.f32 %v333, %v337
  %362 = vrot.lane.b32.xlu0 %v360, 64
  %v363 = vpop.permute.xlu0 %362
  %v365 = vadd.f32 %v359, %v363
  %v366 = vtanh.pop %v365
  %368 = vrot.lane.b32.xlu0 %v366, 64
  %v369 = vpop.permute.xlu0 %368
  %v371 = vmul.f32 %v347, %v369
  %v372 = vpack.c.bf16 %v327, %v327
  %vm373 = vcmask 516096
  %374 = vst.msk [vmem:[%s3] sm:$0x1] %vm373, %v372
  %v375 = vpack.c.bf16 %v371, %v371
  %s376 = scalar_lea.vmem %s50, 2
  %377 = vst.msk [vmem:[%s376] sm:$0x1] %vm373, %v375
  %s378 = scalar_lea.vmem %s0, 4
  %v379 = vld [vmem:[%s378] sm:$0xf]
  %v381 = vsel %vm128, %v372, 0
  %383 = vmatprep.subr.bf16.mxu0 %v113
  %384 = vmatpush1.bf16.msra.mxu0 %v112
  %385 = vmatprep.subr.bf16.mxu0 %v115
  %386 = vmatpush1.bf16.msra.mxu0 %v114
  %387 = vmatprep.subr.bf16.mxu0 %v117
  %388 = vmatpush1.bf16.msra.mxu0 %v116
  %389 = vmatprep.subr.bf16.mxu0 %v119
  %390 = vmatpush1.bf16.msra.mxu0 %v118
  %391 = vmatprep.subr.bf16.mxu0 0
  %392 = vmatpush1.bf16.msra.mxu0 0
  %393 = vmatprep.subr.bf16.mxu0 0
  %394 = vmatpush1.bf16.msra.mxu0 0
  %395 = vmatprep.subr.bf16.mxu0 0
  %396 = vmatpush1.bf16.msra.mxu0 0
  %397 = vmatprep.subr.bf16.mxu0 0
  %398 = vmatpush1.bf16.msra.mxu0 0
  %399 = vmatprep.subr.bf16.mxu0 0
  %400 = vmatpush1.bf16.msra.mxu0 0
  %401 = vmatprep.subr.bf16.mxu0 0
  %402 = vmatpush1.bf16.msra.mxu0 0
  %403 = vmatprep.subr.bf16.mxu0 0
  %404 = vmatpush1.bf16.msra.mxu0 0
  %405 = vmatprep.subr.bf16.mxu0 0
  %406 = vmatpush1.bf16.msra.mxu0 0
  %407 = vmatprep.subr.bf16.mxu0 0
  %408 = vmatpush1.bf16.msra.mxu0 0
  %409 = vmatprep.subr.bf16.mxu0 0
  %410 = vmatpush1.bf16.msra.mxu0 0
  %411 = vmatprep.subr.bf16.mxu0 0
  %412 = vmatpush1.bf16.msra.mxu0 0
  %413 = vmatprep.subr.bf16.mxu0 0
  %414 = vmatpush1.bf16.msra.mxu0 0
  %415 = vmatprep.mubr.bf16.mxu0 0
  %416 = vmatmul.mubr.bf16.gmra.mrb[0].mxu0 %v381
  %v417 = vpop.f32.mrb[0].mxu0
  %v418 = vadd.f32 0.0, %v417
  %v419 = vpop.f32.mrb[0].mxu0
  %v420 = vadd.f32 0.0, %v419
  %v421 = vpop.f32.mrb[0].mxu0
  %v422 = vpop.f32.mrb[0].mxu0
  %423 = vdwg.mxu0
  %v426 = vcombine.low %v418, %v420
  %v428 = vunpack.c.l.s4 1983009808
  %v429 = vunpack.c.0.s8 %v428
  %v430 = vlaneseq
  %v431 = vshrl.u32 %v430, 7
  %v432 = vsub.s32 %v429, %v431
  %v433 = vrot.slane %v426, %v432
  %v435 = vadd.f32 %v379, %v433
  %s436 = scalar_lea.vmem %s43, 4
  %v437 = vld [vmem:[%s436] sm:$0xf]
  %v439 = vsel %vm128, %v375, 0
  %441 = vmatprep.subr.bf16.mxu0 %v213
  %442 = vmatpush1.bf16.msra.mxu0 %v212
  %443 = vmatprep.subr.bf16.mxu0 %v215
  %444 = vmatpush1.bf16.msra.mxu0 %v214
  %445 = vmatprep.subr.bf16.mxu0 %v217
  %446 = vmatpush1.bf16.msra.mxu0 %v216
  %447 = vmatprep.subr.bf16.mxu0 %v219
  %448 = vmatpush1.bf16.msra.mxu0 %v218
  %449 = vmatprep.subr.bf16.mxu0 0
  %450 = vmatpush1.bf16.msra.mxu0 0
  %451 = vmatprep.subr.bf16.mxu0 0
  %452 = vmatpush1.bf16.msra.mxu0 0
  %453 = vmatprep.subr.bf16.mxu0 0
  %454 = vmatpush1.bf16.msra.mxu0 0
  %455 = vmatprep.subr.bf16.mxu0 0
  %456 = vmatpush1.bf16.msra.mxu0 0
  %457 = vmatprep.subr.bf16.mxu0 0
  %458 = vmatpush1.bf16.msra.mxu0 0
  %459 = vmatprep.subr.bf16.mxu0 0
  %460 = vmatpush1.bf16.msra.mxu0 0
  %461 = vmatprep.subr.bf16.mxu0 0
  %462 = vmatpush1.bf16.msra.mxu0 0
  %463 = vmatprep.subr.bf16.mxu0 0
  %464 = vmatpush1.bf16.msra.mxu0 0
  %465 = vmatprep.subr.bf16.mxu0 0
  %466 = vmatpush1.bf16.msra.mxu0 0
  %467 = vmatprep.subr.bf16.mxu0 0
  %468 = vmatpush1.bf16.msra.mxu0 0
  %469 = vmatprep.subr.bf16.mxu0 0
  %470 = vmatpush1.bf16.msra.mxu0 0
  %471 = vmatprep.subr.bf16.mxu0 0
  %472 = vmatpush1.bf16.msra.mxu0 0
  %473 = vmatprep.mubr.bf16.mxu0 0
  %474 = vmatmul.mubr.bf16.gmra.mrb[0].mxu0 %v439
  %v475 = vpop.f32.mrb[0].mxu0
  %v476 = vadd.f32 0.0, %v475
  %v477 = vpop.f32.mrb[0].mxu0
  %v478 = vadd.f32 0.0, %v477
  %v479 = vpop.f32.mrb[0].mxu0
  %v480 = vpop.f32.mrb[0].mxu0
  %481 = vdwg.mxu0
  %v484 = vcombine.low %v476, %v478
  %v486 = vunpack.c.l.s4 1983009808
  %v487 = vunpack.c.0.s8 %v486
  %v488 = vlaneseq
  %v489 = vshrl.u32 %v488, 7
  %v490 = vsub.s32 %v487, %v489
  %v491 = vrot.slane %v484, %v490
  %v493 = vadd.f32 %v437, %v491
  %v494 = vxor.u32 %v435, 2147483648
  %v495 = vmul.f32 %v494, 1.442695
  %v496 = vpow.pop %v495
  %v497 = vadd.f32 %v496, 1.0
  %v498 = vrcp.pop %v497
  %v499 = vmul.f32 1.0, %v498
  %v501 = vrot.slane %v435, 2
  %v503 = vtanh.pop %v501
  %504 = vrot.lane.b32.xlu0 %v435, 64
  %v505 = vpop.permute.xlu0 %504
  %v506 = vrot.slane %v505, 2
  %v508 = vxor.u32 %v506, 2147483648
  %v509 = vmul.f32 %v508, 1.442695
  %v510 = vpow.pop %v509
  %v511 = vadd.f32 %v510, 1.0
  %v512 = vrcp.pop %v511
  %v513 = vmul.f32 1.0, %v512
  %v514 = vmul.f32 %v499, %v321
  %v515 = vmul.f32 %v499, %v503
  %517 = vrot.lane.b32.xlu0 %v515, 64
  %v518 = vpop.permute.xlu0 %517
  %v520 = vadd.f32 %v514, %v518
  %v521 = vtanh.pop %v520
  %523 = vrot.lane.b32.xlu0 %v521, 64
  %v524 = vpop.permute.xlu0 %523
  %v526 = vmul.f32 %v513, %v524
  %v527 = vxor.u32 %v493, 2147483648
  %v528 = vmul.f32 %v527, 1.442695
  %v529 = vpow.pop %v528
  %v530 = vadd.f32 %v529, 1.0
  %v531 = vrcp.pop %v530
  %v532 = vmul.f32 1.0, %v531
  %v534 = vrot.slane %v493, 2
  %v536 = vtanh.pop %v534
  %537 = vrot.lane.b32.xlu0 %v493, 64
  %v538 = vpop.permute.xlu0 %537
  %v539 = vrot.slane %v538, 2
  %v541 = vxor.u32 %v539, 2147483648
  %v542 = vmul.f32 %v541, 1.442695
  %v543 = vpow.pop %v542
  %v544 = vadd.f32 %v543, 1.0
  %v545 = vrcp.pop %v544
  %v546 = vmul.f32 1.0, %v545
  %v547 = vmul.f32 %v532, %v365
  %v548 = vmul.f32 %v532, %v536
  %550 = vrot.lane.b32.xlu0 %v548, 64
  %v551 = vpop.permute.xlu0 %550
  %v553 = vadd.f32 %v547, %v551
  %v554 = vtanh.pop %v553
  %556 = vrot.lane.b32.xlu0 %v554, 64
  %v557 = vpop.permute.xlu0 %556
  %v559 = vmul.f32 %v546, %v557
  %v560 = vpack.c.bf16 %v526, %v526
  %s561 = scalar_lea.vmem %s3, 1
  %562 = vst.msk [vmem:[%s561] sm:$0x1] %vm373, %v560
  %v563 = vpack.c.bf16 %v559, %v559
  %s564 = scalar_lea.vmem %s50, 1
  %565 = vst.msk [vmem:[%s564] sm:$0x1] %vm373, %v563
  %s566 = scalar_lea.vmem %s0, 8
  %v567 = vld [vmem:[%s566] sm:$0xf]
  %v569 = vsel %vm128, %v560, 0
  %571 = vmatprep.subr.bf16.mxu0 %v113
  %572 = vmatpush1.bf16.msra.mxu0 %v112
  %573 = vmatprep.subr.bf16.mxu0 %v115
  %574 = vmatpush1.bf16.msra.mxu0 %v114
  %575 = vmatprep.subr.bf16.mxu0 %v117
  %576 = vmatpush1.bf16.msra.mxu0 %v116
  %577 = vmatprep.subr.bf16.mxu0 %v119
  %578 = vmatpush1.bf16.msra.mxu0 %v118
  %579 = vmatprep.subr.bf16.mxu0 0
  %580 = vmatpush1.bf16.msra.mxu0 0
  %581 = vmatprep.subr.bf16.mxu0 0
  %582 = vmatpush1.bf16.msra.mxu0 0
  %583 = vmatprep.subr.bf16.mxu0 0
  %584 = vmatpush1.bf16.msra.mxu0 0
  %585 = vmatprep.subr.bf16.mxu0 0
  %586 = vmatpush1.bf16.msra.mxu0 0
  %587 = vmatprep.subr.bf16.mxu0 0
  %588 = vmatpush1.bf16.msra.mxu0 0
  %589 = vmatprep.subr.bf16.mxu0 0
  %590 = vmatpush1.bf16.msra.mxu0 0
  %591 = vmatprep.subr.bf16.mxu0 0
  %592 = vmatpush1.bf16.msra.mxu0 0
  %593 = vmatprep.subr.bf16.mxu0 0
  %594 = vmatpush1.bf16.msra.mxu0 0
  %595 = vmatprep.subr.bf16.mxu0 0
  %596 = vmatpush1.bf16.msra.mxu0 0
  %597 = vmatprep.subr.bf16.mxu0 0
  %598 = vmatpush1.bf16.msra.mxu0 0
  %599 = vmatprep.subr.bf16.mxu0 0
  %600 = vmatpush1.bf16.msra.mxu0 0
  %601 = vmatprep.subr.bf16.mxu0 0
  %602 = vmatpush1.bf16.msra.mxu0 0
  %603 = vmatprep.mubr.bf16.mxu0 0
  %604 = vmatmul.mubr.bf16.gmra.mrb[0].mxu0 %v569
  %v605 = vpop.f32.mrb[0].mxu0
  %v606 = vadd.f32 0.0, %v605
  %v607 = vpop.f32.mrb[0].mxu0
  %v608 = vadd.f32 0.0, %v607
  %v609 = vpop.f32.mrb[0].mxu0
  %v610 = vpop.f32.mrb[0].mxu0
  %611 = vdwg.mxu0
  %v614 = vcombine.low %v606, %v608
  %v616 = vunpack.c.l.s4 1983009808
  %v617 = vunpack.c.0.s8 %v616
  %v618 = vlaneseq
  %v619 = vshrl.u32 %v618, 7
  %v620 = vsub.s32 %v617, %v619
  %v621 = vrot.slane %v614, %v620
  %v623 = vadd.f32 %v567, %v621
  %v624 = vld [vmem:[%s43] sm:$0xf]
  %v626 = vsel %vm128, %v563, 0
  %628 = vmatprep.subr.bf16.mxu0 %v213
  %629 = vmatpush1.bf16.msra.mxu0 %v212
  %630 = vmatprep.subr.bf16.mxu0 %v215
  %631 = vmatpush1.bf16.msra.mxu0 %v214
  %632 = vmatprep.subr.bf16.mxu0 %v217
  %633 = vmatpush1.bf16.msra.mxu0 %v216
  %634 = vmatprep.subr.bf16.mxu0 %v219
  %635 = vmatpush1.bf16.msra.mxu0 %v218
  %636 = vmatprep.subr.bf16.mxu0 0
  %637 = vmatpush1.bf16.msra.mxu0 0
  %638 = vmatprep.subr.bf16.mxu0 0
  %639 = vmatpush1.bf16.msra.mxu0 0
  %640 = vmatprep.subr.bf16.mxu0 0
  %641 = vmatpush1.bf16.msra.mxu0 0
  %642 = vmatprep.subr.bf16.mxu0 0
  %643 = vmatpush1.bf16.msra.mxu0 0
  %644 = vmatprep.subr.bf16.mxu0 0
  %645 = vmatpush1.bf16.msra.mxu0 0
  %646 = vmatprep.subr.bf16.mxu0 0
  %647 = vmatpush1.bf16.msra.mxu0 0
  %648 = vmatprep.subr.bf16.mxu0 0
  %649 = vmatpush1.bf16.msra.mxu0 0
  %650 = vmatprep.subr.bf16.mxu0 0
  %651 = vmatpush1.bf16.msra.mxu0 0
  %652 = vmatprep.subr.bf16.mxu0 0
  %653 = vmatpush1.bf16.msra.mxu0 0
  %654 = vmatprep.subr.bf16.mxu0 0
  %655 = vmatpush1.bf16.msra.mxu0 0
  %656 = vmatprep.subr.bf16.mxu0 0
  %657 = vmatpush1.bf16.msra.mxu0 0
  %658 = vmatprep.subr.bf16.mxu0 0
  %659 = vmatpush1.bf16.msra.mxu0 0
  %660 = vmatprep.mubr.bf16.mxu0 0
  %661 = vmatmul.mubr.bf16.gmra.mrb[0].mxu0 %v626
  %v662 = vpop.f32.mrb[0].mxu0
  %v663 = vadd.f32 0.0, %v662
  %v664 = vpop.f32.mrb[0].mxu0
  %v665 = vadd.f32 0.0, %v664
  %v666 = vpop.f32.mrb[0].mxu0
  %v667 = vpop.f32.mrb[0].mxu0
  %668 = vdwg.mxu0
  %v671 = vcombine.low %v663, %v665
  %v673 = vunpack.c.l.s4 1983009808
  %v674 = vunpack.c.0.s8 %v673
  %v675 = vlaneseq
  %v676 = vshrl.u32 %v675, 7
  %v677 = vsub.s32 %v674, %v676
  %v678 = vrot.slane %v671, %v677
  %v680 = vadd.f32 %v624, %v678
  %v681 = vxor.u32 %v623, 2147483648
  %v682 = vmul.f32 %v681, 1.442695
  %v683 = vpow.pop %v682
  %v684 = vadd.f32 %v683, 1.0
  %v685 = vrcp.pop %v684
  %v686 = vmul.f32 1.0, %v685
  %v688 = vrot.slane %v623, 2
  %v690 = vtanh.pop %v688
  %691 = vrot.lane.b32.xlu0 %v623, 64
  %v692 = vpop.permute.xlu0 %691
  %v693 = vrot.slane %v692, 2
  %v695 = vxor.u32 %v693, 2147483648
  %v696 = vmul.f32 %v695, 1.442695
  %v697 = vpow.pop %v696
  %v698 = vadd.f32 %v697, 1.0
  %v699 = vrcp.pop %v698
  %v700 = vmul.f32 1.0, %v699
  %v701 = vmul.f32 %v686, %v520
  %v702 = vmul.f32 %v686, %v690
  %704 = vrot.lane.b32.xlu0 %v702, 64
  %v705 = vpop.permute.xlu0 %704
  %v707 = vadd.f32 %v701, %v705
  %v708 = vtanh.pop %v707
  %710 = vrot.lane.b32.xlu0 %v708, 64
  %v711 = vpop.permute.xlu0 %710
  %v713 = vmul.f32 %v700, %v711
  %v714 = vxor.u32 %v680, 2147483648
  %v715 = vmul.f32 %v714, 1.442695
  %v716 = vpow.pop %v715
  %v717 = vadd.f32 %v716, 1.0
  %v718 = vrcp.pop %v717
  %v719 = vmul.f32 1.0, %v718
  %v721 = vrot.slane %v680, 2
  %v723 = vtanh.pop %v721
  %724 = vrot.lane.b32.xlu0 %v680, 64
  %v725 = vpop.permute.xlu0 %724
  %v726 = vrot.slane %v725, 2
  %v728 = vxor.u32 %v726, 2147483648
  %v729 = vmul.f32 %v728, 1.442695
  %v730 = vpow.pop %v729
  %v731 = vadd.f32 %v730, 1.0
  %v732 = vrcp.pop %v731
  %v733 = vmul.f32 1.0, %v732
  %v734 = vmul.f32 %v719, %v553
  %v735 = vmul.f32 %v719, %v723
  %737 = vrot.lane.b32.xlu0 %v735, 64
  %v738 = vpop.permute.xlu0 %737
  %v740 = vadd.f32 %v734, %v738
  %v741 = vtanh.pop %v740
  %743 = vrot.lane.b32.xlu0 %v741, 64
  %v744 = vpop.permute.xlu0 %743
  %v746 = vmul.f32 %v733, %v744
  %v747 = vpack.c.bf16 %v713, %v713
  %s748 = scalar_lea.vmem %s3, 2
  %749 = vst.msk [vmem:[%s748] sm:$0x1] %vm373, %v747
  %v750 = vpack.c.bf16 %v746, %v746
  %751 = vst.msk [vmem:[%s50] sm:$0x1] %vm373, %v750
  %vm752 = vcmask 517120
  %753 = vst.msk [vmem:[#allocation2] sm:$0x3] %vm752, %v713
  %v756 = vunpack.c.l.s4 1983009808
  %v757 = vunpack.c.0.s8 %v756
  %v758 = vlaneseq
  %v759 = vshrl.u32 %v758, 7
  %v760 = vsub.s32 %v757, %v759
  %v761 = vrot.slane %v707, %v760
  %762 = vrot.lane.b32.xlu0 %v761, 64
  %v763 = vpop.permute.xlu0 %762
  %765 = vst.msk [vmem:[#allocation3] sm:$0x3] %vm752, %v763
  %766 = vst.msk [vmem:[%s82] sm:$0x3] %vm752, %v746
  %v769 = vunpack.c.l.s4 1983009808
  %v770 = vunpack.c.0.s8 %v769
  %v771 = vlaneseq
  %v772 = vshrl.u32 %v771, 7
  %v773 = vsub.s32 %v770, %v772
  %v774 = vrot.slane %v740, %v773
  %775 = vrot.lane.b32.xlu0 %v774, 64
  %v776 = vpop.permute.xlu0 %775
  %778 = vst.msk [vmem:[%s84] sm:$0x3] %vm752, %v776
  %s779 = ssub.s32 0, 0
  %s780 = smul.u32 3, %s779
  %p781 = scmp.lt.s32.totalorder %s780, 2
  %s782 = scalar_select %p781, %s780, 2
  %s783 = scalar_lea.vmem %s4, %s782
  // Predicated region
  $region18: #{wav_autoencoder_forward.33} parent=0 // pred_check
    _
  $region19: #{wav_autoencoder_forward.33} parent=0 // pred_check_branch
    %785 = sbr.rel (0) target = $region21
  $region20: #{wav_autoencoder_forward.33} parent=0 // pred_region
    _
  $region21: #{wav_autoencoder_forward.33} parent=0 // pred_fallthru
    _
  // Predicated region
  $region22: #{wav_autoencoder_forward.33} parent=0 // pred_check
    _
  $region23: #{wav_autoencoder_forward.33} parent=0 // pred_check_branch
    %787 = sbr.rel (0) target = $region25
  $region24: #{wav_autoencoder_forward.33} parent=0 // pred_region
    %s788 = ssub.s32 0, 0
    %s789 = smul.u32 3, %s788
  $region25: #{wav_autoencoder_forward.33} parent=0 // pred_fallthru
    _
  // Predicated region
  $region26: #{wav_autoencoder_forward.33} parent=0 // pred_check
    _
  $region27: #{wav_autoencoder_forward.33} parent=0 // pred_check_branch
    %791 = sbr.rel (0) target = $region29
  $region28: #{wav_autoencoder_forward.33} parent=0 // pred_region
    _
  $region29: #{wav_autoencoder_forward.33} parent=0 // pred_fallthru
    _
  // Predicated region
  $region30: #{wav_autoencoder_forward.33} parent=0 // pred_check
    _
  $region31: #{wav_autoencoder_forward.33} parent=0 // pred_check_branch
    %793 = sbr.rel (0) target = $region33
  $region32: #{wav_autoencoder_forward.33} parent=0 // pred_region
    %s794 = ssub.s32 0, 0
    %s795 = smul.u32 3, %s794
    %p796 = scmp.lt.s32.totalorder %s795, 2
    %s797 = scalar_select %p796, %s795, 2
    %s798 = scalar_lea.vmem %s4, %s797
  $region33: #{wav_autoencoder_forward.33} parent=0 // pred_fallthru
    _

// kernel: wav_autoencoder_forward.37
$region0: #{wav_autoencoder_forward.37}
  #allocation0 [shape = 'u32[]', space=smem, size = 0x4, offset = 0x4, fixed_abs, tag = 'smem constant byte address 0x4 - core index']
  #allocation1 [shape = 'u32[144,128]{1,0:T(1,128)}', space=vmem, size = 0x12000, scoped, tag = 'internal scratch']
  %s0 = inlined_call_operand.vmem [shape: bf16[6,128], index: 0, kind: input, shape index: {}]
  %s1 = inlined_call_operand.vmem [shape: bf16[128,64], index: 1, kind: input, shape index: {}]
  %s2 = inlined_call_operand.vmem [shape: f32[1,64], index: 2, kind: input, shape index: {}]
  %s3 = inlined_call_operand.vmem [shape: bf16[6,64], index: 3, kind: output, shape index: {}]
  %s4 = sld [smem:[#allocation0]]
  $region22: #{wav_autoencoder_forward.37} parent=0
    _
  %s6 = ssub.s32 1, %s4
  %s7 = scalar_select 0, %s6, %s4
  // Predicated region
  $region2: #{wav_autoencoder_forward.37} parent=0 // pred_check
    _
  $region3: #{wav_autoencoder_forward.37} parent=0 // pred_check_branch
    %9 = sbr.rel (0) target = $region5
  $region4: #{wav_autoencoder_forward.37} parent=0 // pred_region
    _
  $region5: #{wav_autoencoder_forward.37} parent=0 // pred_fallthru
    _
  // Predicated region
  $region6: #{wav_autoencoder_forward.37} parent=0 // pred_check
    _
  $region7: #{wav_autoencoder_forward.37} parent=0 // pred_check_branch
    %11 = sbr.rel (0) target = $region9
  $region8: #{wav_autoencoder_forward.37} parent=0 // pred_region
    _
  $region9: #{wav_autoencoder_forward.37} parent=0 // pred_fallthru
    _
  // Predicated region
  $region10: #{wav_autoencoder_forward.37} parent=0 // pred_check
    _
  $region11: #{wav_autoencoder_forward.37} parent=0 // pred_check_branch
    %13 = sbr.rel (0) target = $region13
  $region12: #{wav_autoencoder_forward.37} parent=0 // pred_region
    _
  $region13: #{wav_autoencoder_forward.37} parent=0 // pred_fallthru
    _
  %v15 = vld [vmem:[%s0] sm:$0x7]
  %v16 = vld [vmem:[%s1] sm:$0xf]
  %v17 = vld [vmem:[%s1 + $0x4] sm:$0xf]
  %v18 = vld [vmem:[%s1 + $0x8] sm:$0xf]
  %v19 = vld [vmem:[%s1 + $0xc] sm:$0xf]
  %v20 = vld [vmem:[%s1 + $0x10] sm:$0xf]
  %v21 = vld [vmem:[%s1 + $0x14] sm:$0xf]
  %v22 = vld [vmem:[%s1 + $0x18] sm:$0xf]
  %v23 = vld [vmem:[%s1 + $0x1c] sm:$0xf]
  %v24 = vld [vmem:[%s1 + $0x20] sm:$0xf]
  %v25 = vld [vmem:[%s1 + $0x24] sm:$0xf]
  %v26 = vld [vmem:[%s1 + $0x28] sm:$0xf]
  %v27 = vld [vmem:[%s1 + $0x2c] sm:$0xf]
  %v28 = vld [vmem:[%s1 + $0x30] sm:$0xf]
  %v29 = vld [vmem:[%s1 + $0x34] sm:$0xf]
  %v30 = vld [vmem:[%s1 + $0x38] sm:$0xf]
  %v31 = vld [vmem:[%s1 + $0x3c] sm:$0xf]
  %v32 = vld [vmem:[%s2] sm:$0x1]
  %v34 = vlaneseq
  %v35 = vshrl.u32 %v34, 7
  %v36 = vsub.s32 0, %v35
  %v37 = vrot.slane %v32, %v36
  %v55 = vunpack.c.l.b16 %v16
  %v56 = vunpack.c.l.b16 %v17
  %v57 = vunpack.c.l.b16 %v18
  %v58 = vunpack.c.l.b16 %v19
  %v59 = vunpack.c.l.b16 %v20
  %v60 = vunpack.c.l.b16 %v21
  %v61 = vunpack.c.l.b16 %v22
  %v62 = vunpack.c.l.b16 %v23
  %v63 = vunpack.c.l.b16 %v24
  %v64 = vunpack.c.l.b16 %v25
  %v65 = vunpack.c.l.b16 %v26
  %v66 = vunpack.c.l.b16 %v27
  %v67 = vunpack.c.l.b16 %v28
  %v68 = vunpack.c.l.b16 %v29
  %v69 = vunpack.c.l.b16 %v30
  %v70 = vunpack.c.l.b16 %v31
  %v71 = vpack.c.b16 %v56, %v55
  %v72 = vpack.c.b16 %v58, %v57
  %v73 = vpack.c.b16 %v60, %v59
  %v74 = vpack.c.b16 %v62, %v61
  %v75 = vpack.c.b16 %v64, %v63
  %v76 = vpack.c.b16 %v66, %v65
  %v77 = vpack.c.b16 %v68, %v67
  %v78 = vpack.c.b16 %v70, %v69
  %87 = vmatprep.subr.bf16.mxu0 0
  %88 = vmatpush1.bf16.msra.mxu0 %v71
  %89 = vmatprep.subr.bf16.mxu0 0
  %90 = vmatpush1.bf16.msra.mxu0 %v72
  %91 = vmatprep.subr.bf16.mxu0 0
  %92 = vmatpush1.bf16.msra.mxu0 %v73
  %93 = vmatprep.subr.bf16.mxu0 0
  %94 = vmatpush1.bf16.msra.mxu0 %v74
  %95 = vmatprep.subr.bf16.mxu0 0
  %96 = vmatpush1.bf16.msra.mxu0 %v75
  %97 = vmatprep.subr.bf16.mxu0 0
  %98 = vmatpush1.bf16.msra.mxu0 %v76
  %99 = vmatprep.subr.bf16.mxu0 0
  %100 = vmatpush1.bf16.msra.mxu0 %v77
  %101 = vmatprep.subr.bf16.mxu0 0
  %102 = vmatpush1.bf16.msra.mxu0 %v78
  %103 = vmatprep.subr.bf16.mxu0 0
  %104 = vmatpush1.bf16.msra.mxu0 0
  %105 = vmatprep.subr.bf16.mxu0 0
  %106 = vmatpush1.bf16.msra.mxu0 0
  %107 = vmatprep.subr.bf16.mxu0 0
  %108 = vmatpush1.bf16.msra.mxu0 0
  %109 = vmatprep.subr.bf16.mxu0 0
  %110 = vmatpush1.bf16.msra.mxu0 0
  %111 = vmatprep.subr.bf16.mxu0 0
  %112 = vmatpush1.bf16.msra.mxu0 0
  %113 = vmatprep.subr.bf16.mxu0 0
  %114 = vmatpush1.bf16.msra.mxu0 0
  %115 = vmatprep.subr.bf16.mxu0 0
  %116 = vmatpush1.bf16.msra.mxu0 0
  %117 = vmatprep.subr.bf16.mxu0 0
  %118 = vmatpush1.bf16.msra.mxu0 0
  %119 = vmatprep.mubr.bf16.mxu0 0
  %120 = vmatmul.mubr.bf16.gmra.mrb[0].mxu0 %v15
  %v121 = vpop.f32.mrb[0].mxu0
  %v122 = vadd.f32 %v37, %v121
  %v123 = vpop.f32.mrb[0].mxu0
  %v124 = vpop.f32.mrb[0].mxu0
  %v125 = vpop.f32.mrb[0].mxu0
  %126 = vdwg.mxu0
  %v127 = vpack.c.bf16 %v122, %v122
  %vm128 = vcmask 518144
  %129 = vst.msk [vmem:[%s3] sm:$0x7] %vm128, %v127
  // Predicated region
  $region14: #{wav_autoencoder_forward.37} parent=0 // pred_check
    _
  $region15: #{wav_autoencoder_forward.37} parent=0 // pred_check_branch
    %131 = sbr.rel (0) target = $region17
  $region16: #{wav_autoencoder_forward.37} parent=0 // pred_region
    _
  $region17: #{wav_autoencoder_forward.37} parent=0 // pred_fallthru
    _
  // Predicated region
  $region18: #{wav_autoencoder_forward.37} parent=0 // pred_check
    _
  $region19: #{wav_autoencoder_forward.37} parent=0 // pred_check_branch
    %133 = sbr.rel (0) target = $region21
  $region20: #{wav_autoencoder_forward.37} parent=0 // pred_region
    _
  $region21: #{wav_autoencoder_forward.37} parent=0 // pred_fallthru
    _

// kernel: tile.23
$region0: #{tile.23}
  #allocation0 [shape = 's32[1]{0}', space=sflag, size = 0x4, scoped, tag = 'scoped memory for tile.23']
  %s0 = inlined_call_operand.vmem [shape: f32[32], index: 0, kind: input, shape index: {}]
  %s1 = inlined_call_operand.vmem [shape: f32[4,32], index: 1, kind: output, shape index: {}]
  // Predicated region
  $region2: #{tile.23} parent=0 // pred_check
    _
  $region3: #{tile.23} parent=0 // pred_check_branch
    %3 = sbr.rel (0) target = $region5
  $region4: #{tile.23} parent=0 // pred_region
    _
  $region5: #{tile.23} parent=0 // pred_fallthru
    _
  %v4 = vld [vmem:[%s0] ss:$0 sm:$0xff]
  %5 = vst [vmem:[%s1] sm:$0xf] %v4

// kernel: tile.24
$region0: #{tile.24}
  %s0 = inlined_call_operand.vmem [shape: f32[4,32], index: 0, kind: input, shape index: {}]
  %s1 = inlined_call_operand.vmem [shape: f32[1,128], index: 1, kind: output, shape index: {}]
  $region1: #{tile.24} parent=0
    #allocation0 [shape = 'u8[4096]{0}', space=vmem, size = 0x1000, scoped, tag = 'scoped mem for output reshape']
    #allocation1 [shape = 'u8[4096]{0}', space=vmem, size = 0x1000, scoped, tag = 'scoped mem for input reshape']
    %s3 = sshllo.u32 0, 4
    %v4 = vld [vmem:[%s0] sm:%s3]
    %5 = vst [vmem:[#allocation1] sm:%s3] %v4
    %v6 = vld [vmem:[#allocation1] sm:$0x1]
    %vm7 = vcmask 261120
    %8 = vst.msk [vmem:[#allocation0] sm:$0x1] %vm7, %v6
    %s9 = scalar_lea.vmem [#allocation1], 3
    %v10 = vld [vmem:[%s9] sm:$0x1]
    %11 = vrot.lane.b32.xlu0 %v10, 96
    %v12 = vpop.permute.xlu0 %11
    %vm13 = vcmask 1048320
    %14 = vst.msk [vmem:[#allocation0] sm:$0x1] %vm13, %v12
    %s15 = scalar_lea.vmem [#allocation1], 2
    %v16 = vld [vmem:[%s15] sm:$0x1]
    %17 = vrot.lane.b32.xlu0 %v16, 64
    %v18 = vpop.permute.xlu0 %17
    %vm19 = vcmask 785920
    %20 = vst.msk [vmem:[#allocation0] sm:$0x1] %vm19, %v18
    %s21 = scalar_lea.vmem [#allocation1], 1
    %v22 = vld [vmem:[%s21] sm:$0x1]
    %23 = vrot.lane.b32.xlu0 %v22, 32
    %v24 = vpop.permute.xlu0 %23
    %vm25 = vcmask 523520
    %26 = vst.msk [vmem:[#allocation0] sm:$0x1] %vm25, %v24
    %s28 = sshllo.u32 0, 1
    %v30 = vld [vmem:[#allocation0] sm:%s28]
    %s31 = sshllo.u32 0, 1
    %32 = vst [vmem:[%s1] sm:%s31] %v30

// kernel: wav_autoencoder_forward.38
$region0: #{wav_autoencoder_forward.38}
  #allocation0 [shape = 'u32[]', space=smem, size = 0x4, offset = 0x4, fixed_abs, tag = 'smem constant byte address 0x4 - core index']
  #allocation1 [shape = 'u32[144,128]{1,0:T(1,128)}', space=vmem, size = 0x12000, scoped, tag = 'internal scratch']
  %s0 = inlined_call_operand.vmem [shape: bf16[10,64], index: 0, kind: input, shape index: {}]
  %s1 = inlined_call_operand.vmem [shape: bf16[10,64], index: 1, kind: input, shape index: {}]
  %s2 = inlined_call_operand.vmem [shape: bf16[64,128], index: 2, kind: input, shape index: {}]
  %s3 = inlined_call_operand.vmem [shape: f32[1,128], index: 3, kind: input, shape index: {}]
  %s4 = inlined_call_operand.vmem [shape: bf16[10,64], index: 4, kind: output, shape index: {}]
  %s5 = sld [smem:[#allocation0]]
  $region26: #{wav_autoencoder_forward.38} parent=0
    _
  %s7 = ssub.s32 1, %s5
  %s8 = scalar_select 0, %s7, %s5
  // Predicated region
  $region2: #{wav_autoencoder_forward.38} parent=0 // pred_check
    _
  $region3: #{wav_autoencoder_forward.38} parent=0 // pred_check_branch
    %10 = sbr.rel (0) target = $region5
  $region4: #{wav_autoencoder_forward.38} parent=0 // pred_region
    _
  $region5: #{wav_autoencoder_forward.38} parent=0 // pred_fallthru
    _
  // Predicated region
  $region6: #{wav_autoencoder_forward.38} parent=0 // pred_check
    _
  $region7: #{wav_autoencoder_forward.38} parent=0 // pred_check_branch
    %12 = sbr.rel (0) target = $region9
  $region8: #{wav_autoencoder_forward.38} parent=0 // pred_region
    _
  $region9: #{wav_autoencoder_forward.38} parent=0 // pred_fallthru
    _
  // Predicated region
  $region10: #{wav_autoencoder_forward.38} parent=0 // pred_check
    _
  $region11: #{wav_autoencoder_forward.38} parent=0 // pred_check_branch
    %14 = sbr.rel (0) target = $region13
  $region12: #{wav_autoencoder_forward.38} parent=0 // pred_region
    _
  $region13: #{wav_autoencoder_forward.38} parent=0 // pred_fallthru
    _
  // Predicated region
  $region14: #{wav_autoencoder_forward.38} parent=0 // pred_check
    _
  $region15: #{wav_autoencoder_forward.38} parent=0 // pred_check_branch
    %16 = sbr.rel (0) target = $region17
  $region16: #{wav_autoencoder_forward.38} parent=0 // pred_region
    _
  $region17: #{wav_autoencoder_forward.38} parent=0 // pred_fallthru
    _
  %v18 = vld [vmem:[%s0] sm:$0xf]
  %v19 = vld [vmem:[%s0 + $0x4] sm:$0x1]
  %v20 = vunpack.c.l.bf16 %v18
  %v21 = vunpack.c.l.bf16 %v19
  %v22 = vld [vmem:[%s1] sm:$0xf]
  %v23 = vld [vmem:[%s1 + $0x4] sm:$0x1]
  %v24 = vunpack.c.l.bf16 %v22
  %v25 = vunpack.c.l.bf16 %v23
  %v26 = vadd.f32 %v20, %v24
  %v27 = vadd.f32 %v21, %v25
  %v28 = vpack.c.bf16 %v27, %v26
  %v29 = vld [vmem:[%s2] sm:$0xf]
  %v30 = vld [vmem:[%s2 + $0x4] sm:$0xf]
  %v31 = vld [vmem:[%s2 + $0x8] sm:$0xf]
  %v32 = vld [vmem:[%s2 + $0xc] sm:$0xf]
  %v33 = vld [vmem:[%s2 + $0x10] sm:$0xf]
  %v34 = vld [vmem:[%s2 + $0x14] sm:$0xf]
  %v35 = vld [vmem:[%s2 + $0x18] sm:$0xf]
  %v36 = vld [vmem:[%s2 + $0x1c] sm:$0xf]
  %v37 = vld [vmem:[%s3] sm:$0x1]
  %v39 = vlaneseq
  %v40 = vshrl.u32 %v39, 7
  %v41 = vsub.s32 0, %v40
  %v42 = vrot.slane %v37, %v41
  %v52 = vunpack.c.l.b16 %v29
  %v53 = vunpack.c.l.b16 %v30
  %v54 = vunpack.c.l.b16 %v31
  %v55 = vunpack.c.l.b16 %v32
  %v56 = vunpack.c.l.b16 %v33
  %v57 = vunpack.c.l.b16 %v34
  %v58 = vunpack.c.l.b16 %v35
  %v59 = vunpack.c.l.b16 %v36
  %v60 = vpack.c.b16 %v53, %v52
  %v61 = vpack.c.b16 %v55, %v54
  %v62 = vpack.c.b16 %v57, %v56
  %v63 = vpack.c.b16 %v59, %v58
  %vm68 = vcmask 523264
  %v70 = vsel %vm68, %v28, 0
  %72 = vmatprep.subr.bf16.mxu0 0
  %73 = vmatpush1.bf16.msra.mxu0 %v60
  %74 = vmatprep.subr.bf16.mxu0 0
  %75 = vmatpush1.bf16.msra.mxu0 %v61
  %76 = vmatprep.subr.bf16.mxu0 0
  %77 = vmatpush1.bf16.msra.mxu0 %v62
  %78 = vmatprep.subr.bf16.mxu0 0
  %79 = vmatpush1.bf16.msra.mxu0 %v63
  %80 = vmatprep.subr.bf16.mxu0 0
  %81 = vmatpush1.bf16.msra.mxu0 0
  %82 = vmatprep.subr.bf16.mxu0 0
  %83 = vmatpush1.bf16.msra.mxu0 0
  %84 = vmatprep.subr.bf16.mxu0 0
  %85 = vmatpush1.bf16.msra.mxu0 0
  %86 = vmatprep.subr.bf16.mxu0 0
  %87 = vmatpush1.bf16.msra.mxu0 0
  %88 = vmatprep.subr.bf16.mxu0 0
  %89 = vmatpush1.bf16.msra.mxu0 0
  %90 = vmatprep.subr.bf16.mxu0 0
  %91 = vmatpush1.bf16.msra.mxu0 0
  %92 = vmatprep.subr.bf16.mxu0 0
  %93 = vmatpush1.bf16.msra.mxu0 0
  %94 = vmatprep.subr.bf16.mxu0 0
  %95 = vmatpush1.bf16.msra.mxu0 0
  %96 = vmatprep.subr.bf16.mxu0 0
  %97 = vmatpush1.bf16.msra.mxu0 0
  %98 = vmatprep.subr.bf16.mxu0 0
  %99 = vmatpush1.bf16.msra.mxu0 0
  %100 = vmatprep.subr.bf16.mxu0 0
  %101 = vmatpush1.bf16.msra.mxu0 0
  %102 = vmatprep.subr.bf16.mxu0 0
  %103 = vmatpush1.bf16.msra.mxu0 0
  %104 = vmatprep.mubr.bf16.mxu0 0
  %105 = vmatmul.mubr.bf16.gmra.mrb[0].mxu0 %v70
  %v106 = vpop.f32.mrb[0].mxu0
  %v107 = vadd.f32 %v42, %v106
  %v108 = vpop.f32.mrb[0].mxu0
  %v109 = vpop.f32.mrb[0].mxu0
  %v110 = vadd.f32 %v42, %v109
  %v111 = vpop.f32.mrb[0].mxu0
  %112 = vdwg.mxu0
  %v113 = vxor.u32 %v107, 2147483648
  %v114 = vxor.u32 %v110, 2147483648
  %v115 = vmul.f32 %v113, 1.442695
  %v116 = vpow.pop %v115
  %v117 = vmul.f32 %v114, 1.442695
  %v118 = vpow.pop %v117
  %v119 = vadd.f32 %v116, 1.0
  %v120 = vadd.f32 %v118, 1.0
  %v121 = vrcp.pop %v119
  %v122 = vmul.f32 1.0, %v121
  %v123 = vrcp.pop %v120
  %v124 = vmul.f32 1.0, %v123
  %127 = vrot.lane.b32.xlu0 %v122, 64
  %v128 = vpop.permute.xlu0 %127
  %129 = vrot.lane.b32.xlu0 %v124, 64
  %v130 = vpop.permute.xlu0 %129
  %v133 = vmul.f32 %v107, %v128
  %v134 = vmul.f32 %v110, %v130
  %v135 = vpack.c.bf16 %v134, %v133
  %v137 = vunpack.c.l.b16 %v135
  %v138 = vunpack.c.h.b16 %v135
  %v139 = vpack.c.b16 %v137, %v137
  %v140 = vpack.c.b16 %v138, %v138
  %vm143 = vcmask 519168
  %144 = vst.msk [vmem:[%s4] sm:$0xf] %vm143, %v139
  %vm145 = vcmask 516096
  %146 = vst.msk [vmem:[%s4 + $0x4] sm:$0x1] %vm145, %v140
  // Predicated region
  $region18: #{wav_autoencoder_forward.38} parent=0 // pred_check
    _
  $region19: #{wav_autoencoder_forward.38} parent=0 // pred_check_branch
    %148 = sbr.rel (0) target = $region21
  $region20: #{wav_autoencoder_forward.38} parent=0 // pred_region
    _
  $region21: #{wav_autoencoder_forward.38} parent=0 // pred_fallthru
    _
  // Predicated region
  $region22: #{wav_autoencoder_forward.38} parent=0 // pred_check
    _
  $region23: #{wav_autoencoder_forward.38} parent=0 // pred_check_branch
    %150 = sbr.rel (0) target = $region25
  $region24: #{wav_autoencoder_forward.38} parent=0 // pred_region
    _
  $region25: #{wav_autoencoder_forward.38} parent=0 // pred_fallthru
    _

// kernel: tile.28
$region0: #{tile.28}
  #allocation0 [shape = 's32[1]{0}', space=sflag, size = 0x4, scoped, tag = 'scoped memory for tile.28']
  %s0 = inlined_call_operand.vmem [shape: f32[16], index: 0, kind: input, shape index: {}]
  %s1 = inlined_call_operand.vmem [shape: f32[4,16], index: 1, kind: output, shape index: {}]
  // Predicated region
  $region2: #{tile.28} parent=0 // pred_check
    _
  $region3: #{tile.28} parent=0 // pred_check_branch
    %3 = sbr.rel (0) target = $region5
  $region4: #{tile.28} parent=0 // pred_region
    _
  $region5: #{tile.28} parent=0 // pred_fallthru
    _
  %v4 = vld [vmem:[%s0] ss:$0 sm:$0xff]
  %5 = vst [vmem:[%s1] sm:$0xf] %v4

// kernel: tile.29
$region0: #{tile.29}
  %s0 = inlined_call_operand.vmem [shape: f32[4,16], index: 0, kind: input, shape index: {}]
  %s1 = inlined_call_operand.vmem [shape: f32[1,64], index: 1, kind: output, shape index: {}]
  $region1: #{tile.29} parent=0
    #allocation0 [shape = 'u8[4096]{0}', space=vmem, size = 0x1000, scoped, tag = 'scoped mem for output reshape']
    #allocation1 [shape = 'u8[4096]{0}', space=vmem, size = 0x1000, scoped, tag = 'scoped mem for input reshape']
    %s3 = sshllo.u32 0, 4
    %v4 = vld [vmem:[%s0] sm:%s3]
    %5 = vst [vmem:[#allocation1] sm:%s3] %v4
    %v6 = vld [vmem:[#allocation1] sm:$0x1]
    %vm7 = vcmask 130048
    %8 = vst.msk [vmem:[#allocation0] sm:$0x1] %vm7, %v6
    %s9 = scalar_lea.vmem [#allocation1], 3
    %v10 = vld [vmem:[%s9] sm:$0x1]
    %11 = vrot.lane.b32.xlu0 %v10, 48
    %v12 = vpop.permute.xlu0 %11
    %vm13 = vcmask 523648
    %14 = vst.msk [vmem:[#allocation0] sm:$0x1] %vm13, %v12
    %s15 = scalar_lea.vmem [#allocation1], 2
    %v16 = vld [vmem:[%s15] sm:$0x1]
    %17 = vrot.lane.b32.xlu0 %v16, 32
    %v18 = vpop.permute.xlu0 %17
    %vm19 = vcmask 392448
    %20 = vst.msk [vmem:[#allocation0] sm:$0x1] %vm19, %v18
    %s21 = scalar_lea.vmem [#allocation1], 1
    %v22 = vld [vmem:[%s21] sm:$0x1]
    %23 = vrot.lane.b32.xlu0 %v22, 16
    %v24 = vpop.permute.xlu0 %23
    %vm25 = vcmask 261248
    %26 = vst.msk [vmem:[#allocation0] sm:$0x1] %vm25, %v24
    %s28 = sshllo.u32 0, 1
    %v30 = vld [vmem:[#allocation0] sm:%s28]
    %s31 = sshllo.u32 0, 1
    %32 = vst [vmem:[%s1] sm:%s31] %v30

// kernel: wav_autoencoder_forward.39
$region0: #{wav_autoencoder_forward.39}
  #allocation0 [shape = 'u32[]', space=smem, size = 0x4, offset = 0x4, fixed_abs, tag = 'smem constant byte address 0x4 - core index']
  #allocation1 [shape = 'u32[144,128]{1,0:T(1,128)}', space=vmem, size = 0x12000, scoped, tag = 'internal scratch']
  %s0 = inlined_call_operand.vmem [shape: bf16[12,64], index: 0, kind: input, shape index: {}]
  %s1 = inlined_call_operand.vmem [shape: bf16[12,64], index: 1, kind: input, shape index: {}]
  %s2 = inlined_call_operand.vmem [shape: bf16[64,128], index: 2, kind: input, shape index: {}]
  %s3 = inlined_call_operand.vmem [shape: bf16[64,128], index: 3, kind: input, shape index: {}]
  %s4 = inlined_call_operand.vmem [shape: f32[1,128], index: 4, kind: input, shape index: {}]
  %s5 = inlined_call_operand.vmem [shape: bf16[12,128], index: 5, kind: output, shape index: {}]
  %s6 = sld [smem:[#allocation0]]
  $region30: #{wav_autoencoder_forward.39} parent=0
    _
  %s8 = ssub.s32 1, %s6
  %s9 = scalar_select 0, %s8, %s6
  // Predicated region
  $region2: #{wav_autoencoder_forward.39} parent=0 // pred_check
    _
  $region3: #{wav_autoencoder_forward.39} parent=0 // pred_check_branch
    %11 = sbr.rel (0) target = $region5
  $region4: #{wav_autoencoder_forward.39} parent=0 // pred_region
    _
  $region5: #{wav_autoencoder_forward.39} parent=0 // pred_fallthru
    _
  // Predicated region
  $region6: #{wav_autoencoder_forward.39} parent=0 // pred_check
    _
  $region7: #{wav_autoencoder_forward.39} parent=0 // pred_check_branch
    %13 = sbr.rel (0) target = $region9
  $region8: #{wav_autoencoder_forward.39} parent=0 // pred_region
    _
  $region9: #{wav_autoencoder_forward.39} parent=0 // pred_fallthru
    _
  // Predicated region
  $region10: #{wav_autoencoder_forward.39} parent=0 // pred_check
    _
  $region11: #{wav_autoencoder_forward.39} parent=0 // pred_check_branch
    %15 = sbr.rel (0) target = $region13
  $region12: #{wav_autoencoder_forward.39} parent=0 // pred_region
    _
  $region13: #{wav_autoencoder_forward.39} parent=0 // pred_fallthru
    _
  // Predicated region
  $region14: #{wav_autoencoder_forward.39} parent=0 // pred_check
    _
  $region15: #{wav_autoencoder_forward.39} parent=0 // pred_check_branch
    %17 = sbr.rel (0) target = $region17
  $region16: #{wav_autoencoder_forward.39} parent=0 // pred_region
    _
  $region17: #{wav_autoencoder_forward.39} parent=0 // pred_fallthru
    _
  // Predicated region
  $region18: #{wav_autoencoder_forward.39} parent=0 // pred_check
    _
  $region19: #{wav_autoencoder_forward.39} parent=0 // pred_check_branch
    %19 = sbr.rel (0) target = $region21
  $region20: #{wav_autoencoder_forward.39} parent=0 // pred_region
    _
  $region21: #{wav_autoencoder_forward.39} parent=0 // pred_fallthru
    _
  %v21 = vld [vmem:[%s0] sm:$0xf]
  %v22 = vld [vmem:[%s0 + $0x4] sm:$0x3]
  %v23 = vld [vmem:[%s2] sm:$0xf]
  %v24 = vld [vmem:[%s2 + $0x4] sm:$0xf]
  %v25 = vld [vmem:[%s2 + $0x8] sm:$0xf]
  %v26 = vld [vmem:[%s2 + $0xc] sm:$0xf]
  %v27 = vld [vmem:[%s2 + $0x10] sm:$0xf]
  %v28 = vld [vmem:[%s2 + $0x14] sm:$0xf]
  %v29 = vld [vmem:[%s2 + $0x18] sm:$0xf]
  %v30 = vld [vmem:[%s2 + $0x1c] sm:$0xf]
  %v31 = vld [vmem:[%s1] sm:$0xf]
  %v32 = vld [vmem:[%s1 + $0x4] sm:$0x3]
  %v33 = vld [vmem:[%s3] sm:$0xf]
  %v34 = vld [vmem:[%s3 + $0x4] sm:$0xf]
  %v35 = vld [vmem:[%s3 + $0x8] sm:$0xf]
  %v36 = vld [vmem:[%s3 + $0xc] sm:$0xf]
  %v37 = vld [vmem:[%s3 + $0x10] sm:$0xf]
  %v38 = vld [vmem:[%s3 + $0x14] sm:$0xf]
  %v39 = vld [vmem:[%s3 + $0x18] sm:$0xf]
  %v40 = vld [vmem:[%s3 + $0x1c] sm:$0xf]
  %v43 = vunpack.c.l.b16 %v31
  %v44 = vunpack.c.l.b16 %v32
  %v45 = vpack.c.b16 %v44, %v43
  %v54 = vunpack.c.l.b16 %v33
  %v55 = vunpack.c.l.b16 %v34
  %v56 = vunpack.c.l.b16 %v35
  %v57 = vunpack.c.l.b16 %v36
  %v58 = vunpack.c.l.b16 %v37
  %v59 = vunpack.c.l.b16 %v38
  %v60 = vunpack.c.l.b16 %v39
  %v61 = vunpack.c.l.b16 %v40
  %v62 = vpack.c.b16 %v55, %v54
  %v63 = vpack.c.b16 %v57, %v56
  %v64 = vpack.c.b16 %v59, %v58
  %v65 = vpack.c.b16 %v61, %v60
  %vm70 = vcmask 523264
  %v72 = vsel %vm70, %v45, 0
  %74 = vmatprep.subr.bf16.mxu0 0
  %75 = vmatpush1.bf16.msra.mxu0 %v62
  %76 = vmatprep.subr.bf16.mxu0 0
  %77 = vmatpush1.bf16.msra.mxu0 %v63
  %78 = vmatprep.subr.bf16.mxu0 0
  %79 = vmatpush1.bf16.msra.mxu0 %v64
  %80 = vmatprep.subr.bf16.mxu0 0
  %81 = vmatpush1.bf16.msra.mxu0 %v65
  %82 = vmatprep.subr.bf16.mxu0 0
  %83 = vmatpush1.bf16.msra.mxu0 0
  %84 = vmatprep.subr.bf16.mxu0 0
  %85 = vmatpush1.bf16.msra.mxu0 0
  %86 = vmatprep.subr.bf16.mxu0 0
  %87 = vmatpush1.bf16.msra.mxu0 0
  %88 = vmatprep.subr.bf16.mxu0 0
  %89 = vmatpush1.bf16.msra.mxu0 0
  %90 = vmatprep.subr.bf16.mxu0 0
  %91 = vmatpush1.bf16.msra.mxu0 0
  %92 = vmatprep.subr.bf16.mxu0 0
  %93 = vmatpush1.bf16.msra.mxu0 0
  %94 = vmatprep.subr.bf16.mxu0 0
  %95 = vmatpush1.bf16.msra.mxu0 0
  %96 = vmatprep.subr.bf16.mxu0 0
  %97 = vmatpush1.bf16.msra.mxu0 0
  %98 = vmatprep.subr.bf16.mxu0 0
  %99 = vmatpush1.bf16.msra.mxu0 0
  %100 = vmatprep.subr.bf16.mxu0 0
  %101 = vmatpush1.bf16.msra.mxu0 0
  %102 = vmatprep.subr.bf16.mxu0 0
  %103 = vmatpush1.bf16.msra.mxu0 0
  %104 = vmatprep.subr.bf16.mxu0 0
  %105 = vmatpush1.bf16.msra.mxu0 0
  %106 = vmatprep.mubr.bf16.mxu0 0
  %107 = vmatmul.mubr.bf16.gmra.mrb[0].mxu0 %v72
  %v108 = vpop.f32.mrb[0].mxu0
  %v109 = vadd.f32 0.0, %v108
  %v110 = vpop.f32.mrb[0].mxu0
  %v111 = vpop.f32.mrb[0].mxu0
  %v112 = vadd.f32 0.0, %v111
  %v113 = vpop.f32.mrb[0].mxu0
  %114 = vdwg.mxu0
  %v117 = vunpack.c.l.b16 %v21
  %v118 = vunpack.c.l.b16 %v22
  %v119 = vpack.c.b16 %v118, %v117
  %v128 = vunpack.c.l.b16 %v23
  %v129 = vunpack.c.l.b16 %v24
  %v130 = vunpack.c.l.b16 %v25
  %v131 = vunpack.c.l.b16 %v26
  %v132 = vunpack.c.l.b16 %v27
  %v133 = vunpack.c.l.b16 %v28
  %v134 = vunpack.c.l.b16 %v29
  %v135 = vunpack.c.l.b16 %v30
  %v136 = vpack.c.b16 %v129, %v128
  %v137 = vpack.c.b16 %v131, %v130
  %v138 = vpack.c.b16 %v133, %v132
  %v139 = vpack.c.b16 %v135, %v134
  %v145 = vsel %vm70, %v119, 0
  %147 = vmatprep.subr.bf16.mxu0 0
  %148 = vmatpush1.bf16.msra.mxu0 %v136
  %149 = vmatprep.subr.bf16.mxu0 0
  %150 = vmatpush1.bf16.msra.mxu0 %v137
  %151 = vmatprep.subr.bf16.mxu0 0
  %152 = vmatpush1.bf16.msra.mxu0 %v138
  %153 = vmatprep.subr.bf16.mxu0 0
  %154 = vmatpush1.bf16.msra.mxu0 %v139
  %155 = vmatprep.subr.bf16.mxu0 0
  %156 = vmatpush1.bf16.msra.mxu0 0
  %157 = vmatprep.subr.bf16.mxu0 0
  %158 = vmatpush1.bf16.msra.mxu0 0
  %159 = vmatprep.subr.bf16.mxu0 0
  %160 = vmatpush1.bf16.msra.mxu0 0
  %161 = vmatprep.subr.bf16.mxu0 0
  %162 = vmatpush1.bf16.msra.mxu0 0
  %163 = vmatprep.subr.bf16.mxu0 0
  %164 = vmatpush1.bf16.msra.mxu0 0
  %165 = vmatprep.subr.bf16.mxu0 0
  %166 = vmatpush1.bf16.msra.mxu0 0
  %167 = vmatprep.subr.bf16.mxu0 0
  %168 = vmatpush1.bf16.msra.mxu0 0
  %169 = vmatprep.subr.bf16.mxu0 0
  %170 = vmatpush1.bf16.msra.mxu0 0
  %171 = vmatprep.subr.bf16.mxu0 0
  %172 = vmatpush1.bf16.msra.mxu0 0
  %173 = vmatprep.subr.bf16.mxu0 0
  %174 = vmatpush1.bf16.msra.mxu0 0
  %175 = vmatprep.subr.bf16.mxu0 0
  %176 = vmatpush1.bf16.msra.mxu0 0
  %177 = vmatprep.subr.bf16.mxu0 0
  %178 = vmatpush1.bf16.msra.mxu0 0
  %179 = vmatprep.mubr.bf16.mxu0 0
  %180 = vmatmul.mubr.bf16.gmra.mrb[0].mxu0 %v145
  %v181 = vpop.f32.mrb[0].mxu0
  %v182 = vadd.f32 %v109, %v181
  %v183 = vpop.f32.mrb[0].mxu0
  %v184 = vpop.f32.mrb[0].mxu0
  %v185 = vadd.f32 %v112, %v184
  %v186 = vpop.f32.mrb[0].mxu0
  %187 = vdwg.mxu0
  %v188 = vld [vmem:[%s4] sm:$0x1]
  %v190 = vlaneseq
  %v191 = vshrl.u32 %v190, 7
  %v192 = vsub.s32 0, %v191
  %v193 = vrot.slane %v188, %v192
  %v195 = vadd.f32 %v182, %v193
  %v196 = vadd.f32 %v185, %v193
  %v197 = vmax.f32 %v195, 0.0
  %v198 = vmax.f32 %v196, 0.0
  %v199 = vpack.c.bf16 %v198, %v197
  %v201 = vunpack.c.l.b16 %v199
  %v202 = vunpack.c.h.b16 %v199
  %v203 = vpack.c.b16 %v201, %v201
  %v204 = vpack.c.b16 %v202, %v202
  %207 = vst [vmem:[%s5] sm:$0xf] %v203
  %208 = vst [vmem:[%s5 + $0x4] sm:$0x3] %v204
  // Predicated region
  $region22: #{wav_autoencoder_forward.39} parent=0 // pred_check
    _
  $region23: #{wav_autoencoder_forward.39} parent=0 // pred_check_branch
    %210 = sbr.rel (0) target = $region25
  $region24: #{wav_autoencoder_forward.39} parent=0 // pred_region
    _
  $region25: #{wav_autoencoder_forward.39} parent=0 // pred_fallthru
    _
  // Predicated region
  $region26: #{wav_autoencoder_forward.39} parent=0 // pred_check
    _
  $region27: #{wav_autoencoder_forward.39} parent=0 // pred_check_branch
    %212 = sbr.rel (0) target = $region29
  $region28: #{wav_autoencoder_forward.39} parent=0 // pred_region
    _
  $region29: #{wav_autoencoder_forward.39} parent=0 // pred_fallthru
    _

// kernel: wav_autoencoder_forward.40
$region0: #{wav_autoencoder_forward.40}
  #allocation0 [shape = 'u32[]', space=smem, size = 0x4, offset = 0x4, fixed_abs, tag = 'smem constant byte address 0x4 - core index']
  #allocation1 [shape = 'u32[144,128]{1,0:T(1,128)}', space=vmem, size = 0x12000, scoped, tag = 'internal scratch']
  %s0 = inlined_call_operand.vmem [shape: bf16[22,32], index: 0, kind: input, shape index: {}]
  %s1 = inlined_call_operand.vmem [shape: bf16[22,32], index: 1, kind: input, shape index: {}]
  %s2 = inlined_call_operand.vmem [shape: bf16[32,64], index: 2, kind: input, shape index: {}]
  %s3 = inlined_call_operand.vmem [shape: f32[1,64], index: 3, kind: input, shape index: {}]
  %s4 = inlined_call_operand.vmem [shape: bf16[22,32], index: 4, kind: output, shape index: {}]
  %s5 = sld [smem:[#allocation0]]
  $region26: #{wav_autoencoder_forward.40} parent=0
    _
  %s7 = ssub.s32 1, %s5
  %s8 = scalar_select 0, %s7, %s5
  // Predicated region
  $region2: #{wav_autoencoder_forward.40} parent=0 // pred_check
    _
  $region3: #{wav_autoencoder_forward.40} parent=0 // pred_check_branch
    %10 = sbr.rel (0) target = $region5
  $region4: #{wav_autoencoder_forward.40} parent=0 // pred_region
    _
  $region5: #{wav_autoencoder_forward.40} parent=0 // pred_fallthru
    _
  // Predicated region
  $region6: #{wav_autoencoder_forward.40} parent=0 // pred_check
    _
  $region7: #{wav_autoencoder_forward.40} parent=0 // pred_check_branch
    %12 = sbr.rel (0) target = $region9
  $region8: #{wav_autoencoder_forward.40} parent=0 // pred_region
    _
  $region9: #{wav_autoencoder_forward.40} parent=0 // pred_fallthru
    _
  // Predicated region
  $region10: #{wav_autoencoder_forward.40} parent=0 // pred_check
    _
  $region11: #{wav_autoencoder_forward.40} parent=0 // pred_check_branch
    %14 = sbr.rel (0) target = $region13
  $region12: #{wav_autoencoder_forward.40} parent=0 // pred_region
    _
  $region13: #{wav_autoencoder_forward.40} parent=0 // pred_fallthru
    _
  // Predicated region
  $region14: #{wav_autoencoder_forward.40} parent=0 // pred_check
    _
  $region15: #{wav_autoencoder_forward.40} parent=0 // pred_check_branch
    %16 = sbr.rel (0) target = $region17
  $region16: #{wav_autoencoder_forward.40} parent=0 // pred_region
    _
  $region17: #{wav_autoencoder_forward.40} parent=0 // pred_fallthru
    _
  %v18 = vld [vmem:[%s0] sm:$0xf]
  %v19 = vld [vmem:[%s0 + $0x4] sm:$0xf]
  %v20 = vld [vmem:[%s0 + $0x8] sm:$0x7]
  %v21 = vunpack.c.l.bf16 %v18
  %v22 = vunpack.c.l.bf16 %v19
  %v23 = vunpack.c.l.bf16 %v20
  %v24 = vld [vmem:[%s1] sm:$0xf]
  %v25 = vld [vmem:[%s1 + $0x4] sm:$0xf]
  %v26 = vld [vmem:[%s1 + $0x8] sm:$0x7]
  %v27 = vunpack.c.l.bf16 %v24
  %v28 = vunpack.c.l.bf16 %v25
  %v29 = vunpack.c.l.bf16 %v26
  %v30 = vadd.f32 %v21, %v27
  %v31 = vadd.f32 %v22, %v28
  %v32 = vadd.f32 %v23, %v29
  %v33 = vpack.c.bf16 %v31, %v30
  %v34 = vpack.c.bf16 %v32, %v32
  %v35 = vld [vmem:[%s2] sm:$0xf]
  %v36 = vld [vmem:[%s2 + $0x4] sm:$0xf]
  %v37 = vld [vmem:[%s2 + $0x8] sm:$0xf]
  %v38 = vld [vmem:[%s2 + $0xc] sm:$0xf]
  %v39 = vld [vmem:[%s3] sm:$0x1]
  %v41 = vlaneseq
  %v42 = vshrl.u32 %v41, 7
  %v43 = vsub.s32 0, %v42
  %v44 = vrot.slane %v39, %v43
  %v50 = vunpack.c.l.b16 %v35
  %v51 = vunpack.c.l.b16 %v36
  %v52 = vunpack.c.l.b16 %v37
  %v53 = vunpack.c.l.b16 %v38
  %v54 = vpack.c.b16 %v51, %v50
  %v55 = vpack.c.b16 %v53, %v52
  %vm58 = vcmask 261120
  %v60 = vsel %vm58, %v33, 0
  %v63 = vsel %vm58, %v34, 0
  %65 = vmatprep.subr.bf16.mxu0 0
  %66 = vmatpush1.bf16.msra.mxu0 %v54
  %67 = vmatprep.subr.bf16.mxu0 0
  %68 = vmatpush1.bf16.msra.mxu0 %v55
  %69 = vmatprep.subr.bf16.mxu0 0
  %70 = vmatpush1.bf16.msra.mxu0 0
  %71 = vmatprep.subr.bf16.mxu0 0
  %72 = vmatpush1.bf16.msra.mxu0 0
  %73 = vmatprep.subr.bf16.mxu0 0
  %74 = vmatpush1.bf16.msra.mxu0 0
  %75 = vmatprep.subr.bf16.mxu0 0
  %76 = vmatpush1.bf16.msra.mxu0 0
  %77 = vmatprep.subr.bf16.mxu0 0
  %78 = vmatpush1.bf16.msra.mxu0 0
  %79 = vmatprep.subr.bf16.mxu0 0
  %80 = vmatpush1.bf16.msra.mxu0 0
  %81 = vmatprep.subr.bf16.mxu0 0
  %82 = vmatpush1.bf16.msra.mxu0 0
  %83 = vmatprep.subr.bf16.mxu0 0
  %84 = vmatpush1.bf16.msra.mxu0 0
  %85 = vmatprep.subr.bf16.mxu0 0
  %86 = vmatpush1.bf16.msra.mxu0 0
  %87 = vmatprep.subr.bf16.mxu0 0
  %88 = vmatpush1.bf16.msra.mxu0 0
  %89 = vmatprep.subr.bf16.mxu0 0
  %90 = vmatpush1.bf16.msra.mxu0 0
  %91 = vmatprep.subr.bf16.mxu0 0
  %92 = vmatpush1.bf16.msra.mxu0 0
  %93 = vmatprep.subr.bf16.mxu0 0
  %94 = vmatpush1.bf16.msra.mxu0 0
  %95 = vmatprep.subr.bf16.mxu0 0
  %96 = vmatpush1.bf16.msra.mxu0 0
  %97 = vmatprep.mubr.bf16.mxu0 0
  %98 = vmatmul.mubr.bf16.gmra.mrb[0].mxu0 %v60
  %v99 = vpop.f32.mrb[0].mxu0
  %v100 = vadd.f32 %v44, %v99
  %v101 = vpop.f32.mrb[0].mxu0
  %v102 = vpop.f32.mrb[0].mxu0
  %v103 = vadd.f32 %v44, %v102
  %v104 = vpop.f32.mrb[0].mxu0
  %105 = vmatprep.mubr.bf16.mxu0 0
  %106 = vmatmul.mubr.bf16.gmra.mrb[0].mxu0 %v63
  %v107 = vpop.f32.mrb[0].mxu0
  %v108 = vadd.f32 %v44, %v107
  %v109 = vpop.f32.mrb[0].mxu0
  %v110 = vpop.f32.mrb[0].mxu0
  %v111 = vpop.f32.mrb[0].mxu0
  %112 = vdwg.mxu0
  %v113 = vxor.u32 %v100, 2147483648
  %v114 = vxor.u32 %v103, 2147483648
  %v115 = vxor.u32 %v108, 2147483648
  %v116 = vmul.f32 %v113, 1.442695
  %v117 = vpow.pop %v116
  %v118 = vmul.f32 %v114, 1.442695
  %v119 = vpow.pop %v118
  %v120 = vmul.f32 %v115, 1.442695
  %v121 = vpow.pop %v120
  %v122 = vadd.f32 %v117, 1.0
  %v123 = vadd.f32 %v119, 1.0
  %v124 = vadd.f32 %v121, 1.0
  %v125 = vrcp.pop %v122
  %v126 = vmul.f32 1.0, %v125
  %v127 = vrcp.pop %v123
  %v128 = vmul.f32 1.0, %v127
  %v129 = vrcp.pop %v124
  %v130 = vmul.f32 1.0, %v129
  %134 = vrot.lane.b32.xlu0 %v126, 96
  %v135 = vpop.permute.xlu0 %134
  %136 = vrot.lane.b32.xlu0 %v128, 96
  %v137 = vpop.permute.xlu0 %136
  %138 = vrot.lane.b32.xlu0 %v130, 96
  %v139 = vpop.permute.xlu0 %138
  %v143 = vmul.f32 %v100, %v135
  %v144 = vmul.f32 %v103, %v137
  %v145 = vmul.f32 %v108, %v139
  %v146 = vpack.c.bf16 %v144, %v143
  %v147 = vpack.c.bf16 %v145, %v145
  %v150 = vunpack.c.l.b16 %v146
  %v151 = vunpack.c.h.b16 %v146
  %v152 = vunpack.c.l.b16 %v147
  %v153 = vpack.c.b16 %v150, %v150
  %v154 = vpack.c.b16 %v151, %v151
  %v155 = vpack.c.b16 %v152, %v152
  %vm159 = vcmask 257024
  %160 = vst.msk [vmem:[%s4] sm:$0xf] %vm159, %v153
  %161 = vst.msk [vmem:[%s4 + $0x4] sm:$0xf] %vm159, %v154
  %vm162 = vcmask 256000
  %163 = vst.msk [vmem:[%s4 + $0x8] sm:$0x7] %vm162, %v155
  // Predicated region
  $region18: #{wav_autoencoder_forward.40} parent=0 // pred_check
    _
  $region19: #{wav_autoencoder_forward.40} parent=0 // pred_check_branch
    %165 = sbr.rel (0) target = $region21
  $region20: #{wav_autoencoder_forward.40} parent=0 // pred_region
    _
  $region21: #{wav_autoencoder_forward.40} parent=0 // pred_fallthru
    _
  // Predicated region
  $region22: #{wav_autoencoder_forward.40} parent=0 // pred_check
    _
  $region23: #{wav_autoencoder_forward.40} parent=0 // pred_check_branch
    %167 = sbr.rel (0) target = $region25
  $region24: #{wav_autoencoder_forward.40} parent=0 // pred_region
    _
  $region25: #{wav_autoencoder_forward.40} parent=0 // pred_fallthru
    _

// kernel: wav_autoencoder_forward.41
$region0: #{wav_autoencoder_forward.41}
  #allocation0 [shape = 'u32[]', space=smem, size = 0x4, offset = 0x4, fixed_abs, tag = 'smem constant byte address 0x4 - core index']
  #allocation1 [shape = 'u32[144,128]{1,0:T(1,128)}', space=vmem, size = 0x12000, scoped, tag = 'internal scratch']
  %s0 = inlined_call_operand.vmem [shape: bf16[24,32], index: 0, kind: input, shape index: {}]
  %s1 = inlined_call_operand.vmem [shape: bf16[24,32], index: 1, kind: input, shape index: {}]
  %s2 = inlined_call_operand.vmem [shape: bf16[32,64], index: 2, kind: input, shape index: {}]
  %s3 = inlined_call_operand.vmem [shape: bf16[32,64], index: 3, kind: input, shape index: {}]
  %s4 = inlined_call_operand.vmem [shape: f32[1,64], index: 4, kind: input, shape index: {}]
  %s5 = inlined_call_operand.vmem [shape: bf16[24,64], index: 5, kind: output, shape index: {}]
  %s6 = sld [smem:[#allocation0]]
  $region30: #{wav_autoencoder_forward.41} parent=0
    _
  %s8 = ssub.s32 1, %s6
  %s9 = scalar_select 0, %s8, %s6
  // Predicated region
  $region2: #{wav_autoencoder_forward.41} parent=0 // pred_check
    _
  $region3: #{wav_autoencoder_forward.41} parent=0 // pred_check_branch
    %11 = sbr.rel (0) target = $region5
  $region4: #{wav_autoencoder_forward.41} parent=0 // pred_region
    _
  $region5: #{wav_autoencoder_forward.41} parent=0 // pred_fallthru
    _
  // Predicated region
  $region6: #{wav_autoencoder_forward.41} parent=0 // pred_check
    _
  $region7: #{wav_autoencoder_forward.41} parent=0 // pred_check_branch
    %13 = sbr.rel (0) target = $region9
  $region8: #{wav_autoencoder_forward.41} parent=0 // pred_region
    _
  $region9: #{wav_autoencoder_forward.41} parent=0 // pred_fallthru
    _
  // Predicated region
  $region10: #{wav_autoencoder_forward.41} parent=0 // pred_check
    _
  $region11: #{wav_autoencoder_forward.41} parent=0 // pred_check_branch
    %15 = sbr.rel (0) target = $region13
  $region12: #{wav_autoencoder_forward.41} parent=0 // pred_region
    _
  $region13: #{wav_autoencoder_forward.41} parent=0 // pred_fallthru
    _
  // Predicated region
  $region14: #{wav_autoencoder_forward.41} parent=0 // pred_check
    _
  $region15: #{wav_autoencoder_forward.41} parent=0 // pred_check_branch
    %17 = sbr.rel (0) target = $region17
  $region16: #{wav_autoencoder_forward.41} parent=0 // pred_region
    _
  $region17: #{wav_autoencoder_forward.41} parent=0 // pred_fallthru
    _
  // Predicated region
  $region18: #{wav_autoencoder_forward.41} parent=0 // pred_check
    _
  $region19: #{wav_autoencoder_forward.41} parent=0 // pred_check_branch
    %19 = sbr.rel (0) target = $region21
  $region20: #{wav_autoencoder_forward.41} parent=0 // pred_region
    _
  $region21: #{wav_autoencoder_forward.41} parent=0 // pred_fallthru
    _
  %v21 = vld [vmem:[%s0] sm:$0xf]
  %v22 = vld [vmem:[%s0 + $0x4] sm:$0xf]
  %v23 = vld [vmem:[%s0 + $0x8] sm:$0xf]
  %v24 = vld [vmem:[%s2] sm:$0xf]
  %v25 = vld [vmem:[%s2 + $0x4] sm:$0xf]
  %v26 = vld [vmem:[%s2 + $0x8] sm:$0xf]
  %v27 = vld [vmem:[%s2 + $0xc] sm:$0xf]
  %v28 = vld [vmem:[%s1] sm:$0xf]
  %v29 = vld [vmem:[%s1 + $0x4] sm:$0xf]
  %v30 = vld [vmem:[%s1 + $0x8] sm:$0xf]
  %v31 = vld [vmem:[%s3] sm:$0xf]
  %v32 = vld [vmem:[%s3 + $0x4] sm:$0xf]
  %v33 = vld [vmem:[%s3 + $0x8] sm:$0xf]
  %v34 = vld [vmem:[%s3 + $0xc] sm:$0xf]
  %v38 = vunpack.c.l.b16 %v28
  %v39 = vunpack.c.l.b16 %v29
  %v40 = vunpack.c.l.b16 %v30
  %v41 = vpack.c.b16 %v39, %v38
  %v42 = vpack.c.b16 %v40, %v40
  %v47 = vunpack.c.l.b16 %v31
  %v48 = vunpack.c.l.b16 %v32
  %v49 = vunpack.c.l.b16 %v33
  %v50 = vunpack.c.l.b16 %v34
  %v51 = vpack.c.b16 %v48, %v47
  %v52 = vpack.c.b16 %v50, %v49
  %vm55 = vcmask 261120
  %v57 = vsel %vm55, %v41, 0
  %v60 = vsel %vm55, %v42, 0
  %62 = vmatprep.subr.bf16.mxu0 0
  %63 = vmatpush1.bf16.msra.mxu0 %v51
  %64 = vmatprep.subr.bf16.mxu0 0
  %65 = vmatpush1.bf16.msra.mxu0 %v52
  %66 = vmatprep.subr.bf16.mxu0 0
  %67 = vmatpush1.bf16.msra.mxu0 0
  %68 = vmatprep.subr.bf16.mxu0 0
  %69 = vmatpush1.bf16.msra.mxu0 0
  %70 = vmatprep.subr.bf16.mxu0 0
  %71 = vmatpush1.bf16.msra.mxu0 0
  %72 = vmatprep.subr.bf16.mxu0 0
  %73 = vmatpush1.bf16.msra.mxu0 0
  %74 = vmatprep.subr.bf16.mxu0 0
  %75 = vmatpush1.bf16.msra.mxu0 0
  %76 = vmatprep.subr.bf16.mxu0 0
  %77 = vmatpush1.bf16.msra.mxu0 0
  %78 = vmatprep.subr.bf16.mxu0 0
  %79 = vmatpush1.bf16.msra.mxu0 0
  %80 = vmatprep.subr.bf16.mxu0 0
  %81 = vmatpush1.bf16.msra.mxu0 0
  %82 = vmatprep.subr.bf16.mxu0 0
  %83 = vmatpush1.bf16.msra.mxu0 0
  %84 = vmatprep.subr.bf16.mxu0 0
  %85 = vmatpush1.bf16.msra.mxu0 0
  %86 = vmatprep.subr.bf16.mxu0 0
  %87 = vmatpush1.bf16.msra.mxu0 0
  %88 = vmatprep.subr.bf16.mxu0 0
  %89 = vmatpush1.bf16.msra.mxu0 0
  %90 = vmatprep.subr.bf16.mxu0 0
  %91 = vmatpush1.bf16.msra.mxu0 0
  %92 = vmatprep.subr.bf16.mxu0 0
  %93 = vmatpush1.bf16.msra.mxu0 0
  %94 = vmatprep.mubr.bf16.mxu0 0
  %95 = vmatmul.mubr.bf16.gmra.mrb[0].mxu0 %v57
  %v96 = vpop.f32.mrb[0].mxu0
  %v97 = vadd.f32 0.0, %v96
  %v98 = vpop.f32.mrb[0].mxu0
  %v99 = vpop.f32.mrb[0].mxu0
  %v100 = vadd.f32 0.0, %v99
  %v101 = vpop.f32.mrb[0].mxu0
  %102 = vmatprep.mubr.bf16.mxu0 0
  %103 = vmatmul.mubr.bf16.gmra.mrb[0].mxu0 %v60
  %v104 = vpop.f32.mrb[0].mxu0
  %v105 = vadd.f32 0.0, %v104
  %v106 = vpop.f32.mrb[0].mxu0
  %v107 = vpop.f32.mrb[0].mxu0
  %v108 = vpop.f32.mrb[0].mxu0
  %109 = vdwg.mxu0
  %v113 = vunpack.c.l.b16 %v21
  %v114 = vunpack.c.l.b16 %v22
  %v115 = vunpack.c.l.b16 %v23
  %v116 = vpack.c.b16 %v114, %v113
  %v117 = vpack.c.b16 %v115, %v115
  %v122 = vunpack.c.l.b16 %v24
  %v123 = vunpack.c.l.b16 %v25
  %v124 = vunpack.c.l.b16 %v26
  %v125 = vunpack.c.l.b16 %v27
  %v126 = vpack.c.b16 %v123, %v122
  %v127 = vpack.c.b16 %v125, %v124
  %v131 = vsel %vm55, %v116, 0
  %v134 = vsel %vm55, %v117, 0
  %136 = vmatprep.subr.bf16.mxu0 0
  %137 = vmatpush1.bf16.msra.mxu0 %v126
  %138 = vmatprep.subr.bf16.mxu0 0
  %139 = vmatpush1.bf16.msra.mxu0 %v127
  %140 = vmatprep.subr.bf16.mxu0 0
  %141 = vmatpush1.bf16.msra.mxu0 0
  %142 = vmatprep.subr.bf16.mxu0 0
  %143 = vmatpush1.bf16.msra.mxu0 0
  %144 = vmatprep.subr.bf16.mxu0 0
  %145 = vmatpush1.bf16.msra.mxu0 0
  %146 = vmatprep.subr.bf16.mxu0 0
  %147 = vmatpush1.bf16.msra.mxu0 0
  %148 = vmatprep.subr.bf16.mxu0 0
  %149 = vmatpush1.bf16.msra.mxu0 0
  %150 = vmatprep.subr.bf16.mxu0 0
  %151 = vmatpush1.bf16.msra.mxu0 0
  %152 = vmatprep.subr.bf16.mxu0 0
  %153 = vmatpush1.bf16.msra.mxu0 0
  %154 = vmatprep.subr.bf16.mxu0 0
  %155 = vmatpush1.bf16.msra.mxu0 0
  %156 = vmatprep.subr.bf16.mxu0 0
  %157 = vmatpush1.bf16.msra.mxu0 0
  %158 = vmatprep.subr.bf16.mxu0 0
  %159 = vmatpush1.bf16.msra.mxu0 0
  %160 = vmatprep.subr.bf16.mxu0 0
  %161 = vmatpush1.bf16.msra.mxu0 0
  %162 = vmatprep.subr.bf16.mxu0 0
  %163 = vmatpush1.bf16.msra.mxu0 0
  %164 = vmatprep.subr.bf16.mxu0 0
  %165 = vmatpush1.bf16.msra.mxu0 0
  %166 = vmatprep.subr.bf16.mxu0 0
  %167 = vmatpush1.bf16.msra.mxu0 0
  %168 = vmatprep.mubr.bf16.mxu0 0
  %169 = vmatmul.mubr.bf16.gmra.mrb[0].mxu0 %v131
  %v170 = vpop.f32.mrb[0].mxu0
  %v171 = vadd.f32 %v97, %v170
  %v172 = vpop.f32.mrb[0].mxu0
  %v173 = vpop.f32.mrb[0].mxu0
  %v174 = vadd.f32 %v100, %v173
  %v175 = vpop.f32.mrb[0].mxu0
  %176 = vmatprep.mubr.bf16.mxu0 0
  %177 = vmatmul.mubr.bf16.gmra.mrb[0].mxu0 %v134
  %v178 = vpop.f32.mrb[0].mxu0
  %v179 = vadd.f32 %v105, %v178
  %v180 = vpop.f32.mrb[0].mxu0
  %v181 = vpop.f32.mrb[0].mxu0
  %v182 = vpop.f32.mrb[0].mxu0
  %183 = vdwg.mxu0
  %v184 = vld [vmem:[%s4] sm:$0x1]
  %v186 = vlaneseq
  %v187 = vshrl.u32 %v186, 7
  %v188 = vsub.s32 0, %v187
  %v189 = vrot.slane %v184, %v188
  %v191 = vadd.f32 %v171, %v189
  %v192 = vadd.f32 %v174, %v189
  %v193 = vadd.f32 %v179, %v189
  %v194 = vmax.f32 %v191, 0.0
  %v195 = vmax.f32 %v192, 0.0
  %v196 = vmax.f32 %v193, 0.0
  %v197 = vpack.c.bf16 %v195, %v194
  %v198 = vpack.c.bf16 %v196, %v196
  %v201 = vunpack.c.l.b16 %v197
  %v202 = vunpack.c.h.b16 %v197
  %v203 = vunpack.c.l.b16 %v198
  %v204 = vpack.c.b16 %v201, %v201
  %v205 = vpack.c.b16 %v202, %v202
  %v206 = vpack.c.b16 %v203, %v203
  %vm210 = vcmask 519168
  %211 = vst.msk [vmem:[%s5] sm:$0xf] %vm210, %v204
  %212 = vst.msk [vmem:[%s5 + $0x4] sm:$0xf] %vm210, %v205
  %213 = vst.msk [vmem:[%s5 + $0x8] sm:$0xf] %vm210, %v206
  // Predicated region
  $region22: #{wav_autoencoder_forward.41} parent=0 // pred_check
    _
  $region23: #{wav_autoencoder_forward.41} parent=0 // pred_check_branch
    %215 = sbr.rel (0) target = $region25
  $region24: #{wav_autoencoder_forward.41} parent=0 // pred_region
    _
  $region25: #{wav_autoencoder_forward.41} parent=0 // pred_fallthru
    _
  // Predicated region
  $region26: #{wav_autoencoder_forward.41} parent=0 // pred_check
    _
  $region27: #{wav_autoencoder_forward.41} parent=0 // pred_check_branch
    %217 = sbr.rel (0) target = $region29
  $region28: #{wav_autoencoder_forward.41} parent=0 // pred_region
    _
  $region29: #{wav_autoencoder_forward.41} parent=0 // pred_fallthru
    _

// kernel: tile.33
$region0: #{tile.33}
  #allocation0 [shape = 's32[1]{0}', space=sflag, size = 0x4, scoped, tag = 'scoped memory for tile.33']
  %s0 = inlined_call_operand.vmem [shape: f32[8], index: 0, kind: input, shape index: {}]
  %s1 = inlined_call_operand.vmem [shape: f32[4,8], index: 1, kind: output, shape index: {}]
  // Predicated region
  $region2: #{tile.33} parent=0 // pred_check
    _
  $region3: #{tile.33} parent=0 // pred_check_branch
    %3 = sbr.rel (0) target = $region5
  $region4: #{tile.33} parent=0 // pred_region
    _
  $region5: #{tile.33} parent=0 // pred_fallthru
    _
  %v4 = vld [vmem:[%s0] ss:$0 sm:$0xff]
  %5 = vst [vmem:[%s1] sm:$0xf] %v4

// kernel: tile.34
$region0: #{tile.34}
  %s0 = inlined_call_operand.vmem [shape: f32[4,8], index: 0, kind: input, shape index: {}]
  %s1 = inlined_call_operand.vmem [shape: f32[1,32], index: 1, kind: output, shape index: {}]
  $region1: #{tile.34} parent=0
    #allocation0 [shape = 'u8[4096]{0}', space=vmem, size = 0x1000, scoped, tag = 'scoped mem for output reshape']
    #allocation1 [shape = 'u8[4096]{0}', space=vmem, size = 0x1000, scoped, tag = 'scoped mem for input reshape']
    %s3 = sshllo.u32 0, 4
    %v4 = vld [vmem:[%s0] sm:%s3]
    %5 = vst [vmem:[#allocation1] sm:%s3] %v4
    %v6 = vld [vmem:[#allocation1] sm:$0x1]
    %vm7 = vcmask 64512
    %8 = vst.msk [vmem:[#allocation0] sm:$0x1] %vm7, %v6
    %s9 = scalar_lea.vmem [#allocation1], 3
    %v10 = vld [vmem:[%s9] sm:$0x1]
    %11 = vrot.lane.b32.xlu0 %v10, 24
    %v12 = vpop.permute.xlu0 %11
    %vm13 = vcmask 261312
    %14 = vst.msk [vmem:[#allocation0] sm:$0x1] %vm13, %v12
    %s15 = scalar_lea.vmem [#allocation1], 2
    %v16 = vld [vmem:[%s15] sm:$0x1]
    %17 = vrot.lane.b32.xlu0 %v16, 16
    %v18 = vpop.permute.xlu0 %17
    %vm19 = vcmask 195712
    %20 = vst.msk [vmem:[#allocation0] sm:$0x1] %vm19, %v18
    %s21 = scalar_lea.vmem [#allocation1], 1
    %v22 = vld [vmem:[%s21] sm:$0x1]
    %23 = vrot.lane.b32.xlu0 %v22, 8
    %v24 = vpop.permute.xlu0 %23
    %vm25 = vcmask 130112
    %26 = vst.msk [vmem:[#allocation0] sm:$0x1] %vm25, %v24
    %s28 = sshllo.u32 0, 1
    %v30 = vld [vmem:[#allocation0] sm:%s28]
    %s31 = sshllo.u32 0, 1
    %32 = vst [vmem:[%s1] sm:%s31] %v30

// kernel: wav_autoencoder_forward.42
$region0: #{wav_autoencoder_forward.42}
  #allocation0 [shape = 'u32[]', space=smem, size = 0x4, offset = 0x4, fixed_abs, tag = 'smem constant byte address 0x4 - core index']
  #allocation1 [shape = 'u32[144,128]{1,0:T(1,128)}', space=vmem, size = 0x12000, scoped, tag = 'internal scratch']
  %s0 = inlined_call_operand.vmem [shape: bf16[70,16], index: 0, kind: input, shape index: {}]
  %s1 = inlined_call_operand.vmem [shape: bf16[70,16], index: 1, kind: input, shape index: {}]
  %s2 = inlined_call_operand.vmem [shape: bf16[16,32], index: 2, kind: input, shape index: {}]
  %s3 = inlined_call_operand.vmem [shape: f32[1,32], index: 3, kind: input, shape index: {}]
  %s4 = inlined_call_operand.vmem [shape: bf16[70,16], index: 4, kind: output, shape index: {}]
  %s5 = sld [smem:[#allocation0]]
  $region26: #{wav_autoencoder_forward.42} parent=0
    _
  %s7 = ssub.s32 1, %s5
  %s8 = scalar_select 0, %s7, %s5
  // Predicated region
  $region2: #{wav_autoencoder_forward.42} parent=0 // pred_check
    _
  $region3: #{wav_autoencoder_forward.42} parent=0 // pred_check_branch
    %10 = sbr.rel (0) target = $region5
  $region4: #{wav_autoencoder_forward.42} parent=0 // pred_region
    _
  $region5: #{wav_autoencoder_forward.42} parent=0 // pred_fallthru
    _
  // Predicated region
  $region6: #{wav_autoencoder_forward.42} parent=0 // pred_check
    _
  $region7: #{wav_autoencoder_forward.42} parent=0 // pred_check_branch
    %12 = sbr.rel (0) target = $region9
  $region8: #{wav_autoencoder_forward.42} parent=0 // pred_region
    _
  $region9: #{wav_autoencoder_forward.42} parent=0 // pred_fallthru
    _
  // Predicated region
  $region10: #{wav_autoencoder_forward.42} parent=0 // pred_check
    _
  $region11: #{wav_autoencoder_forward.42} parent=0 // pred_check_branch
    %14 = sbr.rel (0) target = $region13
  $region12: #{wav_autoencoder_forward.42} parent=0 // pred_region
    _
  $region13: #{wav_autoencoder_forward.42} parent=0 // pred_fallthru
    _
  // Predicated region
  $region14: #{wav_autoencoder_forward.42} parent=0 // pred_check
    _
  $region15: #{wav_autoencoder_forward.42} parent=0 // pred_check_branch
    %16 = sbr.rel (0) target = $region17
  $region16: #{wav_autoencoder_forward.42} parent=0 // pred_region
    _
  $region17: #{wav_autoencoder_forward.42} parent=0 // pred_fallthru
    _
  %v18 = vld [vmem:[%s0] sm:$0xf]
  %v19 = vld [vmem:[%s0 + $0x4] sm:$0xf]
  %v20 = vld [vmem:[%s0 + $0x8] sm:$0xf]
  %v21 = vld [vmem:[%s0 + $0xc] sm:$0xf]
  %v22 = vld [vmem:[%s0 + $0x10] sm:$0xf]
  %v23 = vld [vmem:[%s0 + $0x14] sm:$0xf]
  %v24 = vld [vmem:[%s0 + $0x18] sm:$0xf]
  %v25 = vld [vmem:[%s0 + $0x1c] sm:$0xf]
  %v26 = vld [vmem:[%s0 + $0x20] sm:$0x7]
  %v27 = vunpack.c.l.bf16 %v18
  %v28 = vunpack.c.l.bf16 %v19
  %v29 = vunpack.c.l.bf16 %v20
  %v30 = vunpack.c.l.bf16 %v21
  %v31 = vunpack.c.l.bf16 %v22
  %v32 = vunpack.c.l.bf16 %v23
  %v33 = vunpack.c.l.bf16 %v24
  %v34 = vunpack.c.l.bf16 %v25
  %v35 = vunpack.c.l.bf16 %v26
  %v36 = vld [vmem:[%s1] sm:$0xf]
  %v37 = vld [vmem:[%s1 + $0x4] sm:$0xf]
  %v38 = vld [vmem:[%s1 + $0x8] sm:$0xf]
  %v39 = vld [vmem:[%s1 + $0xc] sm:$0xf]
  %v40 = vld [vmem:[%s1 + $0x10] sm:$0xf]
  %v41 = vld [vmem:[%s1 + $0x14] sm:$0xf]
  %v42 = vld [vmem:[%s1 + $0x18] sm:$0xf]
  %v43 = vld [vmem:[%s1 + $0x1c] sm:$0xf]
  %v44 = vld [vmem:[%s1 + $0x20] sm:$0x7]
  %v45 = vunpack.c.l.bf16 %v36
  %v46 = vunpack.c.l.bf16 %v37
  %v47 = vunpack.c.l.bf16 %v38
  %v48 = vunpack.c.l.bf16 %v39
  %v49 = vunpack.c.l.bf16 %v40
  %v50 = vunpack.c.l.bf16 %v41
  %v51 = vunpack.c.l.bf16 %v42
  %v52 = vunpack.c.l.bf16 %v43
  %v53 = vunpack.c.l.bf16 %v44
  %v54 = vadd.f32 %v27, %v45
  %v55 = vadd.f32 %v28, %v46
  %v56 = vadd.f32 %v29, %v47
  %v57 = vadd.f32 %v30, %v48
  %v58 = vadd.f32 %v31, %v49
  %v59 = vadd.f32 %v32, %v50
  %v60 = vadd.f32 %v33, %v51
  %v61 = vadd.f32 %v34, %v52
  %v62 = vadd.f32 %v35, %v53
  %v63 = vpack.c.bf16 %v55, %v54
  %v64 = vpack.c.bf16 %v57, %v56
  %v65 = vpack.c.bf16 %v59, %v58
  %v66 = vpack.c.bf16 %v61, %v60
  %v67 = vpack.c.bf16 %v62, %v62
  %v68 = vld [vmem:[%s2] sm:$0xf]
  %v69 = vld [vmem:[%s2 + $0x4] sm:$0xf]
  %v70 = vld [vmem:[%s3] sm:$0x1]
  %v72 = vlaneseq
  %v73 = vshrl.u32 %v72, 7
  %v74 = vsub.s32 0, %v73
  %v75 = vrot.slane %v70, %v74
  %v79 = vunpack.c.l.b16 %v68
  %v80 = vunpack.c.l.b16 %v69
  %v81 = vpack.c.b16 %v80, %v79
  %vm83 = vcmask 130048
  %v85 = vsel %vm83, %v63, 0
  %v88 = vsel %vm83, %v64, 0
  %v91 = vsel %vm83, %v65, 0
  %v94 = vsel %vm83, %v66, 0
  %v97 = vsel %vm83, %v67, 0
  %99 = vmatprep.subr.bf16.mxu0 0
  %100 = vmatpush1.bf16.msra.mxu0 %v81
  %101 = vmatprep.subr.bf16.mxu0 0
  %102 = vmatpush1.bf16.msra.mxu0 0
  %103 = vmatprep.subr.bf16.mxu0 0
  %104 = vmatpush1.bf16.msra.mxu0 0
  %105 = vmatprep.subr.bf16.mxu0 0
  %106 = vmatpush1.bf16.msra.mxu0 0
  %107 = vmatprep.subr.bf16.mxu0 0
  %108 = vmatpush1.bf16.msra.mxu0 0
  %109 = vmatprep.subr.bf16.mxu0 0
  %110 = vmatpush1.bf16.msra.mxu0 0
  %111 = vmatprep.subr.bf16.mxu0 0
  %112 = vmatpush1.bf16.msra.mxu0 0
  %113 = vmatprep.subr.bf16.mxu0 0
  %114 = vmatpush1.bf16.msra.mxu0 0
  %115 = vmatprep.subr.bf16.mxu0 0
  %116 = vmatpush1.bf16.msra.mxu0 0
  %117 = vmatprep.subr.bf16.mxu0 0
  %118 = vmatpush1.bf16.msra.mxu0 0
  %119 = vmatprep.subr.bf16.mxu0 0
  %120 = vmatpush1.bf16.msra.mxu0 0
  %121 = vmatprep.subr.bf16.mxu0 0
  %122 = vmatpush1.bf16.msra.mxu0 0
  %123 = vmatprep.subr.bf16.mxu0 0
  %124 = vmatpush1.bf16.msra.mxu0 0
  %125 = vmatprep.subr.bf16.mxu0 0
  %126 = vmatpush1.bf16.msra.mxu0 0
  %127 = vmatprep.subr.bf16.mxu0 0
  %128 = vmatpush1.bf16.msra.mxu0 0
  %129 = vmatprep.subr.bf16.mxu0 0
  %130 = vmatpush1.bf16.msra.mxu0 0
  %131 = vmatprep.mubr.bf16.mxu0 0
  %132 = vmatmul.mubr.bf16.gmra.mrb[0].mxu0 %v85
  %v133 = vpop.f32.mrb[0].mxu0
  %v134 = vadd.f32 %v75, %v133
  %v135 = vpop.f32.mrb[0].mxu0
  %v136 = vpop.f32.mrb[0].mxu0
  %v137 = vadd.f32 %v75, %v136
  %v138 = vpop.f32.mrb[0].mxu0
  %139 = vmatprep.mubr.bf16.mxu0 0
  %140 = vmatmul.mubr.bf16.gmra.mrb[0].mxu0 %v88
  %v141 = vpop.f32.mrb[0].mxu0
  %v142 = vadd.f32 %v75, %v141
  %v143 = vpop.f32.mrb[0].mxu0
  %v144 = vpop.f32.mrb[0].mxu0
  %v145 = vadd.f32 %v75, %v144
  %v146 = vpop.f32.mrb[0].mxu0
  %147 = vmatprep.mubr.bf16.mxu0 0
  %148 = vmatmul.mubr.bf16.gmra.mrb[0].mxu0 %v91
  %v149 = vpop.f32.mrb[0].mxu0
  %v150 = vadd.f32 %v75, %v149
  %v151 = vpop.f32.mrb[0].mxu0
  %v152 = vpop.f32.mrb[0].mxu0
  %v153 = vadd.f32 %v75, %v152
  %v154 = vpop.f32.mrb[0].mxu0
  %155 = vmatprep.mubr.bf16.mxu0 0
  %156 = vmatmul.mubr.bf16.gmra.mrb[0].mxu0 %v94
  %v157 = vpop.f32.mrb[0].mxu0
  %v158 = vadd.f32 %v75, %v157
  %v159 = vpop.f32.mrb[0].mxu0
  %v160 = vpop.f32.mrb[0].mxu0
  %v161 = vadd.f32 %v75, %v160
  %v162 = vpop.f32.mrb[0].mxu0
  %163 = vmatprep.mubr.bf16.mxu0 0
  %164 = vmatmul.mubr.bf16.gmra.mrb[0].mxu0 %v97
  %v165 = vpop.f32.mrb[0].mxu0
  %v166 = vadd.f32 %v75, %v165
  %v167 = vpop.f32.mrb[0].mxu0
  %v168 = vpop.f32.mrb[0].mxu0
  %v169 = vpop.f32.mrb[0].mxu0
  %170 = vdwg.mxu0
  %v171 = vxor.u32 %v134, 2147483648
  %v172 = vxor.u32 %v137, 2147483648
  %v173 = vxor.u32 %v142, 2147483648
  %v174 = vxor.u32 %v145, 2147483648
  %v175 = vxor.u32 %v150, 2147483648
  %v176 = vxor.u32 %v153, 2147483648
  %v177 = vxor.u32 %v158, 2147483648
  %v178 = vxor.u32 %v161, 2147483648
  %v179 = vxor.u32 %v166, 2147483648
  %v180 = vmul.f32 %v171, 1.442695
  %v181 = vpow.pop %v180
  %v182 = vmul.f32 %v172, 1.442695
  %v183 = vpow.pop %v182
  %v184 = vmul.f32 %v173, 1.442695
  %v185 = vpow.pop %v184
  %v186 = vmul.f32 %v174, 1.442695
  %v187 = vpow.pop %v186
  %v188 = vmul.f32 %v175, 1.442695
  %v189 = vpow.pop %v188
  %v190 = vmul.f32 %v176, 1.442695
  %v191 = vpow.pop %v190
  %v192 = vmul.f32 %v177, 1.442695
  %v193 = vpow.pop %v192
  %v194 = vmul.f32 %v178, 1.442695
  %v195 = vpow.pop %v194
  %v196 = vmul.f32 %v179, 1.442695
  %v197 = vpow.pop %v196
  %v198 = vadd.f32 %v181, 1.0
  %v199 = vadd.f32 %v183, 1.0
  %v200 = vadd.f32 %v185, 1.0
  %v201 = vadd.f32 %v187, 1.0
  %v202 = vadd.f32 %v189, 1.0
  %v203 = vadd.f32 %v191, 1.0
  %v204 = vadd.f32 %v193, 1.0
  %v205 = vadd.f32 %v195, 1.0
  %v206 = vadd.f32 %v197, 1.0
  %v207 = vrcp.pop %v198
  %v208 = vmul.f32 1.0, %v207
  %v209 = vrcp.pop %v199
  %v210 = vmul.f32 1.0, %v209
  %v211 = vrcp.pop %v200
  %v212 = vmul.f32 1.0, %v211
  %v213 = vrcp.pop %v201
  %v214 = vmul.f32 1.0, %v213
  %v215 = vrcp.pop %v202
  %v216 = vmul.f32 1.0, %v215
  %v217 = vrcp.pop %v203
  %v218 = vmul.f32 1.0, %v217
  %v219 = vrcp.pop %v204
  %v220 = vmul.f32 1.0, %v219
  %v221 = vrcp.pop %v205
  %v222 = vmul.f32 1.0, %v221
  %v223 = vrcp.pop %v206
  %v224 = vmul.f32 1.0, %v223
  %234 = vrot.lane.b32.xlu0 %v208, 112
  %v235 = vpop.permute.xlu0 %234
  %236 = vrot.lane.b32.xlu0 %v210, 112
  %v237 = vpop.permute.xlu0 %236
  %238 = vrot.lane.b32.xlu0 %v212, 112
  %v239 = vpop.permute.xlu0 %238
  %240 = vrot.lane.b32.xlu0 %v214, 112
  %v241 = vpop.permute.xlu0 %240
  %242 = vrot.lane.b32.xlu0 %v216, 112
  %v243 = vpop.permute.xlu0 %242
  %244 = vrot.lane.b32.xlu0 %v218, 112
  %v245 = vpop.permute.xlu0 %244
  %246 = vrot.lane.b32.xlu0 %v220, 112
  %v247 = vpop.permute.xlu0 %246
  %248 = vrot.lane.b32.xlu0 %v222, 112
  %v249 = vpop.permute.xlu0 %248
  %250 = vrot.lane.b32.xlu0 %v224, 112
  %v251 = vpop.permute.xlu0 %250
  %v261 = vmul.f32 %v134, %v235
  %v262 = vmul.f32 %v137, %v237
  %v263 = vmul.f32 %v142, %v239
  %v264 = vmul.f32 %v145, %v241
  %v265 = vmul.f32 %v150, %v243
  %v266 = vmul.f32 %v153, %v245
  %v267 = vmul.f32 %v158, %v247
  %v268 = vmul.f32 %v161, %v249
  %v269 = vmul.f32 %v166, %v251
  %v270 = vpack.c.bf16 %v262, %v261
  %v271 = vpack.c.bf16 %v264, %v263
  %v272 = vpack.c.bf16 %v266, %v265
  %v273 = vpack.c.bf16 %v268, %v267
  %v274 = vpack.c.bf16 %v269, %v269
  %v280 = vunpack.c.l.b16 %v270
  %v281 = vunpack.c.h.b16 %v270
  %v282 = vunpack.c.l.b16 %v271
  %v283 = vunpack.c.h.b16 %v271
  %v284 = vunpack.c.l.b16 %v272
  %v285 = vunpack.c.h.b16 %v272
  %v286 = vunpack.c.l.b16 %v273
  %v287 = vunpack.c.h.b16 %v273
  %v288 = vunpack.c.l.b16 %v274
  %v289 = vpack.c.b16 %v280, %v280
  %v290 = vpack.c.b16 %v281, %v281
  %v291 = vpack.c.b16 %v282, %v282
  %v292 = vpack.c.b16 %v283, %v283
  %v293 = vpack.c.b16 %v284, %v284
  %v294 = vpack.c.b16 %v285, %v285
  %v295 = vpack.c.b16 %v286, %v286
  %v296 = vpack.c.b16 %v287, %v287
  %v297 = vpack.c.b16 %v288, %v288
  %vm307 = vcmask 125952
  %308 = vst.msk [vmem:[%s4] sm:$0xf] %vm307, %v289
  %309 = vst.msk [vmem:[%s4 + $0x4] sm:$0xf] %vm307, %v290
  %310 = vst.msk [vmem:[%s4 + $0x8] sm:$0xf] %vm307, %v291
  %311 = vst.msk [vmem:[%s4 + $0xc] sm:$0xf] %vm307, %v292
  %312 = vst.msk [vmem:[%s4 + $0x10] sm:$0xf] %vm307, %v293
  %313 = vst.msk [vmem:[%s4 + $0x14] sm:$0xf] %vm307, %v294
  %314 = vst.msk [vmem:[%s4 + $0x18] sm:$0xf] %vm307, %v295
  %315 = vst.msk [vmem:[%s4 + $0x1c] sm:$0xf] %vm307, %v296
  %vm316 = vcmask 124928
  %317 = vst.msk [vmem:[%s4 + $0x20] sm:$0x7] %vm316, %v297
  // Predicated region
  $region18: #{wav_autoencoder_forward.42} parent=0 // pred_check
    _
  $region19: #{wav_autoencoder_forward.42} parent=0 // pred_check_branch
    %319 = sbr.rel (0) target = $region21
  $region20: #{wav_autoencoder_forward.42} parent=0 // pred_region
    _
  $region21: #{wav_autoencoder_forward.42} parent=0 // pred_fallthru
    _
  // Predicated region
  $region22: #{wav_autoencoder_forward.42} parent=0 // pred_check
    _
  $region23: #{wav_autoencoder_forward.42} parent=0 // pred_check_branch
    %321 = sbr.rel (0) target = $region25
  $region24: #{wav_autoencoder_forward.42} parent=0 // pred_region
    _
  $region25: #{wav_autoencoder_forward.42} parent=0 // pred_fallthru
    _

// kernel: wav_autoencoder_forward.43
$region0: #{wav_autoencoder_forward.43}
  #allocation0 [shape = 'u32[]', space=smem, size = 0x4, offset = 0x4, fixed_abs, tag = 'smem constant byte address 0x4 - core index']
  #allocation1 [shape = 'u32[144,128]{1,0:T(1,128)}', space=vmem, size = 0x12000, scoped, tag = 'internal scratch']
  %s0 = inlined_call_operand.vmem [shape: bf16[72,16], index: 0, kind: input, shape index: {}]
  %s1 = inlined_call_operand.vmem [shape: bf16[72,16], index: 1, kind: input, shape index: {}]
  %s2 = inlined_call_operand.vmem [shape: bf16[16,32], index: 2, kind: input, shape index: {}]
  %s3 = inlined_call_operand.vmem [shape: bf16[16,32], index: 3, kind: input, shape index: {}]
  %s4 = inlined_call_operand.vmem [shape: f32[1,32], index: 4, kind: input, shape index: {}]
  %s5 = inlined_call_operand.vmem [shape: bf16[72,32], index: 5, kind: output, shape index: {}]
  %s6 = sld [smem:[#allocation0]]
  $region30: #{wav_autoencoder_forward.43} parent=0
    _
  %s8 = ssub.s32 1, %s6
  %s9 = scalar_select 0, %s8, %s6
  // Predicated region
  $region2: #{wav_autoencoder_forward.43} parent=0 // pred_check
    _
  $region3: #{wav_autoencoder_forward.43} parent=0 // pred_check_branch
    %11 = sbr.rel (0) target = $region5
  $region4: #{wav_autoencoder_forward.43} parent=0 // pred_region
    _
  $region5: #{wav_autoencoder_forward.43} parent=0 // pred_fallthru
    _
  // Predicated region
  $region6: #{wav_autoencoder_forward.43} parent=0 // pred_check
    _
  $region7: #{wav_autoencoder_forward.43} parent=0 // pred_check_branch
    %13 = sbr.rel (0) target = $region9
  $region8: #{wav_autoencoder_forward.43} parent=0 // pred_region
    _
  $region9: #{wav_autoencoder_forward.43} parent=0 // pred_fallthru
    _
  // Predicated region
  $region10: #{wav_autoencoder_forward.43} parent=0 // pred_check
    _
  $region11: #{wav_autoencoder_forward.43} parent=0 // pred_check_branch
    %15 = sbr.rel (0) target = $region13
  $region12: #{wav_autoencoder_forward.43} parent=0 // pred_region
    _
  $region13: #{wav_autoencoder_forward.43} parent=0 // pred_fallthru
    _
  // Predicated region
  $region14: #{wav_autoencoder_forward.43} parent=0 // pred_check
    _
  $region15: #{wav_autoencoder_forward.43} parent=0 // pred_check_branch
    %17 = sbr.rel (0) target = $region17
  $region16: #{wav_autoencoder_forward.43} parent=0 // pred_region
    _
  $region17: #{wav_autoencoder_forward.43} parent=0 // pred_fallthru
    _
  // Predicated region
  $region18: #{wav_autoencoder_forward.43} parent=0 // pred_check
    _
  $region19: #{wav_autoencoder_forward.43} parent=0 // pred_check_branch
    %19 = sbr.rel (0) target = $region21
  $region20: #{wav_autoencoder_forward.43} parent=0 // pred_region
    _
  $region21: #{wav_autoencoder_forward.43} parent=0 // pred_fallthru
    _
  %v21 = vld [vmem:[%s0] sm:$0xf]
  %v22 = vld [vmem:[%s0 + $0x4] sm:$0xf]
  %v23 = vld [vmem:[%s0 + $0x8] sm:$0xf]
  %v24 = vld [vmem:[%s0 + $0xc] sm:$0xf]
  %v25 = vld [vmem:[%s0 + $0x10] sm:$0xf]
  %v26 = vld [vmem:[%s0 + $0x14] sm:$0xf]
  %v27 = vld [vmem:[%s0 + $0x18] sm:$0xf]
  %v28 = vld [vmem:[%s0 + $0x1c] sm:$0xf]
  %v29 = vld [vmem:[%s0 + $0x20] sm:$0xf]
  %v30 = vld [vmem:[%s2] sm:$0xf]
  %v31 = vld [vmem:[%s2 + $0x4] sm:$0xf]
  %v32 = vld [vmem:[%s1] sm:$0xf]
  %v33 = vld [vmem:[%s1 + $0x4] sm:$0xf]
  %v34 = vld [vmem:[%s1 + $0x8] sm:$0xf]
  %v35 = vld [vmem:[%s1 + $0xc] sm:$0xf]
  %v36 = vld [vmem:[%s1 + $0x10] sm:$0xf]
  %v37 = vld [vmem:[%s1 + $0x14] sm:$0xf]
  %v38 = vld [vmem:[%s1 + $0x18] sm:$0xf]
  %v39 = vld [vmem:[%s1 + $0x1c] sm:$0xf]
  %v40 = vld [vmem:[%s1 + $0x20] sm:$0xf]
  %v41 = vld [vmem:[%s3] sm:$0xf]
  %v42 = vld [vmem:[%s3 + $0x4] sm:$0xf]
  %v52 = vunpack.c.l.b16 %v32
  %v53 = vunpack.c.l.b16 %v33
  %v54 = vunpack.c.l.b16 %v34
  %v55 = vunpack.c.l.b16 %v35
  %v56 = vunpack.c.l.b16 %v36
  %v57 = vunpack.c.l.b16 %v37
  %v58 = vunpack.c.l.b16 %v38
  %v59 = vunpack.c.l.b16 %v39
  %v60 = vunpack.c.l.b16 %v40
  %v61 = vpack.c.b16 %v53, %v52
  %v62 = vpack.c.b16 %v55, %v54
  %v63 = vpack.c.b16 %v57, %v56
  %v64 = vpack.c.b16 %v59, %v58
  %v65 = vpack.c.b16 %v60, %v60
  %v68 = vunpack.c.l.b16 %v41
  %v69 = vunpack.c.l.b16 %v42
  %v70 = vpack.c.b16 %v69, %v68
  %vm72 = vcmask 130048
  %v74 = vsel %vm72, %v61, 0
  %v77 = vsel %vm72, %v62, 0
  %v80 = vsel %vm72, %v63, 0
  %v83 = vsel %vm72, %v64, 0
  %v86 = vsel %vm72, %v65, 0
  %88 = vmatprep.subr.bf16.mxu0 0
  %89 = vmatpush1.bf16.msra.mxu0 %v70
  %90 = vmatprep.subr.bf16.mxu0 0
  %91 = vmatpush1.bf16.msra.mxu0 0
  %92 = vmatprep.subr.bf16.mxu0 0
  %93 = vmatpush1.bf16.msra.mxu0 0
  %94 = vmatprep.subr.bf16.mxu0 0
  %95 = vmatpush1.bf16.msra.mxu0 0
  %96 = vmatprep.subr.bf16.mxu0 0
  %97 = vmatpush1.bf16.msra.mxu0 0
  %98 = vmatprep.subr.bf16.mxu0 0
  %99 = vmatpush1.bf16.msra.mxu0 0
  %100 = vmatprep.subr.bf16.mxu0 0
  %101 = vmatpush1.bf16.msra.mxu0 0
  %102 = vmatprep.subr.bf16.mxu0 0
  %103 = vmatpush1.bf16.msra.mxu0 0
  %104 = vmatprep.subr.bf16.mxu0 0
  %105 = vmatpush1.bf16.msra.mxu0 0
  %106 = vmatprep.subr.bf16.mxu0 0
  %107 = vmatpush1.bf16.msra.mxu0 0
  %108 = vmatprep.subr.bf16.mxu0 0
  %109 = vmatpush1.bf16.msra.mxu0 0
  %110 = vmatprep.subr.bf16.mxu0 0
  %111 = vmatpush1.bf16.msra.mxu0 0
  %112 = vmatprep.subr.bf16.mxu0 0
  %113 = vmatpush1.bf16.msra.mxu0 0
  %114 = vmatprep.subr.bf16.mxu0 0
  %115 = vmatpush1.bf16.msra.mxu0 0
  %116 = vmatprep.subr.bf16.mxu0 0
  %117 = vmatpush1.bf16.msra.mxu0 0
  %118 = vmatprep.subr.bf16.mxu0 0
  %119 = vmatpush1.bf16.msra.mxu0 0
  %120 = vmatprep.mubr.bf16.mxu0 0
  %121 = vmatmul.mubr.bf16.gmra.mrb[0].mxu0 %v74
  %v122 = vpop.f32.mrb[0].mxu0
  %v123 = vadd.f32 0.0, %v122
  %v124 = vpop.f32.mrb[0].mxu0
  %v125 = vpop.f32.mrb[0].mxu0
  %v126 = vadd.f32 0.0, %v125
  %v127 = vpop.f32.mrb[0].mxu0
  %128 = vmatprep.mubr.bf16.mxu0 0
  %129 = vmatmul.mubr.bf16.gmra.mrb[0].mxu0 %v77
  %v130 = vpop.f32.mrb[0].mxu0
  %v131 = vadd.f32 0.0, %v130
  %v132 = vpop.f32.mrb[0].mxu0
  %v133 = vpop.f32.mrb[0].mxu0
  %v134 = vadd.f32 0.0, %v133
  %v135 = vpop.f32.mrb[0].mxu0
  %136 = vmatprep.mubr.bf16.mxu0 0
  %137 = vmatmul.mubr.bf16.gmra.mrb[0].mxu0 %v80
  %v138 = vpop.f32.mrb[0].mxu0
  %v139 = vadd.f32 0.0, %v138
  %v140 = vpop.f32.mrb[0].mxu0
  %v141 = vpop.f32.mrb[0].mxu0
  %v142 = vadd.f32 0.0, %v141
  %v143 = vpop.f32.mrb[0].mxu0
  %144 = vmatprep.mubr.bf16.mxu0 0
  %145 = vmatmul.mubr.bf16.gmra.mrb[0].mxu0 %v83
  %v146 = vpop.f32.mrb[0].mxu0
  %v147 = vadd.f32 0.0, %v146
  %v148 = vpop.f32.mrb[0].mxu0
  %v149 = vpop.f32.mrb[0].mxu0
  %v150 = vadd.f32 0.0, %v149
  %v151 = vpop.f32.mrb[0].mxu0
  %152 = vmatprep.mubr.bf16.mxu0 0
  %153 = vmatmul.mubr.bf16.gmra.mrb[0].mxu0 %v86
  %v154 = vpop.f32.mrb[0].mxu0
  %v155 = vadd.f32 0.0, %v154
  %v156 = vpop.f32.mrb[0].mxu0
  %v157 = vpop.f32.mrb[0].mxu0
  %v158 = vpop.f32.mrb[0].mxu0
  %159 = vdwg.mxu0
  %v169 = vunpack.c.l.b16 %v21
  %v170 = vunpack.c.l.b16 %v22
  %v171 = vunpack.c.l.b16 %v23
  %v172 = vunpack.c.l.b16 %v24
  %v173 = vunpack.c.l.b16 %v25
  %v174 = vunpack.c.l.b16 %v26
  %v175 = vunpack.c.l.b16 %v27
  %v176 = vunpack.c.l.b16 %v28
  %v177 = vunpack.c.l.b16 %v29
  %v178 = vpack.c.b16 %v170, %v169
  %v179 = vpack.c.b16 %v172, %v171
  %v180 = vpack.c.b16 %v174, %v173
  %v181 = vpack.c.b16 %v176, %v175
  %v182 = vpack.c.b16 %v177, %v177
  %v185 = vunpack.c.l.b16 %v30
  %v186 = vunpack.c.l.b16 %v31
  %v187 = vpack.c.b16 %v186, %v185
  %v190 = vsel %vm72, %v178, 0
  %v193 = vsel %vm72, %v179, 0
  %v196 = vsel %vm72, %v180, 0
  %v199 = vsel %vm72, %v181, 0
  %v202 = vsel %vm72, %v182, 0
  %204 = vmatprep.subr.bf16.mxu0 0
  %205 = vmatpush1.bf16.msra.mxu0 %v187
  %206 = vmatprep.subr.bf16.mxu0 0
  %207 = vmatpush1.bf16.msra.mxu0 0
  %208 = vmatprep.subr.bf16.mxu0 0
  %209 = vmatpush1.bf16.msra.mxu0 0
  %210 = vmatprep.subr.bf16.mxu0 0
  %211 = vmatpush1.bf16.msra.mxu0 0
  %212 = vmatprep.subr.bf16.mxu0 0
  %213 = vmatpush1.bf16.msra.mxu0 0
  %214 = vmatprep.subr.bf16.mxu0 0
  %215 = vmatpush1.bf16.msra.mxu0 0
  %216 = vmatprep.subr.bf16.mxu0 0
  %217 = vmatpush1.bf16.msra.mxu0 0
  %218 = vmatprep.subr.bf16.mxu0 0
  %219 = vmatpush1.bf16.msra.mxu0 0
  %220 = vmatprep.subr.bf16.mxu0 0
  %221 = vmatpush1.bf16.msra.mxu0 0
  %222 = vmatprep.subr.bf16.mxu0 0
  %223 = vmatpush1.bf16.msra.mxu0 0
  %224 = vmatprep.subr.bf16.mxu0 0
  %225 = vmatpush1.bf16.msra.mxu0 0
  %226 = vmatprep.subr.bf16.mxu0 0
  %227 = vmatpush1.bf16.msra.mxu0 0
  %228 = vmatprep.subr.bf16.mxu0 0
  %229 = vmatpush1.bf16.msra.mxu0 0
  %230 = vmatprep.subr.bf16.mxu0 0
  %231 = vmatpush1.bf16.msra.mxu0 0
  %232 = vmatprep.subr.bf16.mxu0 0
  %233 = vmatpush1.bf16.msra.mxu0 0
  %234 = vmatprep.subr.bf16.mxu0 0
  %235 = vmatpush1.bf16.msra.mxu0 0
  %236 = vmatprep.mubr.bf16.mxu0 0
  %237 = vmatmul.mubr.bf16.gmra.mrb[0].mxu0 %v190
  %v238 = vpop.f32.mrb[0].mxu0
  %v239 = vadd.f32 %v123, %v238
  %v240 = vpop.f32.mrb[0].mxu0
  %v241 = vpop.f32.mrb[0].mxu0
  %v242 = vadd.f32 %v126, %v241
  %v243 = vpop.f32.mrb[0].mxu0
  %244 = vmatprep.mubr.bf16.mxu0 0
  %245 = vmatmul.mubr.bf16.gmra.mrb[0].mxu0 %v193
  %v246 = vpop.f32.mrb[0].mxu0
  %v247 = vadd.f32 %v131, %v246
  %v248 = vpop.f32.mrb[0].mxu0
  %v249 = vpop.f32.mrb[0].mxu0
  %v250 = vadd.f32 %v134, %v249
  %v251 = vpop.f32.mrb[0].mxu0
  %252 = vmatprep.mubr.bf16.mxu0 0
  %253 = vmatmul.mubr.bf16.gmra.mrb[0].mxu0 %v196
  %v254 = vpop.f32.mrb[0].mxu0
  %v255 = vadd.f32 %v139, %v254
  %v256 = vpop.f32.mrb[0].mxu0
  %v257 = vpop.f32.mrb[0].mxu0
  %v258 = vadd.f32 %v142, %v257
  %v259 = vpop.f32.mrb[0].mxu0
  %260 = vmatprep.mubr.bf16.mxu0 0
  %261 = vmatmul.mubr.bf16.gmra.mrb[0].mxu0 %v199
  %v262 = vpop.f32.mrb[0].mxu0
  %v263 = vadd.f32 %v147, %v262
  %v264 = vpop.f32.mrb[0].mxu0
  %v265 = vpop.f32.mrb[0].mxu0
  %v266 = vadd.f32 %v150, %v265
  %v267 = vpop.f32.mrb[0].mxu0
  %268 = vmatprep.mubr.bf16.mxu0 0
  %269 = vmatmul.mubr.bf16.gmra.mrb[0].mxu0 %v202
  %v270 = vpop.f32.mrb[0].mxu0
  %v271 = vadd.f32 %v155, %v270
  %v272 = vpop.f32.mrb[0].mxu0
  %v273 = vpop.f32.mrb[0].mxu0
  %v274 = vpop.f32.mrb[0].mxu0
  %275 = vdwg.mxu0
  %v276 = vld [vmem:[%s4] sm:$0x1]
  %v278 = vlaneseq
  %v279 = vshrl.u32 %v278, 7
  %v280 = vsub.s32 0, %v279
  %v281 = vrot.slane %v276, %v280
  %v283 = vadd.f32 %v239, %v281
  %v284 = vadd.f32 %v242, %v281
  %v285 = vadd.f32 %v247, %v281
  %v286 = vadd.f32 %v250, %v281
  %v287 = vadd.f32 %v255, %v281
  %v288 = vadd.f32 %v258, %v281
  %v289 = vadd.f32 %v263, %v281
  %v290 = vadd.f32 %v266, %v281
  %v291 = vadd.f32 %v271, %v281
  %v292 = vmax.f32 %v283, 0.0
  %v293 = vmax.f32 %v284, 0.0
  %v294 = vmax.f32 %v285, 0.0
  %v295 = vmax.f32 %v286, 0.0
  %v296 = vmax.f32 %v287, 0.0
  %v297 = vmax.f32 %v288, 0.0
  %v298 = vmax.f32 %v289, 0.0
  %v299 = vmax.f32 %v290, 0.0
  %v300 = vmax.f32 %v291, 0.0
  %v301 = vpack.c.bf16 %v293, %v292
  %v302 = vpack.c.bf16 %v295, %v294
  %v303 = vpack.c.bf16 %v297, %v296
  %v304 = vpack.c.bf16 %v299, %v298
  %v305 = vpack.c.bf16 %v300, %v300
  %v311 = vunpack.c.l.b16 %v301
  %v312 = vunpack.c.h.b16 %v301
  %v313 = vunpack.c.l.b16 %v302
  %v314 = vunpack.c.h.b16 %v302
  %v315 = vunpack.c.l.b16 %v303
  %v316 = vunpack.c.h.b16 %v303
  %v317 = vunpack.c.l.b16 %v304
  %v318 = vunpack.c.h.b16 %v304
  %v319 = vunpack.c.l.b16 %v305
  %v320 = vpack.c.b16 %v311, %v311
  %v321 = vpack.c.b16 %v312, %v312
  %v322 = vpack.c.b16 %v313, %v313
  %v323 = vpack.c.b16 %v314, %v314
  %v324 = vpack.c.b16 %v315, %v315
  %v325 = vpack.c.b16 %v316, %v316
  %v326 = vpack.c.b16 %v317, %v317
  %v327 = vpack.c.b16 %v318, %v318
  %v328 = vpack.c.b16 %v319, %v319
  %vm338 = vcmask 257024
  %339 = vst.msk [vmem:[%s5] sm:$0xf] %vm338, %v320
  %340 = vst.msk [vmem:[%s5 + $0x4] sm:$0xf] %vm338, %v321
  %341 = vst.msk [vmem:[%s5 + $0x8] sm:$0xf] %vm338, %v322
  %342 = vst.msk [vmem:[%s5 + $0xc] sm:$0xf] %vm338, %v323
  %343 = vst.msk [vmem:[%s5 + $0x10] sm:$0xf] %vm338, %v324
  %344 = vst.msk [vmem:[%s5 + $0x14] sm:$0xf] %vm338, %v325
  %345 = vst.msk [vmem:[%s5 + $0x18] sm:$0xf] %vm338, %v326
  %346 = vst.msk [vmem:[%s5 + $0x1c] sm:$0xf] %vm338, %v327
  %347 = vst.msk [vmem:[%s5 + $0x20] sm:$0xf] %vm338, %v328
  // Predicated region
  $region22: #{wav_autoencoder_forward.43} parent=0 // pred_check
    _
  $region23: #{wav_autoencoder_forward.43} parent=0 // pred_check_branch
    %349 = sbr.rel (0) target = $region25
  $region24: #{wav_autoencoder_forward.43} parent=0 // pred_region
    _
  $region25: #{wav_autoencoder_forward.43} parent=0 // pred_fallthru
    _
  // Predicated region
  $region26: #{wav_autoencoder_forward.43} parent=0 // pred_check
    _
  $region27: #{wav_autoencoder_forward.43} parent=0 // pred_check_branch
    %351 = sbr.rel (0) target = $region29
  $region28: #{wav_autoencoder_forward.43} parent=0 // pred_region
    _
  $region29: #{wav_autoencoder_forward.43} parent=0 // pred_fallthru
    _

// kernel: tile.38
$region0: #{tile.38}
  #allocation0 [shape = 's32[1]{0}', space=sflag, size = 0x4, scoped, tag = 'scoped memory for tile.38']
  %s0 = inlined_call_operand.vmem [shape: f32[2], index: 0, kind: input, shape index: {}]
  %s1 = inlined_call_operand.vmem [shape: f32[4,2], index: 1, kind: output, shape index: {}]
  // Predicated region
  $region2: #{tile.38} parent=0 // pred_check
    _
  $region3: #{tile.38} parent=0 // pred_check_branch
    %3 = sbr.rel (0) target = $region5
  $region4: #{tile.38} parent=0 // pred_region
    _
  $region5: #{tile.38} parent=0 // pred_fallthru
    _
  %v4 = vld [vmem:[%s0] ss:$0 sm:$0xff]
  %5 = vst [vmem:[%s1] sm:$0xf] %v4

// kernel: tile.39
$region0: #{tile.39}
  %s0 = inlined_call_operand.vmem [shape: f32[4,2], index: 0, kind: input, shape index: {}]
  %s1 = inlined_call_operand.vmem [shape: f32[1,8], index: 1, kind: output, shape index: {}]
  $region1: #{tile.39} parent=0
    #allocation0 [shape = 'u8[4096]{0}', space=vmem, size = 0x1000, scoped, tag = 'scoped mem for output reshape']
    #allocation1 [shape = 'u8[4096]{0}', space=vmem, size = 0x1000, scoped, tag = 'scoped mem for input reshape']
    %s3 = sshllo.u32 0, 4
    %v4 = vld [vmem:[%s0] sm:%s3]
    %5 = vst [vmem:[#allocation1] sm:%s3] %v4
    %v6 = vld [vmem:[#allocation1] sm:$0x1]
    %vm7 = vcmask 15360
    %8 = vst.msk [vmem:[#allocation0] sm:$0x1] %vm7, %v6
    %s9 = scalar_lea.vmem [#allocation1], 3
    %v10 = vld [vmem:[%s9] sm:$0x1]
    %11 = vrot.lane.b32.xlu0 %v10, 6
    %v12 = vpop.permute.xlu0 %11
    %vm13 = vcmask 64560
    %14 = vst.msk [vmem:[#allocation0] sm:$0x1] %vm13, %v12
    %s15 = scalar_lea.vmem [#allocation1], 2
    %v16 = vld [vmem:[%s15] sm:$0x1]
    %17 = vrot.lane.b32.xlu0 %v16, 4
    %v18 = vpop.permute.xlu0 %17
    %vm19 = vcmask 48160
    %20 = vst.msk [vmem:[#allocation0] sm:$0x1] %vm19, %v18
    %s21 = scalar_lea.vmem [#allocation1], 1
    %v22 = vld [vmem:[%s21] sm:$0x1]
    %23 = vrot.lane.b32.xlu0 %v22, 2
    %v24 = vpop.permute.xlu0 %23
    %vm25 = vcmask 31760
    %26 = vst.msk [vmem:[#allocation0] sm:$0x1] %vm25, %v24
    %s28 = sshllo.u32 0, 1
    %v30 = vld [vmem:[#allocation0] sm:%s28]
    %s31 = sshllo.u32 0, 1
    %32 = vst [vmem:[%s1] sm:%s31] %v30

// kernel: wav_autoencoder_forward.44
$region0: #{wav_autoencoder_forward.44}
  #allocation0 [shape = 'u32[]', space=smem, size = 0x4, offset = 0x4, fixed_abs, tag = 'smem constant byte address 0x4 - core index']
  #allocation1 [shape = 'u32[144,128]{1,0:T(1,128)}', space=vmem, size = 0x12000, scoped, tag = 'internal scratch']
  %s0 = inlined_call_operand.vmem [shape: bf16[262,8], index: 0, kind: input, shape index: {}]
  %s1 = inlined_call_operand.vmem [shape: bf16[262,8], index: 1, kind: input, shape index: {}]
  %s2 = inlined_call_operand.vmem [shape: bf16[8,16], index: 2, kind: input, shape index: {}]
  %s3 = inlined_call_operand.vmem [shape: f32[1,16], index: 3, kind: input, shape index: {}]
  %s4 = inlined_call_operand.vmem [shape: bf16[262,8], index: 4, kind: output, shape index: {}]
  %s5 = sld [smem:[#allocation0]]
  $region26: #{wav_autoencoder_forward.44} parent=0
    _
  %s7 = ssub.s32 1, %s5
  %s8 = scalar_select 0, %s7, %s5
  // Predicated region
  $region2: #{wav_autoencoder_forward.44} parent=0 // pred_check
    _
  $region3: #{wav_autoencoder_forward.44} parent=0 // pred_check_branch
    %10 = sbr.rel (0) target = $region5
  $region4: #{wav_autoencoder_forward.44} parent=0 // pred_region
    _
  $region5: #{wav_autoencoder_forward.44} parent=0 // pred_fallthru
    _
  // Predicated region
  $region6: #{wav_autoencoder_forward.44} parent=0 // pred_check
    _
  $region7: #{wav_autoencoder_forward.44} parent=0 // pred_check_branch
    %12 = sbr.rel (0) target = $region9
  $region8: #{wav_autoencoder_forward.44} parent=0 // pred_region
    _
  $region9: #{wav_autoencoder_forward.44} parent=0 // pred_fallthru
    _
  // Predicated region
  $region10: #{wav_autoencoder_forward.44} parent=0 // pred_check
    _
  $region11: #{wav_autoencoder_forward.44} parent=0 // pred_check_branch
    %14 = sbr.rel (0) target = $region13
  $region12: #{wav_autoencoder_forward.44} parent=0 // pred_region
    _
  $region13: #{wav_autoencoder_forward.44} parent=0 // pred_fallthru
    _
  // Predicated region
  $region14: #{wav_autoencoder_forward.44} parent=0 // pred_check
    _
  $region15: #{wav_autoencoder_forward.44} parent=0 // pred_check_branch
    %16 = sbr.rel (0) target = $region17
  $region16: #{wav_autoencoder_forward.44} parent=0 // pred_region
    _
  $region17: #{wav_autoencoder_forward.44} parent=0 // pred_fallthru
    _
  %v18 = vld [vmem:[%s0] sm:$0xf]
  %v19 = vld [vmem:[%s0 + $0x4] sm:$0xf]
  %v20 = vld [vmem:[%s0 + $0x8] sm:$0xf]
  %v21 = vld [vmem:[%s0 + $0xc] sm:$0xf]
  %v22 = vld [vmem:[%s0 + $0x10] sm:$0xf]
  %v23 = vld [vmem:[%s0 + $0x14] sm:$0xf]
  %v24 = vld [vmem:[%s0 + $0x18] sm:$0xf]
  %v25 = vld [vmem:[%s0 + $0x1c] sm:$0xf]
  %v26 = vld [vmem:[%s0 + $0x20] sm:$0xf]
  %v27 = vld [vmem:[%s0 + $0x24] sm:$0xf]
  %v28 = vld [vmem:[%s0 + $0x28] sm:$0xf]
  %v29 = vld [vmem:[%s0 + $0x2c] sm:$0xf]
  %v30 = vld [vmem:[%s0 + $0x30] sm:$0xf]
  %v31 = vld [vmem:[%s0 + $0x34] sm:$0xf]
  %v32 = vld [vmem:[%s0 + $0x38] sm:$0xf]
  %v33 = vld [vmem:[%s0 + $0x3c] sm:$0xf]
  %v34 = vld [vmem:[%s0 + $0x40] sm:$0xf]
  %v35 = vld [vmem:[%s0 + $0x44] sm:$0xf]
  %v36 = vld [vmem:[%s0 + $0x48] sm:$0xf]
  %v37 = vld [vmem:[%s0 + $0x4c] sm:$0xf]
  %v38 = vld [vmem:[%s0 + $0x50] sm:$0xf]
  %v39 = vld [vmem:[%s0 + $0x54] sm:$0xf]
  %v40 = vld [vmem:[%s0 + $0x58] sm:$0xf]
  %v41 = vld [vmem:[%s0 + $0x5c] sm:$0xf]
  %v42 = vld [vmem:[%s0 + $0x60] sm:$0xf]
  %v43 = vld [vmem:[%s0 + $0x64] sm:$0xf]
  %v44 = vld [vmem:[%s0 + $0x68] sm:$0xf]
  %v45 = vld [vmem:[%s0 + $0x6c] sm:$0xf]
  %v46 = vld [vmem:[%s0 + $0x70] sm:$0xf]
  %v47 = vld [vmem:[%s0 + $0x74] sm:$0xf]
  %v48 = vld [vmem:[%s0 + $0x78] sm:$0xf]
  %v49 = vld [vmem:[%s0 + $0x7c] sm:$0xf]
  %v50 = vld [vmem:[%s0 + $0x80] sm:$0x7]
  %v51 = vunpack.c.l.bf16 %v18
  %v52 = vunpack.c.l.bf16 %v19
  %v53 = vunpack.c.l.bf16 %v20
  %v54 = vunpack.c.l.bf16 %v21
  %v55 = vunpack.c.l.bf16 %v22
  %v56 = vunpack.c.l.bf16 %v23
  %v57 = vunpack.c.l.bf16 %v24
  %v58 = vunpack.c.l.bf16 %v25
  %v59 = vunpack.c.l.bf16 %v26
  %v60 = vunpack.c.l.bf16 %v27
  %v61 = vunpack.c.l.bf16 %v28
  %v62 = vunpack.c.l.bf16 %v29
  %v63 = vunpack.c.l.bf16 %v30
  %v64 = vunpack.c.l.bf16 %v31
  %v65 = vunpack.c.l.bf16 %v32
  %v66 = vunpack.c.l.bf16 %v33
  %v67 = vunpack.c.l.bf16 %v34
  %v68 = vunpack.c.l.bf16 %v35
  %v69 = vunpack.c.l.bf16 %v36
  %v70 = vunpack.c.l.bf16 %v37
  %v71 = vunpack.c.l.bf16 %v38
  %v72 = vunpack.c.l.bf16 %v39
  %v73 = vunpack.c.l.bf16 %v40
  %v74 = vunpack.c.l.bf16 %v41
  %v75 = vunpack.c.l.bf16 %v42
  %v76 = vunpack.c.l.bf16 %v43
  %v77 = vunpack.c.l.bf16 %v44
  %v78 = vunpack.c.l.bf16 %v45
  %v79 = vunpack.c.l.bf16 %v46
  %v80 = vunpack.c.l.bf16 %v47
  %v81 = vunpack.c.l.bf16 %v48
  %v82 = vunpack.c.l.bf16 %v49
  %v83 = vunpack.c.l.bf16 %v50
  %v84 = vld [vmem:[%s1] sm:$0xf]
  %v85 = vld [vmem:[%s1 + $0x4] sm:$0xf]
  %v86 = vld [vmem:[%s1 + $0x8] sm:$0xf]
  %v87 = vld [vmem:[%s1 + $0xc] sm:$0xf]
  %v88 = vld [vmem:[%s1 + $0x10] sm:$0xf]
  %v89 = vld [vmem:[%s1 + $0x14] sm:$0xf]
  %v90 = vld [vmem:[%s1 + $0x18] sm:$0xf]
  %v91 = vld [vmem:[%s1 + $0x1c] sm:$0xf]
  %v92 = vld [vmem:[%s1 + $0x20] sm:$0xf]
  %v93 = vld [vmem:[%s1 + $0x24] sm:$0xf]
  %v94 = vld [vmem:[%s1 + $0x28] sm:$0xf]
  %v95 = vld [vmem:[%s1 + $0x2c] sm:$0xf]
  %v96 = vld [vmem:[%s1 + $0x30] sm:$0xf]
  %v97 = vld [vmem:[%s1 + $0x34] sm:$0xf]
  %v98 = vld [vmem:[%s1 + $0x38] sm:$0xf]
  %v99 = vld [vmem:[%s1 + $0x3c] sm:$0xf]
  %v100 = vld [vmem:[%s1 + $0x40] sm:$0xf]
  %v101 = vld [vmem:[%s1 + $0x44] sm:$0xf]
  %v102 = vld [vmem:[%s1 + $0x48] sm:$0xf]
  %v103 = vld [vmem:[%s1 + $0x4c] sm:$0xf]
  %v104 = vld [vmem:[%s1 + $0x50] sm:$0xf]
  %v105 = vld [vmem:[%s1 + $0x54] sm:$0xf]
  %v106 = vld [vmem:[%s1 + $0x58] sm:$0xf]
  %v107 = vld [vmem:[%s1 + $0x5c] sm:$0xf]
  %v108 = vld [vmem:[%s1 + $0x60] sm:$0xf]
  %v109 = vld [vmem:[%s1 + $0x64] sm:$0xf]
  %v110 = vld [vmem:[%s1 + $0x68] sm:$0xf]
  %v111 = vld [vmem:[%s1 + $0x6c] sm:$0xf]
  %v112 = vld [vmem:[%s1 + $0x70] sm:$0xf]
  %v113 = vld [vmem:[%s1 + $0x74] sm:$0xf]
  %v114 = vld [vmem:[%s1 + $0x78] sm:$0xf]
  %v115 = vld [vmem:[%s1 + $0x7c] sm:$0xf]
  %v116 = vld [vmem:[%s1 + $0x80] sm:$0x7]
  %v117 = vunpack.c.l.bf16 %v84
  %v118 = vunpack.c.l.bf16 %v85
  %v119 = vunpack.c.l.bf16 %v86
  %v120 = vunpack.c.l.bf16 %v87
  %v121 = vunpack.c.l.bf16 %v88
  %v122 = vunpack.c.l.bf16 %v89
  %v123 = vunpack.c.l.bf16 %v90
  %v124 = vunpack.c.l.bf16 %v91
  %v125 = vunpack.c.l.bf16 %v92
  %v126 = vunpack.c.l.bf16 %v93
  %v127 = vunpack.c.l.bf16 %v94
  %v128 = vunpack.c.l.bf16 %v95
  %v129 = vunpack.c.l.bf16 %v96
  %v130 = vunpack.c.l.bf16 %v97
  %v131 = vunpack.c.l.bf16 %v98
  %v132 = vunpack.c.l.bf16 %v99
  %v133 = vunpack.c.l.bf16 %v100
  %v134 = vunpack.c.l.bf16 %v101
  %v135 = vunpack.c.l.bf16 %v102
  %v136 = vunpack.c.l.bf16 %v103
  %v137 = vunpack.c.l.bf16 %v104
  %v138 = vunpack.c.l.bf16 %v105
  %v139 = vunpack.c.l.bf16 %v106
  %v140 = vunpack.c.l.bf16 %v107
  %v141 = vunpack.c.l.bf16 %v108
  %v142 = vunpack.c.l.bf16 %v109
  %v143 = vunpack.c.l.bf16 %v110
  %v144 = vunpack.c.l.bf16 %v111
  %v145 = vunpack.c.l.bf16 %v112
  %v146 = vunpack.c.l.bf16 %v113
  %v147 = vunpack.c.l.bf16 %v114
  %v148 = vunpack.c.l.bf16 %v115
  %v149 = vunpack.c.l.bf16 %v116
  %v150 = vadd.f32 %v51, %v117
  %v151 = vadd.f32 %v52, %v118
  %v152 = vadd.f32 %v53, %v119
  %v153 = vadd.f32 %v54, %v120
  %v154 = vadd.f32 %v55, %v121
  %v155 = vadd.f32 %v56, %v122
  %v156 = vadd.f32 %v57, %v123
  %v157 = vadd.f32 %v58, %v124
  %v158 = vadd.f32 %v59, %v125
  %v159 = vadd.f32 %v60, %v126
  %v160 = vadd.f32 %v61, %v127
  %v161 = vadd.f32 %v62, %v128
  %v162 = vadd.f32 %v63, %v129
  %v163 = vadd.f32 %v64, %v130
  %v164 = vadd.f32 %v65, %v131
  %v165 = vadd.f32 %v66, %v132
  %v166 = vadd.f32 %v67, %v133
  %v167 = vadd.f32 %v68, %v134
  %v168 = vadd.f32 %v69, %v135
  %v169 = vadd.f32 %v70, %v136
  %v170 = vadd.f32 %v71, %v137
  %v171 = vadd.f32 %v72, %v138
  %v172 = vadd.f32 %v73, %v139
  %v173 = vadd.f32 %v74, %v140
  %v174 = vadd.f32 %v75, %v141
  %v175 = vadd.f32 %v76, %v142
  %v176 = vadd.f32 %v77, %v143
  %v177 = vadd.f32 %v78, %v144
  %v178 = vadd.f32 %v79, %v145
  %v179 = vadd.f32 %v80, %v146
  %v180 = vadd.f32 %v81, %v147
  %v181 = vadd.f32 %v82, %v148
  %v182 = vadd.f32 %v83, %v149
  %v183 = vpack.c.bf16 %v151, %v150
  %v184 = vpack.c.bf16 %v153, %v152
  %v185 = vpack.c.bf16 %v155, %v154
  %v186 = vpack.c.bf16 %v157, %v156
  %v187 = vpack.c.bf16 %v159, %v158
  %v188 = vpack.c.bf16 %v161, %v160
  %v189 = vpack.c.bf16 %v163, %v162
  %v190 = vpack.c.bf16 %v165, %v164
  %v191 = vpack.c.bf16 %v167, %v166
  %v192 = vpack.c.bf16 %v169, %v168
  %v193 = vpack.c.bf16 %v171, %v170
  %v194 = vpack.c.bf16 %v173, %v172
  %v195 = vpack.c.bf16 %v175, %v174
  %v196 = vpack.c.bf16 %v177, %v176
  %v197 = vpack.c.bf16 %v179, %v178
  %v198 = vpack.c.bf16 %v181, %v180
  %v199 = vpack.c.bf16 %v182, %v182
  %v200 = vld [vmem:[%s2] sm:$0xf]
  %v201 = vld [vmem:[%s3] sm:$0x1]
  %v203 = vlaneseq
  %v204 = vshrl.u32 %v203, 7
  %v205 = vsub.s32 0, %v204
  %v206 = vrot.slane %v201, %v205
  %vm208 = vcmask 64512
  %v210 = vsel %vm208, %v183, 0
  %v213 = vsel %vm208, %v184, 0
  %v216 = vsel %vm208, %v185, 0
  %v219 = vsel %vm208, %v186, 0
  %v222 = vsel %vm208, %v187, 0
  %v225 = vsel %vm208, %v188, 0
  %v228 = vsel %vm208, %v189, 0
  %v231 = vsel %vm208, %v190, 0
  %v234 = vsel %vm208, %v191, 0
  %v237 = vsel %vm208, %v192, 0
  %v240 = vsel %vm208, %v193, 0
  %v243 = vsel %vm208, %v194, 0
  %v246 = vsel %vm208, %v195, 0
  %v249 = vsel %vm208, %v196, 0
  %v252 = vsel %vm208, %v197, 0
  %v255 = vsel %vm208, %v198, 0
  %v258 = vsel %vm208, %v199, 0
  %vm260 = vcmask 1043456
  %v262 = vsel %vm260, %v200, 0
  %264 = vmatprep.subr.bf16.mxu0 0
  %265 = vmatpush1.bf16.msra.mxu0 %v262
  %266 = vmatprep.subr.bf16.mxu0 0
  %267 = vmatpush1.bf16.msra.mxu0 0
  %268 = vmatprep.subr.bf16.mxu0 0
  %269 = vmatpush1.bf16.msra.mxu0 0
  %270 = vmatprep.subr.bf16.mxu0 0
  %271 = vmatpush1.bf16.msra.mxu0 0
  %272 = vmatprep.subr.bf16.mxu0 0
  %273 = vmatpush1.bf16.msra.mxu0 0
  %274 = vmatprep.subr.bf16.mxu0 0
  %275 = vmatpush1.bf16.msra.mxu0 0
  %276 = vmatprep.subr.bf16.mxu0 0
  %277 = vmatpush1.bf16.msra.mxu0 0
  %278 = vmatprep.subr.bf16.mxu0 0
  %279 = vmatpush1.bf16.msra.mxu0 0
  %280 = vmatprep.subr.bf16.mxu0 0
  %281 = vmatpush1.bf16.msra.mxu0 0
  %282 = vmatprep.subr.bf16.mxu0 0
  %283 = vmatpush1.bf16.msra.mxu0 0
  %284 = vmatprep.subr.bf16.mxu0 0
  %285 = vmatpush1.bf16.msra.mxu0 0
  %286 = vmatprep.subr.bf16.mxu0 0
  %287 = vmatpush1.bf16.msra.mxu0 0
  %288 = vmatprep.subr.bf16.mxu0 0
  %289 = vmatpush1.bf16.msra.mxu0 0
  %290 = vmatprep.subr.bf16.mxu0 0
  %291 = vmatpush1.bf16.msra.mxu0 0
  %292 = vmatprep.subr.bf16.mxu0 0
  %293 = vmatpush1.bf16.msra.mxu0 0
  %294 = vmatprep.subr.bf16.mxu0 0
  %295 = vmatpush1.bf16.msra.mxu0 0
  %296 = vmatprep.mubr.bf16.mxu0 0
  %297 = vmatmul.mubr.bf16.gmra.mrb[0].mxu0 %v210
  %v298 = vpop.f32.mrb[0].mxu0
  %v299 = vadd.f32 %v206, %v298
  %v300 = vpop.f32.mrb[0].mxu0
  %v301 = vpop.f32.mrb[0].mxu0
  %v302 = vadd.f32 %v206, %v301
  %v303 = vpop.f32.mrb[0].mxu0
  %304 = vmatprep.mubr.bf16.mxu0 0
  %305 = vmatmul.mubr.bf16.gmra.mrb[0].mxu0 %v213
  %v306 = vpop.f32.mrb[0].mxu0
  %v307 = vadd.f32 %v206, %v306
  %v308 = vpop.f32.mrb[0].mxu0
  %v309 = vpop.f32.mrb[0].mxu0
  %v310 = vadd.f32 %v206, %v309
  %v311 = vpop.f32.mrb[0].mxu0
  %312 = vmatprep.mubr.bf16.mxu0 0
  %313 = vmatmul.mubr.bf16.gmra.mrb[0].mxu0 %v216
  %v314 = vpop.f32.mrb[0].mxu0
  %v315 = vadd.f32 %v206, %v314
  %v316 = vpop.f32.mrb[0].mxu0
  %v317 = vpop.f32.mrb[0].mxu0
  %v318 = vadd.f32 %v206, %v317
  %v319 = vpop.f32.mrb[0].mxu0
  %320 = vmatprep.mubr.bf16.mxu0 0
  %321 = vmatmul.mubr.bf16.gmra.mrb[0].mxu0 %v219
  %v322 = vpop.f32.mrb[0].mxu0
  %v323 = vadd.f32 %v206, %v322
  %v324 = vpop.f32.mrb[0].mxu0
  %v325 = vpop.f32.mrb[0].mxu0
  %v326 = vadd.f32 %v206, %v325
  %v327 = vpop.f32.mrb[0].mxu0
  %328 = vmatprep.mubr.bf16.mxu0 0
  %329 = vmatmul.mubr.bf16.gmra.mrb[0].mxu0 %v222
  %v330 = vpop.f32.mrb[0].mxu0
  %v331 = vadd.f32 %v206, %v330
  %v332 = vpop.f32.mrb[0].mxu0
  %v333 = vpop.f32.mrb[0].mxu0
  %v334 = vadd.f32 %v206, %v333
  %v335 = vpop.f32.mrb[0].mxu0
  %336 = vmatprep.mubr.bf16.mxu0 0
  %337 = vmatmul.mubr.bf16.gmra.mrb[0].mxu0 %v225
  %v338 = vpop.f32.mrb[0].mxu0
  %v339 = vadd.f32 %v206, %v338
  %v340 = vpop.f32.mrb[0].mxu0
  %v341 = vpop.f32.mrb[0].mxu0
  %v342 = vadd.f32 %v206, %v341
  %v343 = vpop.f32.mrb[0].mxu0
  %344 = vmatprep.mubr.bf16.mxu0 0
  %345 = vmatmul.mubr.bf16.gmra.mrb[0].mxu0 %v228
  %v346 = vpop.f32.mrb[0].mxu0
  %v347 = vadd.f32 %v206, %v346
  %v348 = vpop.f32.mrb[0].mxu0
  %v349 = vpop.f32.mrb[0].mxu0
  %v350 = vadd.f32 %v206, %v349
  %v351 = vpop.f32.mrb[0].mxu0
  %352 = vmatprep.mubr.bf16.mxu0 0
  %353 = vmatmul.mubr.bf16.gmra.mrb[0].mxu0 %v231
  %v354 = vpop.f32.mrb[0].mxu0
  %v355 = vadd.f32 %v206, %v354
  %v356 = vpop.f32.mrb[0].mxu0
  %v357 = vpop.f32.mrb[0].mxu0
  %v358 = vadd.f32 %v206, %v357
  %v359 = vpop.f32.mrb[0].mxu0
  %360 = vmatprep.mubr.bf16.mxu0 0
  %361 = vmatmul.mubr.bf16.gmra.mrb[0].mxu0 %v234
  %v362 = vpop.f32.mrb[0].mxu0
  %v363 = vadd.f32 %v206, %v362
  %v364 = vpop.f32.mrb[0].mxu0
  %v365 = vpop.f32.mrb[0].mxu0
  %v366 = vadd.f32 %v206, %v365
  %v367 = vpop.f32.mrb[0].mxu0
  %368 = vmatprep.mubr.bf16.mxu0 0
  %369 = vmatmul.mubr.bf16.gmra.mrb[0].mxu0 %v237
  %v370 = vpop.f32.mrb[0].mxu0
  %v371 = vadd.f32 %v206, %v370
  %v372 = vpop.f32.mrb[0].mxu0
  %v373 = vpop.f32.mrb[0].mxu0
  %v374 = vadd.f32 %v206, %v373
  %v375 = vpop.f32.mrb[0].mxu0
  %376 = vmatprep.mubr.bf16.mxu0 0
  %377 = vmatmul.mubr.bf16.gmra.mrb[0].mxu0 %v240
  %v378 = vpop.f32.mrb[0].mxu0
  %v379 = vadd.f32 %v206, %v378
  %v380 = vpop.f32.mrb[0].mxu0
  %v381 = vpop.f32.mrb[0].mxu0
  %v382 = vadd.f32 %v206, %v381
  %v383 = vpop.f32.mrb[0].mxu0
  %384 = vmatprep.mubr.bf16.mxu0 0
  %385 = vmatmul.mubr.bf16.gmra.mrb[0].mxu0 %v243
  %v386 = vpop.f32.mrb[0].mxu0
  %v387 = vadd.f32 %v206, %v386
  %v388 = vpop.f32.mrb[0].mxu0
  %v389 = vpop.f32.mrb[0].mxu0
  %v390 = vadd.f32 %v206, %v389
  %v391 = vpop.f32.mrb[0].mxu0
  %392 = vmatprep.mubr.bf16.mxu0 0
  %393 = vmatmul.mubr.bf16.gmra.mrb[0].mxu0 %v246
  %v394 = vpop.f32.mrb[0].mxu0
  %v395 = vadd.f32 %v206, %v394
  %v396 = vpop.f32.mrb[0].mxu0
  %v397 = vpop.f32.mrb[0].mxu0
  %v398 = vadd.f32 %v206, %v397
  %v399 = vpop.f32.mrb[0].mxu0
  %400 = vmatprep.mubr.bf16.mxu0 0
  %401 = vmatmul.mubr.bf16.gmra.mrb[0].mxu0 %v249
  %v402 = vpop.f32.mrb[0].mxu0
  %v403 = vadd.f32 %v206, %v402
  %v404 = vpop.f32.mrb[0].mxu0
  %v405 = vpop.f32.mrb[0].mxu0
  %v406 = vadd.f32 %v206, %v405
  %v407 = vpop.f32.mrb[0].mxu0
  %408 = vmatprep.mubr.bf16.mxu0 0
  %409 = vmatmul.mubr.bf16.gmra.mrb[0].mxu0 %v252
  %v410 = vpop.f32.mrb[0].mxu0
  %v411 = vadd.f32 %v206, %v410
  %v412 = vpop.f32.mrb[0].mxu0
  %v413 = vpop.f32.mrb[0].mxu0
  %v414 = vadd.f32 %v206, %v413
  %v415 = vpop.f32.mrb[0].mxu0
  %416 = vmatprep.mubr.bf16.mxu0 0
  %417 = vmatmul.mubr.bf16.gmra.mrb[0].mxu0 %v255
  %v418 = vpop.f32.mrb[0].mxu0
  %v419 = vadd.f32 %v206, %v418
  %v420 = vpop.f32.mrb[0].mxu0
  %v421 = vpop.f32.mrb[0].mxu0
  %v422 = vadd.f32 %v206, %v421
  %v423 = vpop.f32.mrb[0].mxu0
  %424 = vmatprep.mubr.bf16.mxu0 0
  %425 = vmatmul.mubr.bf16.gmra.mrb[0].mxu0 %v258
  %v426 = vpop.f32.mrb[0].mxu0
  %v427 = vadd.f32 %v206, %v426
  %v428 = vpop.f32.mrb[0].mxu0
  %v429 = vpop.f32.mrb[0].mxu0
  %v430 = vpop.f32.mrb[0].mxu0
  %431 = vdwg.mxu0
  %v432 = vxor.u32 %v299, 2147483648
  %v433 = vxor.u32 %v302, 2147483648
  %v434 = vxor.u32 %v307, 2147483648
  %v435 = vxor.u32 %v310, 2147483648
  %v436 = vxor.u32 %v315, 2147483648
  %v437 = vxor.u32 %v318, 2147483648
  %v438 = vxor.u32 %v323, 2147483648
  %v439 = vxor.u32 %v326, 2147483648
  %v440 = vxor.u32 %v331, 2147483648
  %v441 = vxor.u32 %v334, 2147483648
  %v442 = vxor.u32 %v339, 2147483648
  %v443 = vxor.u32 %v342, 2147483648
  %v444 = vxor.u32 %v347, 2147483648
  %v445 = vxor.u32 %v350, 2147483648
  %v446 = vxor.u32 %v355, 2147483648
  %v447 = vxor.u32 %v358, 2147483648
  %v448 = vxor.u32 %v363, 2147483648
  %v449 = vxor.u32 %v366, 2147483648
  %v450 = vxor.u32 %v371, 2147483648
  %v451 = vxor.u32 %v374, 2147483648
  %v452 = vxor.u32 %v379, 2147483648
  %v453 = vxor.u32 %v382, 2147483648
  %v454 = vxor.u32 %v387, 2147483648
  %v455 = vxor.u32 %v390, 2147483648
  %v456 = vxor.u32 %v395, 2147483648
  %v457 = vxor.u32 %v398, 2147483648
  %v458 = vxor.u32 %v403, 2147483648
  %v459 = vxor.u32 %v406, 2147483648
  %v460 = vxor.u32 %v411, 2147483648
  %v461 = vxor.u32 %v414, 2147483648
  %v462 = vxor.u32 %v419, 2147483648
  %v463 = vxor.u32 %v422, 2147483648
  %v464 = vxor.u32 %v427, 2147483648
  %v465 = vmul.f32 %v432, 1.442695
  %v466 = vpow.pop %v465
  %v467 = vmul.f32 %v433, 1.442695
  %v468 = vpow.pop %v467
  %v469 = vmul.f32 %v434, 1.442695
  %v470 = vpow.pop %v469
  %v471 = vmul.f32 %v435, 1.442695
  %v472 = vpow.pop %v471
  %v473 = vmul.f32 %v436, 1.442695
  %v474 = vpow.pop %v473
  %v475 = vmul.f32 %v437, 1.442695
  %v476 = vpow.pop %v475
  %v477 = vmul.f32 %v438, 1.442695
  %v478 = vpow.pop %v477
  %v479 = vmul.f32 %v439, 1.442695
  %v480 = vpow.pop %v479
  %v481 = vmul.f32 %v440, 1.442695
  %v482 = vpow.pop %v481
  %v483 = vmul.f32 %v441, 1.442695
  %v484 = vpow.pop %v483
  %v485 = vmul.f32 %v442, 1.442695
  %v486 = vpow.pop %v485
  %v487 = vmul.f32 %v443, 1.442695
  %v488 = vpow.pop %v487
  %v489 = vmul.f32 %v444, 1.442695
  %v490 = vpow.pop %v489
  %v491 = vmul.f32 %v445, 1.442695
  %v492 = vpow.pop %v491
  %v493 = vmul.f32 %v446, 1.442695
  %v494 = vpow.pop %v493
  %v495 = vmul.f32 %v447, 1.442695
  %v496 = vpow.pop %v495
  %v497 = vmul.f32 %v448, 1.442695
  %v498 = vpow.pop %v497
  %v499 = vmul.f32 %v449, 1.442695
  %v500 = vpow.pop %v499
  %v501 = vmul.f32 %v450, 1.442695
  %v502 = vpow.pop %v501
  %v503 = vmul.f32 %v451, 1.442695
  %v504 = vpow.pop %v503
  %v505 = vmul.f32 %v452, 1.442695
  %v506 = vpow.pop %v505
  %v507 = vmul.f32 %v453, 1.442695
  %v508 = vpow.pop %v507
  %v509 = vmul.f32 %v454, 1.442695
  %v510 = vpow.pop %v509
  %v511 = vmul.f32 %v455, 1.442695
  %v512 = vpow.pop %v511
  %v513 = vmul.f32 %v456, 1.442695
  %v514 = vpow.pop %v513
  %v515 = vmul.f32 %v457, 1.442695
  %v516 = vpow.pop %v515
  %v517 = vmul.f32 %v458, 1.442695
  %v518 = vpow.pop %v517
  %v519 = vmul.f32 %v459, 1.442695
  %v520 = vpow.pop %v519
  %v521 = vmul.f32 %v460, 1.442695
  %v522 = vpow.pop %v521
  %v523 = vmul.f32 %v461, 1.442695
  %v524 = vpow.pop %v523
  %v525 = vmul.f32 %v462, 1.442695
  %v526 = vpow.pop %v525
  %v527 = vmul.f32 %v463, 1.442695
  %v528 = vpow.pop %v527
  %v529 = vmul.f32 %v464, 1.442695
  %v530 = vpow.pop %v529
  %v531 = vadd.f32 %v466, 1.0
  %v532 = vadd.f32 %v468, 1.0
  %v533 = vadd.f32 %v470, 1.0
  %v534 = vadd.f32 %v472, 1.0
  %v535 = vadd.f32 %v474, 1.0
  %v536 = vadd.f32 %v476, 1.0
  %v537 = vadd.f32 %v478, 1.0
  %v538 = vadd.f32 %v480, 1.0
  %v539 = vadd.f32 %v482, 1.0
  %v540 = vadd.f32 %v484, 1.0
  %v541 = vadd.f32 %v486, 1.0
  %v542 = vadd.f32 %v488, 1.0
  %v543 = vadd.f32 %v490, 1.0
  %v544 = vadd.f32 %v492, 1.0
  %v545 = vadd.f32 %v494, 1.0
  %v546 = vadd.f32 %v496, 1.0
  %v547 = vadd.f32 %v498, 1.0
  %v548 = vadd.f32 %v500, 1.0
  %v549 = vadd.f32 %v502, 1.0
  %v550 = vadd.f32 %v504, 1.0
  %v551 = vadd.f32 %v506, 1.0
  %v552 = vadd.f32 %v508, 1.0
  %v553 = vadd.f32 %v510, 1.0
  %v554 = vadd.f32 %v512, 1.0
  %v555 = vadd.f32 %v514, 1.0
  %v556 = vadd.f32 %v516, 1.0
  %v557 = vadd.f32 %v518, 1.0
  %v558 = vadd.f32 %v520, 1.0
  %v559 = vadd.f32 %v522, 1.0
  %v560 = vadd.f32 %v524, 1.0
  %v561 = vadd.f32 %v526, 1.0
  %v562 = vadd.f32 %v528, 1.0
  %v563 = vadd.f32 %v530, 1.0
  %v564 = vrcp.pop %v531
  %v565 = vmul.f32 1.0, %v564
  %v566 = vrcp.pop %v532
  %v567 = vmul.f32 1.0, %v566
  %v568 = vrcp.pop %v533
  %v569 = vmul.f32 1.0, %v568
  %v570 = vrcp.pop %v534
  %v571 = vmul.f32 1.0, %v570
  %v572 = vrcp.pop %v535
  %v573 = vmul.f32 1.0, %v572
  %v574 = vrcp.pop %v536
  %v575 = vmul.f32 1.0, %v574
  %v576 = vrcp.pop %v537
  %v577 = vmul.f32 1.0, %v576
  %v578 = vrcp.pop %v538
  %v579 = vmul.f32 1.0, %v578
  %v580 = vrcp.pop %v539
  %v581 = vmul.f32 1.0, %v580
  %v582 = vrcp.pop %v540
  %v583 = vmul.f32 1.0, %v582
  %v584 = vrcp.pop %v541
  %v585 = vmul.f32 1.0, %v584
  %v586 = vrcp.pop %v542
  %v587 = vmul.f32 1.0, %v586
  %v588 = vrcp.pop %v543
  %v589 = vmul.f32 1.0, %v588
  %v590 = vrcp.pop %v544
  %v591 = vmul.f32 1.0, %v590
  %v592 = vrcp.pop %v545
  %v593 = vmul.f32 1.0, %v592
  %v594 = vrcp.pop %v546
  %v595 = vmul.f32 1.0, %v594
  %v596 = vrcp.pop %v547
  %v597 = vmul.f32 1.0, %v596
  %v598 = vrcp.pop %v548
  %v599 = vmul.f32 1.0, %v598
  %v600 = vrcp.pop %v549
  %v601 = vmul.f32 1.0, %v600
  %v602 = vrcp.pop %v550
  %v603 = vmul.f32 1.0, %v602
  %v604 = vrcp.pop %v551
  %v605 = vmul.f32 1.0, %v604
  %v606 = vrcp.pop %v552
  %v607 = vmul.f32 1.0, %v606
  %v608 = vrcp.pop %v553
  %v609 = vmul.f32 1.0, %v608
  %v610 = vrcp.pop %v554
  %v611 = vmul.f32 1.0, %v610
  %v612 = vrcp.pop %v555
  %v613 = vmul.f32 1.0, %v612
  %v614 = vrcp.pop %v556
  %v615 = vmul.f32 1.0, %v614
  %v616 = vrcp.pop %v557
  %v617 = vmul.f32 1.0, %v616
  %v618 = vrcp.pop %v558
  %v619 = vmul.f32 1.0, %v618
  %v620 = vrcp.pop %v559
  %v621 = vmul.f32 1.0, %v620
  %v622 = vrcp.pop %v560
  %v623 = vmul.f32 1.0, %v622
  %v624 = vrcp.pop %v561
  %v625 = vmul.f32 1.0, %v624
  %v626 = vrcp.pop %v562
  %v627 = vmul.f32 1.0, %v626
  %v628 = vrcp.pop %v563
  %v629 = vmul.f32 1.0, %v628
  %663 = vrot.lane.b32.xlu0 %v565, 120
  %v664 = vpop.permute.xlu0 %663
  %665 = vrot.lane.b32.xlu0 %v567, 120
  %v666 = vpop.permute.xlu0 %665
  %667 = vrot.lane.b32.xlu0 %v569, 120
  %v668 = vpop.permute.xlu0 %667
  %669 = vrot.lane.b32.xlu0 %v571, 120
  %v670 = vpop.permute.xlu0 %669
  %671 = vrot.lane.b32.xlu0 %v573, 120
  %v672 = vpop.permute.xlu0 %671
  %673 = vrot.lane.b32.xlu0 %v575, 120
  %v674 = vpop.permute.xlu0 %673
  %675 = vrot.lane.b32.xlu0 %v577, 120
  %v676 = vpop.permute.xlu0 %675
  %677 = vrot.lane.b32.xlu0 %v579, 120
  %v678 = vpop.permute.xlu0 %677
  %679 = vrot.lane.b32.xlu0 %v581, 120
  %v680 = vpop.permute.xlu0 %679
  %681 = vrot.lane.b32.xlu0 %v583, 120
  %v682 = vpop.permute.xlu0 %681
  %683 = vrot.lane.b32.xlu0 %v585, 120
  %v684 = vpop.permute.xlu0 %683
  %685 = vrot.lane.b32.xlu0 %v587, 120
  %v686 = vpop.permute.xlu0 %685
  %687 = vrot.lane.b32.xlu0 %v589, 120
  %v688 = vpop.permute.xlu0 %687
  %689 = vrot.lane.b32.xlu0 %v591, 120
  %v690 = vpop.permute.xlu0 %689
  %691 = vrot.lane.b32.xlu0 %v593, 120
  %v692 = vpop.permute.xlu0 %691
  %693 = vrot.lane.b32.xlu0 %v595, 120
  %v694 = vpop.permute.xlu0 %693
  %695 = vrot.lane.b32.xlu0 %v597, 120
  %v696 = vpop.permute.xlu0 %695
  %697 = vrot.lane.b32.xlu0 %v599, 120
  %v698 = vpop.permute.xlu0 %697
  %699 = vrot.lane.b32.xlu0 %v601, 120
  %v700 = vpop.permute.xlu0 %699
  %701 = vrot.lane.b32.xlu0 %v603, 120
  %v702 = vpop.permute.xlu0 %701
  %703 = vrot.lane.b32.xlu0 %v605, 120
  %v704 = vpop.permute.xlu0 %703
  %705 = vrot.lane.b32.xlu0 %v607, 120
  %v706 = vpop.permute.xlu0 %705
  %707 = vrot.lane.b32.xlu0 %v609, 120
  %v708 = vpop.permute.xlu0 %707
  %709 = vrot.lane.b32.xlu0 %v611, 120
  %v710 = vpop.permute.xlu0 %709
  %711 = vrot.lane.b32.xlu0 %v613, 120
  %v712 = vpop.permute.xlu0 %711
  %713 = vrot.lane.b32.xlu0 %v615, 120
  %v714 = vpop.permute.xlu0 %713
  %715 = vrot.lane.b32.xlu0 %v617, 120
  %v716 = vpop.permute.xlu0 %715
  %717 = vrot.lane.b32.xlu0 %v619, 120
  %v718 = vpop.permute.xlu0 %717
  %719 = vrot.lane.b32.xlu0 %v621, 120
  %v720 = vpop.permute.xlu0 %719
  %721 = vrot.lane.b32.xlu0 %v623, 120
  %v722 = vpop.permute.xlu0 %721
  %723 = vrot.lane.b32.xlu0 %v625, 120
  %v724 = vpop.permute.xlu0 %723
  %725 = vrot.lane.b32.xlu0 %v627, 120
  %v726 = vpop.permute.xlu0 %725
  %727 = vrot.lane.b32.xlu0 %v629, 120
  %v728 = vpop.permute.xlu0 %727
  %v762 = vmul.f32 %v299, %v664
  %v763 = vmul.f32 %v302, %v666
  %v764 = vmul.f32 %v307, %v668
  %v765 = vmul.f32 %v310, %v670
  %v766 = vmul.f32 %v315, %v672
  %v767 = vmul.f32 %v318, %v674
  %v768 = vmul.f32 %v323, %v676
  %v769 = vmul.f32 %v326, %v678
  %v770 = vmul.f32 %v331, %v680
  %v771 = vmul.f32 %v334, %v682
  %v772 = vmul.f32 %v339, %v684
  %v773 = vmul.f32 %v342, %v686
  %v774 = vmul.f32 %v347, %v688
  %v775 = vmul.f32 %v350, %v690
  %v776 = vmul.f32 %v355, %v692
  %v777 = vmul.f32 %v358, %v694
  %v778 = vmul.f32 %v363, %v696
  %v779 = vmul.f32 %v366, %v698
  %v780 = vmul.f32 %v371, %v700
  %v781 = vmul.f32 %v374, %v702
  %v782 = vmul.f32 %v379, %v704
  %v783 = vmul.f32 %v382, %v706
  %v784 = vmul.f32 %v387, %v708
  %v785 = vmul.f32 %v390, %v710
  %v786 = vmul.f32 %v395, %v712
  %v787 = vmul.f32 %v398, %v714
  %v788 = vmul.f32 %v403, %v716
  %v789 = vmul.f32 %v406, %v718
  %v790 = vmul.f32 %v411, %v720
  %v791 = vmul.f32 %v414, %v722
  %v792 = vmul.f32 %v419, %v724
  %v793 = vmul.f32 %v422, %v726
  %v794 = vmul.f32 %v427, %v728
  %v795 = vpack.c.bf16 %v763, %v762
  %v796 = vpack.c.bf16 %v765, %v764
  %v797 = vpack.c.bf16 %v767, %v766
  %v798 = vpack.c.bf16 %v769, %v768
  %v799 = vpack.c.bf16 %v771, %v770
  %v800 = vpack.c.bf16 %v773, %v772
  %v801 = vpack.c.bf16 %v775, %v774
  %v802 = vpack.c.bf16 %v777, %v776
  %v803 = vpack.c.bf16 %v779, %v778
  %v804 = vpack.c.bf16 %v781, %v780
  %v805 = vpack.c.bf16 %v783, %v782
  %v806 = vpack.c.bf16 %v785, %v784
  %v807 = vpack.c.bf16 %v787, %v786
  %v808 = vpack.c.bf16 %v789, %v788
  %v809 = vpack.c.bf16 %v791, %v790
  %v810 = vpack.c.bf16 %v793, %v792
  %v811 = vpack.c.bf16 %v794, %v794
  %v829 = vunpack.c.l.b16 %v795
  %v830 = vunpack.c.h.b16 %v795
  %v831 = vunpack.c.l.b16 %v796
  %v832 = vunpack.c.h.b16 %v796
  %v833 = vunpack.c.l.b16 %v797
  %v834 = vunpack.c.h.b16 %v797
  %v835 = vunpack.c.l.b16 %v798
  %v836 = vunpack.c.h.b16 %v798
  %v837 = vunpack.c.l.b16 %v799
  %v838 = vunpack.c.h.b16 %v799
  %v839 = vunpack.c.l.b16 %v800
  %v840 = vunpack.c.h.b16 %v800
  %v841 = vunpack.c.l.b16 %v801
  %v842 = vunpack.c.h.b16 %v801
  %v843 = vunpack.c.l.b16 %v802
  %v844 = vunpack.c.h.b16 %v802
  %v845 = vunpack.c.l.b16 %v803
  %v846 = vunpack.c.h.b16 %v803
  %v847 = vunpack.c.l.b16 %v804
  %v848 = vunpack.c.h.b16 %v804
  %v849 = vunpack.c.l.b16 %v805
  %v850 = vunpack.c.h.b16 %v805
  %v851 = vunpack.c.l.b16 %v806
  %v852 = vunpack.c.h.b16 %v806
  %v853 = vunpack.c.l.b16 %v807
  %v854 = vunpack.c.h.b16 %v807
  %v855 = vunpack.c.l.b16 %v808
  %v856 = vunpack.c.h.b16 %v808
  %v857 = vunpack.c.l.b16 %v809
  %v858 = vunpack.c.h.b16 %v809
  %v859 = vunpack.c.l.b16 %v810
  %v860 = vunpack.c.h.b16 %v810
  %v861 = vunpack.c.l.b16 %v811
  %v862 = vpack.c.b16 %v829, %v829
  %v863 = vpack.c.b16 %v830, %v830
  %v864 = vpack.c.b16 %v831, %v831
  %v865 = vpack.c.b16 %v832, %v832
  %v866 = vpack.c.b16 %v833, %v833
  %v867 = vpack.c.b16 %v834, %v834
  %v868 = vpack.c.b16 %v835, %v835
  %v869 = vpack.c.b16 %v836, %v836
  %v870 = vpack.c.b16 %v837, %v837
  %v871 = vpack.c.b16 %v838, %v838
  %v872 = vpack.c.b16 %v839, %v839
  %v873 = vpack.c.b16 %v840, %v840
  %v874 = vpack.c.b16 %v841, %v841
  %v875 = vpack.c.b16 %v842, %v842
  %v876 = vpack.c.b16 %v843, %v843
  %v877 = vpack.c.b16 %v844, %v844
  %v878 = vpack.c.b16 %v845, %v845
  %v879 = vpack.c.b16 %v846, %v846
  %v880 = vpack.c.b16 %v847, %v847
  %v881 = vpack.c.b16 %v848, %v848
  %v882 = vpack.c.b16 %v849, %v849
  %v883 = vpack.c.b16 %v850, %v850
  %v884 = vpack.c.b16 %v851, %v851
  %v885 = vpack.c.b16 %v852, %v852
  %v886 = vpack.c.b16 %v853, %v853
  %v887 = vpack.c.b16 %v854, %v854
  %v888 = vpack.c.b16 %v855, %v855
  %v889 = vpack.c.b16 %v856, %v856
  %v890 = vpack.c.b16 %v857, %v857
  %v891 = vpack.c.b16 %v858, %v858
  %v892 = vpack.c.b16 %v859, %v859
  %v893 = vpack.c.b16 %v860, %v860
  %v894 = vpack.c.b16 %v861, %v861
  %vm928 = vcmask 60416
  %929 = vst.msk [vmem:[%s4] sm:$0xf] %vm928, %v862
  %930 = vst.msk [vmem:[%s4 + $0x4] sm:$0xf] %vm928, %v863
  %931 = vst.msk [vmem:[%s4 + $0x8] sm:$0xf] %vm928, %v864
  %932 = vst.msk [vmem:[%s4 + $0xc] sm:$0xf] %vm928, %v865
  %933 = vst.msk [vmem:[%s4 + $0x10] sm:$0xf] %vm928, %v866
  %934 = vst.msk [vmem:[%s4 + $0x14] sm:$0xf] %vm928, %v867
  %935 = vst.msk [vmem:[%s4 + $0x18] sm:$0xf] %vm928, %v868
  %936 = vst.msk [vmem:[%s4 + $0x1c] sm:$0xf] %vm928, %v869
  %937 = vst.msk [vmem:[%s4 + $0x20] sm:$0xf] %vm928, %v870
  %938 = vst.msk [vmem:[%s4 + $0x24] sm:$0xf] %vm928, %v871
  %939 = vst.msk [vmem:[%s4 + $0x28] sm:$0xf] %vm928, %v872
  %940 = vst.msk [vmem:[%s4 + $0x2c] sm:$0xf] %vm928, %v873
  %941 = vst.msk [vmem:[%s4 + $0x30] sm:$0xf] %vm928, %v874
  %942 = vst.msk [vmem:[%s4 + $0x34] sm:$0xf] %vm928, %v875
  %943 = vst.msk [vmem:[%s4 + $0x38] sm:$0xf] %vm928, %v876
  %944 = vst.msk [vmem:[%s4 + $0x3c] sm:$0xf] %vm928, %v877
  %945 = vst.msk [vmem:[%s4 + $0x40] sm:$0xf] %vm928, %v878
  %946 = vst.msk [vmem:[%s4 + $0x44] sm:$0xf] %vm928, %v879
  %947 = vst.msk [vmem:[%s4 + $0x48] sm:$0xf] %vm928, %v880
  %948 = vst.msk [vmem:[%s4 + $0x4c] sm:$0xf] %vm928, %v881
  %949 = vst.msk [vmem:[%s4 + $0x50] sm:$0xf] %vm928, %v882
  %950 = vst.msk [vmem:[%s4 + $0x54] sm:$0xf] %vm928, %v883
  %951 = vst.msk [vmem:[%s4 + $0x58] sm:$0xf] %vm928, %v884
  %952 = vst.msk [vmem:[%s4 + $0x5c] sm:$0xf] %vm928, %v885
  %953 = vst.msk [vmem:[%s4 + $0x60] sm:$0xf] %vm928, %v886
  %954 = vst.msk [vmem:[%s4 + $0x64] sm:$0xf] %vm928, %v887
  %955 = vst.msk [vmem:[%s4 + $0x68] sm:$0xf] %vm928, %v888
  %956 = vst.msk [vmem:[%s4 + $0x6c] sm:$0xf] %vm928, %v889
  %957 = vst.msk [vmem:[%s4 + $0x70] sm:$0xf] %vm928, %v890
  %958 = vst.msk [vmem:[%s4 + $0x74] sm:$0xf] %vm928, %v891
  %959 = vst.msk [vmem:[%s4 + $0x78] sm:$0xf] %vm928, %v892
  %960 = vst.msk [vmem:[%s4 + $0x7c] sm:$0xf] %vm928, %v893
  %vm961 = vcmask 59392
  %962 = vst.msk [vmem:[%s4 + $0x80] sm:$0x7] %vm961, %v894
  // Predicated region
  $region18: #{wav_autoencoder_forward.44} parent=0 // pred_check
    _
  $region19: #{wav_autoencoder_forward.44} parent=0 // pred_check_branch
    %964 = sbr.rel (0) target = $region21
  $region20: #{wav_autoencoder_forward.44} parent=0 // pred_region
    _
  $region21: #{wav_autoencoder_forward.44} parent=0 // pred_fallthru
    _
  // Predicated region
  $region22: #{wav_autoencoder_forward.44} parent=0 // pred_check
    _
  $region23: #{wav_autoencoder_forward.44} parent=0 // pred_check_branch
    %966 = sbr.rel (0) target = $region25
  $region24: #{wav_autoencoder_forward.44} parent=0 // pred_region
    _
  $region25: #{wav_autoencoder_forward.44} parent=0 // pred_fallthru
    _

// kernel: wav_autoencoder_forward.45
$region0: #{wav_autoencoder_forward.45}
  #allocation0 [shape = 'u32[]', space=smem, size = 0x4, offset = 0x4, fixed_abs, tag = 'smem constant byte address 0x4 - core index']
  #allocation1 [shape = 'u32[144,128]{1,0:T(1,128)}', space=vmem, size = 0x12000, scoped, tag = 'internal scratch']
  %s0 = inlined_call_operand.vmem [shape: bf16[264,8], index: 0, kind: input, shape index: {}]
  %s1 = inlined_call_operand.vmem [shape: bf16[264,8], index: 1, kind: input, shape index: {}]
  %s2 = inlined_call_operand.vmem [shape: bf16[8,8], index: 2, kind: input, shape index: {}]
  %s3 = inlined_call_operand.vmem [shape: bf16[8,8], index: 3, kind: input, shape index: {}]
  %s4 = inlined_call_operand.vmem [shape: f32[1,8], index: 4, kind: input, shape index: {}]
  %s5 = inlined_call_operand.vmem [shape: f32[264,8], index: 5, kind: output, shape index: {}]
  %s6 = sld [smem:[#allocation0]]
  $region30: #{wav_autoencoder_forward.45} parent=0
    _
  %s8 = ssub.s32 1, %s6
  %s9 = scalar_select 0, %s8, %s6
  // Predicated region
  $region2: #{wav_autoencoder_forward.45} parent=0 // pred_check
    _
  $region3: #{wav_autoencoder_forward.45} parent=0 // pred_check_branch
    %11 = sbr.rel (0) target = $region5
  $region4: #{wav_autoencoder_forward.45} parent=0 // pred_region
    _
  $region5: #{wav_autoencoder_forward.45} parent=0 // pred_fallthru
    _
  // Predicated region
  $region6: #{wav_autoencoder_forward.45} parent=0 // pred_check
    _
  $region7: #{wav_autoencoder_forward.45} parent=0 // pred_check_branch
    %13 = sbr.rel (0) target = $region9
  $region8: #{wav_autoencoder_forward.45} parent=0 // pred_region
    _
  $region9: #{wav_autoencoder_forward.45} parent=0 // pred_fallthru
    _
  // Predicated region
  $region10: #{wav_autoencoder_forward.45} parent=0 // pred_check
    _
  $region11: #{wav_autoencoder_forward.45} parent=0 // pred_check_branch
    %15 = sbr.rel (0) target = $region13
  $region12: #{wav_autoencoder_forward.45} parent=0 // pred_region
    _
  $region13: #{wav_autoencoder_forward.45} parent=0 // pred_fallthru
    _
  // Predicated region
  $region14: #{wav_autoencoder_forward.45} parent=0 // pred_check
    _
  $region15: #{wav_autoencoder_forward.45} parent=0 // pred_check_branch
    %17 = sbr.rel (0) target = $region17
  $region16: #{wav_autoencoder_forward.45} parent=0 // pred_region
    _
  $region17: #{wav_autoencoder_forward.45} parent=0 // pred_fallthru
    _
  // Predicated region
  $region18: #{wav_autoencoder_forward.45} parent=0 // pred_check
    _
  $region19: #{wav_autoencoder_forward.45} parent=0 // pred_check_branch
    %19 = sbr.rel (0) target = $region21
  $region20: #{wav_autoencoder_forward.45} parent=0 // pred_region
    _
  $region21: #{wav_autoencoder_forward.45} parent=0 // pred_fallthru
    _
  %v21 = vld [vmem:[%s0] sm:$0xf]
  %v22 = vld [vmem:[%s0 + $0x4] sm:$0xf]
  %v23 = vld [vmem:[%s0 + $0x8] sm:$0xf]
  %v24 = vld [vmem:[%s0 + $0xc] sm:$0xf]
  %v25 = vld [vmem:[%s0 + $0x10] sm:$0xf]
  %v26 = vld [vmem:[%s0 + $0x14] sm:$0xf]
  %v27 = vld [vmem:[%s0 + $0x18] sm:$0xf]
  %v28 = vld [vmem:[%s0 + $0x1c] sm:$0xf]
  %v29 = vld [vmem:[%s0 + $0x20] sm:$0xf]
  %v30 = vld [vmem:[%s0 + $0x24] sm:$0xf]
  %v31 = vld [vmem:[%s0 + $0x28] sm:$0xf]
  %v32 = vld [vmem:[%s0 + $0x2c] sm:$0xf]
  %v33 = vld [vmem:[%s0 + $0x30] sm:$0xf]
  %v34 = vld [vmem:[%s0 + $0x34] sm:$0xf]
  %v35 = vld [vmem:[%s0 + $0x38] sm:$0xf]
  %v36 = vld [vmem:[%s0 + $0x3c] sm:$0xf]
  %v37 = vld [vmem:[%s0 + $0x40] sm:$0xf]
  %v38 = vld [vmem:[%s0 + $0x44] sm:$0xf]
  %v39 = vld [vmem:[%s0 + $0x48] sm:$0xf]
  %v40 = vld [vmem:[%s0 + $0x4c] sm:$0xf]
  %v41 = vld [vmem:[%s0 + $0x50] sm:$0xf]
  %v42 = vld [vmem:[%s0 + $0x54] sm:$0xf]
  %v43 = vld [vmem:[%s0 + $0x58] sm:$0xf]
  %v44 = vld [vmem:[%s0 + $0x5c] sm:$0xf]
  %v45 = vld [vmem:[%s0 + $0x60] sm:$0xf]
  %v46 = vld [vmem:[%s0 + $0x64] sm:$0xf]
  %v47 = vld [vmem:[%s0 + $0x68] sm:$0xf]
  %v48 = vld [vmem:[%s0 + $0x6c] sm:$0xf]
  %v49 = vld [vmem:[%s0 + $0x70] sm:$0xf]
  %v50 = vld [vmem:[%s0 + $0x74] sm:$0xf]
  %v51 = vld [vmem:[%s0 + $0x78] sm:$0xf]
  %v52 = vld [vmem:[%s0 + $0x7c] sm:$0xf]
  %v53 = vld [vmem:[%s0 + $0x80] sm:$0xf]
  %v54 = vld [vmem:[%s2] sm:$0xf]
  %v55 = vld [vmem:[%s1] sm:$0xf]
  %v56 = vld [vmem:[%s1 + $0x4] sm:$0xf]
  %v57 = vld [vmem:[%s1 + $0x8] sm:$0xf]
  %v58 = vld [vmem:[%s1 + $0xc] sm:$0xf]
  %v59 = vld [vmem:[%s1 + $0x10] sm:$0xf]
  %v60 = vld [vmem:[%s1 + $0x14] sm:$0xf]
  %v61 = vld [vmem:[%s1 + $0x18] sm:$0xf]
  %v62 = vld [vmem:[%s1 + $0x1c] sm:$0xf]
  %v63 = vld [vmem:[%s1 + $0x20] sm:$0xf]
  %v64 = vld [vmem:[%s1 + $0x24] sm:$0xf]
  %v65 = vld [vmem:[%s1 + $0x28] sm:$0xf]
  %v66 = vld [vmem:[%s1 + $0x2c] sm:$0xf]
  %v67 = vld [vmem:[%s1 + $0x30] sm:$0xf]
  %v68 = vld [vmem:[%s1 + $0x34] sm:$0xf]
  %v69 = vld [vmem:[%s1 + $0x38] sm:$0xf]
  %v70 = vld [vmem:[%s1 + $0x3c] sm:$0xf]
  %v71 = vld [vmem:[%s1 + $0x40] sm:$0xf]
  %v72 = vld [vmem:[%s1 + $0x44] sm:$0xf]
  %v73 = vld [vmem:[%s1 + $0x48] sm:$0xf]
  %v74 = vld [vmem:[%s1 + $0x4c] sm:$0xf]
  %v75 = vld [vmem:[%s1 + $0x50] sm:$0xf]
  %v76 = vld [vmem:[%s1 + $0x54] sm:$0xf]
  %v77 = vld [vmem:[%s1 + $0x58] sm:$0xf]
  %v78 = vld [vmem:[%s1 + $0x5c] sm:$0xf]
  %v79 = vld [vmem:[%s1 + $0x60] sm:$0xf]
  %v80 = vld [vmem:[%s1 + $0x64] sm:$0xf]
  %v81 = vld [vmem:[%s1 + $0x68] sm:$0xf]
  %v82 = vld [vmem:[%s1 + $0x6c] sm:$0xf]
  %v83 = vld [vmem:[%s1 + $0x70] sm:$0xf]
  %v84 = vld [vmem:[%s1 + $0x74] sm:$0xf]
  %v85 = vld [vmem:[%s1 + $0x78] sm:$0xf]
  %v86 = vld [vmem:[%s1 + $0x7c] sm:$0xf]
  %v87 = vld [vmem:[%s1 + $0x80] sm:$0xf]
  %v88 = vld [vmem:[%s3] sm:$0xf]
  %v122 = vunpack.c.l.b16 %v55
  %v123 = vunpack.c.l.b16 %v56
  %v124 = vunpack.c.l.b16 %v57
  %v125 = vunpack.c.l.b16 %v58
  %v126 = vunpack.c.l.b16 %v59
  %v127 = vunpack.c.l.b16 %v60
  %v128 = vunpack.c.l.b16 %v61
  %v129 = vunpack.c.l.b16 %v62
  %v130 = vunpack.c.l.b16 %v63
  %v131 = vunpack.c.l.b16 %v64
  %v132 = vunpack.c.l.b16 %v65
  %v133 = vunpack.c.l.b16 %v66
  %v134 = vunpack.c.l.b16 %v67
  %v135 = vunpack.c.l.b16 %v68
  %v136 = vunpack.c.l.b16 %v69
  %v137 = vunpack.c.l.b16 %v70
  %v138 = vunpack.c.l.b16 %v71
  %v139 = vunpack.c.l.b16 %v72
  %v140 = vunpack.c.l.b16 %v73
  %v141 = vunpack.c.l.b16 %v74
  %v142 = vunpack.c.l.b16 %v75
  %v143 = vunpack.c.l.b16 %v76
  %v144 = vunpack.c.l.b16 %v77
  %v145 = vunpack.c.l.b16 %v78
  %v146 = vunpack.c.l.b16 %v79
  %v147 = vunpack.c.l.b16 %v80
  %v148 = vunpack.c.l.b16 %v81
  %v149 = vunpack.c.l.b16 %v82
  %v150 = vunpack.c.l.b16 %v83
  %v151 = vunpack.c.l.b16 %v84
  %v152 = vunpack.c.l.b16 %v85
  %v153 = vunpack.c.l.b16 %v86
  %v154 = vunpack.c.l.b16 %v87
  %v155 = vpack.c.b16 %v123, %v122
  %v156 = vpack.c.b16 %v125, %v124
  %v157 = vpack.c.b16 %v127, %v126
  %v158 = vpack.c.b16 %v129, %v128
  %v159 = vpack.c.b16 %v131, %v130
  %v160 = vpack.c.b16 %v133, %v132
  %v161 = vpack.c.b16 %v135, %v134
  %v162 = vpack.c.b16 %v137, %v136
  %v163 = vpack.c.b16 %v139, %v138
  %v164 = vpack.c.b16 %v141, %v140
  %v165 = vpack.c.b16 %v143, %v142
  %v166 = vpack.c.b16 %v145, %v144
  %v167 = vpack.c.b16 %v147, %v146
  %v168 = vpack.c.b16 %v149, %v148
  %v169 = vpack.c.b16 %v151, %v150
  %v170 = vpack.c.b16 %v153, %v152
  %v171 = vpack.c.b16 %v154, %v154
  %vm172 = vcmask 64512
  %v174 = vsel %vm172, %v155, 0
  %v177 = vsel %vm172, %v156, 0
  %v180 = vsel %vm172, %v157, 0
  %v183 = vsel %vm172, %v158, 0
  %v186 = vsel %vm172, %v159, 0
  %v189 = vsel %vm172, %v160, 0
  %v192 = vsel %vm172, %v161, 0
  %v195 = vsel %vm172, %v162, 0
  %v198 = vsel %vm172, %v163, 0
  %v201 = vsel %vm172, %v164, 0
  %v204 = vsel %vm172, %v165, 0
  %v207 = vsel %vm172, %v166, 0
  %v210 = vsel %vm172, %v167, 0
  %v213 = vsel %vm172, %v168, 0
  %v216 = vsel %vm172, %v169, 0
  %v219 = vsel %vm172, %v170, 0
  %v222 = vsel %vm172, %v171, 0
  %vm224 = vcmask 1043456
  %v226 = vsel %vm224, %v88, 0
  %228 = vmatprep.subr.bf16.mxu0 0
  %229 = vmatpush1.bf16.msra.mxu0 %v226
  %230 = vmatprep.subr.bf16.mxu0 0
  %231 = vmatpush1.bf16.msra.mxu0 0
  %232 = vmatprep.subr.bf16.mxu0 0
  %233 = vmatpush1.bf16.msra.mxu0 0
  %234 = vmatprep.subr.bf16.mxu0 0
  %235 = vmatpush1.bf16.msra.mxu0 0
  %236 = vmatprep.subr.bf16.mxu0 0
  %237 = vmatpush1.bf16.msra.mxu0 0
  %238 = vmatprep.subr.bf16.mxu0 0
  %239 = vmatpush1.bf16.msra.mxu0 0
  %240 = vmatprep.subr.bf16.mxu0 0
  %241 = vmatpush1.bf16.msra.mxu0 0
  %242 = vmatprep.subr.bf16.mxu0 0
  %243 = vmatpush1.bf16.msra.mxu0 0
  %244 = vmatprep.subr.bf16.mxu0 0
  %245 = vmatpush1.bf16.msra.mxu0 0
  %246 = vmatprep.subr.bf16.mxu0 0
  %247 = vmatpush1.bf16.msra.mxu0 0
  %248 = vmatprep.subr.bf16.mxu0 0
  %249 = vmatpush1.bf16.msra.mxu0 0
  %250 = vmatprep.subr.bf16.mxu0 0
  %251 = vmatpush1.bf16.msra.mxu0 0
  %252 = vmatprep.subr.bf16.mxu0 0
  %253 = vmatpush1.bf16.msra.mxu0 0
  %254 = vmatprep.subr.bf16.mxu0 0
  %255 = vmatpush1.bf16.msra.mxu0 0
  %256 = vmatprep.subr.bf16.mxu0 0
  %257 = vmatpush1.bf16.msra.mxu0 0
  %258 = vmatprep.subr.bf16.mxu0 0
  %259 = vmatpush1.bf16.msra.mxu0 0
  %260 = vmatprep.mubr.bf16.mxu0 0
  %261 = vmatmul.mubr.bf16.gmra.mrb[0].mxu0 %v174
  %v262 = vpop.f32.mrb[0].mxu0
  %v263 = vadd.f32 0.0, %v262
  %v264 = vpop.f32.mrb[0].mxu0
  %v265 = vpop.f32.mrb[0].mxu0
  %v266 = vadd.f32 0.0, %v265
  %v267 = vpop.f32.mrb[0].mxu0
  %268 = vmatprep.mubr.bf16.mxu0 0
  %269 = vmatmul.mubr.bf16.gmra.mrb[0].mxu0 %v177
  %v270 = vpop.f32.mrb[0].mxu0
  %v271 = vadd.f32 0.0, %v270
  %v272 = vpop.f32.mrb[0].mxu0
  %v273 = vpop.f32.mrb[0].mxu0
  %v274 = vadd.f32 0.0, %v273
  %v275 = vpop.f32.mrb[0].mxu0
  %276 = vmatprep.mubr.bf16.mxu0 0
  %277 = vmatmul.mubr.bf16.gmra.mrb[0].mxu0 %v180
  %v278 = vpop.f32.mrb[0].mxu0
  %v279 = vadd.f32 0.0, %v278
  %v280 = vpop.f32.mrb[0].mxu0
  %v281 = vpop.f32.mrb[0].mxu0
  %v282 = vadd.f32 0.0, %v281
  %v283 = vpop.f32.mrb[0].mxu0
  %284 = vmatprep.mubr.bf16.mxu0 0
  %285 = vmatmul.mubr.bf16.gmra.mrb[0].mxu0 %v183
  %v286 = vpop.f32.mrb[0].mxu0
  %v287 = vadd.f32 0.0, %v286
  %v288 = vpop.f32.mrb[0].mxu0
  %v289 = vpop.f32.mrb[0].mxu0
  %v290 = vadd.f32 0.0, %v289
  %v291 = vpop.f32.mrb[0].mxu0
  %292 = vmatprep.mubr.bf16.mxu0 0
  %293 = vmatmul.mubr.bf16.gmra.mrb[0].mxu0 %v186
  %v294 = vpop.f32.mrb[0].mxu0
  %v295 = vadd.f32 0.0, %v294
  %v296 = vpop.f32.mrb[0].mxu0
  %v297 = vpop.f32.mrb[0].mxu0
  %v298 = vadd.f32 0.0, %v297
  %v299 = vpop.f32.mrb[0].mxu0
  %300 = vmatprep.mubr.bf16.mxu0 0
  %301 = vmatmul.mubr.bf16.gmra.mrb[0].mxu0 %v189
  %v302 = vpop.f32.mrb[0].mxu0
  %v303 = vadd.f32 0.0, %v302
  %v304 = vpop.f32.mrb[0].mxu0
  %v305 = vpop.f32.mrb[0].mxu0
  %v306 = vadd.f32 0.0, %v305
  %v307 = vpop.f32.mrb[0].mxu0
  %308 = vmatprep.mubr.bf16.mxu0 0
  %309 = vmatmul.mubr.bf16.gmra.mrb[0].mxu0 %v192
  %v310 = vpop.f32.mrb[0].mxu0
  %v311 = vadd.f32 0.0, %v310
  %v312 = vpop.f32.mrb[0].mxu0
  %v313 = vpop.f32.mrb[0].mxu0
  %v314 = vadd.f32 0.0, %v313
  %v315 = vpop.f32.mrb[0].mxu0
  %316 = vmatprep.mubr.bf16.mxu0 0
  %317 = vmatmul.mubr.bf16.gmra.mrb[0].mxu0 %v195
  %v318 = vpop.f32.mrb[0].mxu0
  %v319 = vadd.f32 0.0, %v318
  %v320 = vpop.f32.mrb[0].mxu0
  %v321 = vpop.f32.mrb[0].mxu0
  %v322 = vadd.f32 0.0, %v321
  %v323 = vpop.f32.mrb[0].mxu0
  %324 = vmatprep.mubr.bf16.mxu0 0
  %325 = vmatmul.mubr.bf16.gmra.mrb[0].mxu0 %v198
  %v326 = vpop.f32.mrb[0].mxu0
  %v327 = vadd.f32 0.0, %v326
  %v328 = vpop.f32.mrb[0].mxu0
  %v329 = vpop.f32.mrb[0].mxu0
  %v330 = vadd.f32 0.0, %v329
  %v331 = vpop.f32.mrb[0].mxu0
  %332 = vmatprep.mubr.bf16.mxu0 0
  %333 = vmatmul.mubr.bf16.gmra.mrb[0].mxu0 %v201
  %v334 = vpop.f32.mrb[0].mxu0
  %v335 = vadd.f32 0.0, %v334
  %v336 = vpop.f32.mrb[0].mxu0
  %v337 = vpop.f32.mrb[0].mxu0
  %v338 = vadd.f32 0.0, %v337
  %v339 = vpop.f32.mrb[0].mxu0
  %340 = vmatprep.mubr.bf16.mxu0 0
  %341 = vmatmul.mubr.bf16.gmra.mrb[0].mxu0 %v204
  %v342 = vpop.f32.mrb[0].mxu0
  %v343 = vadd.f32 0.0, %v342
  %v344 = vpop.f32.mrb[0].mxu0
  %v345 = vpop.f32.mrb[0].mxu0
  %v346 = vadd.f32 0.0, %v345
  %v347 = vpop.f32.mrb[0].mxu0
  %348 = vmatprep.mubr.bf16.mxu0 0
  %349 = vmatmul.mubr.bf16.gmra.mrb[0].mxu0 %v207
  %v350 = vpop.f32.mrb[0].mxu0
  %v351 = vadd.f32 0.0, %v350
  %v352 = vpop.f32.mrb[0].mxu0
  %v353 = vpop.f32.mrb[0].mxu0
  %v354 = vadd.f32 0.0, %v353
  %v355 = vpop.f32.mrb[0].mxu0
  %356 = vmatprep.mubr.bf16.mxu0 0
  %357 = vmatmul.mubr.bf16.gmra.mrb[0].mxu0 %v210
  %v358 = vpop.f32.mrb[0].mxu0
  %v359 = vadd.f32 0.0, %v358
  %v360 = vpop.f32.mrb[0].mxu0
  %v361 = vpop.f32.mrb[0].mxu0
  %v362 = vadd.f32 0.0, %v361
  %v363 = vpop.f32.mrb[0].mxu0
  %364 = vmatprep.mubr.bf16.mxu0 0
  %365 = vmatmul.mubr.bf16.gmra.mrb[0].mxu0 %v213
  %v366 = vpop.f32.mrb[0].mxu0
  %v367 = vadd.f32 0.0, %v366
  %v368 = vpop.f32.mrb[0].mxu0
  %v369 = vpop.f32.mrb[0].mxu0
  %v370 = vadd.f32 0.0, %v369
  %v371 = vpop.f32.mrb[0].mxu0
  %372 = vmatprep.mubr.bf16.mxu0 0
  %373 = vmatmul.mubr.bf16.gmra.mrb[0].mxu0 %v216
  %v374 = vpop.f32.mrb[0].mxu0
  %v375 = vadd.f32 0.0, %v374
  %v376 = vpop.f32.mrb[0].mxu0
  %v377 = vpop.f32.mrb[0].mxu0
  %v378 = vadd.f32 0.0, %v377
  %v379 = vpop.f32.mrb[0].mxu0
  %380 = vmatprep.mubr.bf16.mxu0 0
  %381 = vmatmul.mubr.bf16.gmra.mrb[0].mxu0 %v219
  %v382 = vpop.f32.mrb[0].mxu0
  %v383 = vadd.f32 0.0, %v382
  %v384 = vpop.f32.mrb[0].mxu0
  %v385 = vpop.f32.mrb[0].mxu0
  %v386 = vadd.f32 0.0, %v385
  %v387 = vpop.f32.mrb[0].mxu0
  %388 = vmatprep.mubr.bf16.mxu0 0
  %389 = vmatmul.mubr.bf16.gmra.mrb[0].mxu0 %v222
  %v390 = vpop.f32.mrb[0].mxu0
  %v391 = vadd.f32 0.0, %v390
  %v392 = vpop.f32.mrb[0].mxu0
  %v393 = vpop.f32.mrb[0].mxu0
  %v394 = vpop.f32.mrb[0].mxu0
  %395 = vdwg.mxu0
  %v429 = vunpack.c.l.b16 %v21
  %v430 = vunpack.c.l.b16 %v22
  %v431 = vunpack.c.l.b16 %v23
  %v432 = vunpack.c.l.b16 %v24
  %v433 = vunpack.c.l.b16 %v25
  %v434 = vunpack.c.l.b16 %v26
  %v435 = vunpack.c.l.b16 %v27
  %v436 = vunpack.c.l.b16 %v28
  %v437 = vunpack.c.l.b16 %v29
  %v438 = vunpack.c.l.b16 %v30
  %v439 = vunpack.c.l.b16 %v31
  %v440 = vunpack.c.l.b16 %v32
  %v441 = vunpack.c.l.b16 %v33
  %v442 = vunpack.c.l.b16 %v34
  %v443 = vunpack.c.l.b16 %v35
  %v444 = vunpack.c.l.b16 %v36
  %v445 = vunpack.c.l.b16 %v37
  %v446 = vunpack.c.l.b16 %v38
  %v447 = vunpack.c.l.b16 %v39
  %v448 = vunpack.c.l.b16 %v40
  %v449 = vunpack.c.l.b16 %v41
  %v450 = vunpack.c.l.b16 %v42
  %v451 = vunpack.c.l.b16 %v43
  %v452 = vunpack.c.l.b16 %v44
  %v453 = vunpack.c.l.b16 %v45
  %v454 = vunpack.c.l.b16 %v46
  %v455 = vunpack.c.l.b16 %v47
  %v456 = vunpack.c.l.b16 %v48
  %v457 = vunpack.c.l.b16 %v49
  %v458 = vunpack.c.l.b16 %v50
  %v459 = vunpack.c.l.b16 %v51
  %v460 = vunpack.c.l.b16 %v52
  %v461 = vunpack.c.l.b16 %v53
  %v462 = vpack.c.b16 %v430, %v429
  %v463 = vpack.c.b16 %v432, %v431
  %v464 = vpack.c.b16 %v434, %v433
  %v465 = vpack.c.b16 %v436, %v435
  %v466 = vpack.c.b16 %v438, %v437
  %v467 = vpack.c.b16 %v440, %v439
  %v468 = vpack.c.b16 %v442, %v441
  %v469 = vpack.c.b16 %v444, %v443
  %v470 = vpack.c.b16 %v446, %v445
  %v471 = vpack.c.b16 %v448, %v447
  %v472 = vpack.c.b16 %v450, %v449
  %v473 = vpack.c.b16 %v452, %v451
  %v474 = vpack.c.b16 %v454, %v453
  %v475 = vpack.c.b16 %v456, %v455
  %v476 = vpack.c.b16 %v458, %v457
  %v477 = vpack.c.b16 %v460, %v459
  %v478 = vpack.c.b16 %v461, %v461
  %v480 = vsel %vm172, %v462, 0
  %v483 = vsel %vm172, %v463, 0
  %v486 = vsel %vm172, %v464, 0
  %v489 = vsel %vm172, %v465, 0
  %v492 = vsel %vm172, %v466, 0
  %v495 = vsel %vm172, %v467, 0
  %v498 = vsel %vm172, %v468, 0
  %v501 = vsel %vm172, %v469, 0
  %v504 = vsel %vm172, %v470, 0
  %v507 = vsel %vm172, %v471, 0
  %v510 = vsel %vm172, %v472, 0
  %v513 = vsel %vm172, %v473, 0
  %v516 = vsel %vm172, %v474, 0
  %v519 = vsel %vm172, %v475, 0
  %v522 = vsel %vm172, %v476, 0
  %v525 = vsel %vm172, %v477, 0
  %v528 = vsel %vm172, %v478, 0
  %v531 = vsel %vm224, %v54, 0
  %533 = vmatprep.subr.bf16.mxu0 0
  %534 = vmatpush1.bf16.msra.mxu0 %v531
  %535 = vmatprep.subr.bf16.mxu0 0
  %536 = vmatpush1.bf16.msra.mxu0 0
  %537 = vmatprep.subr.bf16.mxu0 0
  %538 = vmatpush1.bf16.msra.mxu0 0
  %539 = vmatprep.subr.bf16.mxu0 0
  %540 = vmatpush1.bf16.msra.mxu0 0
  %541 = vmatprep.subr.bf16.mxu0 0
  %542 = vmatpush1.bf16.msra.mxu0 0
  %543 = vmatprep.subr.bf16.mxu0 0
  %544 = vmatpush1.bf16.msra.mxu0 0
  %545 = vmatprep.subr.bf16.mxu0 0
  %546 = vmatpush1.bf16.msra.mxu0 0
  %547 = vmatprep.subr.bf16.mxu0 0
  %548 = vmatpush1.bf16.msra.mxu0 0
  %549 = vmatprep.subr.bf16.mxu0 0
  %550 = vmatpush1.bf16.msra.mxu0 0
  %551 = vmatprep.subr.bf16.mxu0 0
  %552 = vmatpush1.bf16.msra.mxu0 0
  %553 = vmatprep.subr.bf16.mxu0 0
  %554 = vmatpush1.bf16.msra.mxu0 0
  %555 = vmatprep.subr.bf16.mxu0 0
  %556 = vmatpush1.bf16.msra.mxu0 0
  %557 = vmatprep.subr.bf16.mxu0 0
  %558 = vmatpush1.bf16.msra.mxu0 0
  %559 = vmatprep.subr.bf16.mxu0 0
  %560 = vmatpush1.bf16.msra.mxu0 0
  %561 = vmatprep.subr.bf16.mxu0 0
  %562 = vmatpush1.bf16.msra.mxu0 0
  %563 = vmatprep.subr.bf16.mxu0 0
  %564 = vmatpush1.bf16.msra.mxu0 0
  %565 = vmatprep.mubr.bf16.mxu0 0
  %566 = vmatmul.mubr.bf16.gmra.mrb[0].mxu0 %v480
  %v567 = vpop.f32.mrb[0].mxu0
  %v568 = vadd.f32 %v263, %v567
  %v569 = vpop.f32.mrb[0].mxu0
  %v570 = vpop.f32.mrb[0].mxu0
  %v571 = vadd.f32 %v266, %v570
  %v572 = vpop.f32.mrb[0].mxu0
  %573 = vmatprep.mubr.bf16.mxu0 0
  %574 = vmatmul.mubr.bf16.gmra.mrb[0].mxu0 %v483
  %v575 = vpop.f32.mrb[0].mxu0
  %v576 = vadd.f32 %v271, %v575
  %v577 = vpop.f32.mrb[0].mxu0
  %v578 = vpop.f32.mrb[0].mxu0
  %v579 = vadd.f32 %v274, %v578
  %v580 = vpop.f32.mrb[0].mxu0
  %581 = vmatprep.mubr.bf16.mxu0 0
  %582 = vmatmul.mubr.bf16.gmra.mrb[0].mxu0 %v486
  %v583 = vpop.f32.mrb[0].mxu0
  %v584 = vadd.f32 %v279, %v583
  %v585 = vpop.f32.mrb[0].mxu0
  %v586 = vpop.f32.mrb[0].mxu0
  %v587 = vadd.f32 %v282, %v586
  %v588 = vpop.f32.mrb[0].mxu0
  %589 = vmatprep.mubr.bf16.mxu0 0
  %590 = vmatmul.mubr.bf16.gmra.mrb[0].mxu0 %v489
  %v591 = vpop.f32.mrb[0].mxu0
  %v592 = vadd.f32 %v287, %v591
  %v593 = vpop.f32.mrb[0].mxu0
  %v594 = vpop.f32.mrb[0].mxu0
  %v595 = vadd.f32 %v290, %v594
  %v596 = vpop.f32.mrb[0].mxu0
  %597 = vmatprep.mubr.bf16.mxu0 0
  %598 = vmatmul.mubr.bf16.gmra.mrb[0].mxu0 %v492
  %v599 = vpop.f32.mrb[0].mxu0
  %v600 = vadd.f32 %v295, %v599
  %v601 = vpop.f32.mrb[0].mxu0
  %v602 = vpop.f32.mrb[0].mxu0
  %v603 = vadd.f32 %v298, %v602
  %v604 = vpop.f32.mrb[0].mxu0
  %605 = vmatprep.mubr.bf16.mxu0 0
  %606 = vmatmul.mubr.bf16.gmra.mrb[0].mxu0 %v495
  %v607 = vpop.f32.mrb[0].mxu0
  %v608 = vadd.f32 %v303, %v607
  %v609 = vpop.f32.mrb[0].mxu0
  %v610 = vpop.f32.mrb[0].mxu0
  %v611 = vadd.f32 %v306, %v610
  %v612 = vpop.f32.mrb[0].mxu0
  %613 = vmatprep.mubr.bf16.mxu0 0
  %614 = vmatmul.mubr.bf16.gmra.mrb[0].mxu0 %v498
  %v615 = vpop.f32.mrb[0].mxu0
  %v616 = vadd.f32 %v311, %v615
  %v617 = vpop.f32.mrb[0].mxu0
  %v618 = vpop.f32.mrb[0].mxu0
  %v619 = vadd.f32 %v314, %v618
  %v620 = vpop.f32.mrb[0].mxu0
  %621 = vmatprep.mubr.bf16.mxu0 0
  %622 = vmatmul.mubr.bf16.gmra.mrb[0].mxu0 %v501
  %v623 = vpop.f32.mrb[0].mxu0
  %v624 = vadd.f32 %v319, %v623
  %v625 = vpop.f32.mrb[0].mxu0
  %v626 = vpop.f32.mrb[0].mxu0
  %v627 = vadd.f32 %v322, %v626
  %v628 = vpop.f32.mrb[0].mxu0
  %629 = vmatprep.mubr.bf16.mxu0 0
  %630 = vmatmul.mubr.bf16.gmra.mrb[0].mxu0 %v504
  %v631 = vpop.f32.mrb[0].mxu0
  %v632 = vadd.f32 %v327, %v631
  %v633 = vpop.f32.mrb[0].mxu0
  %v634 = vpop.f32.mrb[0].mxu0
  %v635 = vadd.f32 %v330, %v634
  %v636 = vpop.f32.mrb[0].mxu0
  %637 = vmatprep.mubr.bf16.mxu0 0
  %638 = vmatmul.mubr.bf16.gmra.mrb[0].mxu0 %v507
  %v639 = vpop.f32.mrb[0].mxu0
  %v640 = vadd.f32 %v335, %v639
  %v641 = vpop.f32.mrb[0].mxu0
  %v642 = vpop.f32.mrb[0].mxu0
  %v643 = vadd.f32 %v338, %v642
  %v644 = vpop.f32.mrb[0].mxu0
  %645 = vmatprep.mubr.bf16.mxu0 0
  %646 = vmatmul.mubr.bf16.gmra.mrb[0].mxu0 %v510
  %v647 = vpop.f32.mrb[0].mxu0
  %v648 = vadd.f32 %v343, %v647
  %v649 = vpop.f32.mrb[0].mxu0
  %v650 = vpop.f32.mrb[0].mxu0
  %v651 = vadd.f32 %v346, %v650
  %v652 = vpop.f32.mrb[0].mxu0
  %653 = vmatprep.mubr.bf16.mxu0 0
  %654 = vmatmul.mubr.bf16.gmra.mrb[0].mxu0 %v513
  %v655 = vpop.f32.mrb[0].mxu0
  %v656 = vadd.f32 %v351, %v655
  %v657 = vpop.f32.mrb[0].mxu0
  %v658 = vpop.f32.mrb[0].mxu0
  %v659 = vadd.f32 %v354, %v658
  %v660 = vpop.f32.mrb[0].mxu0
  %661 = vmatprep.mubr.bf16.mxu0 0
  %662 = vmatmul.mubr.bf16.gmra.mrb[0].mxu0 %v516
  %v663 = vpop.f32.mrb[0].mxu0
  %v664 = vadd.f32 %v359, %v663
  %v665 = vpop.f32.mrb[0].mxu0
  %v666 = vpop.f32.mrb[0].mxu0
  %v667 = vadd.f32 %v362, %v666
  %v668 = vpop.f32.mrb[0].mxu0
  %669 = vmatprep.mubr.bf16.mxu0 0
  %670 = vmatmul.mubr.bf16.gmra.mrb[0].mxu0 %v519
  %v671 = vpop.f32.mrb[0].mxu0
  %v672 = vadd.f32 %v367, %v671
  %v673 = vpop.f32.mrb[0].mxu0
  %v674 = vpop.f32.mrb[0].mxu0
  %v675 = vadd.f32 %v370, %v674
  %v676 = vpop.f32.mrb[0].mxu0
  %677 = vmatprep.mubr.bf16.mxu0 0
  %678 = vmatmul.mubr.bf16.gmra.mrb[0].mxu0 %v522
  %v679 = vpop.f32.mrb[0].mxu0
  %v680 = vadd.f32 %v375, %v679
  %v681 = vpop.f32.mrb[0].mxu0
  %v682 = vpop.f32.mrb[0].mxu0
  %v683 = vadd.f32 %v378, %v682
  %v684 = vpop.f32.mrb[0].mxu0
  %685 = vmatprep.mubr.bf16.mxu0 0
  %686 = vmatmul.mubr.bf16.gmra.mrb[0].mxu0 %v525
  %v687 = vpop.f32.mrb[0].mxu0
  %v688 = vadd.f32 %v383, %v687
  %v689 = vpop.f32.mrb[0].mxu0
  %v690 = vpop.f32.mrb[0].mxu0
  %v691 = vadd.f32 %v386, %v690
  %v692 = vpop.f32.mrb[0].mxu0
  %693 = vmatprep.mubr.bf16.mxu0 0
  %694 = vmatmul.mubr.bf16.gmra.mrb[0].mxu0 %v528
  %v695 = vpop.f32.mrb[0].mxu0
  %v696 = vadd.f32 %v391, %v695
  %v697 = vpop.f32.mrb[0].mxu0
  %v698 = vpop.f32.mrb[0].mxu0
  %v699 = vpop.f32.mrb[0].mxu0
  %700 = vdwg.mxu0
  %v701 = vld [vmem:[%s4] sm:$0x1]
  %v703 = vlaneseq
  %v704 = vshrl.u32 %v703, 7
  %v705 = vsub.s32 0, %v704
  %v706 = vrot.slane %v701, %v705
  %v708 = vadd.f32 %v568, %v706
  %v709 = vadd.f32 %v571, %v706
  %v710 = vadd.f32 %v576, %v706
  %v711 = vadd.f32 %v579, %v706
  %v712 = vadd.f32 %v584, %v706
  %v713 = vadd.f32 %v587, %v706
  %v714 = vadd.f32 %v592, %v706
  %v715 = vadd.f32 %v595, %v706
  %v716 = vadd.f32 %v600, %v706
  %v717 = vadd.f32 %v603, %v706
  %v718 = vadd.f32 %v608, %v706
  %v719 = vadd.f32 %v611, %v706
  %v720 = vadd.f32 %v616, %v706
  %v721 = vadd.f32 %v619, %v706
  %v722 = vadd.f32 %v624, %v706
  %v723 = vadd.f32 %v627, %v706
  %v724 = vadd.f32 %v632, %v706
  %v725 = vadd.f32 %v635, %v706
  %v726 = vadd.f32 %v640, %v706
  %v727 = vadd.f32 %v643, %v706
  %v728 = vadd.f32 %v648, %v706
  %v729 = vadd.f32 %v651, %v706
  %v730 = vadd.f32 %v656, %v706
  %v731 = vadd.f32 %v659, %v706
  %v732 = vadd.f32 %v664, %v706
  %v733 = vadd.f32 %v667, %v706
  %v734 = vadd.f32 %v672, %v706
  %v735 = vadd.f32 %v675, %v706
  %v736 = vadd.f32 %v680, %v706
  %v737 = vadd.f32 %v683, %v706
  %v738 = vadd.f32 %v688, %v706
  %v739 = vadd.f32 %v691, %v706
  %v740 = vadd.f32 %v696, %v706
  %741 = vst.msk [vmem:[%s5] sm:$0xff] %vm172, %v708
  %742 = vst.msk [vmem:[%s5 + $0x8] sm:$0xff] %vm172, %v709
  %743 = vst.msk [vmem:[%s5 + $0x10] sm:$0xff] %vm172, %v710
  %744 = vst.msk [vmem:[%s5 + $0x18] sm:$0xff] %vm172, %v711
  %745 = vst.msk [vmem:[%s5 + $0x20] sm:$0xff] %vm172, %v712
  %746 = vst.msk [vmem:[%s5 + $0x28] sm:$0xff] %vm172, %v713
  %747 = vst.msk [vmem:[%s5 + $0x30] sm:$0xff] %vm172, %v714
  %748 = vst.msk [vmem:[%s5 + $0x38] sm:$0xff] %vm172, %v715
  %749 = vst.msk [vmem:[%s5 + $0x40] sm:$0xff] %vm172, %v716
  %750 = vst.msk [vmem:[%s5 + $0x48] sm:$0xff] %vm172, %v717
  %751 = vst.msk [vmem:[%s5 + $0x50] sm:$0xff] %vm172, %v718
  %752 = vst.msk [vmem:[%s5 + $0x58] sm:$0xff] %vm172, %v719
  %753 = vst.msk [vmem:[%s5 + $0x60] sm:$0xff] %vm172, %v720
  %754 = vst.msk [vmem:[%s5 + $0x68] sm:$0xff] %vm172, %v721
  %755 = vst.msk [vmem:[%s5 + $0x70] sm:$0xff] %vm172, %v722
  %756 = vst.msk [vmem:[%s5 + $0x78] sm:$0xff] %vm172, %v723
  %757 = vst.msk [vmem:[%s5 + $0x80] sm:$0xff] %vm172, %v724
  %758 = vst.msk [vmem:[%s5 + $0x88] sm:$0xff] %vm172, %v725
  %759 = vst.msk [vmem:[%s5 + $0x90] sm:$0xff] %vm172, %v726
  %760 = vst.msk [vmem:[%s5 + $0x98] sm:$0xff] %vm172, %v727
  %761 = vst.msk [vmem:[%s5 + $0xa0] sm:$0xff] %vm172, %v728
  %762 = vst.msk [vmem:[%s5 + $0xa8] sm:$0xff] %vm172, %v729
  %763 = vst.msk [vmem:[%s5 + $0xb0] sm:$0xff] %vm172, %v730
  %764 = vst.msk [vmem:[%s5 + $0xb8] sm:$0xff] %vm172, %v731
  %765 = vst.msk [vmem:[%s5 + $0xc0] sm:$0xff] %vm172, %v732
  %766 = vst.msk [vmem:[%s5 + $0xc8] sm:$0xff] %vm172, %v733
  %767 = vst.msk [vmem:[%s5 + $0xd0] sm:$0xff] %vm172, %v734
  %768 = vst.msk [vmem:[%s5 + $0xd8] sm:$0xff] %vm172, %v735
  %769 = vst.msk [vmem:[%s5 + $0xe0] sm:$0xff] %vm172, %v736
  %770 = vst.msk [vmem:[%s5 + $0xe8] sm:$0xff] %vm172, %v737
  %771 = vst.msk [vmem:[%s5 + $0xf0] sm:$0xff] %vm172, %v738
  %772 = vst.msk [vmem:[%s5 + $0xf8] sm:$0xff] %vm172, %v739
  %773 = vst.msk [vmem:[%s5 + $0x100] sm:$0xff] %vm172, %v740
  // Predicated region
  $region22: #{wav_autoencoder_forward.45} parent=0 // pred_check
    _
  $region23: #{wav_autoencoder_forward.45} parent=0 // pred_check_branch
    %775 = sbr.rel (0) target = $region25
  $region24: #{wav_autoencoder_forward.45} parent=0 // pred_region
    _
  $region25: #{wav_autoencoder_forward.45} parent=0 // pred_fallthru
    _
  // Predicated region
  $region26: #{wav_autoencoder_forward.45} parent=0 // pred_check
    _
  $region27: #{wav_autoencoder_forward.45} parent=0 // pred_check_branch
    %777 = sbr.rel (0) target = $region29
  $region28: #{wav_autoencoder_forward.45} parent=0 // pred_region
    _
  $region29: #{wav_autoencoder_forward.45} parent=0 // pred_fallthru
    _

</llo_original>
